<compile_context>
chip_gen: v7x
topology: tpu7x:2x2x1
jax: 0.10.0
libtpu: 0.0.40
codegen_flags: <defaults>
</compile_context>

<pallas_src>
import math

import jax
import jax.numpy as jnp
from jax.experimental import pallas as pl
from jax.experimental.pallas import tpu as pltpu

# Make the pure-JAX reference matmuls full-precision so the correctness check
# against the (f32-accumulating) Pallas kernel is tight.
jax.config.update("jax_default_matmul_precision", "highest")

LANE = 128      # vreg lane width  -> feature-dim padding target
SUBLANE = 8     # vreg sublane width -> node-dim padding target


def _round_up(x, m):
    return (x + m - 1) // m * m


# ----------------------------------------------------------------------------
# Fused RelCNN kernel (single pallas_call, whole arrays resident in VMEM)
# ----------------------------------------------------------------------------

def _make_relcnn_kernel(num_layers, c_pad):
    """Input-ref layout:
         x, a1, a2,
         [wcat_0, br_0, ..., wcat_{L-1}, br_{L-1}],   # packed lin1|lin2|root per layer
         [wf_0, ..., wf_L],                           # final Linear weight, split per block
         fb                                           # final Linear bias
       followed by the single output ref.
    """

    def kernel(*refs):
        x_ref, a1_ref, a2_ref = refs[0], refs[1], refs[2]
        idx = 3
        layer_refs = refs[idx:idx + 2 * num_layers]
        idx += 2 * num_layers
        wf_refs = refs[idx:idx + num_layers + 1]
        idx += num_layers + 1
        fb_ref = refs[idx]
        out_ref = refs[idx + 1]

        x = x_ref[...]
        a1 = a1_ref[...]            # dense mean-agg operator, src->tgt flow
        a2 = a2_ref[...]            # dense mean-agg operator, tgt->src flow

        # final Linear applied block-wise: xs[0] (= x) contribution + bias.
        acc = jnp.dot(x, wf_refs[0][...],
                      preferred_element_type=jnp.float32) + fb_ref[...]

        h = x
        for l in range(num_layers):
            wcat = layer_refs[2 * l][...]        # (c_prev_pad, 3*c_pad): lin1|lin2|root
            br = layer_refs[2 * l + 1][...]      # (1, c_pad) root bias
            m = jnp.dot(h, wcat, preferred_element_type=jnp.float32)
            m1 = m[:, 0 * c_pad:1 * c_pad]       # lane-aligned static slices
            m2 = m[:, 1 * c_pad:2 * c_pad]
            root = m[:, 2 * c_pad:3 * c_pad] + br
            # RelConv: root(x) + mean-agg(lin1 x) + mean-agg(lin2 x), then ReLU
            # (eval-mode dropout is the identity; batch_norm=False).
            h = jnp.maximum(
                root
                + jnp.dot(a1, m1, preferred_element_type=jnp.float32)
                + jnp.dot(a2, m2, preferred_element_type=jnp.float32),
                0.0)
            # skip-concat's contribution, accumulated in-kernel.
            acc = acc + jnp.dot(h, wf_refs[l + 1][...],
                                preferred_element_type=jnp.float32)

        out_ref[...] = acc                        # (n_pad, c_pad): lane-dense store

    return kernel


# ----------------------------------------------------------------------------
# Glue: dense mean-aggregation operators for RelConv (both flow directions)
# ----------------------------------------------------------------------------

def _mean_adjs(edge_index, n, n_pad):
    # TODO(synk): PyG's sparse scatter-mean aggregation has no clean small-shape
    # Pallas equivalent; it is densified here into (N,N) operators in JAX glue
    # (traced inside the same jit) so the in-kernel aggregation is an MXU matmul.
    src, dst = edge_index[0], edge_index[1]
    cnt = jnp.zeros((n_pad, n_pad), jnp.float32).at[dst, src].add(1.0)
    a1 = cnt / jnp.maximum(cnt.sum(axis=1, keepdims=True), 1.0)       # src->tgt mean
    cnt_t = cnt.T
    a2 = cnt_t / jnp.maximum(cnt_t.sum(axis=1, keepdims=True), 1.0)   # tgt->src mean
    # Padded rows/cols are all-zero, so padded nodes never contaminate real rows.
    return a1, a2


# ----------------------------------------------------------------------------
# Wrapper: pad, pack weights, single pallas_call — all under one jit
# ----------------------------------------------------------------------------

@jax.jit
def relcnn_forward(x, edge_index, params):
    """RelCNN forward (batch_norm=False, cat=True, lin=True, eval-mode dropout)."""
    n, c_in = x.shape
    num_layers = len(params["layers"])
    c_out = params["final_b"].shape[0]

    n_pad = _round_up(n, SUBLANE)
    cip = _round_up(c_in, LANE)
    cop = _round_up(c_out, LANE)

    # Zero padding is exact: padded weight rows/cols are 0, padded bias is 0,
    # padded adjacency rows/cols are 0, and padded output rows/cols are sliced off.
    x_pad = jnp.zeros((n_pad, cip), jnp.float32).at[:n, :c_in].set(x)
    a1, a2 = _mean_adjs(edge_index, n, n_pad)

    kernel_inputs = [x_pad, a1, a2]

    # Pack each layer's (lin1 | lin2 | root) into one wide matrix.
    c_prev, c_prev_pad = c_in, cip
    for lp in params["layers"]:
        wcat = jnp.zeros((c_prev_pad, 3 * cop), jnp.float32)
        wcat = wcat.at[:c_prev, 0 * cop:0 * cop + c_out].set(lp["w1"])
        wcat = wcat.at[:c_prev, 1 * cop:1 * cop + c_out].set(lp["w2"])
        wcat = wcat.at[:c_prev, 2 * cop:2 * cop + c_out].set(lp["wr"])
        br = jnp.zeros((1, cop), jnp.float32).at[0, :c_out].set(lp["br"])
        kernel_inputs += [wcat, br]
        c_prev, c_prev_pad = c_out, cop

    # Split the final Linear weight by skip-connection block (replaces the concat).
    fw = params["final_w"]                      # (c_in + L*c_out, c_out)
    kernel_inputs.append(
        jnp.zeros((cip, cop), jnp.float32).at[:c_in, :c_out].set(fw[:c_in]))
    for l in range(num_layers):
        blk = fw[c_in + l * c_out: c_in + (l + 1) * c_out]
        kernel_inputs.append(
            jnp.zeros((cop, cop), jnp.float32).at[:c_out, :c_out].set(blk))
    kernel_inputs.append(
        jnp.zeros((1, cop), jnp.float32).at[0, :c_out].set(params["final_b"]))

    vmem = pl.BlockSpec(memory_space=pltpu.MemorySpace.VMEM)
    out = pl.pallas_call(
        _make_relcnn_kernel(num_layers, cop),
        out_shape=jax.ShapeDtypeStruct((n_pad, cop), jnp.float32),
        in_specs=[vmem] * len(kernel_inputs),
        out_specs=vmem,
        # Headroom for the fused, fully VMEM-resident kernel (tiny at these shapes).
        compiler_params=pltpu.CompilerParams(vmem_limit_bytes=32 * 1024 * 1024),
    )(*kernel_inputs)

    return out[:n, :c_out]


# ----------------------------------------------------------------------------
# Parameter init (torch.nn.Linear-style uniform) and pure-JAX reference
# ----------------------------------------------------------------------------

def _init_linear(key, fan_in, fan_out, bias=True):
    k1, k2 = jax.random.split(key)
    bound = 1.0 / math.sqrt(fan_in)
    w = jax.random.uniform(k1, (fan_in, fan_out), jnp.float32, -bound, bound)
    b = jax.random.uniform(k2, (fan_out,), jnp.float32, -bound, bound) if bias else None
    return w, b


def init_relcnn_params(key, c_in, c_out, num_layers):
    keys = jax.random.split(key, num_layers + 1)
    layers = []
    c = c_in
    for l in range(num_layers):
        k1, k2, k3 = jax.random.split(keys[l], 3)
        w1, _ = _init_linear(k1, c, c_out, bias=False)
        w2, _ = _init_linear(k2, c, c_out, bias=False)
        wr, br = _init_linear(k3, c, c_out, bias=True)
        layers.append(dict(w1=w1, w2=w2, wr=wr, br=br))
        c = c_out
    fw, fb = _init_linear(keys[-1], c_in + num_layers * c_out, c_out, bias=True)
    return dict(layers=layers, final_w=fw, final_b=fb)


def relcnn_reference(x, edge_index, params):
    """Pure-JAX reference matching the torch RelCNN eval forward."""
    n = x.shape[0]
    a1, a2 = _mean_adjs(edge_index, n, n)
    xs = [x]
    h = x
    for lp in params["layers"]:
        h = jax.nn.relu(h @ lp["wr"] + lp["br"]
                        + a1 @ (h @ lp["w1"]) + a2 @ (h @ lp["w2"]))
        xs.append(h)
    return jnp.concatenate(xs, axis=-1) @ params["final_w"] + params["final_b"]


# ----------------------------------------------------------------------------
# main
# ----------------------------------------------------------------------------

if __name__ == "__main__":
    N, E = 20, 60
    C_IN, C_OUT, NUM_LAYERS = 16, 32, 3

    key = jax.random.PRNGKey(0)
    kx, ks, kd, kp = jax.random.split(key, 4)
    x = jax.random.normal(kx, (N, C_IN), jnp.float32)
    edge_index = jnp.stack([jax.random.randint(ks, (E,), 0, N),
                            jax.random.randint(kd, (E,), 0, N)])
    params = init_relcnn_params(kp, C_IN, C_OUT, NUM_LAYERS)

    out = relcnn_forward(x, edge_index, params)
    out = jax.block_until_ready(out)

    ref = relcnn_reference(x, edge_index, params)
    assert out.shape == (N, C_OUT), out.shape
    assert bool(jnp.all(jnp.isfinite(out))), "non-finite output"
    rel_err = float(jnp.max(jnp.abs(out - ref)) /
                    (float(jnp.max(jnp.abs(ref))) + 1e-6))
    assert rel_err < 1e-3, f"mismatch vs pure-JAX reference: rel_err={rel_err}"
    print("KERNEL_OK")
</pallas_src>

<mosaic_0001>
module attributes {stable_mosaic.version = 11 : i64} {
  func.func @kernel(%arg0: memref<24x128xf32, #tpu.memory_space<vmem>>, %arg1: memref<24x24xf32, #tpu.memory_space<vmem>>, %arg2: memref<24x24xf32, #tpu.memory_space<vmem>>, %arg3: memref<128x384xf32, #tpu.memory_space<vmem>>, %arg4: memref<1x128xf32, #tpu.memory_space<vmem>>, %arg5: memref<128x384xf32, #tpu.memory_space<vmem>>, %arg6: memref<1x128xf32, #tpu.memory_space<vmem>>, %arg7: memref<128x384xf32, #tpu.memory_space<vmem>>, %arg8: memref<1x128xf32, #tpu.memory_space<vmem>>, %arg9: memref<128x128xf32, #tpu.memory_space<vmem>>, %arg10: memref<128x128xf32, #tpu.memory_space<vmem>>, %arg11: memref<128x128xf32, #tpu.memory_space<vmem>>, %arg12: memref<128x128xf32, #tpu.memory_space<vmem>>, %arg13: memref<1x128xf32, #tpu.memory_space<vmem>>, %arg14: memref<24x128xf32, #tpu.memory_space<vmem>>) attributes {dimension_semantics = [], scalar_prefetch = 0 : i64, scratch_operands = 0 : i64, tpu.core_type = #tpu.core_type<tc>} {
    %c0 = arith.constant 0 : index
    %c0_0 = arith.constant 0 : index
    %0 = vector.load %arg0[%c0, %c0_0] : memref<24x128xf32, #tpu.memory_space<vmem>>, vector<24x128xf32>
    %c0_1 = arith.constant 0 : index
    %c0_2 = arith.constant 0 : index
    %1 = vector.load %arg1[%c0_1, %c0_2] : memref<24x24xf32, #tpu.memory_space<vmem>>, vector<24x24xf32>
    %c0_3 = arith.constant 0 : index
    %c0_4 = arith.constant 0 : index
    %2 = vector.load %arg2[%c0_3, %c0_4] : memref<24x24xf32, #tpu.memory_space<vmem>>, vector<24x24xf32>
    %c0_5 = arith.constant 0 : index
    %c0_6 = arith.constant 0 : index
    %3 = vector.load %arg9[%c0_5, %c0_6] : memref<128x128xf32, #tpu.memory_space<vmem>>, vector<128x128xf32>
    %cst = arith.constant dense<0.000000e+00> : vector<24x128xf32>
    %4 = tpu.matmul %0, %3, %cst {dimension_numbers = #tpu.dot_dimension_numbers<[1], [0], [0], [1], [0, 0, 1, 1], [], []>, precision = #tpu.contract_precision<fp32>} : vector<24x128xf32>, vector<128x128xf32>, vector<24x128xf32> -> vector<24x128xf32>
    %c0_7 = arith.constant 0 : index
    %c0_8 = arith.constant 0 : index
    %5 = vector.load %arg13[%c0_7, %c0_8] : memref<1x128xf32, #tpu.memory_space<vmem>>, vector<1x128xf32>
    %6 = vector.broadcast %5 : vector<1x128xf32> to vector<24x128xf32>
    %7 = arith.addf %4, %6 : vector<24x128xf32>
    %c0_9 = arith.constant 0 : index
    %c0_10 = arith.constant 0 : index
    %8 = vector.load %arg3[%c0_9, %c0_10] : memref<128x384xf32, #tpu.memory_space<vmem>>, vector<128x384xf32>
    %c0_11 = arith.constant 0 : index
    %c0_12 = arith.constant 0 : index
    %9 = vector.load %arg4[%c0_11, %c0_12] : memref<1x128xf32, #tpu.memory_space<vmem>>, vector<1x128xf32>
    %cst_13 = arith.constant dense<0.000000e+00> : vector<24x384xf32>
    %10 = tpu.matmul %0, %8, %cst_13 {dimension_numbers = #tpu.dot_dimension_numbers<[1], [0], [0], [1], [0, 0, 1, 1], [], []>, precision = #tpu.contract_precision<fp32>} : vector<24x128xf32>, vector<128x384xf32>, vector<24x384xf32> -> vector<24x384xf32>
    %11 = vector.extract_strided_slice %10 {offsets = [0, 0], sizes = [24, 128], strides = [1, 1]} : vector<24x384xf32> to vector<24x128xf32>
    %12 = vector.extract_strided_slice %10 {offsets = [0, 128], sizes = [24, 128], strides = [1, 1]} : vector<24x384xf32> to vector<24x128xf32>
    %13 = vector.extract_strided_slice %10 {offsets = [0, 256], sizes = [24, 128], strides = [1, 1]} : vector<24x384xf32> to vector<24x128xf32>
    %14 = vector.broadcast %9 : vector<1x128xf32> to vector<24x128xf32>
    %15 = arith.addf %13, %14 : vector<24x128xf32>
    %cst_14 = arith.constant dense<0.000000e+00> : vector<24x128xf32>
    %16 = tpu.matmul %1, %11, %cst_14 {dimension_numbers = #tpu.dot_dimension_numbers<[1], [0], [0], [1], [0, 0, 1, 1], [], []>, precision = #tpu.contract_precision<fp32>} : vector<24x24xf32>, vector<24x128xf32>, vector<24x128xf32> -> vector<24x128xf32>
    %17 = arith.addf %15, %16 : vector<24x128xf32>
    %cst_15 = arith.constant dense<0.000000e+00> : vector<24x128xf32>
    %18 = tpu.matmul %2, %12, %cst_15 {dimension_numbers = #tpu.dot_dimension_numbers<[1], [0], [0], [1], [0, 0, 1, 1], [], []>, precision = #tpu.contract_precision<fp32>} : vector<24x24xf32>, vector<24x128xf32>, vector<24x128xf32> -> vector<24x128xf32>
    %19 = arith.addf %17, %18 : vector<24x128xf32>
    %cst_16 = arith.constant 0.000000e+00 : f32
    %20 = vector.broadcast %cst_16 : f32 to vector<24x128xf32>
    %21 = arith.maximumf %19, %20 : vector<24x128xf32>
    %c0_17 = arith.constant 0 : index
    %c0_18 = arith.constant 0 : index
    %22 = vector.load %arg10[%c0_17, %c0_18] : memref<128x128xf32, #tpu.memory_space<vmem>>, vector<128x128xf32>
    %cst_19 = arith.constant dense<0.000000e+00> : vector<24x128xf32>
    %23 = tpu.matmul %21, %22, %cst_19 {dimension_numbers = #tpu.dot_dimension_numbers<[1], [0], [0], [1], [0, 0, 1, 1], [], []>, precision = #tpu.contract_precision<fp32>} : vector<24x128xf32>, vector<128x128xf32>, vector<24x128xf32> -> vector<24x128xf32>
    %24 = arith.addf %7, %23 : vector<24x128xf32>
    %c0_20 = arith.constant 0 : index
    %c0_21 = arith.constant 0 : index
    %25 = vector.load %arg5[%c0_20, %c0_21] : memref<128x384xf32, #tpu.memory_space<vmem>>, vector<128x384xf32>
    %c0_22 = arith.constant 0 : index
    %c0_23 = arith.constant 0 : index
    %26 = vector.load %arg6[%c0_22, %c0_23] : memref<1x128xf32, #tpu.memory_space<vmem>>, vector<1x128xf32>
    %cst_24 = arith.constant dense<0.000000e+00> : vector<24x384xf32>
    %27 = tpu.matmul %21, %25, %cst_24 {dimension_numbers = #tpu.dot_dimension_numbers<[1], [0], [0], [1], [0, 0, 1, 1], [], []>, precision = #tpu.contract_precision<fp32>} : vector<24x128xf32>, vector<128x384xf32>, vector<24x384xf32> -> vector<24x384xf32>
    %28 = vector.extract_strided_slice %27 {offsets = [0, 0], sizes = [24, 128], strides = [1, 1]} : vector<24x384xf32> to vector<24x128xf32>
    %29 = vector.extract_strided_slice %27 {offsets = [0, 128], sizes = [24, 128], strides = [1, 1]} : vector<24x384xf32> to vector<24x128xf32>
    %30 = vector.extract_strided_slice %27 {offsets = [0, 256], sizes = [24, 128], strides = [1, 1]} : vector<24x384xf32> to vector<24x128xf32>
    %31 = vector.broadcast %26 : vector<1x128xf32> to vector<24x128xf32>
    %32 = arith.addf %30, %31 : vector<24x128xf32>
    %cst_25 = arith.constant dense<0.000000e+00> : vector<24x128xf32>
    %33 = tpu.matmul %1, %28, %cst_25 {dimension_numbers = #tpu.dot_dimension_numbers<[1], [0], [0], [1], [0, 0, 1, 1], [], []>, precision = #tpu.contract_precision<fp32>} : vector<24x24xf32>, vector<24x128xf32>, vector<24x128xf32> -> vector<24x128xf32>
    %34 = arith.addf %32, %33 : vector<24x128xf32>
    %cst_26 = arith.constant dense<0.000000e+00> : vector<24x128xf32>
    %35 = tpu.matmul %2, %29, %cst_26 {dimension_numbers = #tpu.dot_dimension_numbers<[1], [0], [0], [1], [0, 0, 1, 1], [], []>, precision = #tpu.contract_precision<fp32>} : vector<24x24xf32>, vector<24x128xf32>, vector<24x128xf32> -> vector<24x128xf32>
    %36 = arith.addf %34, %35 : vector<24x128xf32>
    %cst_27 = arith.constant 0.000000e+00 : f32
    %37 = vector.broadcast %cst_27 : f32 to vector<24x128xf32>
    %38 = arith.maximumf %36, %37 : vector<24x128xf32>
    %c0_28 = arith.constant 0 : index
    %c0_29 = arith.constant 0 : index
    %39 = vector.load %arg11[%c0_28, %c0_29] : memref<128x128xf32, #tpu.memory_space<vmem>>, vector<128x128xf32>
    %cst_30 = arith.constant dense<0.000000e+00> : vector<24x128xf32>
    %40 = tpu.matmul %38, %39, %cst_30 {dimension_numbers = #tpu.dot_dimension_numbers<[1], [0], [0], [1], [0, 0, 1, 1], [], []>, precision = #tpu.contract_precision<fp32>} : vector<24x128xf32>, vector<128x128xf32>, vector<24x128xf32> -> vector<24x128xf32>
    %41 = arith.addf %24, %40 : vector<24x128xf32>
    %c0_31 = arith.constant 0 : index
    %c0_32 = arith.constant 0 : index
    %42 = vector.load %arg7[%c0_31, %c0_32] : memref<128x384xf32, #tpu.memory_space<vmem>>, vector<128x384xf32>
    %c0_33 = arith.constant 0 : index
    %c0_34 = arith.constant 0 : index
    %43 = vector.load %arg8[%c0_33, %c0_34] : memref<1x128xf32, #tpu.memory_space<vmem>>, vector<1x128xf32>
    %cst_35 = arith.constant dense<0.000000e+00> : vector<24x384xf32>
    %44 = tpu.matmul %38, %42, %cst_35 {dimension_numbers = #tpu.dot_dimension_numbers<[1], [0], [0], [1], [0, 0, 1, 1], [], []>, precision = #tpu.contract_precision<fp32>} : vector<24x128xf32>, vector<128x384xf32>, vector<24x384xf32> -> vector<24x384xf32>
    %45 = vector.extract_strided_slice %44 {offsets = [0, 0], sizes = [24, 128], strides = [1, 1]} : vector<24x384xf32> to vector<24x128xf32>
    %46 = vector.extract_strided_slice %44 {offsets = [0, 128], sizes = [24, 128], strides = [1, 1]} : vector<24x384xf32> to vector<24x128xf32>
    %47 = vector.extract_strided_slice %44 {offsets = [0, 256], sizes = [24, 128], strides = [1, 1]} : vector<24x384xf32> to vector<24x128xf32>
    %48 = vector.broadcast %43 : vector<1x128xf32> to vector<24x128xf32>
    %49 = arith.addf %47, %48 : vector<24x128xf32>
    %cst_36 = arith.constant dense<0.000000e+00> : vector<24x128xf32>
    %50 = tpu.matmul %1, %45, %cst_36 {dimension_numbers = #tpu.dot_dimension_numbers<[1], [0], [0], [1], [0, 0, 1, 1], [], []>, precision = #tpu.contract_precision<fp32>} : vector<24x24xf32>, vector<24x128xf32>, vector<24x128xf32> -> vector<24x128xf32>
    %51 = arith.addf %49, %50 : vector<24x128xf32>
    %cst_37 = arith.constant dense<0.000000e+00> : vector<24x128xf32>
    %52 = tpu.matmul %2, %46, %cst_37 {dimension_numbers = #tpu.dot_dimension_numbers<[1], [0], [0], [1], [0, 0, 1, 1], [], []>, precision = #tpu.contract_precision<fp32>} : vector<24x24xf32>, vector<24x128xf32>, vector<24x128xf32> -> vector<24x128xf32>
    %53 = arith.addf %51, %52 : vector<24x128xf32>
    %cst_38 = arith.constant 0.000000e+00 : f32
    %54 = vector.broadcast %cst_38 : f32 to vector<24x128xf32>
    %55 = arith.maximumf %53, %54 : vector<24x128xf32>
    %c0_39 = arith.constant 0 : index
    %c0_40 = arith.constant 0 : index
    %56 = vector.load %arg12[%c0_39, %c0_40] : memref<128x128xf32, #tpu.memory_space<vmem>>, vector<128x128xf32>
    %cst_41 = arith.constant dense<0.000000e+00> : vector<24x128xf32>
    %57 = tpu.matmul %55, %56, %cst_41 {dimension_numbers = #tpu.dot_dimension_numbers<[1], [0], [0], [1], [0, 0, 1, 1], [], []>, precision = #tpu.contract_precision<fp32>} : vector<24x128xf32>, vector<128x128xf32>, vector<24x128xf32> -> vector<24x128xf32>
    %58 = arith.addf %41, %57 : vector<24x128xf32>
    %c0_42 = arith.constant 0 : index
    %c0_43 = arith.constant 0 : index
    %59 = vector.load %arg14[%c0_42, %c0_43] : memref<24x128xf32, #tpu.memory_space<vmem>>, vector<24x128xf32>
    tpu.vector_store %arg14[%c0_42, %c0_43], %58 {strides = array<i32>} : memref<24x128xf32, #tpu.memory_space<vmem>>, vector<24x128xf32>,
    return
  }
}

</mosaic_0001>

<llo_original>
// kernel: relcnn_forward.1
$region0: #{relcnn_forward.1}
  #allocation0 [shape = 'u32[]', space=smem, size = 0x4, offset = 0x4, fixed_abs, tag = 'smem constant byte address 0x4 - core index']
  #allocation1 [shape = 'u32[144,128]{1,0:T(1,128)}', space=vmem, size = 0x12000, scoped, tag = 'internal scratch']
  %s0 = inlined_call_operand.vmem [shape: f32[24,128], index: 0, kind: input, shape index: {}]
  %s1 = inlined_call_operand.vmem [shape: f32[24,24], index: 1, kind: input, shape index: {}]
  %s2 = inlined_call_operand.vmem [shape: f32[24,24], index: 2, kind: input, shape index: {}]
  %s3 = inlined_call_operand.vmem [shape: f32[128,384], index: 3, kind: input, shape index: {}]
  %s4 = inlined_call_operand.vmem [shape: f32[1,128], index: 4, kind: input, shape index: {}]
  %s5 = inlined_call_operand.vmem [shape: f32[128,384], index: 5, kind: input, shape index: {}]
  %s6 = inlined_call_operand.vmem [shape: f32[1,128], index: 6, kind: input, shape index: {}]
  %s7 = inlined_call_operand.vmem [shape: f32[128,384], index: 7, kind: input, shape index: {}]
  %s8 = inlined_call_operand.vmem [shape: f32[1,128], index: 8, kind: input, shape index: {}]
  %s9 = inlined_call_operand.vmem [shape: f32[128,128], index: 9, kind: input, shape index: {}]
  %s10 = inlined_call_operand.vmem [shape: f32[128,128], index: 10, kind: input, shape index: {}]
  %s11 = inlined_call_operand.vmem [shape: f32[128,128], index: 11, kind: input, shape index: {}]
  %s12 = inlined_call_operand.vmem [shape: f32[128,128], index: 12, kind: input, shape index: {}]
  %s13 = inlined_call_operand.vmem [shape: f32[1,128], index: 13, kind: input, shape index: {}]
  %s14 = inlined_call_operand.hbm [shape: f32[24,128], index: 14, kind: output, shape index: {}]
  %s15 = sld [smem:[#allocation0]]
  $region66: #{relcnn_forward.1} parent=0
    _
  %s17 = ssub.s32 1, %s15
  %s18 = scalar_select 0, %s17, %s15
  $region1: #{relcnn_forward.1} parent=0
    #allocation2 [shape = 'u8[12288]{0}', space=vmem, size = 0x3000, scoped, tag = 'output window, operand 0, single buffered']
    #allocation3 [shape = 's32[1]{0}', space=sflag, size = 0x4, scoped, tag = 'scoped memory for relcnn_forward.1']
    %19 = vsyncpa [#allocation3], 0
    // Predicated region
    $region2: #{relcnn_forward.1} parent=1 // pred_check
      _
    $region3: #{relcnn_forward.1} parent=1 // pred_check_branch
      %21 = sbr.rel (0) target = $region5
    $region4: #{relcnn_forward.1} parent=1 // pred_region
      _
    $region5: #{relcnn_forward.1} parent=1 // pred_fallthru
      _
    // Predicated region
    $region6: #{relcnn_forward.1} parent=1 // pred_check
      _
    $region7: #{relcnn_forward.1} parent=1 // pred_check_branch
      %23 = sbr.rel (0) target = $region9
    $region8: #{relcnn_forward.1} parent=1 // pred_region
      _
    $region9: #{relcnn_forward.1} parent=1 // pred_fallthru
      _
    // Predicated region
    $region10: #{relcnn_forward.1} parent=1 // pred_check
      _
    $region11: #{relcnn_forward.1} parent=1 // pred_check_branch
      %25 = sbr.rel (0) target = $region13
    $region12: #{relcnn_forward.1} parent=1 // pred_region
      _
    $region13: #{relcnn_forward.1} parent=1 // pred_fallthru
      _
    // Predicated region
    $region14: #{relcnn_forward.1} parent=1 // pred_check
      _
    $region15: #{relcnn_forward.1} parent=1 // pred_check_branch
      %27 = sbr.rel (0) target = $region17
    $region16: #{relcnn_forward.1} parent=1 // pred_region
      _
    $region17: #{relcnn_forward.1} parent=1 // pred_fallthru
      _
    // Predicated region
    $region18: #{relcnn_forward.1} parent=1 // pred_check
      _
    $region19: #{relcnn_forward.1} parent=1 // pred_check_branch
      %29 = sbr.rel (0) target = $region21
    $region20: #{relcnn_forward.1} parent=1 // pred_region
      _
    $region21: #{relcnn_forward.1} parent=1 // pred_fallthru
      _
    // Predicated region
    $region22: #{relcnn_forward.1} parent=1 // pred_check
      _
    $region23: #{relcnn_forward.1} parent=1 // pred_check_branch
      %31 = sbr.rel (0) target = $region25
    $region24: #{relcnn_forward.1} parent=1 // pred_region
      _
    $region25: #{relcnn_forward.1} parent=1 // pred_fallthru
      _
    // Predicated region
    $region26: #{relcnn_forward.1} parent=1 // pred_check
      _
    $region27: #{relcnn_forward.1} parent=1 // pred_check_branch
      %33 = sbr.rel (0) target = $region29
    $region28: #{relcnn_forward.1} parent=1 // pred_region
      _
    $region29: #{relcnn_forward.1} parent=1 // pred_fallthru
      _
    // Predicated region
    $region30: #{relcnn_forward.1} parent=1 // pred_check
      _
    $region31: #{relcnn_forward.1} parent=1 // pred_check_branch
      %35 = sbr.rel (0) target = $region33
    $region32: #{relcnn_forward.1} parent=1 // pred_region
      _
    $region33: #{relcnn_forward.1} parent=1 // pred_fallthru
      _
    // Predicated region
    $region34: #{relcnn_forward.1} parent=1 // pred_check
      _
    $region35: #{relcnn_forward.1} parent=1 // pred_check_branch
      %37 = sbr.rel (0) target = $region37
    $region36: #{relcnn_forward.1} parent=1 // pred_region
      _
    $region37: #{relcnn_forward.1} parent=1 // pred_fallthru
      _
    // Predicated region
    $region38: #{relcnn_forward.1} parent=1 // pred_check
      _
    $region39: #{relcnn_forward.1} parent=1 // pred_check_branch
      %39 = sbr.rel (0) target = $region41
    $region40: #{relcnn_forward.1} parent=1 // pred_region
      _
    $region41: #{relcnn_forward.1} parent=1 // pred_fallthru
      _
    // Predicated region
    $region42: #{relcnn_forward.1} parent=1 // pred_check
      _
    $region43: #{relcnn_forward.1} parent=1 // pred_check_branch
      %41 = sbr.rel (0) target = $region45
    $region44: #{relcnn_forward.1} parent=1 // pred_region
      _
    $region45: #{relcnn_forward.1} parent=1 // pred_fallthru
      _
    // Predicated region
    $region46: #{relcnn_forward.1} parent=1 // pred_check
      _
    $region47: #{relcnn_forward.1} parent=1 // pred_check_branch
      %43 = sbr.rel (0) target = $region49
    $region48: #{relcnn_forward.1} parent=1 // pred_region
      _
    $region49: #{relcnn_forward.1} parent=1 // pred_fallthru
      _
    // Predicated region
    $region50: #{relcnn_forward.1} parent=1 // pred_check
      _
    $region51: #{relcnn_forward.1} parent=1 // pred_check_branch
      %45 = sbr.rel (0) target = $region53
    $region52: #{relcnn_forward.1} parent=1 // pred_region
      _
    $region53: #{relcnn_forward.1} parent=1 // pred_fallthru
      _
    // Predicated region
    $region54: #{relcnn_forward.1} parent=1 // pred_check
      _
    $region55: #{relcnn_forward.1} parent=1 // pred_check_branch
      %47 = sbr.rel (0) target = $region57
    $region56: #{relcnn_forward.1} parent=1 // pred_region
      _
    $region57: #{relcnn_forward.1} parent=1 // pred_fallthru
      _
    %v48 = vld [vmem:[%s0] sm:$0xff]
    %v49 = vld [vmem:[%s0 + $0x8] sm:$0xff]
    %v50 = vld [vmem:[%s0 + $0x10] sm:$0xff]
    %v51 = vld [vmem:[%s1] sm:$0xff]
    %v52 = vld [vmem:[%s1 + $0x8] sm:$0xff]
    %v53 = vld [vmem:[%s1 + $0x10] sm:$0xff]
    %v54 = vld [vmem:[%s2] sm:$0xff]
    %v55 = vld [vmem:[%s2 + $0x8] sm:$0xff]
    %v56 = vld [vmem:[%s2 + $0x10] sm:$0xff]
    %v57 = vld [vmem:[%s9] sm:$0xff]
    %v58 = vld [vmem:[%s9 + $0x8] sm:$0xff]
    %v59 = vld [vmem:[%s9 + $0x10] sm:$0xff]
    %v60 = vld [vmem:[%s9 + $0x18] sm:$0xff]
    %v61 = vld [vmem:[%s9 + $0x20] sm:$0xff]
    %v62 = vld [vmem:[%s9 + $0x28] sm:$0xff]
    %v63 = vld [vmem:[%s9 + $0x30] sm:$0xff]
    %v64 = vld [vmem:[%s9 + $0x38] sm:$0xff]
    %v65 = vld [vmem:[%s9 + $0x40] sm:$0xff]
    %v66 = vld [vmem:[%s9 + $0x48] sm:$0xff]
    %v67 = vld [vmem:[%s9 + $0x50] sm:$0xff]
    %v68 = vld [vmem:[%s9 + $0x58] sm:$0xff]
    %v69 = vld [vmem:[%s9 + $0x60] sm:$0xff]
    %v70 = vld [vmem:[%s9 + $0x68] sm:$0xff]
    %v71 = vld [vmem:[%s9 + $0x70] sm:$0xff]
    %v72 = vld [vmem:[%s9 + $0x78] sm:$0xff]
    %v73 = vld [vmem:[%s13] sm:$0x1]
    %v75 = vlaneseq
    %v76 = vshrl.u32 %v75, 7
    %v77 = vsub.s32 0, %v76
    %v78 = vrot.slane %v73, %v77
    %80 = vmatprep.subr.mxu0 0.0
    %v81 = vand.u32 %v57, 4294901760
    %82 = vmatpush1.msra.mxu0 %v81
    %83 = vmatprep.subr.mxu0 0.0
    %v84 = vand.u32 %v58, 4294901760
    %85 = vmatpush1.msra.mxu0 %v84
    %86 = vmatprep.subr.mxu0 0.0
    %v87 = vand.u32 %v59, 4294901760
    %88 = vmatpush1.msra.mxu0 %v87
    %89 = vmatprep.subr.mxu0 0.0
    %v90 = vand.u32 %v60, 4294901760
    %91 = vmatpush1.msra.mxu0 %v90
    %92 = vmatprep.subr.mxu0 0.0
    %v93 = vand.u32 %v61, 4294901760
    %94 = vmatpush1.msra.mxu0 %v93
    %95 = vmatprep.subr.mxu0 0.0
    %v96 = vand.u32 %v62, 4294901760
    %97 = vmatpush1.msra.mxu0 %v96
    %98 = vmatprep.subr.mxu0 0.0
    %v99 = vand.u32 %v63, 4294901760
    %100 = vmatpush1.msra.mxu0 %v99
    %101 = vmatprep.subr.mxu0 0.0
    %v102 = vand.u32 %v64, 4294901760
    %103 = vmatpush1.msra.mxu0 %v102
    %104 = vmatprep.subr.mxu0 0.0
    %v105 = vand.u32 %v65, 4294901760
    %106 = vmatpush1.msra.mxu0 %v105
    %107 = vmatprep.subr.mxu0 0.0
    %v108 = vand.u32 %v66, 4294901760
    %109 = vmatpush1.msra.mxu0 %v108
    %110 = vmatprep.subr.mxu0 0.0
    %v111 = vand.u32 %v67, 4294901760
    %112 = vmatpush1.msra.mxu0 %v111
    %113 = vmatprep.subr.mxu0 0.0
    %v114 = vand.u32 %v68, 4294901760
    %115 = vmatpush1.msra.mxu0 %v114
    %116 = vmatprep.subr.mxu0 0.0
    %v117 = vand.u32 %v69, 4294901760
    %118 = vmatpush1.msra.mxu0 %v117
    %119 = vmatprep.subr.mxu0 0.0
    %v120 = vand.u32 %v70, 4294901760
    %121 = vmatpush1.msra.mxu0 %v120
    %122 = vmatprep.subr.mxu0 0.0
    %v123 = vand.u32 %v71, 4294901760
    %124 = vmatpush1.msra.mxu0 %v123
    %125 = vmatprep.subr.mxu0 0.0
    %v126 = vand.u32 %v72, 4294901760
    %127 = vmatpush1.msra.mxu0 %v126
    %128 = vmatprep.subr.mxu0 0.0
    %129 = vmatpush1.msra.mxu0 0.0
    %130 = vmatprep.subr.mxu0 0.0
    %131 = vmatpush1.msra.mxu0 0.0
    %132 = vmatprep.subr.mxu0 0.0
    %133 = vmatpush1.msra.mxu0 0.0
    %134 = vmatprep.subr.mxu0 0.0
    %135 = vmatpush1.msra.mxu0 0.0
    %136 = vmatprep.subr.mxu0 0.0
    %137 = vmatpush1.msra.mxu0 0.0
    %138 = vmatprep.subr.mxu0 0.0
    %139 = vmatpush1.msra.mxu0 0.0
    %140 = vmatprep.subr.mxu0 0.0
    %141 = vmatpush1.msra.mxu0 0.0
    %142 = vmatprep.subr.mxu0 0.0
    %143 = vmatpush1.msra.mxu0 0.0
    %144 = vmatprep.subr.mxu0 0.0
    %145 = vmatpush1.msra.mxu0 0.0
    %146 = vmatprep.subr.mxu0 0.0
    %147 = vmatpush1.msra.mxu0 0.0
    %148 = vmatprep.subr.mxu0 0.0
    %149 = vmatpush1.msra.mxu0 0.0
    %150 = vmatprep.subr.mxu0 0.0
    %151 = vmatpush1.msra.mxu0 0.0
    %152 = vmatprep.subr.mxu0 0.0
    %153 = vmatpush1.msra.mxu0 0.0
    %154 = vmatprep.subr.mxu0 0.0
    %155 = vmatpush1.msra.mxu0 0.0
    %156 = vmatprep.subr.mxu0 0.0
    %157 = vmatpush1.msra.mxu0 0.0
    %158 = vmatprep.subr.mxu0 0.0
    %159 = vmatpush1.msra.mxu0 0.0
    %160 = vmatprep.mubr.f32.mxu0 0.0
    %v161 = vand.u32 %v48, 4294901760
    %v162 = vsub.f32 %v48, %v161
    %v163 = vand.u32 %v162, 4294901760
    %v164 = vsub.f32 %v162, %v163
    %v165 = vand.u32 %v164, 4294901760
    %166 = vmatmul.mubr.f32.gmra.mrb[0].mxu0 %v165
    %v167 = vpop.f32.mrb[0].mxu0
    %v168 = vadd.f32 %v78, %v167
    %v169 = vpop.f32.mrb[0].mxu0
    %170 = vmatprep.mubr.f32.mxu0 0.0
    %v171 = vand.u32 %v49, 4294901760
    %v172 = vsub.f32 %v49, %v171
    %v173 = vand.u32 %v172, 4294901760
    %v174 = vsub.f32 %v172, %v173
    %v175 = vand.u32 %v174, 4294901760
    %176 = vmatmul.mubr.f32.gmra.mrb[0].mxu0 %v175
    %v177 = vpop.f32.mrb[0].mxu0
    %v178 = vadd.f32 %v78, %v177
    %v179 = vpop.f32.mrb[0].mxu0
    %180 = vmatprep.mubr.f32.mxu0 0.0
    %v181 = vand.u32 %v50, 4294901760
    %v182 = vsub.f32 %v50, %v181
    %v183 = vand.u32 %v182, 4294901760
    %v184 = vsub.f32 %v182, %v183
    %v185 = vand.u32 %v184, 4294901760
    %186 = vmatmul.mubr.f32.gmra.mrb[0].mxu0 %v185
    %v187 = vpop.f32.mrb[0].mxu0
    %v188 = vadd.f32 %v78, %v187
    %v189 = vpop.f32.mrb[0].mxu0
    %190 = vdwg.mxu0
    %191 = vmatprep.subr.mxu0 0.0
    %v192 = vand.u32 %v57, 4294901760
    %v193 = vsub.f32 %v57, %v192
    %v194 = vand.u32 %v193, 4294901760
    %v195 = vsub.f32 %v193, %v194
    %v196 = vand.u32 %v195, 4294901760
    %197 = vmatpush1.msra.mxu0 %v196
    %198 = vmatprep.subr.mxu0 0.0
    %v199 = vand.u32 %v58, 4294901760
    %v200 = vsub.f32 %v58, %v199
    %v201 = vand.u32 %v200, 4294901760
    %v202 = vsub.f32 %v200, %v201
    %v203 = vand.u32 %v202, 4294901760
    %204 = vmatpush1.msra.mxu0 %v203
    %205 = vmatprep.subr.mxu0 0.0
    %v206 = vand.u32 %v59, 4294901760
    %v207 = vsub.f32 %v59, %v206
    %v208 = vand.u32 %v207, 4294901760
    %v209 = vsub.f32 %v207, %v208
    %v210 = vand.u32 %v209, 4294901760
    %211 = vmatpush1.msra.mxu0 %v210
    %212 = vmatprep.subr.mxu0 0.0
    %v213 = vand.u32 %v60, 4294901760
    %v214 = vsub.f32 %v60, %v213
    %v215 = vand.u32 %v214, 4294901760
    %v216 = vsub.f32 %v214, %v215
    %v217 = vand.u32 %v216, 4294901760
    %218 = vmatpush1.msra.mxu0 %v217
    %219 = vmatprep.subr.mxu0 0.0
    %v220 = vand.u32 %v61, 4294901760
    %v221 = vsub.f32 %v61, %v220
    %v222 = vand.u32 %v221, 4294901760
    %v223 = vsub.f32 %v221, %v222
    %v224 = vand.u32 %v223, 4294901760
    %225 = vmatpush1.msra.mxu0 %v224
    %226 = vmatprep.subr.mxu0 0.0
    %v227 = vand.u32 %v62, 4294901760
    %v228 = vsub.f32 %v62, %v227
    %v229 = vand.u32 %v228, 4294901760
    %v230 = vsub.f32 %v228, %v229
    %v231 = vand.u32 %v230, 4294901760
    %232 = vmatpush1.msra.mxu0 %v231
    %233 = vmatprep.subr.mxu0 0.0
    %v234 = vand.u32 %v63, 4294901760
    %v235 = vsub.f32 %v63, %v234
    %v236 = vand.u32 %v235, 4294901760
    %v237 = vsub.f32 %v235, %v236
    %v238 = vand.u32 %v237, 4294901760
    %239 = vmatpush1.msra.mxu0 %v238
    %240 = vmatprep.subr.mxu0 0.0
    %v241 = vand.u32 %v64, 4294901760
    %v242 = vsub.f32 %v64, %v241
    %v243 = vand.u32 %v242, 4294901760
    %v244 = vsub.f32 %v242, %v243
    %v245 = vand.u32 %v244, 4294901760
    %246 = vmatpush1.msra.mxu0 %v245
    %247 = vmatprep.subr.mxu0 0.0
    %v248 = vand.u32 %v65, 4294901760
    %v249 = vsub.f32 %v65, %v248
    %v250 = vand.u32 %v249, 4294901760
    %v251 = vsub.f32 %v249, %v250
    %v252 = vand.u32 %v251, 4294901760
    %253 = vmatpush1.msra.mxu0 %v252
    %254 = vmatprep.subr.mxu0 0.0
    %v255 = vand.u32 %v66, 4294901760
    %v256 = vsub.f32 %v66, %v255
    %v257 = vand.u32 %v256, 4294901760
    %v258 = vsub.f32 %v256, %v257
    %v259 = vand.u32 %v258, 4294901760
    %260 = vmatpush1.msra.mxu0 %v259
    %261 = vmatprep.subr.mxu0 0.0
    %v262 = vand.u32 %v67, 4294901760
    %v263 = vsub.f32 %v67, %v262
    %v264 = vand.u32 %v263, 4294901760
    %v265 = vsub.f32 %v263, %v264
    %v266 = vand.u32 %v265, 4294901760
    %267 = vmatpush1.msra.mxu0 %v266
    %268 = vmatprep.subr.mxu0 0.0
    %v269 = vand.u32 %v68, 4294901760
    %v270 = vsub.f32 %v68, %v269
    %v271 = vand.u32 %v270, 4294901760
    %v272 = vsub.f32 %v270, %v271
    %v273 = vand.u32 %v272, 4294901760
    %274 = vmatpush1.msra.mxu0 %v273
    %275 = vmatprep.subr.mxu0 0.0
    %v276 = vand.u32 %v69, 4294901760
    %v277 = vsub.f32 %v69, %v276
    %v278 = vand.u32 %v277, 4294901760
    %v279 = vsub.f32 %v277, %v278
    %v280 = vand.u32 %v279, 4294901760
    %281 = vmatpush1.msra.mxu0 %v280
    %282 = vmatprep.subr.mxu0 0.0
    %v283 = vand.u32 %v70, 4294901760
    %v284 = vsub.f32 %v70, %v283
    %v285 = vand.u32 %v284, 4294901760
    %v286 = vsub.f32 %v284, %v285
    %v287 = vand.u32 %v286, 4294901760
    %288 = vmatpush1.msra.mxu0 %v287
    %289 = vmatprep.subr.mxu0 0.0
    %v290 = vand.u32 %v71, 4294901760
    %v291 = vsub.f32 %v71, %v290
    %v292 = vand.u32 %v291, 4294901760
    %v293 = vsub.f32 %v291, %v292
    %v294 = vand.u32 %v293, 4294901760
    %295 = vmatpush1.msra.mxu0 %v294
    %296 = vmatprep.subr.mxu0 0.0
    %v297 = vand.u32 %v72, 4294901760
    %v298 = vsub.f32 %v72, %v297
    %v299 = vand.u32 %v298, 4294901760
    %v300 = vsub.f32 %v298, %v299
    %v301 = vand.u32 %v300, 4294901760
    %302 = vmatpush1.msra.mxu0 %v301
    %303 = vmatprep.subr.mxu0 0.0
    %304 = vmatpush1.msra.mxu0 0.0
    %305 = vmatprep.subr.mxu0 0.0
    %306 = vmatpush1.msra.mxu0 0.0
    %307 = vmatprep.subr.mxu0 0.0
    %308 = vmatpush1.msra.mxu0 0.0
    %309 = vmatprep.subr.mxu0 0.0
    %310 = vmatpush1.msra.mxu0 0.0
    %311 = vmatprep.subr.mxu0 0.0
    %312 = vmatpush1.msra.mxu0 0.0
    %313 = vmatprep.subr.mxu0 0.0
    %314 = vmatpush1.msra.mxu0 0.0
    %315 = vmatprep.subr.mxu0 0.0
    %316 = vmatpush1.msra.mxu0 0.0
    %317 = vmatprep.subr.mxu0 0.0
    %318 = vmatpush1.msra.mxu0 0.0
    %319 = vmatprep.subr.mxu0 0.0
    %320 = vmatpush1.msra.mxu0 0.0
    %321 = vmatprep.subr.mxu0 0.0
    %322 = vmatpush1.msra.mxu0 0.0
    %323 = vmatprep.subr.mxu0 0.0
    %324 = vmatpush1.msra.mxu0 0.0
    %325 = vmatprep.subr.mxu0 0.0
    %326 = vmatpush1.msra.mxu0 0.0
    %327 = vmatprep.subr.mxu0 0.0
    %328 = vmatpush1.msra.mxu0 0.0
    %329 = vmatprep.subr.mxu0 0.0
    %330 = vmatpush1.msra.mxu0 0.0
    %331 = vmatprep.subr.mxu0 0.0
    %332 = vmatpush1.msra.mxu0 0.0
    %333 = vmatprep.subr.mxu0 0.0
    %334 = vmatpush1.msra.mxu0 0.0
    %335 = vmatprep.mubr.f32.mxu0 0.0
    %v336 = vand.u32 %v48, 4294901760
    %337 = vmatmul.mubr.f32.gmra.mrb[0].mxu0 %v336
    %v338 = vpop.f32.mrb[0].mxu0
    %v339 = vadd.f32 %v168, %v338
    %v340 = vpop.f32.mrb[0].mxu0
    %341 = vmatprep.mubr.f32.mxu0 0.0
    %v342 = vand.u32 %v49, 4294901760
    %343 = vmatmul.mubr.f32.gmra.mrb[0].mxu0 %v342
    %v344 = vpop.f32.mrb[0].mxu0
    %v345 = vadd.f32 %v178, %v344
    %v346 = vpop.f32.mrb[0].mxu0
    %347 = vmatprep.mubr.f32.mxu0 0.0
    %v348 = vand.u32 %v50, 4294901760
    %349 = vmatmul.mubr.f32.gmra.mrb[0].mxu0 %v348
    %v350 = vpop.f32.mrb[0].mxu0
    %v351 = vadd.f32 %v188, %v350
    %v352 = vpop.f32.mrb[0].mxu0
    %353 = vdwg.mxu0
    %354 = vmatprep.subr.mxu0 0.0
    %v355 = vand.u32 %v57, 4294901760
    %v356 = vsub.f32 %v57, %v355
    %357 = vmatpush1.msra.mxu0 %v356
    %358 = vmatprep.subr.mxu0 0.0
    %v359 = vand.u32 %v58, 4294901760
    %v360 = vsub.f32 %v58, %v359
    %361 = vmatpush1.msra.mxu0 %v360
    %362 = vmatprep.subr.mxu0 0.0
    %v363 = vand.u32 %v59, 4294901760
    %v364 = vsub.f32 %v59, %v363
    %365 = vmatpush1.msra.mxu0 %v364
    %366 = vmatprep.subr.mxu0 0.0
    %v367 = vand.u32 %v60, 4294901760
    %v368 = vsub.f32 %v60, %v367
    %369 = vmatpush1.msra.mxu0 %v368
    %370 = vmatprep.subr.mxu0 0.0
    %v371 = vand.u32 %v61, 4294901760
    %v372 = vsub.f32 %v61, %v371
    %373 = vmatpush1.msra.mxu0 %v372
    %374 = vmatprep.subr.mxu0 0.0
    %v375 = vand.u32 %v62, 4294901760
    %v376 = vsub.f32 %v62, %v375
    %377 = vmatpush1.msra.mxu0 %v376
    %378 = vmatprep.subr.mxu0 0.0
    %v379 = vand.u32 %v63, 4294901760
    %v380 = vsub.f32 %v63, %v379
    %381 = vmatpush1.msra.mxu0 %v380
    %382 = vmatprep.subr.mxu0 0.0
    %v383 = vand.u32 %v64, 4294901760
    %v384 = vsub.f32 %v64, %v383
    %385 = vmatpush1.msra.mxu0 %v384
    %386 = vmatprep.subr.mxu0 0.0
    %v387 = vand.u32 %v65, 4294901760
    %v388 = vsub.f32 %v65, %v387
    %389 = vmatpush1.msra.mxu0 %v388
    %390 = vmatprep.subr.mxu0 0.0
    %v391 = vand.u32 %v66, 4294901760
    %v392 = vsub.f32 %v66, %v391
    %393 = vmatpush1.msra.mxu0 %v392
    %394 = vmatprep.subr.mxu0 0.0
    %v395 = vand.u32 %v67, 4294901760
    %v396 = vsub.f32 %v67, %v395
    %397 = vmatpush1.msra.mxu0 %v396
    %398 = vmatprep.subr.mxu0 0.0
    %v399 = vand.u32 %v68, 4294901760
    %v400 = vsub.f32 %v68, %v399
    %401 = vmatpush1.msra.mxu0 %v400
    %402 = vmatprep.subr.mxu0 0.0
    %v403 = vand.u32 %v69, 4294901760
    %v404 = vsub.f32 %v69, %v403
    %405 = vmatpush1.msra.mxu0 %v404
    %406 = vmatprep.subr.mxu0 0.0
    %v407 = vand.u32 %v70, 4294901760
    %v408 = vsub.f32 %v70, %v407
    %409 = vmatpush1.msra.mxu0 %v408
    %410 = vmatprep.subr.mxu0 0.0
    %v411 = vand.u32 %v71, 4294901760
    %v412 = vsub.f32 %v71, %v411
    %413 = vmatpush1.msra.mxu0 %v412
    %414 = vmatprep.subr.mxu0 0.0
    %v415 = vand.u32 %v72, 4294901760
    %v416 = vsub.f32 %v72, %v415
    %417 = vmatpush1.msra.mxu0 %v416
    %418 = vmatprep.subr.mxu0 0.0
    %419 = vmatpush1.msra.mxu0 0.0
    %420 = vmatprep.subr.mxu0 0.0
    %421 = vmatpush1.msra.mxu0 0.0
    %422 = vmatprep.subr.mxu0 0.0
    %423 = vmatpush1.msra.mxu0 0.0
    %424 = vmatprep.subr.mxu0 0.0
    %425 = vmatpush1.msra.mxu0 0.0
    %426 = vmatprep.subr.mxu0 0.0
    %427 = vmatpush1.msra.mxu0 0.0
    %428 = vmatprep.subr.mxu0 0.0
    %429 = vmatpush1.msra.mxu0 0.0
    %430 = vmatprep.subr.mxu0 0.0
    %431 = vmatpush1.msra.mxu0 0.0
    %432 = vmatprep.subr.mxu0 0.0
    %433 = vmatpush1.msra.mxu0 0.0
    %434 = vmatprep.subr.mxu0 0.0
    %435 = vmatpush1.msra.mxu0 0.0
    %436 = vmatprep.subr.mxu0 0.0
    %437 = vmatpush1.msra.mxu0 0.0
    %438 = vmatprep.subr.mxu0 0.0
    %439 = vmatpush1.msra.mxu0 0.0
    %440 = vmatprep.subr.mxu0 0.0
    %441 = vmatpush1.msra.mxu0 0.0
    %442 = vmatprep.subr.mxu0 0.0
    %443 = vmatpush1.msra.mxu0 0.0
    %444 = vmatprep.subr.mxu0 0.0
    %445 = vmatpush1.msra.mxu0 0.0
    %446 = vmatprep.subr.mxu0 0.0
    %447 = vmatpush1.msra.mxu0 0.0
    %448 = vmatprep.subr.mxu0 0.0
    %449 = vmatpush1.msra.mxu0 0.0
    %450 = vmatprep.mubr.f32.mxu0 0.0
    %v451 = vand.u32 %v48, 4294901760
    %v452 = vsub.f32 %v48, %v451
    %453 = vmatmul.mubr.f32.gmra.mrb[0].mxu0 %v452
    %v454 = vpop.f32.mrb[0].mxu0
    %v455 = vadd.f32 %v339, %v454
    %v456 = vpop.f32.mrb[0].mxu0
    %457 = vmatprep.mubr.f32.mxu0 0.0
    %v458 = vand.u32 %v49, 4294901760
    %v459 = vsub.f32 %v49, %v458
    %460 = vmatmul.mubr.f32.gmra.mrb[0].mxu0 %v459
    %v461 = vpop.f32.mrb[0].mxu0
    %v462 = vadd.f32 %v345, %v461
    %v463 = vpop.f32.mrb[0].mxu0
    %464 = vmatprep.mubr.f32.mxu0 0.0
    %v465 = vand.u32 %v50, 4294901760
    %v466 = vsub.f32 %v50, %v465
    %467 = vmatmul.mubr.f32.gmra.mrb[0].mxu0 %v466
    %v468 = vpop.f32.mrb[0].mxu0
    %v469 = vadd.f32 %v351, %v468
    %v470 = vpop.f32.mrb[0].mxu0
    %471 = vdwg.mxu0
    %472 = vmatprep.subr.mxu0 0.0
    %v473 = vand.u32 %v57, 4294901760
    %474 = vmatpush1.msra.mxu0 %v473
    %475 = vmatprep.subr.mxu0 0.0
    %v476 = vand.u32 %v58, 4294901760
    %477 = vmatpush1.msra.mxu0 %v476
    %478 = vmatprep.subr.mxu0 0.0
    %v479 = vand.u32 %v59, 4294901760
    %480 = vmatpush1.msra.mxu0 %v479
    %481 = vmatprep.subr.mxu0 0.0
    %v482 = vand.u32 %v60, 4294901760
    %483 = vmatpush1.msra.mxu0 %v482
    %484 = vmatprep.subr.mxu0 0.0
    %v485 = vand.u32 %v61, 4294901760
    %486 = vmatpush1.msra.mxu0 %v485
    %487 = vmatprep.subr.mxu0 0.0
    %v488 = vand.u32 %v62, 4294901760
    %489 = vmatpush1.msra.mxu0 %v488
    %490 = vmatprep.subr.mxu0 0.0
    %v491 = vand.u32 %v63, 4294901760
    %492 = vmatpush1.msra.mxu0 %v491
    %493 = vmatprep.subr.mxu0 0.0
    %v494 = vand.u32 %v64, 4294901760
    %495 = vmatpush1.msra.mxu0 %v494
    %496 = vmatprep.subr.mxu0 0.0
    %v497 = vand.u32 %v65, 4294901760
    %498 = vmatpush1.msra.mxu0 %v497
    %499 = vmatprep.subr.mxu0 0.0
    %v500 = vand.u32 %v66, 4294901760
    %501 = vmatpush1.msra.mxu0 %v500
    %502 = vmatprep.subr.mxu0 0.0
    %v503 = vand.u32 %v67, 4294901760
    %504 = vmatpush1.msra.mxu0 %v503
    %505 = vmatprep.subr.mxu0 0.0
    %v506 = vand.u32 %v68, 4294901760
    %507 = vmatpush1.msra.mxu0 %v506
    %508 = vmatprep.subr.mxu0 0.0
    %v509 = vand.u32 %v69, 4294901760
    %510 = vmatpush1.msra.mxu0 %v509
    %511 = vmatprep.subr.mxu0 0.0
    %v512 = vand.u32 %v70, 4294901760
    %513 = vmatpush1.msra.mxu0 %v512
    %514 = vmatprep.subr.mxu0 0.0
    %v515 = vand.u32 %v71, 4294901760
    %516 = vmatpush1.msra.mxu0 %v515
    %517 = vmatprep.subr.mxu0 0.0
    %v518 = vand.u32 %v72, 4294901760
    %519 = vmatpush1.msra.mxu0 %v518
    %520 = vmatprep.subr.mxu0 0.0
    %521 = vmatpush1.msra.mxu0 0.0
    %522 = vmatprep.subr.mxu0 0.0
    %523 = vmatpush1.msra.mxu0 0.0
    %524 = vmatprep.subr.mxu0 0.0
    %525 = vmatpush1.msra.mxu0 0.0
    %526 = vmatprep.subr.mxu0 0.0
    %527 = vmatpush1.msra.mxu0 0.0
    %528 = vmatprep.subr.mxu0 0.0
    %529 = vmatpush1.msra.mxu0 0.0
    %530 = vmatprep.subr.mxu0 0.0
    %531 = vmatpush1.msra.mxu0 0.0
    %532 = vmatprep.subr.mxu0 0.0
    %533 = vmatpush1.msra.mxu0 0.0
    %534 = vmatprep.subr.mxu0 0.0
    %535 = vmatpush1.msra.mxu0 0.0
    %536 = vmatprep.subr.mxu0 0.0
    %537 = vmatpush1.msra.mxu0 0.0
    %538 = vmatprep.subr.mxu0 0.0
    %539 = vmatpush1.msra.mxu0 0.0
    %540 = vmatprep.subr.mxu0 0.0
    %541 = vmatpush1.msra.mxu0 0.0
    %542 = vmatprep.subr.mxu0 0.0
    %543 = vmatpush1.msra.mxu0 0.0
    %544 = vmatprep.subr.mxu0 0.0
    %545 = vmatpush1.msra.mxu0 0.0
    %546 = vmatprep.subr.mxu0 0.0
    %547 = vmatpush1.msra.mxu0 0.0
    %548 = vmatprep.subr.mxu0 0.0
    %549 = vmatpush1.msra.mxu0 0.0
    %550 = vmatprep.subr.mxu0 0.0
    %551 = vmatpush1.msra.mxu0 0.0
    %552 = vmatprep.mubr.f32.mxu0 0.0
    %v553 = vand.u32 %v48, 4294901760
    %v554 = vsub.f32 %v48, %v553
    %v555 = vand.u32 %v554, 4294901760
    %556 = vmatmul.mubr.f32.gmra.mrb[0].mxu0 %v555
    %v557 = vpop.f32.mrb[0].mxu0
    %v558 = vadd.f32 %v455, %v557
    %v559 = vpop.f32.mrb[0].mxu0
    %560 = vmatprep.mubr.f32.mxu0 0.0
    %v561 = vand.u32 %v49, 4294901760
    %v562 = vsub.f32 %v49, %v561
    %v563 = vand.u32 %v562, 4294901760
    %564 = vmatmul.mubr.f32.gmra.mrb[0].mxu0 %v563
    %v565 = vpop.f32.mrb[0].mxu0
    %v566 = vadd.f32 %v462, %v565
    %v567 = vpop.f32.mrb[0].mxu0
    %568 = vmatprep.mubr.f32.mxu0 0.0
    %v569 = vand.u32 %v50, 4294901760
    %v570 = vsub.f32 %v50, %v569
    %v571 = vand.u32 %v570, 4294901760
    %572 = vmatmul.mubr.f32.gmra.mrb[0].mxu0 %v571
    %v573 = vpop.f32.mrb[0].mxu0
    %v574 = vadd.f32 %v469, %v573
    %v575 = vpop.f32.mrb[0].mxu0
    %576 = vdwg.mxu0
    %577 = vmatprep.subr.mxu0 0.0
    %v578 = vand.u32 %v57, 4294901760
    %v579 = vsub.f32 %v57, %v578
    %v580 = vand.u32 %v579, 4294901760
    %581 = vmatpush1.msra.mxu0 %v580
    %582 = vmatprep.subr.mxu0 0.0
    %v583 = vand.u32 %v58, 4294901760
    %v584 = vsub.f32 %v58, %v583
    %v585 = vand.u32 %v584, 4294901760
    %586 = vmatpush1.msra.mxu0 %v585
    %587 = vmatprep.subr.mxu0 0.0
    %v588 = vand.u32 %v59, 4294901760
    %v589 = vsub.f32 %v59, %v588
    %v590 = vand.u32 %v589, 4294901760
    %591 = vmatpush1.msra.mxu0 %v590
    %592 = vmatprep.subr.mxu0 0.0
    %v593 = vand.u32 %v60, 4294901760
    %v594 = vsub.f32 %v60, %v593
    %v595 = vand.u32 %v594, 4294901760
    %596 = vmatpush1.msra.mxu0 %v595
    %597 = vmatprep.subr.mxu0 0.0
    %v598 = vand.u32 %v61, 4294901760
    %v599 = vsub.f32 %v61, %v598
    %v600 = vand.u32 %v599, 4294901760
    %601 = vmatpush1.msra.mxu0 %v600
    %602 = vmatprep.subr.mxu0 0.0
    %v603 = vand.u32 %v62, 4294901760
    %v604 = vsub.f32 %v62, %v603
    %v605 = vand.u32 %v604, 4294901760
    %606 = vmatpush1.msra.mxu0 %v605
    %607 = vmatprep.subr.mxu0 0.0
    %v608 = vand.u32 %v63, 4294901760
    %v609 = vsub.f32 %v63, %v608
    %v610 = vand.u32 %v609, 4294901760
    %611 = vmatpush1.msra.mxu0 %v610
    %612 = vmatprep.subr.mxu0 0.0
    %v613 = vand.u32 %v64, 4294901760
    %v614 = vsub.f32 %v64, %v613
    %v615 = vand.u32 %v614, 4294901760
    %616 = vmatpush1.msra.mxu0 %v615
    %617 = vmatprep.subr.mxu0 0.0
    %v618 = vand.u32 %v65, 4294901760
    %v619 = vsub.f32 %v65, %v618
    %v620 = vand.u32 %v619, 4294901760
    %621 = vmatpush1.msra.mxu0 %v620
    %622 = vmatprep.subr.mxu0 0.0
    %v623 = vand.u32 %v66, 4294901760
    %v624 = vsub.f32 %v66, %v623
    %v625 = vand.u32 %v624, 4294901760
    %626 = vmatpush1.msra.mxu0 %v625
    %627 = vmatprep.subr.mxu0 0.0
    %v628 = vand.u32 %v67, 4294901760
    %v629 = vsub.f32 %v67, %v628
    %v630 = vand.u32 %v629, 4294901760
    %631 = vmatpush1.msra.mxu0 %v630
    %632 = vmatprep.subr.mxu0 0.0
    %v633 = vand.u32 %v68, 4294901760
    %v634 = vsub.f32 %v68, %v633
    %v635 = vand.u32 %v634, 4294901760
    %636 = vmatpush1.msra.mxu0 %v635
    %637 = vmatprep.subr.mxu0 0.0
    %v638 = vand.u32 %v69, 4294901760
    %v639 = vsub.f32 %v69, %v638
    %v640 = vand.u32 %v639, 4294901760
    %641 = vmatpush1.msra.mxu0 %v640
    %642 = vmatprep.subr.mxu0 0.0
    %v643 = vand.u32 %v70, 4294901760
    %v644 = vsub.f32 %v70, %v643
    %v645 = vand.u32 %v644, 4294901760
    %646 = vmatpush1.msra.mxu0 %v645
    %647 = vmatprep.subr.mxu0 0.0
    %v648 = vand.u32 %v71, 4294901760
    %v649 = vsub.f32 %v71, %v648
    %v650 = vand.u32 %v649, 4294901760
    %651 = vmatpush1.msra.mxu0 %v650
    %652 = vmatprep.subr.mxu0 0.0
    %v653 = vand.u32 %v72, 4294901760
    %v654 = vsub.f32 %v72, %v653
    %v655 = vand.u32 %v654, 4294901760
    %656 = vmatpush1.msra.mxu0 %v655
    %657 = vmatprep.subr.mxu0 0.0
    %658 = vmatpush1.msra.mxu0 0.0
    %659 = vmatprep.subr.mxu0 0.0
    %660 = vmatpush1.msra.mxu0 0.0
    %661 = vmatprep.subr.mxu0 0.0
    %662 = vmatpush1.msra.mxu0 0.0
    %663 = vmatprep.subr.mxu0 0.0
    %664 = vmatpush1.msra.mxu0 0.0
    %665 = vmatprep.subr.mxu0 0.0
    %666 = vmatpush1.msra.mxu0 0.0
    %667 = vmatprep.subr.mxu0 0.0
    %668 = vmatpush1.msra.mxu0 0.0
    %669 = vmatprep.subr.mxu0 0.0
    %670 = vmatpush1.msra.mxu0 0.0
    %671 = vmatprep.subr.mxu0 0.0
    %672 = vmatpush1.msra.mxu0 0.0
    %673 = vmatprep.subr.mxu0 0.0
    %674 = vmatpush1.msra.mxu0 0.0
    %675 = vmatprep.subr.mxu0 0.0
    %676 = vmatpush1.msra.mxu0 0.0
    %677 = vmatprep.subr.mxu0 0.0
    %678 = vmatpush1.msra.mxu0 0.0
    %679 = vmatprep.subr.mxu0 0.0
    %680 = vmatpush1.msra.mxu0 0.0
    %681 = vmatprep.subr.mxu0 0.0
    %682 = vmatpush1.msra.mxu0 0.0
    %683 = vmatprep.subr.mxu0 0.0
    %684 = vmatpush1.msra.mxu0 0.0
    %685 = vmatprep.subr.mxu0 0.0
    %686 = vmatpush1.msra.mxu0 0.0
    %687 = vmatprep.subr.mxu0 0.0
    %688 = vmatpush1.msra.mxu0 0.0
    %689 = vmatprep.mubr.f32.mxu0 0.0
    %v690 = vand.u32 %v48, 4294901760
    %691 = vmatmul.mubr.f32.gmra.mrb[0].mxu0 %v690
    %v692 = vpop.f32.mrb[0].mxu0
    %v693 = vadd.f32 %v558, %v692
    %v694 = vpop.f32.mrb[0].mxu0
    %695 = vmatprep.mubr.f32.mxu0 0.0
    %v696 = vand.u32 %v49, 4294901760
    %697 = vmatmul.mubr.f32.gmra.mrb[0].mxu0 %v696
    %v698 = vpop.f32.mrb[0].mxu0
    %v699 = vadd.f32 %v566, %v698
    %v700 = vpop.f32.mrb[0].mxu0
    %701 = vmatprep.mubr.f32.mxu0 0.0
    %v702 = vand.u32 %v50, 4294901760
    %703 = vmatmul.mubr.f32.gmra.mrb[0].mxu0 %v702
    %v704 = vpop.f32.mrb[0].mxu0
    %v705 = vadd.f32 %v574, %v704
    %v706 = vpop.f32.mrb[0].mxu0
    %707 = vdwg.mxu0
    %708 = vmatprep.subr.mxu0 0.0
    %v709 = vand.u32 %v57, 4294901760
    %710 = vmatpush1.msra.mxu0 %v709
    %711 = vmatprep.subr.mxu0 0.0
    %v712 = vand.u32 %v58, 4294901760
    %713 = vmatpush1.msra.mxu0 %v712
    %714 = vmatprep.subr.mxu0 0.0
    %v715 = vand.u32 %v59, 4294901760
    %716 = vmatpush1.msra.mxu0 %v715
    %717 = vmatprep.subr.mxu0 0.0
    %v718 = vand.u32 %v60, 4294901760
    %719 = vmatpush1.msra.mxu0 %v718
    %720 = vmatprep.subr.mxu0 0.0
    %v721 = vand.u32 %v61, 4294901760
    %722 = vmatpush1.msra.mxu0 %v721
    %723 = vmatprep.subr.mxu0 0.0
    %v724 = vand.u32 %v62, 4294901760
    %725 = vmatpush1.msra.mxu0 %v724
    %726 = vmatprep.subr.mxu0 0.0
    %v727 = vand.u32 %v63, 4294901760
    %728 = vmatpush1.msra.mxu0 %v727
    %729 = vmatprep.subr.mxu0 0.0
    %v730 = vand.u32 %v64, 4294901760
    %731 = vmatpush1.msra.mxu0 %v730
    %732 = vmatprep.subr.mxu0 0.0
    %v733 = vand.u32 %v65, 4294901760
    %734 = vmatpush1.msra.mxu0 %v733
    %735 = vmatprep.subr.mxu0 0.0
    %v736 = vand.u32 %v66, 4294901760
    %737 = vmatpush1.msra.mxu0 %v736
    %738 = vmatprep.subr.mxu0 0.0
    %v739 = vand.u32 %v67, 4294901760
    %740 = vmatpush1.msra.mxu0 %v739
    %741 = vmatprep.subr.mxu0 0.0
    %v742 = vand.u32 %v68, 4294901760
    %743 = vmatpush1.msra.mxu0 %v742
    %744 = vmatprep.subr.mxu0 0.0
    %v745 = vand.u32 %v69, 4294901760
    %746 = vmatpush1.msra.mxu0 %v745
    %747 = vmatprep.subr.mxu0 0.0
    %v748 = vand.u32 %v70, 4294901760
    %749 = vmatpush1.msra.mxu0 %v748
    %750 = vmatprep.subr.mxu0 0.0
    %v751 = vand.u32 %v71, 4294901760
    %752 = vmatpush1.msra.mxu0 %v751
    %753 = vmatprep.subr.mxu0 0.0
    %v754 = vand.u32 %v72, 4294901760
    %755 = vmatpush1.msra.mxu0 %v754
    %756 = vmatprep.subr.mxu0 0.0
    %757 = vmatpush1.msra.mxu0 0.0
    %758 = vmatprep.subr.mxu0 0.0
    %759 = vmatpush1.msra.mxu0 0.0
    %760 = vmatprep.subr.mxu0 0.0
    %761 = vmatpush1.msra.mxu0 0.0
    %762 = vmatprep.subr.mxu0 0.0
    %763 = vmatpush1.msra.mxu0 0.0
    %764 = vmatprep.subr.mxu0 0.0
    %765 = vmatpush1.msra.mxu0 0.0
    %766 = vmatprep.subr.mxu0 0.0
    %767 = vmatpush1.msra.mxu0 0.0
    %768 = vmatprep.subr.mxu0 0.0
    %769 = vmatpush1.msra.mxu0 0.0
    %770 = vmatprep.subr.mxu0 0.0
    %771 = vmatpush1.msra.mxu0 0.0
    %772 = vmatprep.subr.mxu0 0.0
    %773 = vmatpush1.msra.mxu0 0.0
    %774 = vmatprep.subr.mxu0 0.0
    %775 = vmatpush1.msra.mxu0 0.0
    %776 = vmatprep.subr.mxu0 0.0
    %777 = vmatpush1.msra.mxu0 0.0
    %778 = vmatprep.subr.mxu0 0.0
    %779 = vmatpush1.msra.mxu0 0.0
    %780 = vmatprep.subr.mxu0 0.0
    %781 = vmatpush1.msra.mxu0 0.0
    %782 = vmatprep.subr.mxu0 0.0
    %783 = vmatpush1.msra.mxu0 0.0
    %784 = vmatprep.subr.mxu0 0.0
    %785 = vmatpush1.msra.mxu0 0.0
    %786 = vmatprep.subr.mxu0 0.0
    %787 = vmatpush1.msra.mxu0 0.0
    %788 = vmatprep.mubr.f32.mxu0 0.0
    %v789 = vand.u32 %v48, 4294901760
    %790 = vmatmul.mubr.f32.gmra.mrb[0].mxu0 %v789
    %v791 = vpop.f32.mrb[0].mxu0
    %v792 = vadd.f32 %v693, %v791
    %v793 = vpop.f32.mrb[0].mxu0
    %794 = vmatprep.mubr.f32.mxu0 0.0
    %v795 = vand.u32 %v49, 4294901760
    %796 = vmatmul.mubr.f32.gmra.mrb[0].mxu0 %v795
    %v797 = vpop.f32.mrb[0].mxu0
    %v798 = vadd.f32 %v699, %v797
    %v799 = vpop.f32.mrb[0].mxu0
    %800 = vmatprep.mubr.f32.mxu0 0.0
    %v801 = vand.u32 %v50, 4294901760
    %802 = vmatmul.mubr.f32.gmra.mrb[0].mxu0 %v801
    %v803 = vpop.f32.mrb[0].mxu0
    %v804 = vadd.f32 %v705, %v803
    %v805 = vpop.f32.mrb[0].mxu0
    %806 = vdwg.mxu0
    %v807 = vld [vmem:[%s3] sm:$0xff]
    %v808 = vld [vmem:[%s3 + $0x8] sm:$0xff]
    %v809 = vld [vmem:[%s3 + $0x10] sm:$0xff]
    %v810 = vld [vmem:[%s3 + $0x18] sm:$0xff]
    %v811 = vld [vmem:[%s3 + $0x20] sm:$0xff]
    %v812 = vld [vmem:[%s3 + $0x28] sm:$0xff]
    %v813 = vld [vmem:[%s3 + $0x30] sm:$0xff]
    %v814 = vld [vmem:[%s3 + $0x38] sm:$0xff]
    %v815 = vld [vmem:[%s3 + $0x40] sm:$0xff]
    %v816 = vld [vmem:[%s3 + $0x48] sm:$0xff]
    %v817 = vld [vmem:[%s3 + $0x50] sm:$0xff]
    %v818 = vld [vmem:[%s3 + $0x58] sm:$0xff]
    %v819 = vld [vmem:[%s3 + $0x60] sm:$0xff]
    %v820 = vld [vmem:[%s3 + $0x68] sm:$0xff]
    %v821 = vld [vmem:[%s3 + $0x70] sm:$0xff]
    %v822 = vld [vmem:[%s3 + $0x78] sm:$0xff]
    %v823 = vld [vmem:[%s3 + $0x80] sm:$0xff]
    %v824 = vld [vmem:[%s3 + $0x88] sm:$0xff]
    %v825 = vld [vmem:[%s3 + $0x90] sm:$0xff]
    %v826 = vld [vmem:[%s3 + $0x98] sm:$0xff]
    %v827 = vld [vmem:[%s3 + $0xa0] sm:$0xff]
    %v828 = vld [vmem:[%s3 + $0xa8] sm:$0xff]
    %v829 = vld [vmem:[%s3 + $0xb0] sm:$0xff]
    %v830 = vld [vmem:[%s3 + $0xb8] sm:$0xff]
    %v831 = vld [vmem:[%s3 + $0xc0] sm:$0xff]
    %v832 = vld [vmem:[%s3 + $0xc8] sm:$0xff]
    %v833 = vld [vmem:[%s3 + $0xd0] sm:$0xff]
    %v834 = vld [vmem:[%s3 + $0xd8] sm:$0xff]
    %v835 = vld [vmem:[%s3 + $0xe0] sm:$0xff]
    %v836 = vld [vmem:[%s3 + $0xe8] sm:$0xff]
    %v837 = vld [vmem:[%s3 + $0xf0] sm:$0xff]
    %v838 = vld [vmem:[%s3 + $0xf8] sm:$0xff]
    %v839 = vld [vmem:[%s3 + $0x100] sm:$0xff]
    %v840 = vld [vmem:[%s3 + $0x108] sm:$0xff]
    %v841 = vld [vmem:[%s3 + $0x110] sm:$0xff]
    %v842 = vld [vmem:[%s3 + $0x118] sm:$0xff]
    %v843 = vld [vmem:[%s3 + $0x120] sm:$0xff]
    %v844 = vld [vmem:[%s3 + $0x128] sm:$0xff]
    %v845 = vld [vmem:[%s3 + $0x130] sm:$0xff]
    %v846 = vld [vmem:[%s3 + $0x138] sm:$0xff]
    %v847 = vld [vmem:[%s3 + $0x140] sm:$0xff]
    %v848 = vld [vmem:[%s3 + $0x148] sm:$0xff]
    %v849 = vld [vmem:[%s3 + $0x150] sm:$0xff]
    %v850 = vld [vmem:[%s3 + $0x158] sm:$0xff]
    %v851 = vld [vmem:[%s3 + $0x160] sm:$0xff]
    %v852 = vld [vmem:[%s3 + $0x168] sm:$0xff]
    %v853 = vld [vmem:[%s3 + $0x170] sm:$0xff]
    %v854 = vld [vmem:[%s3 + $0x178] sm:$0xff]
    %v855 = vld [vmem:[%s4] sm:$0x1]
    %v856 = vand.u32 %v808, 4294901760
    %857 = vmatprep.subr.mxu0 %v856
    %v858 = vand.u32 %v807, 4294901760
    %859 = vmatpush1.msra.mxu0 %v858
    %v860 = vand.u32 %v811, 4294901760
    %861 = vmatprep.subr.mxu0 %v860
    %v862 = vand.u32 %v810, 4294901760
    %863 = vmatpush1.msra.mxu0 %v862
    %v864 = vand.u32 %v814, 4294901760
    %865 = vmatprep.subr.mxu0 %v864
    %v866 = vand.u32 %v813, 4294901760
    %867 = vmatpush1.msra.mxu0 %v866
    %v868 = vand.u32 %v817, 4294901760
    %869 = vmatprep.subr.mxu0 %v868
    %v870 = vand.u32 %v816, 4294901760
    %871 = vmatpush1.msra.mxu0 %v870
    %v872 = vand.u32 %v820, 4294901760
    %873 = vmatprep.subr.mxu0 %v872
    %v874 = vand.u32 %v819, 4294901760
    %875 = vmatpush1.msra.mxu0 %v874
    %v876 = vand.u32 %v823, 4294901760
    %877 = vmatprep.subr.mxu0 %v876
    %v878 = vand.u32 %v822, 4294901760
    %879 = vmatpush1.msra.mxu0 %v878
    %v880 = vand.u32 %v826, 4294901760
    %881 = vmatprep.subr.mxu0 %v880
    %v882 = vand.u32 %v825, 4294901760
    %883 = vmatpush1.msra.mxu0 %v882
    %v884 = vand.u32 %v829, 4294901760
    %885 = vmatprep.subr.mxu0 %v884
    %v886 = vand.u32 %v828, 4294901760
    %887 = vmatpush1.msra.mxu0 %v886
    %v888 = vand.u32 %v832, 4294901760
    %889 = vmatprep.subr.mxu0 %v888
    %v890 = vand.u32 %v831, 4294901760
    %891 = vmatpush1.msra.mxu0 %v890
    %v892 = vand.u32 %v835, 4294901760
    %893 = vmatprep.subr.mxu0 %v892
    %v894 = vand.u32 %v834, 4294901760
    %895 = vmatpush1.msra.mxu0 %v894
    %v896 = vand.u32 %v838, 4294901760
    %897 = vmatprep.subr.mxu0 %v896
    %v898 = vand.u32 %v837, 4294901760
    %899 = vmatpush1.msra.mxu0 %v898
    %v900 = vand.u32 %v841, 4294901760
    %901 = vmatprep.subr.mxu0 %v900
    %v902 = vand.u32 %v840, 4294901760
    %903 = vmatpush1.msra.mxu0 %v902
    %v904 = vand.u32 %v844, 4294901760
    %905 = vmatprep.subr.mxu0 %v904
    %v906 = vand.u32 %v843, 4294901760
    %907 = vmatpush1.msra.mxu0 %v906
    %v908 = vand.u32 %v847, 4294901760
    %909 = vmatprep.subr.mxu0 %v908
    %v910 = vand.u32 %v846, 4294901760
    %911 = vmatpush1.msra.mxu0 %v910
    %v912 = vand.u32 %v850, 4294901760
    %913 = vmatprep.subr.mxu0 %v912
    %v914 = vand.u32 %v849, 4294901760
    %915 = vmatpush1.msra.mxu0 %v914
    %v916 = vand.u32 %v853, 4294901760
    %917 = vmatprep.subr.mxu0 %v916
    %v918 = vand.u32 %v852, 4294901760
    %919 = vmatpush1.msra.mxu0 %v918
    %920 = vmatprep.subr.mxu0 0.0
    %921 = vmatpush1.msra.mxu0 0.0
    %922 = vmatprep.subr.mxu0 0.0
    %923 = vmatpush1.msra.mxu0 0.0
    %924 = vmatprep.subr.mxu0 0.0
    %925 = vmatpush1.msra.mxu0 0.0
    %926 = vmatprep.subr.mxu0 0.0
    %927 = vmatpush1.msra.mxu0 0.0
    %928 = vmatprep.subr.mxu0 0.0
    %929 = vmatpush1.msra.mxu0 0.0
    %930 = vmatprep.subr.mxu0 0.0
    %931 = vmatpush1.msra.mxu0 0.0
    %932 = vmatprep.subr.mxu0 0.0
    %933 = vmatpush1.msra.mxu0 0.0
    %934 = vmatprep.subr.mxu0 0.0
    %935 = vmatpush1.msra.mxu0 0.0
    %936 = vmatprep.subr.mxu0 0.0
    %937 = vmatpush1.msra.mxu0 0.0
    %938 = vmatprep.subr.mxu0 0.0
    %939 = vmatpush1.msra.mxu0 0.0
    %940 = vmatprep.subr.mxu0 0.0
    %941 = vmatpush1.msra.mxu0 0.0
    %942 = vmatprep.subr.mxu0 0.0
    %943 = vmatpush1.msra.mxu0 0.0
    %944 = vmatprep.subr.mxu0 0.0
    %945 = vmatpush1.msra.mxu0 0.0
    %946 = vmatprep.subr.mxu0 0.0
    %947 = vmatpush1.msra.mxu0 0.0
    %948 = vmatprep.subr.mxu0 0.0
    %949 = vmatpush1.msra.mxu0 0.0
    %950 = vmatprep.subr.mxu0 0.0
    %951 = vmatpush1.msra.mxu0 0.0
    %952 = vmatprep.mubr.f32.mxu0 0.0
    %v953 = vand.u32 %v48, 4294901760
    %v954 = vsub.f32 %v48, %v953
    %v955 = vand.u32 %v954, 4294901760
    %v956 = vsub.f32 %v954, %v955
    %v957 = vand.u32 %v956, 4294901760
    %958 = vmatmul.mubr.f32.gmra.mrb[0].mxu0 %v957
    %v959 = vpop.f32.mrb[0].mxu0
    %v960 = vadd.f32 0.0, %v959
    %v961 = vpop.f32.mrb[0].mxu0
    %v962 = vadd.f32 0.0, %v961
    %963 = vmatprep.mubr.f32.mxu0 0.0
    %v964 = vand.u32 %v49, 4294901760
    %v965 = vsub.f32 %v49, %v964
    %v966 = vand.u32 %v965, 4294901760
    %v967 = vsub.f32 %v965, %v966
    %v968 = vand.u32 %v967, 4294901760
    %969 = vmatmul.mubr.f32.gmra.mrb[0].mxu0 %v968
    %v970 = vpop.f32.mrb[0].mxu0
    %v971 = vadd.f32 0.0, %v970
    %v972 = vpop.f32.mrb[0].mxu0
    %v973 = vadd.f32 0.0, %v972
    %974 = vmatprep.mubr.f32.mxu0 0.0
    %v975 = vand.u32 %v50, 4294901760
    %v976 = vsub.f32 %v50, %v975
    %v977 = vand.u32 %v976, 4294901760
    %v978 = vsub.f32 %v976, %v977
    %v979 = vand.u32 %v978, 4294901760
    %980 = vmatmul.mubr.f32.gmra.mrb[0].mxu0 %v979
    %v981 = vpop.f32.mrb[0].mxu0
    %v982 = vadd.f32 0.0, %v981
    %v983 = vpop.f32.mrb[0].mxu0
    %v984 = vadd.f32 0.0, %v983
    %985 = vdwg.mxu0
    %v986 = vand.u32 %v808, 4294901760
    %v987 = vsub.f32 %v808, %v986
    %v988 = vand.u32 %v987, 4294901760
    %v989 = vsub.f32 %v987, %v988
    %v990 = vand.u32 %v989, 4294901760
    %991 = vmatprep.subr.mxu0 %v990
    %v992 = vand.u32 %v807, 4294901760
    %v993 = vsub.f32 %v807, %v992
    %v994 = vand.u32 %v993, 4294901760
    %v995 = vsub.f32 %v993, %v994
    %v996 = vand.u32 %v995, 4294901760
    %997 = vmatpush1.msra.mxu0 %v996
    %v998 = vand.u32 %v811, 4294901760
    %v999 = vsub.f32 %v811, %v998
    %v1000 = vand.u32 %v999, 4294901760
    %v1001 = vsub.f32 %v999, %v1000
    %v1002 = vand.u32 %v1001, 4294901760
    %1003 = vmatprep.subr.mxu0 %v1002
    %v1004 = vand.u32 %v810, 4294901760
    %v1005 = vsub.f32 %v810, %v1004
    %v1006 = vand.u32 %v1005, 4294901760
    %v1007 = vsub.f32 %v1005, %v1006
    %v1008 = vand.u32 %v1007, 4294901760
    %1009 = vmatpush1.msra.mxu0 %v1008
    %v1010 = vand.u32 %v814, 4294901760
    %v1011 = vsub.f32 %v814, %v1010
    %v1012 = vand.u32 %v1011, 4294901760
    %v1013 = vsub.f32 %v1011, %v1012
    %v1014 = vand.u32 %v1013, 4294901760
    %1015 = vmatprep.subr.mxu0 %v1014
    %v1016 = vand.u32 %v813, 4294901760
    %v1017 = vsub.f32 %v813, %v1016
    %v1018 = vand.u32 %v1017, 4294901760
    %v1019 = vsub.f32 %v1017, %v1018
    %v1020 = vand.u32 %v1019, 4294901760
    %1021 = vmatpush1.msra.mxu0 %v1020
    %v1022 = vand.u32 %v817, 4294901760
    %v1023 = vsub.f32 %v817, %v1022
    %v1024 = vand.u32 %v1023, 4294901760
    %v1025 = vsub.f32 %v1023, %v1024
    %v1026 = vand.u32 %v1025, 4294901760
    %1027 = vmatprep.subr.mxu0 %v1026
    %v1028 = vand.u32 %v816, 4294901760
    %v1029 = vsub.f32 %v816, %v1028
    %v1030 = vand.u32 %v1029, 4294901760
    %v1031 = vsub.f32 %v1029, %v1030
    %v1032 = vand.u32 %v1031, 4294901760
    %1033 = vmatpush1.msra.mxu0 %v1032
    %v1034 = vand.u32 %v820, 4294901760
    %v1035 = vsub.f32 %v820, %v1034
    %v1036 = vand.u32 %v1035, 4294901760
    %v1037 = vsub.f32 %v1035, %v1036
    %v1038 = vand.u32 %v1037, 4294901760
    %1039 = vmatprep.subr.mxu0 %v1038
    %v1040 = vand.u32 %v819, 4294901760
    %v1041 = vsub.f32 %v819, %v1040
    %v1042 = vand.u32 %v1041, 4294901760
    %v1043 = vsub.f32 %v1041, %v1042
    %v1044 = vand.u32 %v1043, 4294901760
    %1045 = vmatpush1.msra.mxu0 %v1044
    %v1046 = vand.u32 %v823, 4294901760
    %v1047 = vsub.f32 %v823, %v1046
    %v1048 = vand.u32 %v1047, 4294901760
    %v1049 = vsub.f32 %v1047, %v1048
    %v1050 = vand.u32 %v1049, 4294901760
    %1051 = vmatprep.subr.mxu0 %v1050
    %v1052 = vand.u32 %v822, 4294901760
    %v1053 = vsub.f32 %v822, %v1052
    %v1054 = vand.u32 %v1053, 4294901760
    %v1055 = vsub.f32 %v1053, %v1054
    %v1056 = vand.u32 %v1055, 4294901760
    %1057 = vmatpush1.msra.mxu0 %v1056
    %v1058 = vand.u32 %v826, 4294901760
    %v1059 = vsub.f32 %v826, %v1058
    %v1060 = vand.u32 %v1059, 4294901760
    %v1061 = vsub.f32 %v1059, %v1060
    %v1062 = vand.u32 %v1061, 4294901760
    %1063 = vmatprep.subr.mxu0 %v1062
    %v1064 = vand.u32 %v825, 4294901760
    %v1065 = vsub.f32 %v825, %v1064
    %v1066 = vand.u32 %v1065, 4294901760
    %v1067 = vsub.f32 %v1065, %v1066
    %v1068 = vand.u32 %v1067, 4294901760
    %1069 = vmatpush1.msra.mxu0 %v1068
    %v1070 = vand.u32 %v829, 4294901760
    %v1071 = vsub.f32 %v829, %v1070
    %v1072 = vand.u32 %v1071, 4294901760
    %v1073 = vsub.f32 %v1071, %v1072
    %v1074 = vand.u32 %v1073, 4294901760
    %1075 = vmatprep.subr.mxu0 %v1074
    %v1076 = vand.u32 %v828, 4294901760
    %v1077 = vsub.f32 %v828, %v1076
    %v1078 = vand.u32 %v1077, 4294901760
    %v1079 = vsub.f32 %v1077, %v1078
    %v1080 = vand.u32 %v1079, 4294901760
    %1081 = vmatpush1.msra.mxu0 %v1080
    %v1082 = vand.u32 %v832, 4294901760
    %v1083 = vsub.f32 %v832, %v1082
    %v1084 = vand.u32 %v1083, 4294901760
    %v1085 = vsub.f32 %v1083, %v1084
    %v1086 = vand.u32 %v1085, 4294901760
    %1087 = vmatprep.subr.mxu0 %v1086
    %v1088 = vand.u32 %v831, 4294901760
    %v1089 = vsub.f32 %v831, %v1088
    %v1090 = vand.u32 %v1089, 4294901760
    %v1091 = vsub.f32 %v1089, %v1090
    %v1092 = vand.u32 %v1091, 4294901760
    %1093 = vmatpush1.msra.mxu0 %v1092
    %v1094 = vand.u32 %v835, 4294901760
    %v1095 = vsub.f32 %v835, %v1094
    %v1096 = vand.u32 %v1095, 4294901760
    %v1097 = vsub.f32 %v1095, %v1096
    %v1098 = vand.u32 %v1097, 4294901760
    %1099 = vmatprep.subr.mxu0 %v1098
    %v1100 = vand.u32 %v834, 4294901760
    %v1101 = vsub.f32 %v834, %v1100
    %v1102 = vand.u32 %v1101, 4294901760
    %v1103 = vsub.f32 %v1101, %v1102
    %v1104 = vand.u32 %v1103, 4294901760
    %1105 = vmatpush1.msra.mxu0 %v1104
    %v1106 = vand.u32 %v838, 4294901760
    %v1107 = vsub.f32 %v838, %v1106
    %v1108 = vand.u32 %v1107, 4294901760
    %v1109 = vsub.f32 %v1107, %v1108
    %v1110 = vand.u32 %v1109, 4294901760
    %1111 = vmatprep.subr.mxu0 %v1110
    %v1112 = vand.u32 %v837, 4294901760
    %v1113 = vsub.f32 %v837, %v1112
    %v1114 = vand.u32 %v1113, 4294901760
    %v1115 = vsub.f32 %v1113, %v1114
    %v1116 = vand.u32 %v1115, 4294901760
    %1117 = vmatpush1.msra.mxu0 %v1116
    %v1118 = vand.u32 %v841, 4294901760
    %v1119 = vsub.f32 %v841, %v1118
    %v1120 = vand.u32 %v1119, 4294901760
    %v1121 = vsub.f32 %v1119, %v1120
    %v1122 = vand.u32 %v1121, 4294901760
    %1123 = vmatprep.subr.mxu0 %v1122
    %v1124 = vand.u32 %v840, 4294901760
    %v1125 = vsub.f32 %v840, %v1124
    %v1126 = vand.u32 %v1125, 4294901760
    %v1127 = vsub.f32 %v1125, %v1126
    %v1128 = vand.u32 %v1127, 4294901760
    %1129 = vmatpush1.msra.mxu0 %v1128
    %v1130 = vand.u32 %v844, 4294901760
    %v1131 = vsub.f32 %v844, %v1130
    %v1132 = vand.u32 %v1131, 4294901760
    %v1133 = vsub.f32 %v1131, %v1132
    %v1134 = vand.u32 %v1133, 4294901760
    %1135 = vmatprep.subr.mxu0 %v1134
    %v1136 = vand.u32 %v843, 4294901760
    %v1137 = vsub.f32 %v843, %v1136
    %v1138 = vand.u32 %v1137, 4294901760
    %v1139 = vsub.f32 %v1137, %v1138
    %v1140 = vand.u32 %v1139, 4294901760
    %1141 = vmatpush1.msra.mxu0 %v1140
    %v1142 = vand.u32 %v847, 4294901760
    %v1143 = vsub.f32 %v847, %v1142
    %v1144 = vand.u32 %v1143, 4294901760
    %v1145 = vsub.f32 %v1143, %v1144
    %v1146 = vand.u32 %v1145, 4294901760
    %1147 = vmatprep.subr.mxu0 %v1146
    %v1148 = vand.u32 %v846, 4294901760
    %v1149 = vsub.f32 %v846, %v1148
    %v1150 = vand.u32 %v1149, 4294901760
    %v1151 = vsub.f32 %v1149, %v1150
    %v1152 = vand.u32 %v1151, 4294901760
    %1153 = vmatpush1.msra.mxu0 %v1152
    %v1154 = vand.u32 %v850, 4294901760
    %v1155 = vsub.f32 %v850, %v1154
    %v1156 = vand.u32 %v1155, 4294901760
    %v1157 = vsub.f32 %v1155, %v1156
    %v1158 = vand.u32 %v1157, 4294901760
    %1159 = vmatprep.subr.mxu0 %v1158
    %v1160 = vand.u32 %v849, 4294901760
    %v1161 = vsub.f32 %v849, %v1160
    %v1162 = vand.u32 %v1161, 4294901760
    %v1163 = vsub.f32 %v1161, %v1162
    %v1164 = vand.u32 %v1163, 4294901760
    %1165 = vmatpush1.msra.mxu0 %v1164
    %v1166 = vand.u32 %v853, 4294901760
    %v1167 = vsub.f32 %v853, %v1166
    %v1168 = vand.u32 %v1167, 4294901760
    %v1169 = vsub.f32 %v1167, %v1168
    %v1170 = vand.u32 %v1169, 4294901760
    %1171 = vmatprep.subr.mxu0 %v1170
    %v1172 = vand.u32 %v852, 4294901760
    %v1173 = vsub.f32 %v852, %v1172
    %v1174 = vand.u32 %v1173, 4294901760
    %v1175 = vsub.f32 %v1173, %v1174
    %v1176 = vand.u32 %v1175, 4294901760
    %1177 = vmatpush1.msra.mxu0 %v1176
    %1178 = vmatprep.subr.mxu0 0.0
    %1179 = vmatpush1.msra.mxu0 0.0
    %1180 = vmatprep.subr.mxu0 0.0
    %1181 = vmatpush1.msra.mxu0 0.0
    %1182 = vmatprep.subr.mxu0 0.0
    %1183 = vmatpush1.msra.mxu0 0.0
    %1184 = vmatprep.subr.mxu0 0.0
    %1185 = vmatpush1.msra.mxu0 0.0
    %1186 = vmatprep.subr.mxu0 0.0
    %1187 = vmatpush1.msra.mxu0 0.0
    %1188 = vmatprep.subr.mxu0 0.0
    %1189 = vmatpush1.msra.mxu0 0.0
    %1190 = vmatprep.subr.mxu0 0.0
    %1191 = vmatpush1.msra.mxu0 0.0
    %1192 = vmatprep.subr.mxu0 0.0
    %1193 = vmatpush1.msra.mxu0 0.0
    %1194 = vmatprep.subr.mxu0 0.0
    %1195 = vmatpush1.msra.mxu0 0.0
    %1196 = vmatprep.subr.mxu0 0.0
    %1197 = vmatpush1.msra.mxu0 0.0
    %1198 = vmatprep.subr.mxu0 0.0
    %1199 = vmatpush1.msra.mxu0 0.0
    %1200 = vmatprep.subr.mxu0 0.0
    %1201 = vmatpush1.msra.mxu0 0.0
    %1202 = vmatprep.subr.mxu0 0.0
    %1203 = vmatpush1.msra.mxu0 0.0
    %1204 = vmatprep.subr.mxu0 0.0
    %1205 = vmatpush1.msra.mxu0 0.0
    %1206 = vmatprep.subr.mxu0 0.0
    %1207 = vmatpush1.msra.mxu0 0.0
    %1208 = vmatprep.subr.mxu0 0.0
    %1209 = vmatpush1.msra.mxu0 0.0
    %1210 = vmatprep.mubr.f32.mxu0 0.0
    %v1211 = vand.u32 %v48, 4294901760
    %1212 = vmatmul.mubr.f32.gmra.mrb[0].mxu0 %v1211
    %v1213 = vpop.f32.mrb[0].mxu0
    %v1214 = vadd.f32 %v960, %v1213
    %v1215 = vpop.f32.mrb[0].mxu0
    %v1216 = vadd.f32 %v962, %v1215
    %1217 = vmatprep.mubr.f32.mxu0 0.0
    %v1218 = vand.u32 %v49, 4294901760
    %1219 = vmatmul.mubr.f32.gmra.mrb[0].mxu0 %v1218
    %v1220 = vpop.f32.mrb[0].mxu0
    %v1221 = vadd.f32 %v971, %v1220
    %v1222 = vpop.f32.mrb[0].mxu0
    %v1223 = vadd.f32 %v973, %v1222
    %1224 = vmatprep.mubr.f32.mxu0 0.0
    %v1225 = vand.u32 %v50, 4294901760
    %1226 = vmatmul.mubr.f32.gmra.mrb[0].mxu0 %v1225
    %v1227 = vpop.f32.mrb[0].mxu0
    %v1228 = vadd.f32 %v982, %v1227
    %v1229 = vpop.f32.mrb[0].mxu0
    %v1230 = vadd.f32 %v984, %v1229
    %1231 = vdwg.mxu0
    %v1232 = vand.u32 %v808, 4294901760
    %v1233 = vsub.f32 %v808, %v1232
    %1234 = vmatprep.subr.mxu0 %v1233
    %v1235 = vand.u32 %v807, 4294901760
    %v1236 = vsub.f32 %v807, %v1235
    %1237 = vmatpush1.msra.mxu0 %v1236
    %v1238 = vand.u32 %v811, 4294901760
    %v1239 = vsub.f32 %v811, %v1238
    %1240 = vmatprep.subr.mxu0 %v1239
    %v1241 = vand.u32 %v810, 4294901760
    %v1242 = vsub.f32 %v810, %v1241
    %1243 = vmatpush1.msra.mxu0 %v1242
    %v1244 = vand.u32 %v814, 4294901760
    %v1245 = vsub.f32 %v814, %v1244
    %1246 = vmatprep.subr.mxu0 %v1245
    %v1247 = vand.u32 %v813, 4294901760
    %v1248 = vsub.f32 %v813, %v1247
    %1249 = vmatpush1.msra.mxu0 %v1248
    %v1250 = vand.u32 %v817, 4294901760
    %v1251 = vsub.f32 %v817, %v1250
    %1252 = vmatprep.subr.mxu0 %v1251
    %v1253 = vand.u32 %v816, 4294901760
    %v1254 = vsub.f32 %v816, %v1253
    %1255 = vmatpush1.msra.mxu0 %v1254
    %v1256 = vand.u32 %v820, 4294901760
    %v1257 = vsub.f32 %v820, %v1256
    %1258 = vmatprep.subr.mxu0 %v1257
    %v1259 = vand.u32 %v819, 4294901760
    %v1260 = vsub.f32 %v819, %v1259
    %1261 = vmatpush1.msra.mxu0 %v1260
    %v1262 = vand.u32 %v823, 4294901760
    %v1263 = vsub.f32 %v823, %v1262
    %1264 = vmatprep.subr.mxu0 %v1263
    %v1265 = vand.u32 %v822, 4294901760
    %v1266 = vsub.f32 %v822, %v1265
    %1267 = vmatpush1.msra.mxu0 %v1266
    %v1268 = vand.u32 %v826, 4294901760
    %v1269 = vsub.f32 %v826, %v1268
    %1270 = vmatprep.subr.mxu0 %v1269
    %v1271 = vand.u32 %v825, 4294901760
    %v1272 = vsub.f32 %v825, %v1271
    %1273 = vmatpush1.msra.mxu0 %v1272
    %v1274 = vand.u32 %v829, 4294901760
    %v1275 = vsub.f32 %v829, %v1274
    %1276 = vmatprep.subr.mxu0 %v1275
    %v1277 = vand.u32 %v828, 4294901760
    %v1278 = vsub.f32 %v828, %v1277
    %1279 = vmatpush1.msra.mxu0 %v1278
    %v1280 = vand.u32 %v832, 4294901760
    %v1281 = vsub.f32 %v832, %v1280
    %1282 = vmatprep.subr.mxu0 %v1281
    %v1283 = vand.u32 %v831, 4294901760
    %v1284 = vsub.f32 %v831, %v1283
    %1285 = vmatpush1.msra.mxu0 %v1284
    %v1286 = vand.u32 %v835, 4294901760
    %v1287 = vsub.f32 %v835, %v1286
    %1288 = vmatprep.subr.mxu0 %v1287
    %v1289 = vand.u32 %v834, 4294901760
    %v1290 = vsub.f32 %v834, %v1289
    %1291 = vmatpush1.msra.mxu0 %v1290
    %v1292 = vand.u32 %v838, 4294901760
    %v1293 = vsub.f32 %v838, %v1292
    %1294 = vmatprep.subr.mxu0 %v1293
    %v1295 = vand.u32 %v837, 4294901760
    %v1296 = vsub.f32 %v837, %v1295
    %1297 = vmatpush1.msra.mxu0 %v1296
    %v1298 = vand.u32 %v841, 4294901760
    %v1299 = vsub.f32 %v841, %v1298
    %1300 = vmatprep.subr.mxu0 %v1299
    %v1301 = vand.u32 %v840, 4294901760
    %v1302 = vsub.f32 %v840, %v1301
    %1303 = vmatpush1.msra.mxu0 %v1302
    %v1304 = vand.u32 %v844, 4294901760
    %v1305 = vsub.f32 %v844, %v1304
    %1306 = vmatprep.subr.mxu0 %v1305
    %v1307 = vand.u32 %v843, 4294901760
    %v1308 = vsub.f32 %v843, %v1307
    %1309 = vmatpush1.msra.mxu0 %v1308
    %v1310 = vand.u32 %v847, 4294901760
    %v1311 = vsub.f32 %v847, %v1310
    %1312 = vmatprep.subr.mxu0 %v1311
    %v1313 = vand.u32 %v846, 4294901760
    %v1314 = vsub.f32 %v846, %v1313
    %1315 = vmatpush1.msra.mxu0 %v1314
    %v1316 = vand.u32 %v850, 4294901760
    %v1317 = vsub.f32 %v850, %v1316
    %1318 = vmatprep.subr.mxu0 %v1317
    %v1319 = vand.u32 %v849, 4294901760
    %v1320 = vsub.f32 %v849, %v1319
    %1321 = vmatpush1.msra.mxu0 %v1320
    %v1322 = vand.u32 %v853, 4294901760
    %v1323 = vsub.f32 %v853, %v1322
    %1324 = vmatprep.subr.mxu0 %v1323
    %v1325 = vand.u32 %v852, 4294901760
    %v1326 = vsub.f32 %v852, %v1325
    %1327 = vmatpush1.msra.mxu0 %v1326
    %1328 = vmatprep.subr.mxu0 0.0
    %1329 = vmatpush1.msra.mxu0 0.0
    %1330 = vmatprep.subr.mxu0 0.0
    %1331 = vmatpush1.msra.mxu0 0.0
    %1332 = vmatprep.subr.mxu0 0.0
    %1333 = vmatpush1.msra.mxu0 0.0
    %1334 = vmatprep.subr.mxu0 0.0
    %1335 = vmatpush1.msra.mxu0 0.0
    %1336 = vmatprep.subr.mxu0 0.0
    %1337 = vmatpush1.msra.mxu0 0.0
    %1338 = vmatprep.subr.mxu0 0.0
    %1339 = vmatpush1.msra.mxu0 0.0
    %1340 = vmatprep.subr.mxu0 0.0
    %1341 = vmatpush1.msra.mxu0 0.0
    %1342 = vmatprep.subr.mxu0 0.0
    %1343 = vmatpush1.msra.mxu0 0.0
    %1344 = vmatprep.subr.mxu0 0.0
    %1345 = vmatpush1.msra.mxu0 0.0
    %1346 = vmatprep.subr.mxu0 0.0
    %1347 = vmatpush1.msra.mxu0 0.0
    %1348 = vmatprep.subr.mxu0 0.0
    %1349 = vmatpush1.msra.mxu0 0.0
    %1350 = vmatprep.subr.mxu0 0.0
    %1351 = vmatpush1.msra.mxu0 0.0
    %1352 = vmatprep.subr.mxu0 0.0
    %1353 = vmatpush1.msra.mxu0 0.0
    %1354 = vmatprep.subr.mxu0 0.0
    %1355 = vmatpush1.msra.mxu0 0.0
    %1356 = vmatprep.subr.mxu0 0.0
    %1357 = vmatpush1.msra.mxu0 0.0
    %1358 = vmatprep.subr.mxu0 0.0
    %1359 = vmatpush1.msra.mxu0 0.0
    %1360 = vmatprep.mubr.f32.mxu0 0.0
    %v1361 = vand.u32 %v48, 4294901760
    %v1362 = vsub.f32 %v48, %v1361
    %1363 = vmatmul.mubr.f32.gmra.mrb[0].mxu0 %v1362
    %v1364 = vpop.f32.mrb[0].mxu0
    %v1365 = vadd.f32 %v1214, %v1364
    %v1366 = vpop.f32.mrb[0].mxu0
    %v1367 = vadd.f32 %v1216, %v1366
    %1368 = vmatprep.mubr.f32.mxu0 0.0
    %v1369 = vand.u32 %v49, 4294901760
    %v1370 = vsub.f32 %v49, %v1369
    %1371 = vmatmul.mubr.f32.gmra.mrb[0].mxu0 %v1370
    %v1372 = vpop.f32.mrb[0].mxu0
    %v1373 = vadd.f32 %v1221, %v1372
    %v1374 = vpop.f32.mrb[0].mxu0
    %v1375 = vadd.f32 %v1223, %v1374
    %1376 = vmatprep.mubr.f32.mxu0 0.0
    %v1377 = vand.u32 %v50, 4294901760
    %v1378 = vsub.f32 %v50, %v1377
    %1379 = vmatmul.mubr.f32.gmra.mrb[0].mxu0 %v1378
    %v1380 = vpop.f32.mrb[0].mxu0
    %v1381 = vadd.f32 %v1228, %v1380
    %v1382 = vpop.f32.mrb[0].mxu0
    %v1383 = vadd.f32 %v1230, %v1382
    %1384 = vdwg.mxu0
    %v1385 = vand.u32 %v808, 4294901760
    %1386 = vmatprep.subr.mxu0 %v1385
    %v1387 = vand.u32 %v807, 4294901760
    %1388 = vmatpush1.msra.mxu0 %v1387
    %v1389 = vand.u32 %v811, 4294901760
    %1390 = vmatprep.subr.mxu0 %v1389
    %v1391 = vand.u32 %v810, 4294901760
    %1392 = vmatpush1.msra.mxu0 %v1391
    %v1393 = vand.u32 %v814, 4294901760
    %1394 = vmatprep.subr.mxu0 %v1393
    %v1395 = vand.u32 %v813, 4294901760
    %1396 = vmatpush1.msra.mxu0 %v1395
    %v1397 = vand.u32 %v817, 4294901760
    %1398 = vmatprep.subr.mxu0 %v1397
    %v1399 = vand.u32 %v816, 4294901760
    %1400 = vmatpush1.msra.mxu0 %v1399
    %v1401 = vand.u32 %v820, 4294901760
    %1402 = vmatprep.subr.mxu0 %v1401
    %v1403 = vand.u32 %v819, 4294901760
    %1404 = vmatpush1.msra.mxu0 %v1403
    %v1405 = vand.u32 %v823, 4294901760
    %1406 = vmatprep.subr.mxu0 %v1405
    %v1407 = vand.u32 %v822, 4294901760
    %1408 = vmatpush1.msra.mxu0 %v1407
    %v1409 = vand.u32 %v826, 4294901760
    %1410 = vmatprep.subr.mxu0 %v1409
    %v1411 = vand.u32 %v825, 4294901760
    %1412 = vmatpush1.msra.mxu0 %v1411
    %v1413 = vand.u32 %v829, 4294901760
    %1414 = vmatprep.subr.mxu0 %v1413
    %v1415 = vand.u32 %v828, 4294901760
    %1416 = vmatpush1.msra.mxu0 %v1415
    %v1417 = vand.u32 %v832, 4294901760
    %1418 = vmatprep.subr.mxu0 %v1417
    %v1419 = vand.u32 %v831, 4294901760
    %1420 = vmatpush1.msra.mxu0 %v1419
    %v1421 = vand.u32 %v835, 4294901760
    %1422 = vmatprep.subr.mxu0 %v1421
    %v1423 = vand.u32 %v834, 4294901760
    %1424 = vmatpush1.msra.mxu0 %v1423
    %v1425 = vand.u32 %v838, 4294901760
    %1426 = vmatprep.subr.mxu0 %v1425
    %v1427 = vand.u32 %v837, 4294901760
    %1428 = vmatpush1.msra.mxu0 %v1427
    %v1429 = vand.u32 %v841, 4294901760
    %1430 = vmatprep.subr.mxu0 %v1429
    %v1431 = vand.u32 %v840, 4294901760
    %1432 = vmatpush1.msra.mxu0 %v1431
    %v1433 = vand.u32 %v844, 4294901760
    %1434 = vmatprep.subr.mxu0 %v1433
    %v1435 = vand.u32 %v843, 4294901760
    %1436 = vmatpush1.msra.mxu0 %v1435
    %v1437 = vand.u32 %v847, 4294901760
    %1438 = vmatprep.subr.mxu0 %v1437
    %v1439 = vand.u32 %v846, 4294901760
    %1440 = vmatpush1.msra.mxu0 %v1439
    %v1441 = vand.u32 %v850, 4294901760
    %1442 = vmatprep.subr.mxu0 %v1441
    %v1443 = vand.u32 %v849, 4294901760
    %1444 = vmatpush1.msra.mxu0 %v1443
    %v1445 = vand.u32 %v853, 4294901760
    %1446 = vmatprep.subr.mxu0 %v1445
    %v1447 = vand.u32 %v852, 4294901760
    %1448 = vmatpush1.msra.mxu0 %v1447
    %1449 = vmatprep.subr.mxu0 0.0
    %1450 = vmatpush1.msra.mxu0 0.0
    %1451 = vmatprep.subr.mxu0 0.0
    %1452 = vmatpush1.msra.mxu0 0.0
    %1453 = vmatprep.subr.mxu0 0.0
    %1454 = vmatpush1.msra.mxu0 0.0
    %1455 = vmatprep.subr.mxu0 0.0
    %1456 = vmatpush1.msra.mxu0 0.0
    %1457 = vmatprep.subr.mxu0 0.0
    %1458 = vmatpush1.msra.mxu0 0.0
    %1459 = vmatprep.subr.mxu0 0.0
    %1460 = vmatpush1.msra.mxu0 0.0
    %1461 = vmatprep.subr.mxu0 0.0
    %1462 = vmatpush1.msra.mxu0 0.0
    %1463 = vmatprep.subr.mxu0 0.0
    %1464 = vmatpush1.msra.mxu0 0.0
    %1465 = vmatprep.subr.mxu0 0.0
    %1466 = vmatpush1.msra.mxu0 0.0
    %1467 = vmatprep.subr.mxu0 0.0
    %1468 = vmatpush1.msra.mxu0 0.0
    %1469 = vmatprep.subr.mxu0 0.0
    %1470 = vmatpush1.msra.mxu0 0.0
    %1471 = vmatprep.subr.mxu0 0.0
    %1472 = vmatpush1.msra.mxu0 0.0
    %1473 = vmatprep.subr.mxu0 0.0
    %1474 = vmatpush1.msra.mxu0 0.0
    %1475 = vmatprep.subr.mxu0 0.0
    %1476 = vmatpush1.msra.mxu0 0.0
    %1477 = vmatprep.subr.mxu0 0.0
    %1478 = vmatpush1.msra.mxu0 0.0
    %1479 = vmatprep.subr.mxu0 0.0
    %1480 = vmatpush1.msra.mxu0 0.0
    %1481 = vmatprep.mubr.f32.mxu0 0.0
    %v1482 = vand.u32 %v48, 4294901760
    %v1483 = vsub.f32 %v48, %v1482
    %v1484 = vand.u32 %v1483, 4294901760
    %1485 = vmatmul.mubr.f32.gmra.mrb[0].mxu0 %v1484
    %v1486 = vpop.f32.mrb[0].mxu0
    %v1487 = vadd.f32 %v1365, %v1486
    %v1488 = vpop.f32.mrb[0].mxu0
    %v1489 = vadd.f32 %v1367, %v1488
    %1490 = vmatprep.mubr.f32.mxu0 0.0
    %v1491 = vand.u32 %v49, 4294901760
    %v1492 = vsub.f32 %v49, %v1491
    %v1493 = vand.u32 %v1492, 4294901760
    %1494 = vmatmul.mubr.f32.gmra.mrb[0].mxu0 %v1493
    %v1495 = vpop.f32.mrb[0].mxu0
    %v1496 = vadd.f32 %v1373, %v1495
    %v1497 = vpop.f32.mrb[0].mxu0
    %v1498 = vadd.f32 %v1375, %v1497
    %1499 = vmatprep.mubr.f32.mxu0 0.0
    %v1500 = vand.u32 %v50, 4294901760
    %v1501 = vsub.f32 %v50, %v1500
    %v1502 = vand.u32 %v1501, 4294901760
    %1503 = vmatmul.mubr.f32.gmra.mrb[0].mxu0 %v1502
    %v1504 = vpop.f32.mrb[0].mxu0
    %v1505 = vadd.f32 %v1381, %v1504
    %v1506 = vpop.f32.mrb[0].mxu0
    %v1507 = vadd.f32 %v1383, %v1506
    %1508 = vdwg.mxu0
    %v1509 = vand.u32 %v808, 4294901760
    %v1510 = vsub.f32 %v808, %v1509
    %v1511 = vand.u32 %v1510, 4294901760
    %1512 = vmatprep.subr.mxu0 %v1511
    %v1513 = vand.u32 %v807, 4294901760
    %v1514 = vsub.f32 %v807, %v1513
    %v1515 = vand.u32 %v1514, 4294901760
    %1516 = vmatpush1.msra.mxu0 %v1515
    %v1517 = vand.u32 %v811, 4294901760
    %v1518 = vsub.f32 %v811, %v1517
    %v1519 = vand.u32 %v1518, 4294901760
    %1520 = vmatprep.subr.mxu0 %v1519
    %v1521 = vand.u32 %v810, 4294901760
    %v1522 = vsub.f32 %v810, %v1521
    %v1523 = vand.u32 %v1522, 4294901760
    %1524 = vmatpush1.msra.mxu0 %v1523
    %v1525 = vand.u32 %v814, 4294901760
    %v1526 = vsub.f32 %v814, %v1525
    %v1527 = vand.u32 %v1526, 4294901760
    %1528 = vmatprep.subr.mxu0 %v1527
    %v1529 = vand.u32 %v813, 4294901760
    %v1530 = vsub.f32 %v813, %v1529
    %v1531 = vand.u32 %v1530, 4294901760
    %1532 = vmatpush1.msra.mxu0 %v1531
    %v1533 = vand.u32 %v817, 4294901760
    %v1534 = vsub.f32 %v817, %v1533
    %v1535 = vand.u32 %v1534, 4294901760
    %1536 = vmatprep.subr.mxu0 %v1535
    %v1537 = vand.u32 %v816, 4294901760
    %v1538 = vsub.f32 %v816, %v1537
    %v1539 = vand.u32 %v1538, 4294901760
    %1540 = vmatpush1.msra.mxu0 %v1539
    %v1541 = vand.u32 %v820, 4294901760
    %v1542 = vsub.f32 %v820, %v1541
    %v1543 = vand.u32 %v1542, 4294901760
    %1544 = vmatprep.subr.mxu0 %v1543
    %v1545 = vand.u32 %v819, 4294901760
    %v1546 = vsub.f32 %v819, %v1545
    %v1547 = vand.u32 %v1546, 4294901760
    %1548 = vmatpush1.msra.mxu0 %v1547
    %v1549 = vand.u32 %v823, 4294901760
    %v1550 = vsub.f32 %v823, %v1549
    %v1551 = vand.u32 %v1550, 4294901760
    %1552 = vmatprep.subr.mxu0 %v1551
    %v1553 = vand.u32 %v822, 4294901760
    %v1554 = vsub.f32 %v822, %v1553
    %v1555 = vand.u32 %v1554, 4294901760
    %1556 = vmatpush1.msra.mxu0 %v1555
    %v1557 = vand.u32 %v826, 4294901760
    %v1558 = vsub.f32 %v826, %v1557
    %v1559 = vand.u32 %v1558, 4294901760
    %1560 = vmatprep.subr.mxu0 %v1559
    %v1561 = vand.u32 %v825, 4294901760
    %v1562 = vsub.f32 %v825, %v1561
    %v1563 = vand.u32 %v1562, 4294901760
    %1564 = vmatpush1.msra.mxu0 %v1563
    %v1565 = vand.u32 %v829, 4294901760
    %v1566 = vsub.f32 %v829, %v1565
    %v1567 = vand.u32 %v1566, 4294901760
    %1568 = vmatprep.subr.mxu0 %v1567
    %v1569 = vand.u32 %v828, 4294901760
    %v1570 = vsub.f32 %v828, %v1569
    %v1571 = vand.u32 %v1570, 4294901760
    %1572 = vmatpush1.msra.mxu0 %v1571
    %v1573 = vand.u32 %v832, 4294901760
    %v1574 = vsub.f32 %v832, %v1573
    %v1575 = vand.u32 %v1574, 4294901760
    %1576 = vmatprep.subr.mxu0 %v1575
    %v1577 = vand.u32 %v831, 4294901760
    %v1578 = vsub.f32 %v831, %v1577
    %v1579 = vand.u32 %v1578, 4294901760
    %1580 = vmatpush1.msra.mxu0 %v1579
    %v1581 = vand.u32 %v835, 4294901760
    %v1582 = vsub.f32 %v835, %v1581
    %v1583 = vand.u32 %v1582, 4294901760
    %1584 = vmatprep.subr.mxu0 %v1583
    %v1585 = vand.u32 %v834, 4294901760
    %v1586 = vsub.f32 %v834, %v1585
    %v1587 = vand.u32 %v1586, 4294901760
    %1588 = vmatpush1.msra.mxu0 %v1587
    %v1589 = vand.u32 %v838, 4294901760
    %v1590 = vsub.f32 %v838, %v1589
    %v1591 = vand.u32 %v1590, 4294901760
    %1592 = vmatprep.subr.mxu0 %v1591
    %v1593 = vand.u32 %v837, 4294901760
    %v1594 = vsub.f32 %v837, %v1593
    %v1595 = vand.u32 %v1594, 4294901760
    %1596 = vmatpush1.msra.mxu0 %v1595
    %v1597 = vand.u32 %v841, 4294901760
    %v1598 = vsub.f32 %v841, %v1597
    %v1599 = vand.u32 %v1598, 4294901760
    %1600 = vmatprep.subr.mxu0 %v1599
    %v1601 = vand.u32 %v840, 4294901760
    %v1602 = vsub.f32 %v840, %v1601
    %v1603 = vand.u32 %v1602, 4294901760
    %1604 = vmatpush1.msra.mxu0 %v1603
    %v1605 = vand.u32 %v844, 4294901760
    %v1606 = vsub.f32 %v844, %v1605
    %v1607 = vand.u32 %v1606, 4294901760
    %1608 = vmatprep.subr.mxu0 %v1607
    %v1609 = vand.u32 %v843, 4294901760
    %v1610 = vsub.f32 %v843, %v1609
    %v1611 = vand.u32 %v1610, 4294901760
    %1612 = vmatpush1.msra.mxu0 %v1611
    %v1613 = vand.u32 %v847, 4294901760
    %v1614 = vsub.f32 %v847, %v1613
    %v1615 = vand.u32 %v1614, 4294901760
    %1616 = vmatprep.subr.mxu0 %v1615
    %v1617 = vand.u32 %v846, 4294901760
    %v1618 = vsub.f32 %v846, %v1617
    %v1619 = vand.u32 %v1618, 4294901760
    %1620 = vmatpush1.msra.mxu0 %v1619
    %v1621 = vand.u32 %v850, 4294901760
    %v1622 = vsub.f32 %v850, %v1621
    %v1623 = vand.u32 %v1622, 4294901760
    %1624 = vmatprep.subr.mxu0 %v1623
    %v1625 = vand.u32 %v849, 4294901760
    %v1626 = vsub.f32 %v849, %v1625
    %v1627 = vand.u32 %v1626, 4294901760
    %1628 = vmatpush1.msra.mxu0 %v1627
    %v1629 = vand.u32 %v853, 4294901760
    %v1630 = vsub.f32 %v853, %v1629
    %v1631 = vand.u32 %v1630, 4294901760
    %1632 = vmatprep.subr.mxu0 %v1631
    %v1633 = vand.u32 %v852, 4294901760
    %v1634 = vsub.f32 %v852, %v1633
    %v1635 = vand.u32 %v1634, 4294901760
    %1636 = vmatpush1.msra.mxu0 %v1635
    %1637 = vmatprep.subr.mxu0 0.0
    %1638 = vmatpush1.msra.mxu0 0.0
    %1639 = vmatprep.subr.mxu0 0.0
    %1640 = vmatpush1.msra.mxu0 0.0
    %1641 = vmatprep.subr.mxu0 0.0
    %1642 = vmatpush1.msra.mxu0 0.0
    %1643 = vmatprep.subr.mxu0 0.0
    %1644 = vmatpush1.msra.mxu0 0.0
    %1645 = vmatprep.subr.mxu0 0.0
    %1646 = vmatpush1.msra.mxu0 0.0
    %1647 = vmatprep.subr.mxu0 0.0
    %1648 = vmatpush1.msra.mxu0 0.0
    %1649 = vmatprep.subr.mxu0 0.0
    %1650 = vmatpush1.msra.mxu0 0.0
    %1651 = vmatprep.subr.mxu0 0.0
    %1652 = vmatpush1.msra.mxu0 0.0
    %1653 = vmatprep.subr.mxu0 0.0
    %1654 = vmatpush1.msra.mxu0 0.0
    %1655 = vmatprep.subr.mxu0 0.0
    %1656 = vmatpush1.msra.mxu0 0.0
    %1657 = vmatprep.subr.mxu0 0.0
    %1658 = vmatpush1.msra.mxu0 0.0
    %1659 = vmatprep.subr.mxu0 0.0
    %1660 = vmatpush1.msra.mxu0 0.0
    %1661 = vmatprep.subr.mxu0 0.0
    %1662 = vmatpush1.msra.mxu0 0.0
    %1663 = vmatprep.subr.mxu0 0.0
    %1664 = vmatpush1.msra.mxu0 0.0
    %1665 = vmatprep.subr.mxu0 0.0
    %1666 = vmatpush1.msra.mxu0 0.0
    %1667 = vmatprep.subr.mxu0 0.0
    %1668 = vmatpush1.msra.mxu0 0.0
    %1669 = vmatprep.mubr.f32.mxu0 0.0
    %v1670 = vand.u32 %v48, 4294901760
    %1671 = vmatmul.mubr.f32.gmra.mrb[0].mxu0 %v1670
    %v1672 = vpop.f32.mrb[0].mxu0
    %v1673 = vadd.f32 %v1487, %v1672
    %v1674 = vpop.f32.mrb[0].mxu0
    %v1675 = vadd.f32 %v1489, %v1674
    %1676 = vmatprep.mubr.f32.mxu0 0.0
    %v1677 = vand.u32 %v49, 4294901760
    %1678 = vmatmul.mubr.f32.gmra.mrb[0].mxu0 %v1677
    %v1679 = vpop.f32.mrb[0].mxu0
    %v1680 = vadd.f32 %v1496, %v1679
    %v1681 = vpop.f32.mrb[0].mxu0
    %v1682 = vadd.f32 %v1498, %v1681
    %1683 = vmatprep.mubr.f32.mxu0 0.0
    %v1684 = vand.u32 %v50, 4294901760
    %1685 = vmatmul.mubr.f32.gmra.mrb[0].mxu0 %v1684
    %v1686 = vpop.f32.mrb[0].mxu0
    %v1687 = vadd.f32 %v1505, %v1686
    %v1688 = vpop.f32.mrb[0].mxu0
    %v1689 = vadd.f32 %v1507, %v1688
    %1690 = vdwg.mxu0
    %v1691 = vand.u32 %v808, 4294901760
    %1692 = vmatprep.subr.mxu0 %v1691
    %v1693 = vand.u32 %v807, 4294901760
    %1694 = vmatpush1.msra.mxu0 %v1693
    %v1695 = vand.u32 %v811, 4294901760
    %1696 = vmatprep.subr.mxu0 %v1695
    %v1697 = vand.u32 %v810, 4294901760
    %1698 = vmatpush1.msra.mxu0 %v1697
    %v1699 = vand.u32 %v814, 4294901760
    %1700 = vmatprep.subr.mxu0 %v1699
    %v1701 = vand.u32 %v813, 4294901760
    %1702 = vmatpush1.msra.mxu0 %v1701
    %v1703 = vand.u32 %v817, 4294901760
    %1704 = vmatprep.subr.mxu0 %v1703
    %v1705 = vand.u32 %v816, 4294901760
    %1706 = vmatpush1.msra.mxu0 %v1705
    %v1707 = vand.u32 %v820, 4294901760
    %1708 = vmatprep.subr.mxu0 %v1707
    %v1709 = vand.u32 %v819, 4294901760
    %1710 = vmatpush1.msra.mxu0 %v1709
    %v1711 = vand.u32 %v823, 4294901760
    %1712 = vmatprep.subr.mxu0 %v1711
    %v1713 = vand.u32 %v822, 4294901760
    %1714 = vmatpush1.msra.mxu0 %v1713
    %v1715 = vand.u32 %v826, 4294901760
    %1716 = vmatprep.subr.mxu0 %v1715
    %v1717 = vand.u32 %v825, 4294901760
    %1718 = vmatpush1.msra.mxu0 %v1717
    %v1719 = vand.u32 %v829, 4294901760
    %1720 = vmatprep.subr.mxu0 %v1719
    %v1721 = vand.u32 %v828, 4294901760
    %1722 = vmatpush1.msra.mxu0 %v1721
    %v1723 = vand.u32 %v832, 4294901760
    %1724 = vmatprep.subr.mxu0 %v1723
    %v1725 = vand.u32 %v831, 4294901760
    %1726 = vmatpush1.msra.mxu0 %v1725
    %v1727 = vand.u32 %v835, 4294901760
    %1728 = vmatprep.subr.mxu0 %v1727
    %v1729 = vand.u32 %v834, 4294901760
    %1730 = vmatpush1.msra.mxu0 %v1729
    %v1731 = vand.u32 %v838, 4294901760
    %1732 = vmatprep.subr.mxu0 %v1731
    %v1733 = vand.u32 %v837, 4294901760
    %1734 = vmatpush1.msra.mxu0 %v1733
    %v1735 = vand.u32 %v841, 4294901760
    %1736 = vmatprep.subr.mxu0 %v1735
    %v1737 = vand.u32 %v840, 4294901760
    %1738 = vmatpush1.msra.mxu0 %v1737
    %v1739 = vand.u32 %v844, 4294901760
    %1740 = vmatprep.subr.mxu0 %v1739
    %v1741 = vand.u32 %v843, 4294901760
    %1742 = vmatpush1.msra.mxu0 %v1741
    %v1743 = vand.u32 %v847, 4294901760
    %1744 = vmatprep.subr.mxu0 %v1743
    %v1745 = vand.u32 %v846, 4294901760
    %1746 = vmatpush1.msra.mxu0 %v1745
    %v1747 = vand.u32 %v850, 4294901760
    %1748 = vmatprep.subr.mxu0 %v1747
    %v1749 = vand.u32 %v849, 4294901760
    %1750 = vmatpush1.msra.mxu0 %v1749
    %v1751 = vand.u32 %v853, 4294901760
    %1752 = vmatprep.subr.mxu0 %v1751
    %v1753 = vand.u32 %v852, 4294901760
    %1754 = vmatpush1.msra.mxu0 %v1753
    %1755 = vmatprep.subr.mxu0 0.0
    %1756 = vmatpush1.msra.mxu0 0.0
    %1757 = vmatprep.subr.mxu0 0.0
    %1758 = vmatpush1.msra.mxu0 0.0
    %1759 = vmatprep.subr.mxu0 0.0
    %1760 = vmatpush1.msra.mxu0 0.0
    %1761 = vmatprep.subr.mxu0 0.0
    %1762 = vmatpush1.msra.mxu0 0.0
    %1763 = vmatprep.subr.mxu0 0.0
    %1764 = vmatpush1.msra.mxu0 0.0
    %1765 = vmatprep.subr.mxu0 0.0
    %1766 = vmatpush1.msra.mxu0 0.0
    %1767 = vmatprep.subr.mxu0 0.0
    %1768 = vmatpush1.msra.mxu0 0.0
    %1769 = vmatprep.subr.mxu0 0.0
    %1770 = vmatpush1.msra.mxu0 0.0
    %1771 = vmatprep.subr.mxu0 0.0
    %1772 = vmatpush1.msra.mxu0 0.0
    %1773 = vmatprep.subr.mxu0 0.0
    %1774 = vmatpush1.msra.mxu0 0.0
    %1775 = vmatprep.subr.mxu0 0.0
    %1776 = vmatpush1.msra.mxu0 0.0
    %1777 = vmatprep.subr.mxu0 0.0
    %1778 = vmatpush1.msra.mxu0 0.0
    %1779 = vmatprep.subr.mxu0 0.0
    %1780 = vmatpush1.msra.mxu0 0.0
    %1781 = vmatprep.subr.mxu0 0.0
    %1782 = vmatpush1.msra.mxu0 0.0
    %1783 = vmatprep.subr.mxu0 0.0
    %1784 = vmatpush1.msra.mxu0 0.0
    %1785 = vmatprep.subr.mxu0 0.0
    %1786 = vmatpush1.msra.mxu0 0.0
    %1787 = vmatprep.mubr.f32.mxu0 0.0
    %v1788 = vand.u32 %v48, 4294901760
    %1789 = vmatmul.mubr.f32.gmra.mrb[0].mxu0 %v1788
    %v1790 = vpop.f32.mrb[0].mxu0
    %v1791 = vadd.f32 %v1673, %v1790
    %v1792 = vpop.f32.mrb[0].mxu0
    %v1793 = vadd.f32 %v1675, %v1792
    %1794 = vmatprep.mubr.f32.mxu0 0.0
    %v1795 = vand.u32 %v49, 4294901760
    %1796 = vmatmul.mubr.f32.gmra.mrb[0].mxu0 %v1795
    %v1797 = vpop.f32.mrb[0].mxu0
    %v1798 = vadd.f32 %v1680, %v1797
    %v1799 = vpop.f32.mrb[0].mxu0
    %v1800 = vadd.f32 %v1682, %v1799
    %1801 = vmatprep.mubr.f32.mxu0 0.0
    %v1802 = vand.u32 %v50, 4294901760
    %1803 = vmatmul.mubr.f32.gmra.mrb[0].mxu0 %v1802
    %v1804 = vpop.f32.mrb[0].mxu0
    %v1805 = vadd.f32 %v1687, %v1804
    %v1806 = vpop.f32.mrb[0].mxu0
    %v1807 = vadd.f32 %v1689, %v1806
    %1808 = vdwg.mxu0
    %1809 = vmatprep.subr.mxu0 0.0
    %v1810 = vand.u32 %v809, 4294901760
    %1811 = vmatpush1.msra.mxu0 %v1810
    %1812 = vmatprep.subr.mxu0 0.0
    %v1813 = vand.u32 %v812, 4294901760
    %1814 = vmatpush1.msra.mxu0 %v1813
    %1815 = vmatprep.subr.mxu0 0.0
    %v1816 = vand.u32 %v815, 4294901760
    %1817 = vmatpush1.msra.mxu0 %v1816
    %1818 = vmatprep.subr.mxu0 0.0
    %v1819 = vand.u32 %v818, 4294901760
    %1820 = vmatpush1.msra.mxu0 %v1819
    %1821 = vmatprep.subr.mxu0 0.0
    %v1822 = vand.u32 %v821, 4294901760
    %1823 = vmatpush1.msra.mxu0 %v1822
    %1824 = vmatprep.subr.mxu0 0.0
    %v1825 = vand.u32 %v824, 4294901760
    %1826 = vmatpush1.msra.mxu0 %v1825
    %1827 = vmatprep.subr.mxu0 0.0
    %v1828 = vand.u32 %v827, 4294901760
    %1829 = vmatpush1.msra.mxu0 %v1828
    %1830 = vmatprep.subr.mxu0 0.0
    %v1831 = vand.u32 %v830, 4294901760
    %1832 = vmatpush1.msra.mxu0 %v1831
    %1833 = vmatprep.subr.mxu0 0.0
    %v1834 = vand.u32 %v833, 4294901760
    %1835 = vmatpush1.msra.mxu0 %v1834
    %1836 = vmatprep.subr.mxu0 0.0
    %v1837 = vand.u32 %v836, 4294901760
    %1838 = vmatpush1.msra.mxu0 %v1837
    %1839 = vmatprep.subr.mxu0 0.0
    %v1840 = vand.u32 %v839, 4294901760
    %1841 = vmatpush1.msra.mxu0 %v1840
    %1842 = vmatprep.subr.mxu0 0.0
    %v1843 = vand.u32 %v842, 4294901760
    %1844 = vmatpush1.msra.mxu0 %v1843
    %1845 = vmatprep.subr.mxu0 0.0
    %v1846 = vand.u32 %v845, 4294901760
    %1847 = vmatpush1.msra.mxu0 %v1846
    %1848 = vmatprep.subr.mxu0 0.0
    %v1849 = vand.u32 %v848, 4294901760
    %1850 = vmatpush1.msra.mxu0 %v1849
    %1851 = vmatprep.subr.mxu0 0.0
    %v1852 = vand.u32 %v851, 4294901760
    %1853 = vmatpush1.msra.mxu0 %v1852
    %1854 = vmatprep.subr.mxu0 0.0
    %v1855 = vand.u32 %v854, 4294901760
    %1856 = vmatpush1.msra.mxu0 %v1855
    %1857 = vmatprep.subr.mxu0 0.0
    %1858 = vmatpush1.msra.mxu0 0.0
    %1859 = vmatprep.subr.mxu0 0.0
    %1860 = vmatpush1.msra.mxu0 0.0
    %1861 = vmatprep.subr.mxu0 0.0
    %1862 = vmatpush1.msra.mxu0 0.0
    %1863 = vmatprep.subr.mxu0 0.0
    %1864 = vmatpush1.msra.mxu0 0.0
    %1865 = vmatprep.subr.mxu0 0.0
    %1866 = vmatpush1.msra.mxu0 0.0
    %1867 = vmatprep.subr.mxu0 0.0
    %1868 = vmatpush1.msra.mxu0 0.0
    %1869 = vmatprep.subr.mxu0 0.0
    %1870 = vmatpush1.msra.mxu0 0.0
    %1871 = vmatprep.subr.mxu0 0.0
    %1872 = vmatpush1.msra.mxu0 0.0
    %1873 = vmatprep.subr.mxu0 0.0
    %1874 = vmatpush1.msra.mxu0 0.0
    %1875 = vmatprep.subr.mxu0 0.0
    %1876 = vmatpush1.msra.mxu0 0.0
    %1877 = vmatprep.subr.mxu0 0.0
    %1878 = vmatpush1.msra.mxu0 0.0
    %1879 = vmatprep.subr.mxu0 0.0
    %1880 = vmatpush1.msra.mxu0 0.0
    %1881 = vmatprep.subr.mxu0 0.0
    %1882 = vmatpush1.msra.mxu0 0.0
    %1883 = vmatprep.subr.mxu0 0.0
    %1884 = vmatpush1.msra.mxu0 0.0
    %1885 = vmatprep.subr.mxu0 0.0
    %1886 = vmatpush1.msra.mxu0 0.0
    %1887 = vmatprep.subr.mxu0 0.0
    %1888 = vmatpush1.msra.mxu0 0.0
    %1889 = vmatprep.mubr.f32.mxu0 0.0
    %v1890 = vand.u32 %v48, 4294901760
    %v1891 = vsub.f32 %v48, %v1890
    %v1892 = vand.u32 %v1891, 4294901760
    %v1893 = vsub.f32 %v1891, %v1892
    %v1894 = vand.u32 %v1893, 4294901760
    %1895 = vmatmul.mubr.f32.gmra.mrb[0].mxu0 %v1894
    %v1896 = vpop.f32.mrb[0].mxu0
    %v1897 = vadd.f32 0.0, %v1896
    %v1898 = vpop.f32.mrb[0].mxu0
    %1899 = vmatprep.mubr.f32.mxu0 0.0
    %v1900 = vand.u32 %v49, 4294901760
    %v1901 = vsub.f32 %v49, %v1900
    %v1902 = vand.u32 %v1901, 4294901760
    %v1903 = vsub.f32 %v1901, %v1902
    %v1904 = vand.u32 %v1903, 4294901760
    %1905 = vmatmul.mubr.f32.gmra.mrb[0].mxu0 %v1904
    %v1906 = vpop.f32.mrb[0].mxu0
    %v1907 = vadd.f32 0.0, %v1906
    %v1908 = vpop.f32.mrb[0].mxu0
    %1909 = vmatprep.mubr.f32.mxu0 0.0
    %v1910 = vand.u32 %v50, 4294901760
    %v1911 = vsub.f32 %v50, %v1910
    %v1912 = vand.u32 %v1911, 4294901760
    %v1913 = vsub.f32 %v1911, %v1912
    %v1914 = vand.u32 %v1913, 4294901760
    %1915 = vmatmul.mubr.f32.gmra.mrb[0].mxu0 %v1914
    %v1916 = vpop.f32.mrb[0].mxu0
    %v1917 = vadd.f32 0.0, %v1916
    %v1918 = vpop.f32.mrb[0].mxu0
    %1919 = vdwg.mxu0
    %1920 = vmatprep.subr.mxu0 0.0
    %v1921 = vand.u32 %v809, 4294901760
    %v1922 = vsub.f32 %v809, %v1921
    %v1923 = vand.u32 %v1922, 4294901760
    %v1924 = vsub.f32 %v1922, %v1923
    %v1925 = vand.u32 %v1924, 4294901760
    %1926 = vmatpush1.msra.mxu0 %v1925
    %1927 = vmatprep.subr.mxu0 0.0
    %v1928 = vand.u32 %v812, 4294901760
    %v1929 = vsub.f32 %v812, %v1928
    %v1930 = vand.u32 %v1929, 4294901760
    %v1931 = vsub.f32 %v1929, %v1930
    %v1932 = vand.u32 %v1931, 4294901760
    %1933 = vmatpush1.msra.mxu0 %v1932
    %1934 = vmatprep.subr.mxu0 0.0
    %v1935 = vand.u32 %v815, 4294901760
    %v1936 = vsub.f32 %v815, %v1935
    %v1937 = vand.u32 %v1936, 4294901760
    %v1938 = vsub.f32 %v1936, %v1937
    %v1939 = vand.u32 %v1938, 4294901760
    %1940 = vmatpush1.msra.mxu0 %v1939
    %1941 = vmatprep.subr.mxu0 0.0
    %v1942 = vand.u32 %v818, 4294901760
    %v1943 = vsub.f32 %v818, %v1942
    %v1944 = vand.u32 %v1943, 4294901760
    %v1945 = vsub.f32 %v1943, %v1944
    %v1946 = vand.u32 %v1945, 4294901760
    %1947 = vmatpush1.msra.mxu0 %v1946
    %1948 = vmatprep.subr.mxu0 0.0
    %v1949 = vand.u32 %v821, 4294901760
    %v1950 = vsub.f32 %v821, %v1949
    %v1951 = vand.u32 %v1950, 4294901760
    %v1952 = vsub.f32 %v1950, %v1951
    %v1953 = vand.u32 %v1952, 4294901760
    %1954 = vmatpush1.msra.mxu0 %v1953
    %1955 = vmatprep.subr.mxu0 0.0
    %v1956 = vand.u32 %v824, 4294901760
    %v1957 = vsub.f32 %v824, %v1956
    %v1958 = vand.u32 %v1957, 4294901760
    %v1959 = vsub.f32 %v1957, %v1958
    %v1960 = vand.u32 %v1959, 4294901760
    %1961 = vmatpush1.msra.mxu0 %v1960
    %1962 = vmatprep.subr.mxu0 0.0
    %v1963 = vand.u32 %v827, 4294901760
    %v1964 = vsub.f32 %v827, %v1963
    %v1965 = vand.u32 %v1964, 4294901760
    %v1966 = vsub.f32 %v1964, %v1965
    %v1967 = vand.u32 %v1966, 4294901760
    %1968 = vmatpush1.msra.mxu0 %v1967
    %1969 = vmatprep.subr.mxu0 0.0
    %v1970 = vand.u32 %v830, 4294901760
    %v1971 = vsub.f32 %v830, %v1970
    %v1972 = vand.u32 %v1971, 4294901760
    %v1973 = vsub.f32 %v1971, %v1972
    %v1974 = vand.u32 %v1973, 4294901760
    %1975 = vmatpush1.msra.mxu0 %v1974
    %1976 = vmatprep.subr.mxu0 0.0
    %v1977 = vand.u32 %v833, 4294901760
    %v1978 = vsub.f32 %v833, %v1977
    %v1979 = vand.u32 %v1978, 4294901760
    %v1980 = vsub.f32 %v1978, %v1979
    %v1981 = vand.u32 %v1980, 4294901760
    %1982 = vmatpush1.msra.mxu0 %v1981
    %1983 = vmatprep.subr.mxu0 0.0
    %v1984 = vand.u32 %v836, 4294901760
    %v1985 = vsub.f32 %v836, %v1984
    %v1986 = vand.u32 %v1985, 4294901760
    %v1987 = vsub.f32 %v1985, %v1986
    %v1988 = vand.u32 %v1987, 4294901760
    %1989 = vmatpush1.msra.mxu0 %v1988
    %1990 = vmatprep.subr.mxu0 0.0
    %v1991 = vand.u32 %v839, 4294901760
    %v1992 = vsub.f32 %v839, %v1991
    %v1993 = vand.u32 %v1992, 4294901760
    %v1994 = vsub.f32 %v1992, %v1993
    %v1995 = vand.u32 %v1994, 4294901760
    %1996 = vmatpush1.msra.mxu0 %v1995
    %1997 = vmatprep.subr.mxu0 0.0
    %v1998 = vand.u32 %v842, 4294901760
    %v1999 = vsub.f32 %v842, %v1998
    %v2000 = vand.u32 %v1999, 4294901760
    %v2001 = vsub.f32 %v1999, %v2000
    %v2002 = vand.u32 %v2001, 4294901760
    %2003 = vmatpush1.msra.mxu0 %v2002
    %2004 = vmatprep.subr.mxu0 0.0
    %v2005 = vand.u32 %v845, 4294901760
    %v2006 = vsub.f32 %v845, %v2005
    %v2007 = vand.u32 %v2006, 4294901760
    %v2008 = vsub.f32 %v2006, %v2007
    %v2009 = vand.u32 %v2008, 4294901760
    %2010 = vmatpush1.msra.mxu0 %v2009
    %2011 = vmatprep.subr.mxu0 0.0
    %v2012 = vand.u32 %v848, 4294901760
    %v2013 = vsub.f32 %v848, %v2012
    %v2014 = vand.u32 %v2013, 4294901760
    %v2015 = vsub.f32 %v2013, %v2014
    %v2016 = vand.u32 %v2015, 4294901760
    %2017 = vmatpush1.msra.mxu0 %v2016
    %2018 = vmatprep.subr.mxu0 0.0
    %v2019 = vand.u32 %v851, 4294901760
    %v2020 = vsub.f32 %v851, %v2019
    %v2021 = vand.u32 %v2020, 4294901760
    %v2022 = vsub.f32 %v2020, %v2021
    %v2023 = vand.u32 %v2022, 4294901760
    %2024 = vmatpush1.msra.mxu0 %v2023
    %2025 = vmatprep.subr.mxu0 0.0
    %v2026 = vand.u32 %v854, 4294901760
    %v2027 = vsub.f32 %v854, %v2026
    %v2028 = vand.u32 %v2027, 4294901760
    %v2029 = vsub.f32 %v2027, %v2028
    %v2030 = vand.u32 %v2029, 4294901760
    %2031 = vmatpush1.msra.mxu0 %v2030
    %2032 = vmatprep.subr.mxu0 0.0
    %2033 = vmatpush1.msra.mxu0 0.0
    %2034 = vmatprep.subr.mxu0 0.0
    %2035 = vmatpush1.msra.mxu0 0.0
    %2036 = vmatprep.subr.mxu0 0.0
    %2037 = vmatpush1.msra.mxu0 0.0
    %2038 = vmatprep.subr.mxu0 0.0
    %2039 = vmatpush1.msra.mxu0 0.0
    %2040 = vmatprep.subr.mxu0 0.0
    %2041 = vmatpush1.msra.mxu0 0.0
    %2042 = vmatprep.subr.mxu0 0.0
    %2043 = vmatpush1.msra.mxu0 0.0
    %2044 = vmatprep.subr.mxu0 0.0
    %2045 = vmatpush1.msra.mxu0 0.0
    %2046 = vmatprep.subr.mxu0 0.0
    %2047 = vmatpush1.msra.mxu0 0.0
    %2048 = vmatprep.subr.mxu0 0.0
    %2049 = vmatpush1.msra.mxu0 0.0
    %2050 = vmatprep.subr.mxu0 0.0
    %2051 = vmatpush1.msra.mxu0 0.0
    %2052 = vmatprep.subr.mxu0 0.0
    %2053 = vmatpush1.msra.mxu0 0.0
    %2054 = vmatprep.subr.mxu0 0.0
    %2055 = vmatpush1.msra.mxu0 0.0
    %2056 = vmatprep.subr.mxu0 0.0
    %2057 = vmatpush1.msra.mxu0 0.0
    %2058 = vmatprep.subr.mxu0 0.0
    %2059 = vmatpush1.msra.mxu0 0.0
    %2060 = vmatprep.subr.mxu0 0.0
    %2061 = vmatpush1.msra.mxu0 0.0
    %2062 = vmatprep.subr.mxu0 0.0
    %2063 = vmatpush1.msra.mxu0 0.0
    %2064 = vmatprep.mubr.f32.mxu0 0.0
    %v2065 = vand.u32 %v48, 4294901760
    %2066 = vmatmul.mubr.f32.gmra.mrb[0].mxu0 %v2065
    %v2067 = vpop.f32.mrb[0].mxu0
    %v2068 = vadd.f32 %v1897, %v2067
    %v2069 = vpop.f32.mrb[0].mxu0
    %2070 = vmatprep.mubr.f32.mxu0 0.0
    %v2071 = vand.u32 %v49, 4294901760
    %2072 = vmatmul.mubr.f32.gmra.mrb[0].mxu0 %v2071
    %v2073 = vpop.f32.mrb[0].mxu0
    %v2074 = vadd.f32 %v1907, %v2073
    %v2075 = vpop.f32.mrb[0].mxu0
    %2076 = vmatprep.mubr.f32.mxu0 0.0
    %v2077 = vand.u32 %v50, 4294901760
    %2078 = vmatmul.mubr.f32.gmra.mrb[0].mxu0 %v2077
    %v2079 = vpop.f32.mrb[0].mxu0
    %v2080 = vadd.f32 %v1917, %v2079
    %v2081 = vpop.f32.mrb[0].mxu0
    %2082 = vdwg.mxu0
    %2083 = vmatprep.subr.mxu0 0.0
    %v2084 = vand.u32 %v809, 4294901760
    %v2085 = vsub.f32 %v809, %v2084
    %2086 = vmatpush1.msra.mxu0 %v2085
    %2087 = vmatprep.subr.mxu0 0.0
    %v2088 = vand.u32 %v812, 4294901760
    %v2089 = vsub.f32 %v812, %v2088
    %2090 = vmatpush1.msra.mxu0 %v2089
    %2091 = vmatprep.subr.mxu0 0.0
    %v2092 = vand.u32 %v815, 4294901760
    %v2093 = vsub.f32 %v815, %v2092
    %2094 = vmatpush1.msra.mxu0 %v2093
    %2095 = vmatprep.subr.mxu0 0.0
    %v2096 = vand.u32 %v818, 4294901760
    %v2097 = vsub.f32 %v818, %v2096
    %2098 = vmatpush1.msra.mxu0 %v2097
    %2099 = vmatprep.subr.mxu0 0.0
    %v2100 = vand.u32 %v821, 4294901760
    %v2101 = vsub.f32 %v821, %v2100
    %2102 = vmatpush1.msra.mxu0 %v2101
    %2103 = vmatprep.subr.mxu0 0.0
    %v2104 = vand.u32 %v824, 4294901760
    %v2105 = vsub.f32 %v824, %v2104
    %2106 = vmatpush1.msra.mxu0 %v2105
    %2107 = vmatprep.subr.mxu0 0.0
    %v2108 = vand.u32 %v827, 4294901760
    %v2109 = vsub.f32 %v827, %v2108
    %2110 = vmatpush1.msra.mxu0 %v2109
    %2111 = vmatprep.subr.mxu0 0.0
    %v2112 = vand.u32 %v830, 4294901760
    %v2113 = vsub.f32 %v830, %v2112
    %2114 = vmatpush1.msra.mxu0 %v2113
    %2115 = vmatprep.subr.mxu0 0.0
    %v2116 = vand.u32 %v833, 4294901760
    %v2117 = vsub.f32 %v833, %v2116
    %2118 = vmatpush1.msra.mxu0 %v2117
    %2119 = vmatprep.subr.mxu0 0.0
    %v2120 = vand.u32 %v836, 4294901760
    %v2121 = vsub.f32 %v836, %v2120
    %2122 = vmatpush1.msra.mxu0 %v2121
    %2123 = vmatprep.subr.mxu0 0.0
    %v2124 = vand.u32 %v839, 4294901760
    %v2125 = vsub.f32 %v839, %v2124
    %2126 = vmatpush1.msra.mxu0 %v2125
    %2127 = vmatprep.subr.mxu0 0.0
    %v2128 = vand.u32 %v842, 4294901760
    %v2129 = vsub.f32 %v842, %v2128
    %2130 = vmatpush1.msra.mxu0 %v2129
    %2131 = vmatprep.subr.mxu0 0.0
    %v2132 = vand.u32 %v845, 4294901760
    %v2133 = vsub.f32 %v845, %v2132
    %2134 = vmatpush1.msra.mxu0 %v2133
    %2135 = vmatprep.subr.mxu0 0.0
    %v2136 = vand.u32 %v848, 4294901760
    %v2137 = vsub.f32 %v848, %v2136
    %2138 = vmatpush1.msra.mxu0 %v2137
    %2139 = vmatprep.subr.mxu0 0.0
    %v2140 = vand.u32 %v851, 4294901760
    %v2141 = vsub.f32 %v851, %v2140
    %2142 = vmatpush1.msra.mxu0 %v2141
    %2143 = vmatprep.subr.mxu0 0.0
    %v2144 = vand.u32 %v854, 4294901760
    %v2145 = vsub.f32 %v854, %v2144
    %2146 = vmatpush1.msra.mxu0 %v2145
    %2147 = vmatprep.subr.mxu0 0.0
    %2148 = vmatpush1.msra.mxu0 0.0
    %2149 = vmatprep.subr.mxu0 0.0
    %2150 = vmatpush1.msra.mxu0 0.0
    %2151 = vmatprep.subr.mxu0 0.0
    %2152 = vmatpush1.msra.mxu0 0.0
    %2153 = vmatprep.subr.mxu0 0.0
    %2154 = vmatpush1.msra.mxu0 0.0
    %2155 = vmatprep.subr.mxu0 0.0
    %2156 = vmatpush1.msra.mxu0 0.0
    %2157 = vmatprep.subr.mxu0 0.0
    %2158 = vmatpush1.msra.mxu0 0.0
    %2159 = vmatprep.subr.mxu0 0.0
    %2160 = vmatpush1.msra.mxu0 0.0
    %2161 = vmatprep.subr.mxu0 0.0
    %2162 = vmatpush1.msra.mxu0 0.0
    %2163 = vmatprep.subr.mxu0 0.0
    %2164 = vmatpush1.msra.mxu0 0.0
    %2165 = vmatprep.subr.mxu0 0.0
    %2166 = vmatpush1.msra.mxu0 0.0
    %2167 = vmatprep.subr.mxu0 0.0
    %2168 = vmatpush1.msra.mxu0 0.0
    %2169 = vmatprep.subr.mxu0 0.0
    %2170 = vmatpush1.msra.mxu0 0.0
    %2171 = vmatprep.subr.mxu0 0.0
    %2172 = vmatpush1.msra.mxu0 0.0
    %2173 = vmatprep.subr.mxu0 0.0
    %2174 = vmatpush1.msra.mxu0 0.0
    %2175 = vmatprep.subr.mxu0 0.0
    %2176 = vmatpush1.msra.mxu0 0.0
    %2177 = vmatprep.subr.mxu0 0.0
    %2178 = vmatpush1.msra.mxu0 0.0
    %2179 = vmatprep.mubr.f32.mxu0 0.0
    %v2180 = vand.u32 %v48, 4294901760
    %v2181 = vsub.f32 %v48, %v2180
    %2182 = vmatmul.mubr.f32.gmra.mrb[0].mxu0 %v2181
    %v2183 = vpop.f32.mrb[0].mxu0
    %v2184 = vadd.f32 %v2068, %v2183
    %v2185 = vpop.f32.mrb[0].mxu0
    %2186 = vmatprep.mubr.f32.mxu0 0.0
    %v2187 = vand.u32 %v49, 4294901760
    %v2188 = vsub.f32 %v49, %v2187
    %2189 = vmatmul.mubr.f32.gmra.mrb[0].mxu0 %v2188
    %v2190 = vpop.f32.mrb[0].mxu0
    %v2191 = vadd.f32 %v2074, %v2190
    %v2192 = vpop.f32.mrb[0].mxu0
    %2193 = vmatprep.mubr.f32.mxu0 0.0
    %v2194 = vand.u32 %v50, 4294901760
    %v2195 = vsub.f32 %v50, %v2194
    %2196 = vmatmul.mubr.f32.gmra.mrb[0].mxu0 %v2195
    %v2197 = vpop.f32.mrb[0].mxu0
    %v2198 = vadd.f32 %v2080, %v2197
    %v2199 = vpop.f32.mrb[0].mxu0
    %2200 = vdwg.mxu0
    %2201 = vmatprep.subr.mxu0 0.0
    %v2202 = vand.u32 %v809, 4294901760
    %2203 = vmatpush1.msra.mxu0 %v2202
    %2204 = vmatprep.subr.mxu0 0.0
    %v2205 = vand.u32 %v812, 4294901760
    %2206 = vmatpush1.msra.mxu0 %v2205
    %2207 = vmatprep.subr.mxu0 0.0
    %v2208 = vand.u32 %v815, 4294901760
    %2209 = vmatpush1.msra.mxu0 %v2208
    %2210 = vmatprep.subr.mxu0 0.0
    %v2211 = vand.u32 %v818, 4294901760
    %2212 = vmatpush1.msra.mxu0 %v2211
    %2213 = vmatprep.subr.mxu0 0.0
    %v2214 = vand.u32 %v821, 4294901760
    %2215 = vmatpush1.msra.mxu0 %v2214
    %2216 = vmatprep.subr.mxu0 0.0
    %v2217 = vand.u32 %v824, 4294901760
    %2218 = vmatpush1.msra.mxu0 %v2217
    %2219 = vmatprep.subr.mxu0 0.0
    %v2220 = vand.u32 %v827, 4294901760
    %2221 = vmatpush1.msra.mxu0 %v2220
    %2222 = vmatprep.subr.mxu0 0.0
    %v2223 = vand.u32 %v830, 4294901760
    %2224 = vmatpush1.msra.mxu0 %v2223
    %2225 = vmatprep.subr.mxu0 0.0
    %v2226 = vand.u32 %v833, 4294901760
    %2227 = vmatpush1.msra.mxu0 %v2226
    %2228 = vmatprep.subr.mxu0 0.0
    %v2229 = vand.u32 %v836, 4294901760
    %2230 = vmatpush1.msra.mxu0 %v2229
    %2231 = vmatprep.subr.mxu0 0.0
    %v2232 = vand.u32 %v839, 4294901760
    %2233 = vmatpush1.msra.mxu0 %v2232
    %2234 = vmatprep.subr.mxu0 0.0
    %v2235 = vand.u32 %v842, 4294901760
    %2236 = vmatpush1.msra.mxu0 %v2235
    %2237 = vmatprep.subr.mxu0 0.0
    %v2238 = vand.u32 %v845, 4294901760
    %2239 = vmatpush1.msra.mxu0 %v2238
    %2240 = vmatprep.subr.mxu0 0.0
    %v2241 = vand.u32 %v848, 4294901760
    %2242 = vmatpush1.msra.mxu0 %v2241
    %2243 = vmatprep.subr.mxu0 0.0
    %v2244 = vand.u32 %v851, 4294901760
    %2245 = vmatpush1.msra.mxu0 %v2244
    %2246 = vmatprep.subr.mxu0 0.0
    %v2247 = vand.u32 %v854, 4294901760
    %2248 = vmatpush1.msra.mxu0 %v2247
    %2249 = vmatprep.subr.mxu0 0.0
    %2250 = vmatpush1.msra.mxu0 0.0
    %2251 = vmatprep.subr.mxu0 0.0
    %2252 = vmatpush1.msra.mxu0 0.0
    %2253 = vmatprep.subr.mxu0 0.0
    %2254 = vmatpush1.msra.mxu0 0.0
    %2255 = vmatprep.subr.mxu0 0.0
    %2256 = vmatpush1.msra.mxu0 0.0
    %2257 = vmatprep.subr.mxu0 0.0
    %2258 = vmatpush1.msra.mxu0 0.0
    %2259 = vmatprep.subr.mxu0 0.0
    %2260 = vmatpush1.msra.mxu0 0.0
    %2261 = vmatprep.subr.mxu0 0.0
    %2262 = vmatpush1.msra.mxu0 0.0
    %2263 = vmatprep.subr.mxu0 0.0
    %2264 = vmatpush1.msra.mxu0 0.0
    %2265 = vmatprep.subr.mxu0 0.0
    %2266 = vmatpush1.msra.mxu0 0.0
    %2267 = vmatprep.subr.mxu0 0.0
    %2268 = vmatpush1.msra.mxu0 0.0
    %2269 = vmatprep.subr.mxu0 0.0
    %2270 = vmatpush1.msra.mxu0 0.0
    %2271 = vmatprep.subr.mxu0 0.0
    %2272 = vmatpush1.msra.mxu0 0.0
    %2273 = vmatprep.subr.mxu0 0.0
    %2274 = vmatpush1.msra.mxu0 0.0
    %2275 = vmatprep.subr.mxu0 0.0
    %2276 = vmatpush1.msra.mxu0 0.0
    %2277 = vmatprep.subr.mxu0 0.0
    %2278 = vmatpush1.msra.mxu0 0.0
    %2279 = vmatprep.subr.mxu0 0.0
    %2280 = vmatpush1.msra.mxu0 0.0
    %2281 = vmatprep.mubr.f32.mxu0 0.0
    %v2282 = vand.u32 %v48, 4294901760
    %v2283 = vsub.f32 %v48, %v2282
    %v2284 = vand.u32 %v2283, 4294901760
    %2285 = vmatmul.mubr.f32.gmra.mrb[0].mxu0 %v2284
    %v2286 = vpop.f32.mrb[0].mxu0
    %v2287 = vadd.f32 %v2184, %v2286
    %v2288 = vpop.f32.mrb[0].mxu0
    %2289 = vmatprep.mubr.f32.mxu0 0.0
    %v2290 = vand.u32 %v49, 4294901760
    %v2291 = vsub.f32 %v49, %v2290
    %v2292 = vand.u32 %v2291, 4294901760
    %2293 = vmatmul.mubr.f32.gmra.mrb[0].mxu0 %v2292
    %v2294 = vpop.f32.mrb[0].mxu0
    %v2295 = vadd.f32 %v2191, %v2294
    %v2296 = vpop.f32.mrb[0].mxu0
    %2297 = vmatprep.mubr.f32.mxu0 0.0
    %v2298 = vand.u32 %v50, 4294901760
    %v2299 = vsub.f32 %v50, %v2298
    %v2300 = vand.u32 %v2299, 4294901760
    %2301 = vmatmul.mubr.f32.gmra.mrb[0].mxu0 %v2300
    %v2302 = vpop.f32.mrb[0].mxu0
    %v2303 = vadd.f32 %v2198, %v2302
    %v2304 = vpop.f32.mrb[0].mxu0
    %2305 = vdwg.mxu0
    %2306 = vmatprep.subr.mxu0 0.0
    %v2307 = vand.u32 %v809, 4294901760
    %v2308 = vsub.f32 %v809, %v2307
    %v2309 = vand.u32 %v2308, 4294901760
    %2310 = vmatpush1.msra.mxu0 %v2309
    %2311 = vmatprep.subr.mxu0 0.0
    %v2312 = vand.u32 %v812, 4294901760
    %v2313 = vsub.f32 %v812, %v2312
    %v2314 = vand.u32 %v2313, 4294901760
    %2315 = vmatpush1.msra.mxu0 %v2314
    %2316 = vmatprep.subr.mxu0 0.0
    %v2317 = vand.u32 %v815, 4294901760
    %v2318 = vsub.f32 %v815, %v2317
    %v2319 = vand.u32 %v2318, 4294901760
    %2320 = vmatpush1.msra.mxu0 %v2319
    %2321 = vmatprep.subr.mxu0 0.0
    %v2322 = vand.u32 %v818, 4294901760
    %v2323 = vsub.f32 %v818, %v2322
    %v2324 = vand.u32 %v2323, 4294901760
    %2325 = vmatpush1.msra.mxu0 %v2324
    %2326 = vmatprep.subr.mxu0 0.0
    %v2327 = vand.u32 %v821, 4294901760
    %v2328 = vsub.f32 %v821, %v2327
    %v2329 = vand.u32 %v2328, 4294901760
    %2330 = vmatpush1.msra.mxu0 %v2329
    %2331 = vmatprep.subr.mxu0 0.0
    %v2332 = vand.u32 %v824, 4294901760
    %v2333 = vsub.f32 %v824, %v2332
    %v2334 = vand.u32 %v2333, 4294901760
    %2335 = vmatpush1.msra.mxu0 %v2334
    %2336 = vmatprep.subr.mxu0 0.0
    %v2337 = vand.u32 %v827, 4294901760
    %v2338 = vsub.f32 %v827, %v2337
    %v2339 = vand.u32 %v2338, 4294901760
    %2340 = vmatpush1.msra.mxu0 %v2339
    %2341 = vmatprep.subr.mxu0 0.0
    %v2342 = vand.u32 %v830, 4294901760
    %v2343 = vsub.f32 %v830, %v2342
    %v2344 = vand.u32 %v2343, 4294901760
    %2345 = vmatpush1.msra.mxu0 %v2344
    %2346 = vmatprep.subr.mxu0 0.0
    %v2347 = vand.u32 %v833, 4294901760
    %v2348 = vsub.f32 %v833, %v2347
    %v2349 = vand.u32 %v2348, 4294901760
    %2350 = vmatpush1.msra.mxu0 %v2349
    %2351 = vmatprep.subr.mxu0 0.0
    %v2352 = vand.u32 %v836, 4294901760
    %v2353 = vsub.f32 %v836, %v2352
    %v2354 = vand.u32 %v2353, 4294901760
    %2355 = vmatpush1.msra.mxu0 %v2354
    %2356 = vmatprep.subr.mxu0 0.0
    %v2357 = vand.u32 %v839, 4294901760
    %v2358 = vsub.f32 %v839, %v2357
    %v2359 = vand.u32 %v2358, 4294901760
    %2360 = vmatpush1.msra.mxu0 %v2359
    %2361 = vmatprep.subr.mxu0 0.0
    %v2362 = vand.u32 %v842, 4294901760
    %v2363 = vsub.f32 %v842, %v2362
    %v2364 = vand.u32 %v2363, 4294901760
    %2365 = vmatpush1.msra.mxu0 %v2364
    %2366 = vmatprep.subr.mxu0 0.0
    %v2367 = vand.u32 %v845, 4294901760
    %v2368 = vsub.f32 %v845, %v2367
    %v2369 = vand.u32 %v2368, 4294901760
    %2370 = vmatpush1.msra.mxu0 %v2369
    %2371 = vmatprep.subr.mxu0 0.0
    %v2372 = vand.u32 %v848, 4294901760
    %v2373 = vsub.f32 %v848, %v2372
    %v2374 = vand.u32 %v2373, 4294901760
    %2375 = vmatpush1.msra.mxu0 %v2374
    %2376 = vmatprep.subr.mxu0 0.0
    %v2377 = vand.u32 %v851, 4294901760
    %v2378 = vsub.f32 %v851, %v2377
    %v2379 = vand.u32 %v2378, 4294901760
    %2380 = vmatpush1.msra.mxu0 %v2379
    %2381 = vmatprep.subr.mxu0 0.0
    %v2382 = vand.u32 %v854, 4294901760
    %v2383 = vsub.f32 %v854, %v2382
    %v2384 = vand.u32 %v2383, 4294901760
    %2385 = vmatpush1.msra.mxu0 %v2384
    %2386 = vmatprep.subr.mxu0 0.0
    %2387 = vmatpush1.msra.mxu0 0.0
    %2388 = vmatprep.subr.mxu0 0.0
    %2389 = vmatpush1.msra.mxu0 0.0
    %2390 = vmatprep.subr.mxu0 0.0
    %2391 = vmatpush1.msra.mxu0 0.0
    %2392 = vmatprep.subr.mxu0 0.0
    %2393 = vmatpush1.msra.mxu0 0.0
    %2394 = vmatprep.subr.mxu0 0.0
    %2395 = vmatpush1.msra.mxu0 0.0
    %2396 = vmatprep.subr.mxu0 0.0
    %2397 = vmatpush1.msra.mxu0 0.0
    %2398 = vmatprep.subr.mxu0 0.0
    %2399 = vmatpush1.msra.mxu0 0.0
    %2400 = vmatprep.subr.mxu0 0.0
    %2401 = vmatpush1.msra.mxu0 0.0
    %2402 = vmatprep.subr.mxu0 0.0
    %2403 = vmatpush1.msra.mxu0 0.0
    %2404 = vmatprep.subr.mxu0 0.0
    %2405 = vmatpush1.msra.mxu0 0.0
    %2406 = vmatprep.subr.mxu0 0.0
    %2407 = vmatpush1.msra.mxu0 0.0
    %2408 = vmatprep.subr.mxu0 0.0
    %2409 = vmatpush1.msra.mxu0 0.0
    %2410 = vmatprep.subr.mxu0 0.0
    %2411 = vmatpush1.msra.mxu0 0.0
    %2412 = vmatprep.subr.mxu0 0.0
    %2413 = vmatpush1.msra.mxu0 0.0
    %2414 = vmatprep.subr.mxu0 0.0
    %2415 = vmatpush1.msra.mxu0 0.0
    %2416 = vmatprep.subr.mxu0 0.0
    %2417 = vmatpush1.msra.mxu0 0.0
    %2418 = vmatprep.mubr.f32.mxu0 0.0
    %v2419 = vand.u32 %v48, 4294901760
    %2420 = vmatmul.mubr.f32.gmra.mrb[0].mxu0 %v2419
    %v2421 = vpop.f32.mrb[0].mxu0
    %v2422 = vadd.f32 %v2287, %v2421
    %v2423 = vpop.f32.mrb[0].mxu0
    %2424 = vmatprep.mubr.f32.mxu0 0.0
    %v2425 = vand.u32 %v49, 4294901760
    %2426 = vmatmul.mubr.f32.gmra.mrb[0].mxu0 %v2425
    %v2427 = vpop.f32.mrb[0].mxu0
    %v2428 = vadd.f32 %v2295, %v2427
    %v2429 = vpop.f32.mrb[0].mxu0
    %2430 = vmatprep.mubr.f32.mxu0 0.0
    %v2431 = vand.u32 %v50, 4294901760
    %2432 = vmatmul.mubr.f32.gmra.mrb[0].mxu0 %v2431
    %v2433 = vpop.f32.mrb[0].mxu0
    %v2434 = vadd.f32 %v2303, %v2433
    %v2435 = vpop.f32.mrb[0].mxu0
    %2436 = vdwg.mxu0
    %2437 = vmatprep.subr.mxu0 0.0
    %v2438 = vand.u32 %v809, 4294901760
    %2439 = vmatpush1.msra.mxu0 %v2438
    %2440 = vmatprep.subr.mxu0 0.0
    %v2441 = vand.u32 %v812, 4294901760
    %2442 = vmatpush1.msra.mxu0 %v2441
    %2443 = vmatprep.subr.mxu0 0.0
    %v2444 = vand.u32 %v815, 4294901760
    %2445 = vmatpush1.msra.mxu0 %v2444
    %2446 = vmatprep.subr.mxu0 0.0
    %v2447 = vand.u32 %v818, 4294901760
    %2448 = vmatpush1.msra.mxu0 %v2447
    %2449 = vmatprep.subr.mxu0 0.0
    %v2450 = vand.u32 %v821, 4294901760
    %2451 = vmatpush1.msra.mxu0 %v2450
    %2452 = vmatprep.subr.mxu0 0.0
    %v2453 = vand.u32 %v824, 4294901760
    %2454 = vmatpush1.msra.mxu0 %v2453
    %2455 = vmatprep.subr.mxu0 0.0
    %v2456 = vand.u32 %v827, 4294901760
    %2457 = vmatpush1.msra.mxu0 %v2456
    %2458 = vmatprep.subr.mxu0 0.0
    %v2459 = vand.u32 %v830, 4294901760
    %2460 = vmatpush1.msra.mxu0 %v2459
    %2461 = vmatprep.subr.mxu0 0.0
    %v2462 = vand.u32 %v833, 4294901760
    %2463 = vmatpush1.msra.mxu0 %v2462
    %2464 = vmatprep.subr.mxu0 0.0
    %v2465 = vand.u32 %v836, 4294901760
    %2466 = vmatpush1.msra.mxu0 %v2465
    %2467 = vmatprep.subr.mxu0 0.0
    %v2468 = vand.u32 %v839, 4294901760
    %2469 = vmatpush1.msra.mxu0 %v2468
    %2470 = vmatprep.subr.mxu0 0.0
    %v2471 = vand.u32 %v842, 4294901760
    %2472 = vmatpush1.msra.mxu0 %v2471
    %2473 = vmatprep.subr.mxu0 0.0
    %v2474 = vand.u32 %v845, 4294901760
    %2475 = vmatpush1.msra.mxu0 %v2474
    %2476 = vmatprep.subr.mxu0 0.0
    %v2477 = vand.u32 %v848, 4294901760
    %2478 = vmatpush1.msra.mxu0 %v2477
    %2479 = vmatprep.subr.mxu0 0.0
    %v2480 = vand.u32 %v851, 4294901760
    %2481 = vmatpush1.msra.mxu0 %v2480
    %2482 = vmatprep.subr.mxu0 0.0
    %v2483 = vand.u32 %v854, 4294901760
    %2484 = vmatpush1.msra.mxu0 %v2483
    %2485 = vmatprep.subr.mxu0 0.0
    %2486 = vmatpush1.msra.mxu0 0.0
    %2487 = vmatprep.subr.mxu0 0.0
    %2488 = vmatpush1.msra.mxu0 0.0
    %2489 = vmatprep.subr.mxu0 0.0
    %2490 = vmatpush1.msra.mxu0 0.0
    %2491 = vmatprep.subr.mxu0 0.0
    %2492 = vmatpush1.msra.mxu0 0.0
    %2493 = vmatprep.subr.mxu0 0.0
    %2494 = vmatpush1.msra.mxu0 0.0
    %2495 = vmatprep.subr.mxu0 0.0
    %2496 = vmatpush1.msra.mxu0 0.0
    %2497 = vmatprep.subr.mxu0 0.0
    %2498 = vmatpush1.msra.mxu0 0.0
    %2499 = vmatprep.subr.mxu0 0.0
    %2500 = vmatpush1.msra.mxu0 0.0
    %2501 = vmatprep.subr.mxu0 0.0
    %2502 = vmatpush1.msra.mxu0 0.0
    %2503 = vmatprep.subr.mxu0 0.0
    %2504 = vmatpush1.msra.mxu0 0.0
    %2505 = vmatprep.subr.mxu0 0.0
    %2506 = vmatpush1.msra.mxu0 0.0
    %2507 = vmatprep.subr.mxu0 0.0
    %2508 = vmatpush1.msra.mxu0 0.0
    %2509 = vmatprep.subr.mxu0 0.0
    %2510 = vmatpush1.msra.mxu0 0.0
    %2511 = vmatprep.subr.mxu0 0.0
    %2512 = vmatpush1.msra.mxu0 0.0
    %2513 = vmatprep.subr.mxu0 0.0
    %2514 = vmatpush1.msra.mxu0 0.0
    %2515 = vmatprep.subr.mxu0 0.0
    %2516 = vmatpush1.msra.mxu0 0.0
    %2517 = vmatprep.mubr.f32.mxu0 0.0
    %v2518 = vand.u32 %v48, 4294901760
    %2519 = vmatmul.mubr.f32.gmra.mrb[0].mxu0 %v2518
    %v2520 = vpop.f32.mrb[0].mxu0
    %v2521 = vadd.f32 %v2422, %v2520
    %v2522 = vpop.f32.mrb[0].mxu0
    %2523 = vmatprep.mubr.f32.mxu0 0.0
    %v2524 = vand.u32 %v49, 4294901760
    %2525 = vmatmul.mubr.f32.gmra.mrb[0].mxu0 %v2524
    %v2526 = vpop.f32.mrb[0].mxu0
    %v2527 = vadd.f32 %v2428, %v2526
    %v2528 = vpop.f32.mrb[0].mxu0
    %2529 = vmatprep.mubr.f32.mxu0 0.0
    %v2530 = vand.u32 %v50, 4294901760
    %2531 = vmatmul.mubr.f32.gmra.mrb[0].mxu0 %v2530
    %v2532 = vpop.f32.mrb[0].mxu0
    %v2533 = vadd.f32 %v2434, %v2532
    %v2534 = vpop.f32.mrb[0].mxu0
    %2535 = vdwg.mxu0
    %v2537 = vlaneseq
    %v2538 = vshrl.u32 %v2537, 7
    %v2539 = vsub.s32 0, %v2538
    %v2540 = vrot.slane %v855, %v2539
    %v2542 = vadd.f32 %v2521, %v2540
    %v2543 = vadd.f32 %v2527, %v2540
    %v2544 = vadd.f32 %v2533, %v2540
    %vm2545 = vcmask 195584
    %v2547 = vsel %vm2545, %v51, 0
    %v2550 = vsel %vm2545, %v52, 0
    %v2553 = vsel %vm2545, %v53, 0
    %2555 = vmatprep.subr.mxu0 0.0
    %v2556 = vand.u32 %v1791, 4294901760
    %2557 = vmatpush1.msra.mxu0 %v2556
    %2558 = vmatprep.subr.mxu0 0.0
    %v2559 = vand.u32 %v1798, 4294901760
    %2560 = vmatpush1.msra.mxu0 %v2559
    %2561 = vmatprep.subr.mxu0 0.0
    %v2562 = vand.u32 %v1805, 4294901760
    %2563 = vmatpush1.msra.mxu0 %v2562
    %2564 = vmatprep.subr.mxu0 0.0
    %2565 = vmatpush1.msra.mxu0 0.0
    %2566 = vmatprep.subr.mxu0 0.0
    %2567 = vmatpush1.msra.mxu0 0.0
    %2568 = vmatprep.subr.mxu0 0.0
    %2569 = vmatpush1.msra.mxu0 0.0
    %2570 = vmatprep.subr.mxu0 0.0
    %2571 = vmatpush1.msra.mxu0 0.0
    %2572 = vmatprep.subr.mxu0 0.0
    %2573 = vmatpush1.msra.mxu0 0.0
    %2574 = vmatprep.subr.mxu0 0.0
    %2575 = vmatpush1.msra.mxu0 0.0
    %2576 = vmatprep.subr.mxu0 0.0
    %2577 = vmatpush1.msra.mxu0 0.0
    %2578 = vmatprep.subr.mxu0 0.0
    %2579 = vmatpush1.msra.mxu0 0.0
    %2580 = vmatprep.subr.mxu0 0.0
    %2581 = vmatpush1.msra.mxu0 0.0
    %2582 = vmatprep.subr.mxu0 0.0
    %2583 = vmatpush1.msra.mxu0 0.0
    %2584 = vmatprep.subr.mxu0 0.0
    %2585 = vmatpush1.msra.mxu0 0.0
    %2586 = vmatprep.subr.mxu0 0.0
    %2587 = vmatpush1.msra.mxu0 0.0
    %2588 = vmatprep.subr.mxu0 0.0
    %2589 = vmatpush1.msra.mxu0 0.0
    %2590 = vmatprep.subr.mxu0 0.0
    %2591 = vmatpush1.msra.mxu0 0.0
    %2592 = vmatprep.subr.mxu0 0.0
    %2593 = vmatpush1.msra.mxu0 0.0
    %2594 = vmatprep.subr.mxu0 0.0
    %2595 = vmatpush1.msra.mxu0 0.0
    %2596 = vmatprep.subr.mxu0 0.0
    %2597 = vmatpush1.msra.mxu0 0.0
    %2598 = vmatprep.subr.mxu0 0.0
    %2599 = vmatpush1.msra.mxu0 0.0
    %2600 = vmatprep.subr.mxu0 0.0
    %2601 = vmatpush1.msra.mxu0 0.0
    %2602 = vmatprep.subr.mxu0 0.0
    %2603 = vmatpush1.msra.mxu0 0.0
    %2604 = vmatprep.subr.mxu0 0.0
    %2605 = vmatpush1.msra.mxu0 0.0
    %2606 = vmatprep.subr.mxu0 0.0
    %2607 = vmatpush1.msra.mxu0 0.0
    %2608 = vmatprep.subr.mxu0 0.0
    %2609 = vmatpush1.msra.mxu0 0.0
    %2610 = vmatprep.subr.mxu0 0.0
    %2611 = vmatpush1.msra.mxu0 0.0
    %2612 = vmatprep.subr.mxu0 0.0
    %2613 = vmatpush1.msra.mxu0 0.0
    %2614 = vmatprep.subr.mxu0 0.0
    %2615 = vmatpush1.msra.mxu0 0.0
    %2616 = vmatprep.subr.mxu0 0.0
    %2617 = vmatpush1.msra.mxu0 0.0
    %2618 = vmatprep.subr.mxu0 0.0
    %2619 = vmatpush1.msra.mxu0 0.0
    %2620 = vmatprep.subr.mxu0 0.0
    %2621 = vmatpush1.msra.mxu0 0.0
    %2622 = vmatprep.mubr.f32.mxu0 0.0
    %v2623 = vand.u32 %v2547, 4294901760
    %v2624 = vsub.f32 %v2547, %v2623
    %v2625 = vand.u32 %v2624, 4294901760
    %v2626 = vsub.f32 %v2624, %v2625
    %v2627 = vand.u32 %v2626, 4294901760
    %2628 = vmatmul.mubr.f32.gmra.mrb[0].mxu0 %v2627
    %v2629 = vpop.f32.mrb[0].mxu0
    %v2630 = vadd.f32 0.0, %v2629
    %v2631 = vpop.f32.mrb[0].mxu0
    %2632 = vmatprep.mubr.f32.mxu0 0.0
    %v2633 = vand.u32 %v2550, 4294901760
    %v2634 = vsub.f32 %v2550, %v2633
    %v2635 = vand.u32 %v2634, 4294901760
    %v2636 = vsub.f32 %v2634, %v2635
    %v2637 = vand.u32 %v2636, 4294901760
    %2638 = vmatmul.mubr.f32.gmra.mrb[0].mxu0 %v2637
    %v2639 = vpop.f32.mrb[0].mxu0
    %v2640 = vadd.f32 0.0, %v2639
    %v2641 = vpop.f32.mrb[0].mxu0
    %2642 = vmatprep.mubr.f32.mxu0 0.0
    %v2643 = vand.u32 %v2553, 4294901760
    %v2644 = vsub.f32 %v2553, %v2643
    %v2645 = vand.u32 %v2644, 4294901760
    %v2646 = vsub.f32 %v2644, %v2645
    %v2647 = vand.u32 %v2646, 4294901760
    %2648 = vmatmul.mubr.f32.gmra.mrb[0].mxu0 %v2647
    %v2649 = vpop.f32.mrb[0].mxu0
    %v2650 = vadd.f32 0.0, %v2649
    %v2651 = vpop.f32.mrb[0].mxu0
    %2652 = vdwg.mxu0
    %2653 = vmatprep.subr.mxu0 0.0
    %v2654 = vand.u32 %v1791, 4294901760
    %v2655 = vsub.f32 %v1791, %v2654
    %v2656 = vand.u32 %v2655, 4294901760
    %v2657 = vsub.f32 %v2655, %v2656
    %v2658 = vand.u32 %v2657, 4294901760
    %2659 = vmatpush1.msra.mxu0 %v2658
    %2660 = vmatprep.subr.mxu0 0.0
    %v2661 = vand.u32 %v1798, 4294901760
    %v2662 = vsub.f32 %v1798, %v2661
    %v2663 = vand.u32 %v2662, 4294901760
    %v2664 = vsub.f32 %v2662, %v2663
    %v2665 = vand.u32 %v2664, 4294901760
    %2666 = vmatpush1.msra.mxu0 %v2665
    %2667 = vmatprep.subr.mxu0 0.0
    %v2668 = vand.u32 %v1805, 4294901760
    %v2669 = vsub.f32 %v1805, %v2668
    %v2670 = vand.u32 %v2669, 4294901760
    %v2671 = vsub.f32 %v2669, %v2670
    %v2672 = vand.u32 %v2671, 4294901760
    %2673 = vmatpush1.msra.mxu0 %v2672
    %2674 = vmatprep.subr.mxu0 0.0
    %2675 = vmatpush1.msra.mxu0 0.0
    %2676 = vmatprep.subr.mxu0 0.0
    %2677 = vmatpush1.msra.mxu0 0.0
    %2678 = vmatprep.subr.mxu0 0.0
    %2679 = vmatpush1.msra.mxu0 0.0
    %2680 = vmatprep.subr.mxu0 0.0
    %2681 = vmatpush1.msra.mxu0 0.0
    %2682 = vmatprep.subr.mxu0 0.0
    %2683 = vmatpush1.msra.mxu0 0.0
    %2684 = vmatprep.subr.mxu0 0.0
    %2685 = vmatpush1.msra.mxu0 0.0
    %2686 = vmatprep.subr.mxu0 0.0
    %2687 = vmatpush1.msra.mxu0 0.0
    %2688 = vmatprep.subr.mxu0 0.0
    %2689 = vmatpush1.msra.mxu0 0.0
    %2690 = vmatprep.subr.mxu0 0.0
    %2691 = vmatpush1.msra.mxu0 0.0
    %2692 = vmatprep.subr.mxu0 0.0
    %2693 = vmatpush1.msra.mxu0 0.0
    %2694 = vmatprep.subr.mxu0 0.0
    %2695 = vmatpush1.msra.mxu0 0.0
    %2696 = vmatprep.subr.mxu0 0.0
    %2697 = vmatpush1.msra.mxu0 0.0
    %2698 = vmatprep.subr.mxu0 0.0
    %2699 = vmatpush1.msra.mxu0 0.0
    %2700 = vmatprep.subr.mxu0 0.0
    %2701 = vmatpush1.msra.mxu0 0.0
    %2702 = vmatprep.subr.mxu0 0.0
    %2703 = vmatpush1.msra.mxu0 0.0
    %2704 = vmatprep.subr.mxu0 0.0
    %2705 = vmatpush1.msra.mxu0 0.0
    %2706 = vmatprep.subr.mxu0 0.0
    %2707 = vmatpush1.msra.mxu0 0.0
    %2708 = vmatprep.subr.mxu0 0.0
    %2709 = vmatpush1.msra.mxu0 0.0
    %2710 = vmatprep.subr.mxu0 0.0
    %2711 = vmatpush1.msra.mxu0 0.0
    %2712 = vmatprep.subr.mxu0 0.0
    %2713 = vmatpush1.msra.mxu0 0.0
    %2714 = vmatprep.subr.mxu0 0.0
    %2715 = vmatpush1.msra.mxu0 0.0
    %2716 = vmatprep.subr.mxu0 0.0
    %2717 = vmatpush1.msra.mxu0 0.0
    %2718 = vmatprep.subr.mxu0 0.0
    %2719 = vmatpush1.msra.mxu0 0.0
    %2720 = vmatprep.subr.mxu0 0.0
    %2721 = vmatpush1.msra.mxu0 0.0
    %2722 = vmatprep.subr.mxu0 0.0
    %2723 = vmatpush1.msra.mxu0 0.0
    %2724 = vmatprep.subr.mxu0 0.0
    %2725 = vmatpush1.msra.mxu0 0.0
    %2726 = vmatprep.subr.mxu0 0.0
    %2727 = vmatpush1.msra.mxu0 0.0
    %2728 = vmatprep.subr.mxu0 0.0
    %2729 = vmatpush1.msra.mxu0 0.0
    %2730 = vmatprep.subr.mxu0 0.0
    %2731 = vmatpush1.msra.mxu0 0.0
    %2732 = vmatprep.mubr.f32.mxu0 0.0
    %v2733 = vand.u32 %v2547, 4294901760
    %2734 = vmatmul.mubr.f32.gmra.mrb[0].mxu0 %v2733
    %v2735 = vpop.f32.mrb[0].mxu0
    %v2736 = vadd.f32 %v2630, %v2735
    %v2737 = vpop.f32.mrb[0].mxu0
    %2738 = vmatprep.mubr.f32.mxu0 0.0
    %v2739 = vand.u32 %v2550, 4294901760
    %2740 = vmatmul.mubr.f32.gmra.mrb[0].mxu0 %v2739
    %v2741 = vpop.f32.mrb[0].mxu0
    %v2742 = vadd.f32 %v2640, %v2741
    %v2743 = vpop.f32.mrb[0].mxu0
    %2744 = vmatprep.mubr.f32.mxu0 0.0
    %v2745 = vand.u32 %v2553, 4294901760
    %2746 = vmatmul.mubr.f32.gmra.mrb[0].mxu0 %v2745
    %v2747 = vpop.f32.mrb[0].mxu0
    %v2748 = vadd.f32 %v2650, %v2747
    %v2749 = vpop.f32.mrb[0].mxu0
    %2750 = vdwg.mxu0
    %2751 = vmatprep.subr.mxu0 0.0
    %v2752 = vand.u32 %v1791, 4294901760
    %v2753 = vsub.f32 %v1791, %v2752
    %2754 = vmatpush1.msra.mxu0 %v2753
    %2755 = vmatprep.subr.mxu0 0.0
    %v2756 = vand.u32 %v1798, 4294901760
    %v2757 = vsub.f32 %v1798, %v2756
    %2758 = vmatpush1.msra.mxu0 %v2757
    %2759 = vmatprep.subr.mxu0 0.0
    %v2760 = vand.u32 %v1805, 4294901760
    %v2761 = vsub.f32 %v1805, %v2760
    %2762 = vmatpush1.msra.mxu0 %v2761
    %2763 = vmatprep.subr.mxu0 0.0
    %2764 = vmatpush1.msra.mxu0 0.0
    %2765 = vmatprep.subr.mxu0 0.0
    %2766 = vmatpush1.msra.mxu0 0.0
    %2767 = vmatprep.subr.mxu0 0.0
    %2768 = vmatpush1.msra.mxu0 0.0
    %2769 = vmatprep.subr.mxu0 0.0
    %2770 = vmatpush1.msra.mxu0 0.0
    %2771 = vmatprep.subr.mxu0 0.0
    %2772 = vmatpush1.msra.mxu0 0.0
    %2773 = vmatprep.subr.mxu0 0.0
    %2774 = vmatpush1.msra.mxu0 0.0
    %2775 = vmatprep.subr.mxu0 0.0
    %2776 = vmatpush1.msra.mxu0 0.0
    %2777 = vmatprep.subr.mxu0 0.0
    %2778 = vmatpush1.msra.mxu0 0.0
    %2779 = vmatprep.subr.mxu0 0.0
    %2780 = vmatpush1.msra.mxu0 0.0
    %2781 = vmatprep.subr.mxu0 0.0
    %2782 = vmatpush1.msra.mxu0 0.0
    %2783 = vmatprep.subr.mxu0 0.0
    %2784 = vmatpush1.msra.mxu0 0.0
    %2785 = vmatprep.subr.mxu0 0.0
    %2786 = vmatpush1.msra.mxu0 0.0
    %2787 = vmatprep.subr.mxu0 0.0
    %2788 = vmatpush1.msra.mxu0 0.0
    %2789 = vmatprep.subr.mxu0 0.0
    %2790 = vmatpush1.msra.mxu0 0.0
    %2791 = vmatprep.subr.mxu0 0.0
    %2792 = vmatpush1.msra.mxu0 0.0
    %2793 = vmatprep.subr.mxu0 0.0
    %2794 = vmatpush1.msra.mxu0 0.0
    %2795 = vmatprep.subr.mxu0 0.0
    %2796 = vmatpush1.msra.mxu0 0.0
    %2797 = vmatprep.subr.mxu0 0.0
    %2798 = vmatpush1.msra.mxu0 0.0
    %2799 = vmatprep.subr.mxu0 0.0
    %2800 = vmatpush1.msra.mxu0 0.0
    %2801 = vmatprep.subr.mxu0 0.0
    %2802 = vmatpush1.msra.mxu0 0.0
    %2803 = vmatprep.subr.mxu0 0.0
    %2804 = vmatpush1.msra.mxu0 0.0
    %2805 = vmatprep.subr.mxu0 0.0
    %2806 = vmatpush1.msra.mxu0 0.0
    %2807 = vmatprep.subr.mxu0 0.0
    %2808 = vmatpush1.msra.mxu0 0.0
    %2809 = vmatprep.subr.mxu0 0.0
    %2810 = vmatpush1.msra.mxu0 0.0
    %2811 = vmatprep.subr.mxu0 0.0
    %2812 = vmatpush1.msra.mxu0 0.0
    %2813 = vmatprep.subr.mxu0 0.0
    %2814 = vmatpush1.msra.mxu0 0.0
    %2815 = vmatprep.subr.mxu0 0.0
    %2816 = vmatpush1.msra.mxu0 0.0
    %2817 = vmatprep.subr.mxu0 0.0
    %2818 = vmatpush1.msra.mxu0 0.0
    %2819 = vmatprep.subr.mxu0 0.0
    %2820 = vmatpush1.msra.mxu0 0.0
    %2821 = vmatprep.mubr.f32.mxu0 0.0
    %v2822 = vand.u32 %v2547, 4294901760
    %v2823 = vsub.f32 %v2547, %v2822
    %2824 = vmatmul.mubr.f32.gmra.mrb[0].mxu0 %v2823
    %v2825 = vpop.f32.mrb[0].mxu0
    %v2826 = vadd.f32 %v2736, %v2825
    %v2827 = vpop.f32.mrb[0].mxu0
    %2828 = vmatprep.mubr.f32.mxu0 0.0
    %v2829 = vand.u32 %v2550, 4294901760
    %v2830 = vsub.f32 %v2550, %v2829
    %2831 = vmatmul.mubr.f32.gmra.mrb[0].mxu0 %v2830
    %v2832 = vpop.f32.mrb[0].mxu0
    %v2833 = vadd.f32 %v2742, %v2832
    %v2834 = vpop.f32.mrb[0].mxu0
    %2835 = vmatprep.mubr.f32.mxu0 0.0
    %v2836 = vand.u32 %v2553, 4294901760
    %v2837 = vsub.f32 %v2553, %v2836
    %2838 = vmatmul.mubr.f32.gmra.mrb[0].mxu0 %v2837
    %v2839 = vpop.f32.mrb[0].mxu0
    %v2840 = vadd.f32 %v2748, %v2839
    %v2841 = vpop.f32.mrb[0].mxu0
    %2842 = vdwg.mxu0
    %2843 = vmatprep.subr.mxu0 0.0
    %v2844 = vand.u32 %v1791, 4294901760
    %2845 = vmatpush1.msra.mxu0 %v2844
    %2846 = vmatprep.subr.mxu0 0.0
    %v2847 = vand.u32 %v1798, 4294901760
    %2848 = vmatpush1.msra.mxu0 %v2847
    %2849 = vmatprep.subr.mxu0 0.0
    %v2850 = vand.u32 %v1805, 4294901760
    %2851 = vmatpush1.msra.mxu0 %v2850
    %2852 = vmatprep.subr.mxu0 0.0
    %2853 = vmatpush1.msra.mxu0 0.0
    %2854 = vmatprep.subr.mxu0 0.0
    %2855 = vmatpush1.msra.mxu0 0.0
    %2856 = vmatprep.subr.mxu0 0.0
    %2857 = vmatpush1.msra.mxu0 0.0
    %2858 = vmatprep.subr.mxu0 0.0
    %2859 = vmatpush1.msra.mxu0 0.0
    %2860 = vmatprep.subr.mxu0 0.0
    %2861 = vmatpush1.msra.mxu0 0.0
    %2862 = vmatprep.subr.mxu0 0.0
    %2863 = vmatpush1.msra.mxu0 0.0
    %2864 = vmatprep.subr.mxu0 0.0
    %2865 = vmatpush1.msra.mxu0 0.0
    %2866 = vmatprep.subr.mxu0 0.0
    %2867 = vmatpush1.msra.mxu0 0.0
    %2868 = vmatprep.subr.mxu0 0.0
    %2869 = vmatpush1.msra.mxu0 0.0
    %2870 = vmatprep.subr.mxu0 0.0
    %2871 = vmatpush1.msra.mxu0 0.0
    %2872 = vmatprep.subr.mxu0 0.0
    %2873 = vmatpush1.msra.mxu0 0.0
    %2874 = vmatprep.subr.mxu0 0.0
    %2875 = vmatpush1.msra.mxu0 0.0
    %2876 = vmatprep.subr.mxu0 0.0
    %2877 = vmatpush1.msra.mxu0 0.0
    %2878 = vmatprep.subr.mxu0 0.0
    %2879 = vmatpush1.msra.mxu0 0.0
    %2880 = vmatprep.subr.mxu0 0.0
    %2881 = vmatpush1.msra.mxu0 0.0
    %2882 = vmatprep.subr.mxu0 0.0
    %2883 = vmatpush1.msra.mxu0 0.0
    %2884 = vmatprep.subr.mxu0 0.0
    %2885 = vmatpush1.msra.mxu0 0.0
    %2886 = vmatprep.subr.mxu0 0.0
    %2887 = vmatpush1.msra.mxu0 0.0
    %2888 = vmatprep.subr.mxu0 0.0
    %2889 = vmatpush1.msra.mxu0 0.0
    %2890 = vmatprep.subr.mxu0 0.0
    %2891 = vmatpush1.msra.mxu0 0.0
    %2892 = vmatprep.subr.mxu0 0.0
    %2893 = vmatpush1.msra.mxu0 0.0
    %2894 = vmatprep.subr.mxu0 0.0
    %2895 = vmatpush1.msra.mxu0 0.0
    %2896 = vmatprep.subr.mxu0 0.0
    %2897 = vmatpush1.msra.mxu0 0.0
    %2898 = vmatprep.subr.mxu0 0.0
    %2899 = vmatpush1.msra.mxu0 0.0
    %2900 = vmatprep.subr.mxu0 0.0
    %2901 = vmatpush1.msra.mxu0 0.0
    %2902 = vmatprep.subr.mxu0 0.0
    %2903 = vmatpush1.msra.mxu0 0.0
    %2904 = vmatprep.subr.mxu0 0.0
    %2905 = vmatpush1.msra.mxu0 0.0
    %2906 = vmatprep.subr.mxu0 0.0
    %2907 = vmatpush1.msra.mxu0 0.0
    %2908 = vmatprep.subr.mxu0 0.0
    %2909 = vmatpush1.msra.mxu0 0.0
    %2910 = vmatprep.mubr.f32.mxu0 0.0
    %v2911 = vand.u32 %v2547, 4294901760
    %v2912 = vsub.f32 %v2547, %v2911
    %v2913 = vand.u32 %v2912, 4294901760
    %2914 = vmatmul.mubr.f32.gmra.mrb[0].mxu0 %v2913
    %v2915 = vpop.f32.mrb[0].mxu0
    %v2916 = vadd.f32 %v2826, %v2915
    %v2917 = vpop.f32.mrb[0].mxu0
    %2918 = vmatprep.mubr.f32.mxu0 0.0
    %v2919 = vand.u32 %v2550, 4294901760
    %v2920 = vsub.f32 %v2550, %v2919
    %v2921 = vand.u32 %v2920, 4294901760
    %2922 = vmatmul.mubr.f32.gmra.mrb[0].mxu0 %v2921
    %v2923 = vpop.f32.mrb[0].mxu0
    %v2924 = vadd.f32 %v2833, %v2923
    %v2925 = vpop.f32.mrb[0].mxu0
    %2926 = vmatprep.mubr.f32.mxu0 0.0
    %v2927 = vand.u32 %v2553, 4294901760
    %v2928 = vsub.f32 %v2553, %v2927
    %v2929 = vand.u32 %v2928, 4294901760
    %2930 = vmatmul.mubr.f32.gmra.mrb[0].mxu0 %v2929
    %v2931 = vpop.f32.mrb[0].mxu0
    %v2932 = vadd.f32 %v2840, %v2931
    %v2933 = vpop.f32.mrb[0].mxu0
    %2934 = vdwg.mxu0
    %2935 = vmatprep.subr.mxu0 0.0
    %v2936 = vand.u32 %v1791, 4294901760
    %v2937 = vsub.f32 %v1791, %v2936
    %v2938 = vand.u32 %v2937, 4294901760
    %2939 = vmatpush1.msra.mxu0 %v2938
    %2940 = vmatprep.subr.mxu0 0.0
    %v2941 = vand.u32 %v1798, 4294901760
    %v2942 = vsub.f32 %v1798, %v2941
    %v2943 = vand.u32 %v2942, 4294901760
    %2944 = vmatpush1.msra.mxu0 %v2943
    %2945 = vmatprep.subr.mxu0 0.0
    %v2946 = vand.u32 %v1805, 4294901760
    %v2947 = vsub.f32 %v1805, %v2946
    %v2948 = vand.u32 %v2947, 4294901760
    %2949 = vmatpush1.msra.mxu0 %v2948
    %2950 = vmatprep.subr.mxu0 0.0
    %2951 = vmatpush1.msra.mxu0 0.0
    %2952 = vmatprep.subr.mxu0 0.0
    %2953 = vmatpush1.msra.mxu0 0.0
    %2954 = vmatprep.subr.mxu0 0.0
    %2955 = vmatpush1.msra.mxu0 0.0
    %2956 = vmatprep.subr.mxu0 0.0
    %2957 = vmatpush1.msra.mxu0 0.0
    %2958 = vmatprep.subr.mxu0 0.0
    %2959 = vmatpush1.msra.mxu0 0.0
    %2960 = vmatprep.subr.mxu0 0.0
    %2961 = vmatpush1.msra.mxu0 0.0
    %2962 = vmatprep.subr.mxu0 0.0
    %2963 = vmatpush1.msra.mxu0 0.0
    %2964 = vmatprep.subr.mxu0 0.0
    %2965 = vmatpush1.msra.mxu0 0.0
    %2966 = vmatprep.subr.mxu0 0.0
    %2967 = vmatpush1.msra.mxu0 0.0
    %2968 = vmatprep.subr.mxu0 0.0
    %2969 = vmatpush1.msra.mxu0 0.0
    %2970 = vmatprep.subr.mxu0 0.0
    %2971 = vmatpush1.msra.mxu0 0.0
    %2972 = vmatprep.subr.mxu0 0.0
    %2973 = vmatpush1.msra.mxu0 0.0
    %2974 = vmatprep.subr.mxu0 0.0
    %2975 = vmatpush1.msra.mxu0 0.0
    %2976 = vmatprep.subr.mxu0 0.0
    %2977 = vmatpush1.msra.mxu0 0.0
    %2978 = vmatprep.subr.mxu0 0.0
    %2979 = vmatpush1.msra.mxu0 0.0
    %2980 = vmatprep.subr.mxu0 0.0
    %2981 = vmatpush1.msra.mxu0 0.0
    %2982 = vmatprep.subr.mxu0 0.0
    %2983 = vmatpush1.msra.mxu0 0.0
    %2984 = vmatprep.subr.mxu0 0.0
    %2985 = vmatpush1.msra.mxu0 0.0
    %2986 = vmatprep.subr.mxu0 0.0
    %2987 = vmatpush1.msra.mxu0 0.0
    %2988 = vmatprep.subr.mxu0 0.0
    %2989 = vmatpush1.msra.mxu0 0.0
    %2990 = vmatprep.subr.mxu0 0.0
    %2991 = vmatpush1.msra.mxu0 0.0
    %2992 = vmatprep.subr.mxu0 0.0
    %2993 = vmatpush1.msra.mxu0 0.0
    %2994 = vmatprep.subr.mxu0 0.0
    %2995 = vmatpush1.msra.mxu0 0.0
    %2996 = vmatprep.subr.mxu0 0.0
    %2997 = vmatpush1.msra.mxu0 0.0
    %2998 = vmatprep.subr.mxu0 0.0
    %2999 = vmatpush1.msra.mxu0 0.0
    %3000 = vmatprep.subr.mxu0 0.0
    %3001 = vmatpush1.msra.mxu0 0.0
    %3002 = vmatprep.subr.mxu0 0.0
    %3003 = vmatpush1.msra.mxu0 0.0
    %3004 = vmatprep.subr.mxu0 0.0
    %3005 = vmatpush1.msra.mxu0 0.0
    %3006 = vmatprep.subr.mxu0 0.0
    %3007 = vmatpush1.msra.mxu0 0.0
    %3008 = vmatprep.mubr.f32.mxu0 0.0
    %v3009 = vand.u32 %v2547, 4294901760
    %3010 = vmatmul.mubr.f32.gmra.mrb[0].mxu0 %v3009
    %v3011 = vpop.f32.mrb[0].mxu0
    %v3012 = vadd.f32 %v2916, %v3011
    %v3013 = vpop.f32.mrb[0].mxu0
    %3014 = vmatprep.mubr.f32.mxu0 0.0
    %v3015 = vand.u32 %v2550, 4294901760
    %3016 = vmatmul.mubr.f32.gmra.mrb[0].mxu0 %v3015
    %v3017 = vpop.f32.mrb[0].mxu0
    %v3018 = vadd.f32 %v2924, %v3017
    %v3019 = vpop.f32.mrb[0].mxu0
    %3020 = vmatprep.mubr.f32.mxu0 0.0
    %v3021 = vand.u32 %v2553, 4294901760
    %3022 = vmatmul.mubr.f32.gmra.mrb[0].mxu0 %v3021
    %v3023 = vpop.f32.mrb[0].mxu0
    %v3024 = vadd.f32 %v2932, %v3023
    %v3025 = vpop.f32.mrb[0].mxu0
    %3026 = vdwg.mxu0
    %3027 = vmatprep.subr.mxu0 0.0
    %v3028 = vand.u32 %v1791, 4294901760
    %3029 = vmatpush1.msra.mxu0 %v3028
    %3030 = vmatprep.subr.mxu0 0.0
    %v3031 = vand.u32 %v1798, 4294901760
    %3032 = vmatpush1.msra.mxu0 %v3031
    %3033 = vmatprep.subr.mxu0 0.0
    %v3034 = vand.u32 %v1805, 4294901760
    %3035 = vmatpush1.msra.mxu0 %v3034
    %3036 = vmatprep.subr.mxu0 0.0
    %3037 = vmatpush1.msra.mxu0 0.0
    %3038 = vmatprep.subr.mxu0 0.0
    %3039 = vmatpush1.msra.mxu0 0.0
    %3040 = vmatprep.subr.mxu0 0.0
    %3041 = vmatpush1.msra.mxu0 0.0
    %3042 = vmatprep.subr.mxu0 0.0
    %3043 = vmatpush1.msra.mxu0 0.0
    %3044 = vmatprep.subr.mxu0 0.0
    %3045 = vmatpush1.msra.mxu0 0.0
    %3046 = vmatprep.subr.mxu0 0.0
    %3047 = vmatpush1.msra.mxu0 0.0
    %3048 = vmatprep.subr.mxu0 0.0
    %3049 = vmatpush1.msra.mxu0 0.0
    %3050 = vmatprep.subr.mxu0 0.0
    %3051 = vmatpush1.msra.mxu0 0.0
    %3052 = vmatprep.subr.mxu0 0.0
    %3053 = vmatpush1.msra.mxu0 0.0
    %3054 = vmatprep.subr.mxu0 0.0
    %3055 = vmatpush1.msra.mxu0 0.0
    %3056 = vmatprep.subr.mxu0 0.0
    %3057 = vmatpush1.msra.mxu0 0.0
    %3058 = vmatprep.subr.mxu0 0.0
    %3059 = vmatpush1.msra.mxu0 0.0
    %3060 = vmatprep.subr.mxu0 0.0
    %3061 = vmatpush1.msra.mxu0 0.0
    %3062 = vmatprep.subr.mxu0 0.0
    %3063 = vmatpush1.msra.mxu0 0.0
    %3064 = vmatprep.subr.mxu0 0.0
    %3065 = vmatpush1.msra.mxu0 0.0
    %3066 = vmatprep.subr.mxu0 0.0
    %3067 = vmatpush1.msra.mxu0 0.0
    %3068 = vmatprep.subr.mxu0 0.0
    %3069 = vmatpush1.msra.mxu0 0.0
    %3070 = vmatprep.subr.mxu0 0.0
    %3071 = vmatpush1.msra.mxu0 0.0
    %3072 = vmatprep.subr.mxu0 0.0
    %3073 = vmatpush1.msra.mxu0 0.0
    %3074 = vmatprep.subr.mxu0 0.0
    %3075 = vmatpush1.msra.mxu0 0.0
    %3076 = vmatprep.subr.mxu0 0.0
    %3077 = vmatpush1.msra.mxu0 0.0
    %3078 = vmatprep.subr.mxu0 0.0
    %3079 = vmatpush1.msra.mxu0 0.0
    %3080 = vmatprep.subr.mxu0 0.0
    %3081 = vmatpush1.msra.mxu0 0.0
    %3082 = vmatprep.subr.mxu0 0.0
    %3083 = vmatpush1.msra.mxu0 0.0
    %3084 = vmatprep.subr.mxu0 0.0
    %3085 = vmatpush1.msra.mxu0 0.0
    %3086 = vmatprep.subr.mxu0 0.0
    %3087 = vmatpush1.msra.mxu0 0.0
    %3088 = vmatprep.subr.mxu0 0.0
    %3089 = vmatpush1.msra.mxu0 0.0
    %3090 = vmatprep.subr.mxu0 0.0
    %3091 = vmatpush1.msra.mxu0 0.0
    %3092 = vmatprep.subr.mxu0 0.0
    %3093 = vmatpush1.msra.mxu0 0.0
    %3094 = vmatprep.mubr.f32.mxu0 0.0
    %v3095 = vand.u32 %v2547, 4294901760
    %3096 = vmatmul.mubr.f32.gmra.mrb[0].mxu0 %v3095
    %v3097 = vpop.f32.mrb[0].mxu0
    %v3098 = vadd.f32 %v3012, %v3097
    %v3099 = vpop.f32.mrb[0].mxu0
    %3100 = vmatprep.mubr.f32.mxu0 0.0
    %v3101 = vand.u32 %v2550, 4294901760
    %3102 = vmatmul.mubr.f32.gmra.mrb[0].mxu0 %v3101
    %v3103 = vpop.f32.mrb[0].mxu0
    %v3104 = vadd.f32 %v3018, %v3103
    %v3105 = vpop.f32.mrb[0].mxu0
    %3106 = vmatprep.mubr.f32.mxu0 0.0
    %v3107 = vand.u32 %v2553, 4294901760
    %3108 = vmatmul.mubr.f32.gmra.mrb[0].mxu0 %v3107
    %v3109 = vpop.f32.mrb[0].mxu0
    %v3110 = vadd.f32 %v3024, %v3109
    %v3111 = vpop.f32.mrb[0].mxu0
    %3112 = vdwg.mxu0
    %v3113 = vadd.f32 %v2542, %v3098
    %v3114 = vadd.f32 %v2543, %v3104
    %v3115 = vadd.f32 %v2544, %v3110
    %v3117 = vsel %vm2545, %v54, 0
    %v3120 = vsel %vm2545, %v55, 0
    %v3123 = vsel %vm2545, %v56, 0
    %3125 = vmatprep.subr.mxu0 0.0
    %v3126 = vand.u32 %v1793, 4294901760
    %3127 = vmatpush1.msra.mxu0 %v3126
    %3128 = vmatprep.subr.mxu0 0.0
    %v3129 = vand.u32 %v1800, 4294901760
    %3130 = vmatpush1.msra.mxu0 %v3129
    %3131 = vmatprep.subr.mxu0 0.0
    %v3132 = vand.u32 %v1807, 4294901760
    %3133 = vmatpush1.msra.mxu0 %v3132
    %3134 = vmatprep.subr.mxu0 0.0
    %3135 = vmatpush1.msra.mxu0 0.0
    %3136 = vmatprep.subr.mxu0 0.0
    %3137 = vmatpush1.msra.mxu0 0.0
    %3138 = vmatprep.subr.mxu0 0.0
    %3139 = vmatpush1.msra.mxu0 0.0
    %3140 = vmatprep.subr.mxu0 0.0
    %3141 = vmatpush1.msra.mxu0 0.0
    %3142 = vmatprep.subr.mxu0 0.0
    %3143 = vmatpush1.msra.mxu0 0.0
    %3144 = vmatprep.subr.mxu0 0.0
    %3145 = vmatpush1.msra.mxu0 0.0
    %3146 = vmatprep.subr.mxu0 0.0
    %3147 = vmatpush1.msra.mxu0 0.0
    %3148 = vmatprep.subr.mxu0 0.0
    %3149 = vmatpush1.msra.mxu0 0.0
    %3150 = vmatprep.subr.mxu0 0.0
    %3151 = vmatpush1.msra.mxu0 0.0
    %3152 = vmatprep.subr.mxu0 0.0
    %3153 = vmatpush1.msra.mxu0 0.0
    %3154 = vmatprep.subr.mxu0 0.0
    %3155 = vmatpush1.msra.mxu0 0.0
    %3156 = vmatprep.subr.mxu0 0.0
    %3157 = vmatpush1.msra.mxu0 0.0
    %3158 = vmatprep.subr.mxu0 0.0
    %3159 = vmatpush1.msra.mxu0 0.0
    %3160 = vmatprep.subr.mxu0 0.0
    %3161 = vmatpush1.msra.mxu0 0.0
    %3162 = vmatprep.subr.mxu0 0.0
    %3163 = vmatpush1.msra.mxu0 0.0
    %3164 = vmatprep.subr.mxu0 0.0
    %3165 = vmatpush1.msra.mxu0 0.0
    %3166 = vmatprep.subr.mxu0 0.0
    %3167 = vmatpush1.msra.mxu0 0.0
    %3168 = vmatprep.subr.mxu0 0.0
    %3169 = vmatpush1.msra.mxu0 0.0
    %3170 = vmatprep.subr.mxu0 0.0
    %3171 = vmatpush1.msra.mxu0 0.0
    %3172 = vmatprep.subr.mxu0 0.0
    %3173 = vmatpush1.msra.mxu0 0.0
    %3174 = vmatprep.subr.mxu0 0.0
    %3175 = vmatpush1.msra.mxu0 0.0
    %3176 = vmatprep.subr.mxu0 0.0
    %3177 = vmatpush1.msra.mxu0 0.0
    %3178 = vmatprep.subr.mxu0 0.0
    %3179 = vmatpush1.msra.mxu0 0.0
    %3180 = vmatprep.subr.mxu0 0.0
    %3181 = vmatpush1.msra.mxu0 0.0
    %3182 = vmatprep.subr.mxu0 0.0
    %3183 = vmatpush1.msra.mxu0 0.0
    %3184 = vmatprep.subr.mxu0 0.0
    %3185 = vmatpush1.msra.mxu0 0.0
    %3186 = vmatprep.subr.mxu0 0.0
    %3187 = vmatpush1.msra.mxu0 0.0
    %3188 = vmatprep.subr.mxu0 0.0
    %3189 = vmatpush1.msra.mxu0 0.0
    %3190 = vmatprep.subr.mxu0 0.0
    %3191 = vmatpush1.msra.mxu0 0.0
    %3192 = vmatprep.mubr.f32.mxu0 0.0
    %v3193 = vand.u32 %v3117, 4294901760
    %v3194 = vsub.f32 %v3117, %v3193
    %v3195 = vand.u32 %v3194, 4294901760
    %v3196 = vsub.f32 %v3194, %v3195
    %v3197 = vand.u32 %v3196, 4294901760
    %3198 = vmatmul.mubr.f32.gmra.mrb[0].mxu0 %v3197
    %v3199 = vpop.f32.mrb[0].mxu0
    %v3200 = vadd.f32 0.0, %v3199
    %v3201 = vpop.f32.mrb[0].mxu0
    %3202 = vmatprep.mubr.f32.mxu0 0.0
    %v3203 = vand.u32 %v3120, 4294901760
    %v3204 = vsub.f32 %v3120, %v3203
    %v3205 = vand.u32 %v3204, 4294901760
    %v3206 = vsub.f32 %v3204, %v3205
    %v3207 = vand.u32 %v3206, 4294901760
    %3208 = vmatmul.mubr.f32.gmra.mrb[0].mxu0 %v3207
    %v3209 = vpop.f32.mrb[0].mxu0
    %v3210 = vadd.f32 0.0, %v3209
    %v3211 = vpop.f32.mrb[0].mxu0
    %3212 = vmatprep.mubr.f32.mxu0 0.0
    %v3213 = vand.u32 %v3123, 4294901760
    %v3214 = vsub.f32 %v3123, %v3213
    %v3215 = vand.u32 %v3214, 4294901760
    %v3216 = vsub.f32 %v3214, %v3215
    %v3217 = vand.u32 %v3216, 4294901760
    %3218 = vmatmul.mubr.f32.gmra.mrb[0].mxu0 %v3217
    %v3219 = vpop.f32.mrb[0].mxu0
    %v3220 = vadd.f32 0.0, %v3219
    %v3221 = vpop.f32.mrb[0].mxu0
    %3222 = vdwg.mxu0
    %3223 = vmatprep.subr.mxu0 0.0
    %v3224 = vand.u32 %v1793, 4294901760
    %v3225 = vsub.f32 %v1793, %v3224
    %v3226 = vand.u32 %v3225, 4294901760
    %v3227 = vsub.f32 %v3225, %v3226
    %v3228 = vand.u32 %v3227, 4294901760
    %3229 = vmatpush1.msra.mxu0 %v3228
    %3230 = vmatprep.subr.mxu0 0.0
    %v3231 = vand.u32 %v1800, 4294901760
    %v3232 = vsub.f32 %v1800, %v3231
    %v3233 = vand.u32 %v3232, 4294901760
    %v3234 = vsub.f32 %v3232, %v3233
    %v3235 = vand.u32 %v3234, 4294901760
    %3236 = vmatpush1.msra.mxu0 %v3235
    %3237 = vmatprep.subr.mxu0 0.0
    %v3238 = vand.u32 %v1807, 4294901760
    %v3239 = vsub.f32 %v1807, %v3238
    %v3240 = vand.u32 %v3239, 4294901760
    %v3241 = vsub.f32 %v3239, %v3240
    %v3242 = vand.u32 %v3241, 4294901760
    %3243 = vmatpush1.msra.mxu0 %v3242
    %3244 = vmatprep.subr.mxu0 0.0
    %3245 = vmatpush1.msra.mxu0 0.0
    %3246 = vmatprep.subr.mxu0 0.0
    %3247 = vmatpush1.msra.mxu0 0.0
    %3248 = vmatprep.subr.mxu0 0.0
    %3249 = vmatpush1.msra.mxu0 0.0
    %3250 = vmatprep.subr.mxu0 0.0
    %3251 = vmatpush1.msra.mxu0 0.0
    %3252 = vmatprep.subr.mxu0 0.0
    %3253 = vmatpush1.msra.mxu0 0.0
    %3254 = vmatprep.subr.mxu0 0.0
    %3255 = vmatpush1.msra.mxu0 0.0
    %3256 = vmatprep.subr.mxu0 0.0
    %3257 = vmatpush1.msra.mxu0 0.0
    %3258 = vmatprep.subr.mxu0 0.0
    %3259 = vmatpush1.msra.mxu0 0.0
    %3260 = vmatprep.subr.mxu0 0.0
    %3261 = vmatpush1.msra.mxu0 0.0
    %3262 = vmatprep.subr.mxu0 0.0
    %3263 = vmatpush1.msra.mxu0 0.0
    %3264 = vmatprep.subr.mxu0 0.0
    %3265 = vmatpush1.msra.mxu0 0.0
    %3266 = vmatprep.subr.mxu0 0.0
    %3267 = vmatpush1.msra.mxu0 0.0
    %3268 = vmatprep.subr.mxu0 0.0
    %3269 = vmatpush1.msra.mxu0 0.0
    %3270 = vmatprep.subr.mxu0 0.0
    %3271 = vmatpush1.msra.mxu0 0.0
    %3272 = vmatprep.subr.mxu0 0.0
    %3273 = vmatpush1.msra.mxu0 0.0
    %3274 = vmatprep.subr.mxu0 0.0
    %3275 = vmatpush1.msra.mxu0 0.0
    %3276 = vmatprep.subr.mxu0 0.0
    %3277 = vmatpush1.msra.mxu0 0.0
    %3278 = vmatprep.subr.mxu0 0.0
    %3279 = vmatpush1.msra.mxu0 0.0
    %3280 = vmatprep.subr.mxu0 0.0
    %3281 = vmatpush1.msra.mxu0 0.0
    %3282 = vmatprep.subr.mxu0 0.0
    %3283 = vmatpush1.msra.mxu0 0.0
    %3284 = vmatprep.subr.mxu0 0.0
    %3285 = vmatpush1.msra.mxu0 0.0
    %3286 = vmatprep.subr.mxu0 0.0
    %3287 = vmatpush1.msra.mxu0 0.0
    %3288 = vmatprep.subr.mxu0 0.0
    %3289 = vmatpush1.msra.mxu0 0.0
    %3290 = vmatprep.subr.mxu0 0.0
    %3291 = vmatpush1.msra.mxu0 0.0
    %3292 = vmatprep.subr.mxu0 0.0
    %3293 = vmatpush1.msra.mxu0 0.0
    %3294 = vmatprep.subr.mxu0 0.0
    %3295 = vmatpush1.msra.mxu0 0.0
    %3296 = vmatprep.subr.mxu0 0.0
    %3297 = vmatpush1.msra.mxu0 0.0
    %3298 = vmatprep.subr.mxu0 0.0
    %3299 = vmatpush1.msra.mxu0 0.0
    %3300 = vmatprep.subr.mxu0 0.0
    %3301 = vmatpush1.msra.mxu0 0.0
    %3302 = vmatprep.mubr.f32.mxu0 0.0
    %v3303 = vand.u32 %v3117, 4294901760
    %3304 = vmatmul.mubr.f32.gmra.mrb[0].mxu0 %v3303
    %v3305 = vpop.f32.mrb[0].mxu0
    %v3306 = vadd.f32 %v3200, %v3305
    %v3307 = vpop.f32.mrb[0].mxu0
    %3308 = vmatprep.mubr.f32.mxu0 0.0
    %v3309 = vand.u32 %v3120, 4294901760
    %3310 = vmatmul.mubr.f32.gmra.mrb[0].mxu0 %v3309
    %v3311 = vpop.f32.mrb[0].mxu0
    %v3312 = vadd.f32 %v3210, %v3311
    %v3313 = vpop.f32.mrb[0].mxu0
    %3314 = vmatprep.mubr.f32.mxu0 0.0
    %v3315 = vand.u32 %v3123, 4294901760
    %3316 = vmatmul.mubr.f32.gmra.mrb[0].mxu0 %v3315
    %v3317 = vpop.f32.mrb[0].mxu0
    %v3318 = vadd.f32 %v3220, %v3317
    %v3319 = vpop.f32.mrb[0].mxu0
    %3320 = vdwg.mxu0
    %3321 = vmatprep.subr.mxu0 0.0
    %v3322 = vand.u32 %v1793, 4294901760
    %v3323 = vsub.f32 %v1793, %v3322
    %3324 = vmatpush1.msra.mxu0 %v3323
    %3325 = vmatprep.subr.mxu0 0.0
    %v3326 = vand.u32 %v1800, 4294901760
    %v3327 = vsub.f32 %v1800, %v3326
    %3328 = vmatpush1.msra.mxu0 %v3327
    %3329 = vmatprep.subr.mxu0 0.0
    %v3330 = vand.u32 %v1807, 4294901760
    %v3331 = vsub.f32 %v1807, %v3330
    %3332 = vmatpush1.msra.mxu0 %v3331
    %3333 = vmatprep.subr.mxu0 0.0
    %3334 = vmatpush1.msra.mxu0 0.0
    %3335 = vmatprep.subr.mxu0 0.0
    %3336 = vmatpush1.msra.mxu0 0.0
    %3337 = vmatprep.subr.mxu0 0.0
    %3338 = vmatpush1.msra.mxu0 0.0
    %3339 = vmatprep.subr.mxu0 0.0
    %3340 = vmatpush1.msra.mxu0 0.0
    %3341 = vmatprep.subr.mxu0 0.0
    %3342 = vmatpush1.msra.mxu0 0.0
    %3343 = vmatprep.subr.mxu0 0.0
    %3344 = vmatpush1.msra.mxu0 0.0
    %3345 = vmatprep.subr.mxu0 0.0
    %3346 = vmatpush1.msra.mxu0 0.0
    %3347 = vmatprep.subr.mxu0 0.0
    %3348 = vmatpush1.msra.mxu0 0.0
    %3349 = vmatprep.subr.mxu0 0.0
    %3350 = vmatpush1.msra.mxu0 0.0
    %3351 = vmatprep.subr.mxu0 0.0
    %3352 = vmatpush1.msra.mxu0 0.0
    %3353 = vmatprep.subr.mxu0 0.0
    %3354 = vmatpush1.msra.mxu0 0.0
    %3355 = vmatprep.subr.mxu0 0.0
    %3356 = vmatpush1.msra.mxu0 0.0
    %3357 = vmatprep.subr.mxu0 0.0
    %3358 = vmatpush1.msra.mxu0 0.0
    %3359 = vmatprep.subr.mxu0 0.0
    %3360 = vmatpush1.msra.mxu0 0.0
    %3361 = vmatprep.subr.mxu0 0.0
    %3362 = vmatpush1.msra.mxu0 0.0
    %3363 = vmatprep.subr.mxu0 0.0
    %3364 = vmatpush1.msra.mxu0 0.0
    %3365 = vmatprep.subr.mxu0 0.0
    %3366 = vmatpush1.msra.mxu0 0.0
    %3367 = vmatprep.subr.mxu0 0.0
    %3368 = vmatpush1.msra.mxu0 0.0
    %3369 = vmatprep.subr.mxu0 0.0
    %3370 = vmatpush1.msra.mxu0 0.0
    %3371 = vmatprep.subr.mxu0 0.0
    %3372 = vmatpush1.msra.mxu0 0.0
    %3373 = vmatprep.subr.mxu0 0.0
    %3374 = vmatpush1.msra.mxu0 0.0
    %3375 = vmatprep.subr.mxu0 0.0
    %3376 = vmatpush1.msra.mxu0 0.0
    %3377 = vmatprep.subr.mxu0 0.0
    %3378 = vmatpush1.msra.mxu0 0.0
    %3379 = vmatprep.subr.mxu0 0.0
    %3380 = vmatpush1.msra.mxu0 0.0
    %3381 = vmatprep.subr.mxu0 0.0
    %3382 = vmatpush1.msra.mxu0 0.0
    %3383 = vmatprep.subr.mxu0 0.0
    %3384 = vmatpush1.msra.mxu0 0.0
    %3385 = vmatprep.subr.mxu0 0.0
    %3386 = vmatpush1.msra.mxu0 0.0
    %3387 = vmatprep.subr.mxu0 0.0
    %3388 = vmatpush1.msra.mxu0 0.0
    %3389 = vmatprep.subr.mxu0 0.0
    %3390 = vmatpush1.msra.mxu0 0.0
    %3391 = vmatprep.mubr.f32.mxu0 0.0
    %v3392 = vand.u32 %v3117, 4294901760
    %v3393 = vsub.f32 %v3117, %v3392
    %3394 = vmatmul.mubr.f32.gmra.mrb[0].mxu0 %v3393
    %v3395 = vpop.f32.mrb[0].mxu0
    %v3396 = vadd.f32 %v3306, %v3395
    %v3397 = vpop.f32.mrb[0].mxu0
    %3398 = vmatprep.mubr.f32.mxu0 0.0
    %v3399 = vand.u32 %v3120, 4294901760
    %v3400 = vsub.f32 %v3120, %v3399
    %3401 = vmatmul.mubr.f32.gmra.mrb[0].mxu0 %v3400
    %v3402 = vpop.f32.mrb[0].mxu0
    %v3403 = vadd.f32 %v3312, %v3402
    %v3404 = vpop.f32.mrb[0].mxu0
    %3405 = vmatprep.mubr.f32.mxu0 0.0
    %v3406 = vand.u32 %v3123, 4294901760
    %v3407 = vsub.f32 %v3123, %v3406
    %3408 = vmatmul.mubr.f32.gmra.mrb[0].mxu0 %v3407
    %v3409 = vpop.f32.mrb[0].mxu0
    %v3410 = vadd.f32 %v3318, %v3409
    %v3411 = vpop.f32.mrb[0].mxu0
    %3412 = vdwg.mxu0
    %3413 = vmatprep.subr.mxu0 0.0
    %v3414 = vand.u32 %v1793, 4294901760
    %3415 = vmatpush1.msra.mxu0 %v3414
    %3416 = vmatprep.subr.mxu0 0.0
    %v3417 = vand.u32 %v1800, 4294901760
    %3418 = vmatpush1.msra.mxu0 %v3417
    %3419 = vmatprep.subr.mxu0 0.0
    %v3420 = vand.u32 %v1807, 4294901760
    %3421 = vmatpush1.msra.mxu0 %v3420
    %3422 = vmatprep.subr.mxu0 0.0
    %3423 = vmatpush1.msra.mxu0 0.0
    %3424 = vmatprep.subr.mxu0 0.0
    %3425 = vmatpush1.msra.mxu0 0.0
    %3426 = vmatprep.subr.mxu0 0.0
    %3427 = vmatpush1.msra.mxu0 0.0
    %3428 = vmatprep.subr.mxu0 0.0
    %3429 = vmatpush1.msra.mxu0 0.0
    %3430 = vmatprep.subr.mxu0 0.0
    %3431 = vmatpush1.msra.mxu0 0.0
    %3432 = vmatprep.subr.mxu0 0.0
    %3433 = vmatpush1.msra.mxu0 0.0
    %3434 = vmatprep.subr.mxu0 0.0
    %3435 = vmatpush1.msra.mxu0 0.0
    %3436 = vmatprep.subr.mxu0 0.0
    %3437 = vmatpush1.msra.mxu0 0.0
    %3438 = vmatprep.subr.mxu0 0.0
    %3439 = vmatpush1.msra.mxu0 0.0
    %3440 = vmatprep.subr.mxu0 0.0
    %3441 = vmatpush1.msra.mxu0 0.0
    %3442 = vmatprep.subr.mxu0 0.0
    %3443 = vmatpush1.msra.mxu0 0.0
    %3444 = vmatprep.subr.mxu0 0.0
    %3445 = vmatpush1.msra.mxu0 0.0
    %3446 = vmatprep.subr.mxu0 0.0
    %3447 = vmatpush1.msra.mxu0 0.0
    %3448 = vmatprep.subr.mxu0 0.0
    %3449 = vmatpush1.msra.mxu0 0.0
    %3450 = vmatprep.subr.mxu0 0.0
    %3451 = vmatpush1.msra.mxu0 0.0
    %3452 = vmatprep.subr.mxu0 0.0
    %3453 = vmatpush1.msra.mxu0 0.0
    %3454 = vmatprep.subr.mxu0 0.0
    %3455 = vmatpush1.msra.mxu0 0.0
    %3456 = vmatprep.subr.mxu0 0.0
    %3457 = vmatpush1.msra.mxu0 0.0
    %3458 = vmatprep.subr.mxu0 0.0
    %3459 = vmatpush1.msra.mxu0 0.0
    %3460 = vmatprep.subr.mxu0 0.0
    %3461 = vmatpush1.msra.mxu0 0.0
    %3462 = vmatprep.subr.mxu0 0.0
    %3463 = vmatpush1.msra.mxu0 0.0
    %3464 = vmatprep.subr.mxu0 0.0
    %3465 = vmatpush1.msra.mxu0 0.0
    %3466 = vmatprep.subr.mxu0 0.0
    %3467 = vmatpush1.msra.mxu0 0.0
    %3468 = vmatprep.subr.mxu0 0.0
    %3469 = vmatpush1.msra.mxu0 0.0
    %3470 = vmatprep.subr.mxu0 0.0
    %3471 = vmatpush1.msra.mxu0 0.0
    %3472 = vmatprep.subr.mxu0 0.0
    %3473 = vmatpush1.msra.mxu0 0.0
    %3474 = vmatprep.subr.mxu0 0.0
    %3475 = vmatpush1.msra.mxu0 0.0
    %3476 = vmatprep.subr.mxu0 0.0
    %3477 = vmatpush1.msra.mxu0 0.0
    %3478 = vmatprep.subr.mxu0 0.0
    %3479 = vmatpush1.msra.mxu0 0.0
    %3480 = vmatprep.mubr.f32.mxu0 0.0
    %v3481 = vand.u32 %v3117, 4294901760
    %v3482 = vsub.f32 %v3117, %v3481
    %v3483 = vand.u32 %v3482, 4294901760
    %3484 = vmatmul.mubr.f32.gmra.mrb[0].mxu0 %v3483
    %v3485 = vpop.f32.mrb[0].mxu0
    %v3486 = vadd.f32 %v3396, %v3485
    %v3487 = vpop.f32.mrb[0].mxu0
    %3488 = vmatprep.mubr.f32.mxu0 0.0
    %v3489 = vand.u32 %v3120, 4294901760
    %v3490 = vsub.f32 %v3120, %v3489
    %v3491 = vand.u32 %v3490, 4294901760
    %3492 = vmatmul.mubr.f32.gmra.mrb[0].mxu0 %v3491
    %v3493 = vpop.f32.mrb[0].mxu0
    %v3494 = vadd.f32 %v3403, %v3493
    %v3495 = vpop.f32.mrb[0].mxu0
    %3496 = vmatprep.mubr.f32.mxu0 0.0
    %v3497 = vand.u32 %v3123, 4294901760
    %v3498 = vsub.f32 %v3123, %v3497
    %v3499 = vand.u32 %v3498, 4294901760
    %3500 = vmatmul.mubr.f32.gmra.mrb[0].mxu0 %v3499
    %v3501 = vpop.f32.mrb[0].mxu0
    %v3502 = vadd.f32 %v3410, %v3501
    %v3503 = vpop.f32.mrb[0].mxu0
    %3504 = vdwg.mxu0
    %3505 = vmatprep.subr.mxu0 0.0
    %v3506 = vand.u32 %v1793, 4294901760
    %v3507 = vsub.f32 %v1793, %v3506
    %v3508 = vand.u32 %v3507, 4294901760
    %3509 = vmatpush1.msra.mxu0 %v3508
    %3510 = vmatprep.subr.mxu0 0.0
    %v3511 = vand.u32 %v1800, 4294901760
    %v3512 = vsub.f32 %v1800, %v3511
    %v3513 = vand.u32 %v3512, 4294901760
    %3514 = vmatpush1.msra.mxu0 %v3513
    %3515 = vmatprep.subr.mxu0 0.0
    %v3516 = vand.u32 %v1807, 4294901760
    %v3517 = vsub.f32 %v1807, %v3516
    %v3518 = vand.u32 %v3517, 4294901760
    %3519 = vmatpush1.msra.mxu0 %v3518
    %3520 = vmatprep.subr.mxu0 0.0
    %3521 = vmatpush1.msra.mxu0 0.0
    %3522 = vmatprep.subr.mxu0 0.0
    %3523 = vmatpush1.msra.mxu0 0.0
    %3524 = vmatprep.subr.mxu0 0.0
    %3525 = vmatpush1.msra.mxu0 0.0
    %3526 = vmatprep.subr.mxu0 0.0
    %3527 = vmatpush1.msra.mxu0 0.0
    %3528 = vmatprep.subr.mxu0 0.0
    %3529 = vmatpush1.msra.mxu0 0.0
    %3530 = vmatprep.subr.mxu0 0.0
    %3531 = vmatpush1.msra.mxu0 0.0
    %3532 = vmatprep.subr.mxu0 0.0
    %3533 = vmatpush1.msra.mxu0 0.0
    %3534 = vmatprep.subr.mxu0 0.0
    %3535 = vmatpush1.msra.mxu0 0.0
    %3536 = vmatprep.subr.mxu0 0.0
    %3537 = vmatpush1.msra.mxu0 0.0
    %3538 = vmatprep.subr.mxu0 0.0
    %3539 = vmatpush1.msra.mxu0 0.0
    %3540 = vmatprep.subr.mxu0 0.0
    %3541 = vmatpush1.msra.mxu0 0.0
    %3542 = vmatprep.subr.mxu0 0.0
    %3543 = vmatpush1.msra.mxu0 0.0
    %3544 = vmatprep.subr.mxu0 0.0
    %3545 = vmatpush1.msra.mxu0 0.0
    %3546 = vmatprep.subr.mxu0 0.0
    %3547 = vmatpush1.msra.mxu0 0.0
    %3548 = vmatprep.subr.mxu0 0.0
    %3549 = vmatpush1.msra.mxu0 0.0
    %3550 = vmatprep.subr.mxu0 0.0
    %3551 = vmatpush1.msra.mxu0 0.0
    %3552 = vmatprep.subr.mxu0 0.0
    %3553 = vmatpush1.msra.mxu0 0.0
    %3554 = vmatprep.subr.mxu0 0.0
    %3555 = vmatpush1.msra.mxu0 0.0
    %3556 = vmatprep.subr.mxu0 0.0
    %3557 = vmatpush1.msra.mxu0 0.0
    %3558 = vmatprep.subr.mxu0 0.0
    %3559 = vmatpush1.msra.mxu0 0.0
    %3560 = vmatprep.subr.mxu0 0.0
    %3561 = vmatpush1.msra.mxu0 0.0
    %3562 = vmatprep.subr.mxu0 0.0
    %3563 = vmatpush1.msra.mxu0 0.0
    %3564 = vmatprep.subr.mxu0 0.0
    %3565 = vmatpush1.msra.mxu0 0.0
    %3566 = vmatprep.subr.mxu0 0.0
    %3567 = vmatpush1.msra.mxu0 0.0
    %3568 = vmatprep.subr.mxu0 0.0
    %3569 = vmatpush1.msra.mxu0 0.0
    %3570 = vmatprep.subr.mxu0 0.0
    %3571 = vmatpush1.msra.mxu0 0.0
    %3572 = vmatprep.subr.mxu0 0.0
    %3573 = vmatpush1.msra.mxu0 0.0
    %3574 = vmatprep.subr.mxu0 0.0
    %3575 = vmatpush1.msra.mxu0 0.0
    %3576 = vmatprep.subr.mxu0 0.0
    %3577 = vmatpush1.msra.mxu0 0.0
    %3578 = vmatprep.mubr.f32.mxu0 0.0
    %v3579 = vand.u32 %v3117, 4294901760
    %3580 = vmatmul.mubr.f32.gmra.mrb[0].mxu0 %v3579
    %v3581 = vpop.f32.mrb[0].mxu0
    %v3582 = vadd.f32 %v3486, %v3581
    %v3583 = vpop.f32.mrb[0].mxu0
    %3584 = vmatprep.mubr.f32.mxu0 0.0
    %v3585 = vand.u32 %v3120, 4294901760
    %3586 = vmatmul.mubr.f32.gmra.mrb[0].mxu0 %v3585
    %v3587 = vpop.f32.mrb[0].mxu0
    %v3588 = vadd.f32 %v3494, %v3587
    %v3589 = vpop.f32.mrb[0].mxu0
    %3590 = vmatprep.mubr.f32.mxu0 0.0
    %v3591 = vand.u32 %v3123, 4294901760
    %3592 = vmatmul.mubr.f32.gmra.mrb[0].mxu0 %v3591
    %v3593 = vpop.f32.mrb[0].mxu0
    %v3594 = vadd.f32 %v3502, %v3593
    %v3595 = vpop.f32.mrb[0].mxu0
    %3596 = vdwg.mxu0
    %3597 = vmatprep.subr.mxu0 0.0
    %v3598 = vand.u32 %v1793, 4294901760
    %3599 = vmatpush1.msra.mxu0 %v3598
    %3600 = vmatprep.subr.mxu0 0.0
    %v3601 = vand.u32 %v1800, 4294901760
    %3602 = vmatpush1.msra.mxu0 %v3601
    %3603 = vmatprep.subr.mxu0 0.0
    %v3604 = vand.u32 %v1807, 4294901760
    %3605 = vmatpush1.msra.mxu0 %v3604
    %3606 = vmatprep.subr.mxu0 0.0
    %3607 = vmatpush1.msra.mxu0 0.0
    %3608 = vmatprep.subr.mxu0 0.0
    %3609 = vmatpush1.msra.mxu0 0.0
    %3610 = vmatprep.subr.mxu0 0.0
    %3611 = vmatpush1.msra.mxu0 0.0
    %3612 = vmatprep.subr.mxu0 0.0
    %3613 = vmatpush1.msra.mxu0 0.0
    %3614 = vmatprep.subr.mxu0 0.0
    %3615 = vmatpush1.msra.mxu0 0.0
    %3616 = vmatprep.subr.mxu0 0.0
    %3617 = vmatpush1.msra.mxu0 0.0
    %3618 = vmatprep.subr.mxu0 0.0
    %3619 = vmatpush1.msra.mxu0 0.0
    %3620 = vmatprep.subr.mxu0 0.0
    %3621 = vmatpush1.msra.mxu0 0.0
    %3622 = vmatprep.subr.mxu0 0.0
    %3623 = vmatpush1.msra.mxu0 0.0
    %3624 = vmatprep.subr.mxu0 0.0
    %3625 = vmatpush1.msra.mxu0 0.0
    %3626 = vmatprep.subr.mxu0 0.0
    %3627 = vmatpush1.msra.mxu0 0.0
    %3628 = vmatprep.subr.mxu0 0.0
    %3629 = vmatpush1.msra.mxu0 0.0
    %3630 = vmatprep.subr.mxu0 0.0
    %3631 = vmatpush1.msra.mxu0 0.0
    %3632 = vmatprep.subr.mxu0 0.0
    %3633 = vmatpush1.msra.mxu0 0.0
    %3634 = vmatprep.subr.mxu0 0.0
    %3635 = vmatpush1.msra.mxu0 0.0
    %3636 = vmatprep.subr.mxu0 0.0
    %3637 = vmatpush1.msra.mxu0 0.0
    %3638 = vmatprep.subr.mxu0 0.0
    %3639 = vmatpush1.msra.mxu0 0.0
    %3640 = vmatprep.subr.mxu0 0.0
    %3641 = vmatpush1.msra.mxu0 0.0
    %3642 = vmatprep.subr.mxu0 0.0
    %3643 = vmatpush1.msra.mxu0 0.0
    %3644 = vmatprep.subr.mxu0 0.0
    %3645 = vmatpush1.msra.mxu0 0.0
    %3646 = vmatprep.subr.mxu0 0.0
    %3647 = vmatpush1.msra.mxu0 0.0
    %3648 = vmatprep.subr.mxu0 0.0
    %3649 = vmatpush1.msra.mxu0 0.0
    %3650 = vmatprep.subr.mxu0 0.0
    %3651 = vmatpush1.msra.mxu0 0.0
    %3652 = vmatprep.subr.mxu0 0.0
    %3653 = vmatpush1.msra.mxu0 0.0
    %3654 = vmatprep.subr.mxu0 0.0
    %3655 = vmatpush1.msra.mxu0 0.0
    %3656 = vmatprep.subr.mxu0 0.0
    %3657 = vmatpush1.msra.mxu0 0.0
    %3658 = vmatprep.subr.mxu0 0.0
    %3659 = vmatpush1.msra.mxu0 0.0
    %3660 = vmatprep.subr.mxu0 0.0
    %3661 = vmatpush1.msra.mxu0 0.0
    %3662 = vmatprep.subr.mxu0 0.0
    %3663 = vmatpush1.msra.mxu0 0.0
    %3664 = vmatprep.mubr.f32.mxu0 0.0
    %v3665 = vand.u32 %v3117, 4294901760
    %3666 = vmatmul.mubr.f32.gmra.mrb[0].mxu0 %v3665
    %v3667 = vpop.f32.mrb[0].mxu0
    %v3668 = vadd.f32 %v3582, %v3667
    %v3669 = vpop.f32.mrb[0].mxu0
    %3670 = vmatprep.mubr.f32.mxu0 0.0
    %v3671 = vand.u32 %v3120, 4294901760
    %3672 = vmatmul.mubr.f32.gmra.mrb[0].mxu0 %v3671
    %v3673 = vpop.f32.mrb[0].mxu0
    %v3674 = vadd.f32 %v3588, %v3673
    %v3675 = vpop.f32.mrb[0].mxu0
    %3676 = vmatprep.mubr.f32.mxu0 0.0
    %v3677 = vand.u32 %v3123, 4294901760
    %3678 = vmatmul.mubr.f32.gmra.mrb[0].mxu0 %v3677
    %v3679 = vpop.f32.mrb[0].mxu0
    %v3680 = vadd.f32 %v3594, %v3679
    %v3681 = vpop.f32.mrb[0].mxu0
    %3682 = vdwg.mxu0
    %v3683 = vadd.f32 %v3113, %v3668
    %v3684 = vadd.f32 %v3114, %v3674
    %v3685 = vadd.f32 %v3115, %v3680
    %v3686 = vmax.f32 %v3683, 0.0
    %v3687 = vmax.f32 %v3684, 0.0
    %v3688 = vmax.f32 %v3685, 0.0
    %v3689 = vld [vmem:[%s10] sm:$0xff]
    %v3690 = vld [vmem:[%s10 + $0x8] sm:$0xff]
    %v3691 = vld [vmem:[%s10 + $0x10] sm:$0xff]
    %v3692 = vld [vmem:[%s10 + $0x18] sm:$0xff]
    %v3693 = vld [vmem:[%s10 + $0x20] sm:$0xff]
    %v3694 = vld [vmem:[%s10 + $0x28] sm:$0xff]
    %v3695 = vld [vmem:[%s10 + $0x30] sm:$0xff]
    %v3696 = vld [vmem:[%s10 + $0x38] sm:$0xff]
    %v3697 = vld [vmem:[%s10 + $0x40] sm:$0xff]
    %v3698 = vld [vmem:[%s10 + $0x48] sm:$0xff]
    %v3699 = vld [vmem:[%s10 + $0x50] sm:$0xff]
    %v3700 = vld [vmem:[%s10 + $0x58] sm:$0xff]
    %v3701 = vld [vmem:[%s10 + $0x60] sm:$0xff]
    %v3702 = vld [vmem:[%s10 + $0x68] sm:$0xff]
    %v3703 = vld [vmem:[%s10 + $0x70] sm:$0xff]
    %v3704 = vld [vmem:[%s10 + $0x78] sm:$0xff]
    %3705 = vmatprep.subr.mxu0 0.0
    %v3706 = vand.u32 %v3689, 4294901760
    %3707 = vmatpush1.msra.mxu0 %v3706
    %3708 = vmatprep.subr.mxu0 0.0
    %v3709 = vand.u32 %v3690, 4294901760
    %3710 = vmatpush1.msra.mxu0 %v3709
    %3711 = vmatprep.subr.mxu0 0.0
    %v3712 = vand.u32 %v3691, 4294901760
    %3713 = vmatpush1.msra.mxu0 %v3712
    %3714 = vmatprep.subr.mxu0 0.0
    %v3715 = vand.u32 %v3692, 4294901760
    %3716 = vmatpush1.msra.mxu0 %v3715
    %3717 = vmatprep.subr.mxu0 0.0
    %v3718 = vand.u32 %v3693, 4294901760
    %3719 = vmatpush1.msra.mxu0 %v3718
    %3720 = vmatprep.subr.mxu0 0.0
    %v3721 = vand.u32 %v3694, 4294901760
    %3722 = vmatpush1.msra.mxu0 %v3721
    %3723 = vmatprep.subr.mxu0 0.0
    %v3724 = vand.u32 %v3695, 4294901760
    %3725 = vmatpush1.msra.mxu0 %v3724
    %3726 = vmatprep.subr.mxu0 0.0
    %v3727 = vand.u32 %v3696, 4294901760
    %3728 = vmatpush1.msra.mxu0 %v3727
    %3729 = vmatprep.subr.mxu0 0.0
    %v3730 = vand.u32 %v3697, 4294901760
    %3731 = vmatpush1.msra.mxu0 %v3730
    %3732 = vmatprep.subr.mxu0 0.0
    %v3733 = vand.u32 %v3698, 4294901760
    %3734 = vmatpush1.msra.mxu0 %v3733
    %3735 = vmatprep.subr.mxu0 0.0
    %v3736 = vand.u32 %v3699, 4294901760
    %3737 = vmatpush1.msra.mxu0 %v3736
    %3738 = vmatprep.subr.mxu0 0.0
    %v3739 = vand.u32 %v3700, 4294901760
    %3740 = vmatpush1.msra.mxu0 %v3739
    %3741 = vmatprep.subr.mxu0 0.0
    %v3742 = vand.u32 %v3701, 4294901760
    %3743 = vmatpush1.msra.mxu0 %v3742
    %3744 = vmatprep.subr.mxu0 0.0
    %v3745 = vand.u32 %v3702, 4294901760
    %3746 = vmatpush1.msra.mxu0 %v3745
    %3747 = vmatprep.subr.mxu0 0.0
    %v3748 = vand.u32 %v3703, 4294901760
    %3749 = vmatpush1.msra.mxu0 %v3748
    %3750 = vmatprep.subr.mxu0 0.0
    %v3751 = vand.u32 %v3704, 4294901760
    %3752 = vmatpush1.msra.mxu0 %v3751
    %3753 = vmatprep.subr.mxu0 0.0
    %3754 = vmatpush1.msra.mxu0 0.0
    %3755 = vmatprep.subr.mxu0 0.0
    %3756 = vmatpush1.msra.mxu0 0.0
    %3757 = vmatprep.subr.mxu0 0.0
    %3758 = vmatpush1.msra.mxu0 0.0
    %3759 = vmatprep.subr.mxu0 0.0
    %3760 = vmatpush1.msra.mxu0 0.0
    %3761 = vmatprep.subr.mxu0 0.0
    %3762 = vmatpush1.msra.mxu0 0.0
    %3763 = vmatprep.subr.mxu0 0.0
    %3764 = vmatpush1.msra.mxu0 0.0
    %3765 = vmatprep.subr.mxu0 0.0
    %3766 = vmatpush1.msra.mxu0 0.0
    %3767 = vmatprep.subr.mxu0 0.0
    %3768 = vmatpush1.msra.mxu0 0.0
    %3769 = vmatprep.subr.mxu0 0.0
    %3770 = vmatpush1.msra.mxu0 0.0
    %3771 = vmatprep.subr.mxu0 0.0
    %3772 = vmatpush1.msra.mxu0 0.0
    %3773 = vmatprep.subr.mxu0 0.0
    %3774 = vmatpush1.msra.mxu0 0.0
    %3775 = vmatprep.subr.mxu0 0.0
    %3776 = vmatpush1.msra.mxu0 0.0
    %3777 = vmatprep.subr.mxu0 0.0
    %3778 = vmatpush1.msra.mxu0 0.0
    %3779 = vmatprep.subr.mxu0 0.0
    %3780 = vmatpush1.msra.mxu0 0.0
    %3781 = vmatprep.subr.mxu0 0.0
    %3782 = vmatpush1.msra.mxu0 0.0
    %3783 = vmatprep.subr.mxu0 0.0
    %3784 = vmatpush1.msra.mxu0 0.0
    %3785 = vmatprep.mubr.f32.mxu0 0.0
    %v3786 = vand.u32 %v3686, 4294901760
    %v3787 = vsub.f32 %v3686, %v3786
    %v3788 = vand.u32 %v3787, 4294901760
    %v3789 = vsub.f32 %v3787, %v3788
    %v3790 = vand.u32 %v3789, 4294901760
    %3791 = vmatmul.mubr.f32.gmra.mrb[0].mxu0 %v3790
    %v3792 = vpop.f32.mrb[0].mxu0
    %v3793 = vadd.f32 0.0, %v3792
    %v3794 = vpop.f32.mrb[0].mxu0
    %3795 = vmatprep.mubr.f32.mxu0 0.0
    %v3796 = vand.u32 %v3687, 4294901760
    %v3797 = vsub.f32 %v3687, %v3796
    %v3798 = vand.u32 %v3797, 4294901760
    %v3799 = vsub.f32 %v3797, %v3798
    %v3800 = vand.u32 %v3799, 4294901760
    %3801 = vmatmul.mubr.f32.gmra.mrb[0].mxu0 %v3800
    %v3802 = vpop.f32.mrb[0].mxu0
    %v3803 = vadd.f32 0.0, %v3802
    %v3804 = vpop.f32.mrb[0].mxu0
    %3805 = vmatprep.mubr.f32.mxu0 0.0
    %v3806 = vand.u32 %v3688, 4294901760
    %v3807 = vsub.f32 %v3688, %v3806
    %v3808 = vand.u32 %v3807, 4294901760
    %v3809 = vsub.f32 %v3807, %v3808
    %v3810 = vand.u32 %v3809, 4294901760
    %3811 = vmatmul.mubr.f32.gmra.mrb[0].mxu0 %v3810
    %v3812 = vpop.f32.mrb[0].mxu0
    %v3813 = vadd.f32 0.0, %v3812
    %v3814 = vpop.f32.mrb[0].mxu0
    %3815 = vdwg.mxu0
    %3816 = vmatprep.subr.mxu0 0.0
    %v3817 = vand.u32 %v3689, 4294901760
    %v3818 = vsub.f32 %v3689, %v3817
    %v3819 = vand.u32 %v3818, 4294901760
    %v3820 = vsub.f32 %v3818, %v3819
    %v3821 = vand.u32 %v3820, 4294901760
    %3822 = vmatpush1.msra.mxu0 %v3821
    %3823 = vmatprep.subr.mxu0 0.0
    %v3824 = vand.u32 %v3690, 4294901760
    %v3825 = vsub.f32 %v3690, %v3824
    %v3826 = vand.u32 %v3825, 4294901760
    %v3827 = vsub.f32 %v3825, %v3826
    %v3828 = vand.u32 %v3827, 4294901760
    %3829 = vmatpush1.msra.mxu0 %v3828
    %3830 = vmatprep.subr.mxu0 0.0
    %v3831 = vand.u32 %v3691, 4294901760
    %v3832 = vsub.f32 %v3691, %v3831
    %v3833 = vand.u32 %v3832, 4294901760
    %v3834 = vsub.f32 %v3832, %v3833
    %v3835 = vand.u32 %v3834, 4294901760
    %3836 = vmatpush1.msra.mxu0 %v3835
    %3837 = vmatprep.subr.mxu0 0.0
    %v3838 = vand.u32 %v3692, 4294901760
    %v3839 = vsub.f32 %v3692, %v3838
    %v3840 = vand.u32 %v3839, 4294901760
    %v3841 = vsub.f32 %v3839, %v3840
    %v3842 = vand.u32 %v3841, 4294901760
    %3843 = vmatpush1.msra.mxu0 %v3842
    %3844 = vmatprep.subr.mxu0 0.0
    %v3845 = vand.u32 %v3693, 4294901760
    %v3846 = vsub.f32 %v3693, %v3845
    %v3847 = vand.u32 %v3846, 4294901760
    %v3848 = vsub.f32 %v3846, %v3847
    %v3849 = vand.u32 %v3848, 4294901760
    %3850 = vmatpush1.msra.mxu0 %v3849
    %3851 = vmatprep.subr.mxu0 0.0
    %v3852 = vand.u32 %v3694, 4294901760
    %v3853 = vsub.f32 %v3694, %v3852
    %v3854 = vand.u32 %v3853, 4294901760
    %v3855 = vsub.f32 %v3853, %v3854
    %v3856 = vand.u32 %v3855, 4294901760
    %3857 = vmatpush1.msra.mxu0 %v3856
    %3858 = vmatprep.subr.mxu0 0.0
    %v3859 = vand.u32 %v3695, 4294901760
    %v3860 = vsub.f32 %v3695, %v3859
    %v3861 = vand.u32 %v3860, 4294901760
    %v3862 = vsub.f32 %v3860, %v3861
    %v3863 = vand.u32 %v3862, 4294901760
    %3864 = vmatpush1.msra.mxu0 %v3863
    %3865 = vmatprep.subr.mxu0 0.0
    %v3866 = vand.u32 %v3696, 4294901760
    %v3867 = vsub.f32 %v3696, %v3866
    %v3868 = vand.u32 %v3867, 4294901760
    %v3869 = vsub.f32 %v3867, %v3868
    %v3870 = vand.u32 %v3869, 4294901760
    %3871 = vmatpush1.msra.mxu0 %v3870
    %3872 = vmatprep.subr.mxu0 0.0
    %v3873 = vand.u32 %v3697, 4294901760
    %v3874 = vsub.f32 %v3697, %v3873
    %v3875 = vand.u32 %v3874, 4294901760
    %v3876 = vsub.f32 %v3874, %v3875
    %v3877 = vand.u32 %v3876, 4294901760
    %3878 = vmatpush1.msra.mxu0 %v3877
    %3879 = vmatprep.subr.mxu0 0.0
    %v3880 = vand.u32 %v3698, 4294901760
    %v3881 = vsub.f32 %v3698, %v3880
    %v3882 = vand.u32 %v3881, 4294901760
    %v3883 = vsub.f32 %v3881, %v3882
    %v3884 = vand.u32 %v3883, 4294901760
    %3885 = vmatpush1.msra.mxu0 %v3884
    %3886 = vmatprep.subr.mxu0 0.0
    %v3887 = vand.u32 %v3699, 4294901760
    %v3888 = vsub.f32 %v3699, %v3887
    %v3889 = vand.u32 %v3888, 4294901760
    %v3890 = vsub.f32 %v3888, %v3889
    %v3891 = vand.u32 %v3890, 4294901760
    %3892 = vmatpush1.msra.mxu0 %v3891
    %3893 = vmatprep.subr.mxu0 0.0
    %v3894 = vand.u32 %v3700, 4294901760
    %v3895 = vsub.f32 %v3700, %v3894
    %v3896 = vand.u32 %v3895, 4294901760
    %v3897 = vsub.f32 %v3895, %v3896
    %v3898 = vand.u32 %v3897, 4294901760
    %3899 = vmatpush1.msra.mxu0 %v3898
    %3900 = vmatprep.subr.mxu0 0.0
    %v3901 = vand.u32 %v3701, 4294901760
    %v3902 = vsub.f32 %v3701, %v3901
    %v3903 = vand.u32 %v3902, 4294901760
    %v3904 = vsub.f32 %v3902, %v3903
    %v3905 = vand.u32 %v3904, 4294901760
    %3906 = vmatpush1.msra.mxu0 %v3905
    %3907 = vmatprep.subr.mxu0 0.0
    %v3908 = vand.u32 %v3702, 4294901760
    %v3909 = vsub.f32 %v3702, %v3908
    %v3910 = vand.u32 %v3909, 4294901760
    %v3911 = vsub.f32 %v3909, %v3910
    %v3912 = vand.u32 %v3911, 4294901760
    %3913 = vmatpush1.msra.mxu0 %v3912
    %3914 = vmatprep.subr.mxu0 0.0
    %v3915 = vand.u32 %v3703, 4294901760
    %v3916 = vsub.f32 %v3703, %v3915
    %v3917 = vand.u32 %v3916, 4294901760
    %v3918 = vsub.f32 %v3916, %v3917
    %v3919 = vand.u32 %v3918, 4294901760
    %3920 = vmatpush1.msra.mxu0 %v3919
    %3921 = vmatprep.subr.mxu0 0.0
    %v3922 = vand.u32 %v3704, 4294901760
    %v3923 = vsub.f32 %v3704, %v3922
    %v3924 = vand.u32 %v3923, 4294901760
    %v3925 = vsub.f32 %v3923, %v3924
    %v3926 = vand.u32 %v3925, 4294901760
    %3927 = vmatpush1.msra.mxu0 %v3926
    %3928 = vmatprep.subr.mxu0 0.0
    %3929 = vmatpush1.msra.mxu0 0.0
    %3930 = vmatprep.subr.mxu0 0.0
    %3931 = vmatpush1.msra.mxu0 0.0
    %3932 = vmatprep.subr.mxu0 0.0
    %3933 = vmatpush1.msra.mxu0 0.0
    %3934 = vmatprep.subr.mxu0 0.0
    %3935 = vmatpush1.msra.mxu0 0.0
    %3936 = vmatprep.subr.mxu0 0.0
    %3937 = vmatpush1.msra.mxu0 0.0
    %3938 = vmatprep.subr.mxu0 0.0
    %3939 = vmatpush1.msra.mxu0 0.0
    %3940 = vmatprep.subr.mxu0 0.0
    %3941 = vmatpush1.msra.mxu0 0.0
    %3942 = vmatprep.subr.mxu0 0.0
    %3943 = vmatpush1.msra.mxu0 0.0
    %3944 = vmatprep.subr.mxu0 0.0
    %3945 = vmatpush1.msra.mxu0 0.0
    %3946 = vmatprep.subr.mxu0 0.0
    %3947 = vmatpush1.msra.mxu0 0.0
    %3948 = vmatprep.subr.mxu0 0.0
    %3949 = vmatpush1.msra.mxu0 0.0
    %3950 = vmatprep.subr.mxu0 0.0
    %3951 = vmatpush1.msra.mxu0 0.0
    %3952 = vmatprep.subr.mxu0 0.0
    %3953 = vmatpush1.msra.mxu0 0.0
    %3954 = vmatprep.subr.mxu0 0.0
    %3955 = vmatpush1.msra.mxu0 0.0
    %3956 = vmatprep.subr.mxu0 0.0
    %3957 = vmatpush1.msra.mxu0 0.0
    %3958 = vmatprep.subr.mxu0 0.0
    %3959 = vmatpush1.msra.mxu0 0.0
    %3960 = vmatprep.mubr.f32.mxu0 0.0
    %v3961 = vand.u32 %v3686, 4294901760
    %3962 = vmatmul.mubr.f32.gmra.mrb[0].mxu0 %v3961
    %v3963 = vpop.f32.mrb[0].mxu0
    %v3964 = vadd.f32 %v3793, %v3963
    %v3965 = vpop.f32.mrb[0].mxu0
    %3966 = vmatprep.mubr.f32.mxu0 0.0
    %v3967 = vand.u32 %v3687, 4294901760
    %3968 = vmatmul.mubr.f32.gmra.mrb[0].mxu0 %v3967
    %v3969 = vpop.f32.mrb[0].mxu0
    %v3970 = vadd.f32 %v3803, %v3969
    %v3971 = vpop.f32.mrb[0].mxu0
    %3972 = vmatprep.mubr.f32.mxu0 0.0
    %v3973 = vand.u32 %v3688, 4294901760
    %3974 = vmatmul.mubr.f32.gmra.mrb[0].mxu0 %v3973
    %v3975 = vpop.f32.mrb[0].mxu0
    %v3976 = vadd.f32 %v3813, %v3975
    %v3977 = vpop.f32.mrb[0].mxu0
    %3978 = vdwg.mxu0
    %3979 = vmatprep.subr.mxu0 0.0
    %v3980 = vand.u32 %v3689, 4294901760
    %v3981 = vsub.f32 %v3689, %v3980
    %3982 = vmatpush1.msra.mxu0 %v3981
    %3983 = vmatprep.subr.mxu0 0.0
    %v3984 = vand.u32 %v3690, 4294901760
    %v3985 = vsub.f32 %v3690, %v3984
    %3986 = vmatpush1.msra.mxu0 %v3985
    %3987 = vmatprep.subr.mxu0 0.0
    %v3988 = vand.u32 %v3691, 4294901760
    %v3989 = vsub.f32 %v3691, %v3988
    %3990 = vmatpush1.msra.mxu0 %v3989
    %3991 = vmatprep.subr.mxu0 0.0
    %v3992 = vand.u32 %v3692, 4294901760
    %v3993 = vsub.f32 %v3692, %v3992
    %3994 = vmatpush1.msra.mxu0 %v3993
    %3995 = vmatprep.subr.mxu0 0.0
    %v3996 = vand.u32 %v3693, 4294901760
    %v3997 = vsub.f32 %v3693, %v3996
    %3998 = vmatpush1.msra.mxu0 %v3997
    %3999 = vmatprep.subr.mxu0 0.0
    %v4000 = vand.u32 %v3694, 4294901760
    %v4001 = vsub.f32 %v3694, %v4000
    %4002 = vmatpush1.msra.mxu0 %v4001
    %4003 = vmatprep.subr.mxu0 0.0
    %v4004 = vand.u32 %v3695, 4294901760
    %v4005 = vsub.f32 %v3695, %v4004
    %4006 = vmatpush1.msra.mxu0 %v4005
    %4007 = vmatprep.subr.mxu0 0.0
    %v4008 = vand.u32 %v3696, 4294901760
    %v4009 = vsub.f32 %v3696, %v4008
    %4010 = vmatpush1.msra.mxu0 %v4009
    %4011 = vmatprep.subr.mxu0 0.0
    %v4012 = vand.u32 %v3697, 4294901760
    %v4013 = vsub.f32 %v3697, %v4012
    %4014 = vmatpush1.msra.mxu0 %v4013
    %4015 = vmatprep.subr.mxu0 0.0
    %v4016 = vand.u32 %v3698, 4294901760
    %v4017 = vsub.f32 %v3698, %v4016
    %4018 = vmatpush1.msra.mxu0 %v4017
    %4019 = vmatprep.subr.mxu0 0.0
    %v4020 = vand.u32 %v3699, 4294901760
    %v4021 = vsub.f32 %v3699, %v4020
    %4022 = vmatpush1.msra.mxu0 %v4021
    %4023 = vmatprep.subr.mxu0 0.0
    %v4024 = vand.u32 %v3700, 4294901760
    %v4025 = vsub.f32 %v3700, %v4024
    %4026 = vmatpush1.msra.mxu0 %v4025
    %4027 = vmatprep.subr.mxu0 0.0
    %v4028 = vand.u32 %v3701, 4294901760
    %v4029 = vsub.f32 %v3701, %v4028
    %4030 = vmatpush1.msra.mxu0 %v4029
    %4031 = vmatprep.subr.mxu0 0.0
    %v4032 = vand.u32 %v3702, 4294901760
    %v4033 = vsub.f32 %v3702, %v4032
    %4034 = vmatpush1.msra.mxu0 %v4033
    %4035 = vmatprep.subr.mxu0 0.0
    %v4036 = vand.u32 %v3703, 4294901760
    %v4037 = vsub.f32 %v3703, %v4036
    %4038 = vmatpush1.msra.mxu0 %v4037
    %4039 = vmatprep.subr.mxu0 0.0
    %v4040 = vand.u32 %v3704, 4294901760
    %v4041 = vsub.f32 %v3704, %v4040
    %4042 = vmatpush1.msra.mxu0 %v4041
    %4043 = vmatprep.subr.mxu0 0.0
    %4044 = vmatpush1.msra.mxu0 0.0
    %4045 = vmatprep.subr.mxu0 0.0
    %4046 = vmatpush1.msra.mxu0 0.0
    %4047 = vmatprep.subr.mxu0 0.0
    %4048 = vmatpush1.msra.mxu0 0.0
    %4049 = vmatprep.subr.mxu0 0.0
    %4050 = vmatpush1.msra.mxu0 0.0
    %4051 = vmatprep.subr.mxu0 0.0
    %4052 = vmatpush1.msra.mxu0 0.0
    %4053 = vmatprep.subr.mxu0 0.0
    %4054 = vmatpush1.msra.mxu0 0.0
    %4055 = vmatprep.subr.mxu0 0.0
    %4056 = vmatpush1.msra.mxu0 0.0
    %4057 = vmatprep.subr.mxu0 0.0
    %4058 = vmatpush1.msra.mxu0 0.0
    %4059 = vmatprep.subr.mxu0 0.0
    %4060 = vmatpush1.msra.mxu0 0.0
    %4061 = vmatprep.subr.mxu0 0.0
    %4062 = vmatpush1.msra.mxu0 0.0
    %4063 = vmatprep.subr.mxu0 0.0
    %4064 = vmatpush1.msra.mxu0 0.0
    %4065 = vmatprep.subr.mxu0 0.0
    %4066 = vmatpush1.msra.mxu0 0.0
    %4067 = vmatprep.subr.mxu0 0.0
    %4068 = vmatpush1.msra.mxu0 0.0
    %4069 = vmatprep.subr.mxu0 0.0
    %4070 = vmatpush1.msra.mxu0 0.0
    %4071 = vmatprep.subr.mxu0 0.0
    %4072 = vmatpush1.msra.mxu0 0.0
    %4073 = vmatprep.subr.mxu0 0.0
    %4074 = vmatpush1.msra.mxu0 0.0
    %4075 = vmatprep.mubr.f32.mxu0 0.0
    %v4076 = vand.u32 %v3686, 4294901760
    %v4077 = vsub.f32 %v3686, %v4076
    %4078 = vmatmul.mubr.f32.gmra.mrb[0].mxu0 %v4077
    %v4079 = vpop.f32.mrb[0].mxu0
    %v4080 = vadd.f32 %v3964, %v4079
    %v4081 = vpop.f32.mrb[0].mxu0
    %4082 = vmatprep.mubr.f32.mxu0 0.0
    %v4083 = vand.u32 %v3687, 4294901760
    %v4084 = vsub.f32 %v3687, %v4083
    %4085 = vmatmul.mubr.f32.gmra.mrb[0].mxu0 %v4084
    %v4086 = vpop.f32.mrb[0].mxu0
    %v4087 = vadd.f32 %v3970, %v4086
    %v4088 = vpop.f32.mrb[0].mxu0
    %4089 = vmatprep.mubr.f32.mxu0 0.0
    %v4090 = vand.u32 %v3688, 4294901760
    %v4091 = vsub.f32 %v3688, %v4090
    %4092 = vmatmul.mubr.f32.gmra.mrb[0].mxu0 %v4091
    %v4093 = vpop.f32.mrb[0].mxu0
    %v4094 = vadd.f32 %v3976, %v4093
    %v4095 = vpop.f32.mrb[0].mxu0
    %4096 = vdwg.mxu0
    %4097 = vmatprep.subr.mxu0 0.0
    %v4098 = vand.u32 %v3689, 4294901760
    %4099 = vmatpush1.msra.mxu0 %v4098
    %4100 = vmatprep.subr.mxu0 0.0
    %v4101 = vand.u32 %v3690, 4294901760
    %4102 = vmatpush1.msra.mxu0 %v4101
    %4103 = vmatprep.subr.mxu0 0.0
    %v4104 = vand.u32 %v3691, 4294901760
    %4105 = vmatpush1.msra.mxu0 %v4104
    %4106 = vmatprep.subr.mxu0 0.0
    %v4107 = vand.u32 %v3692, 4294901760
    %4108 = vmatpush1.msra.mxu0 %v4107
    %4109 = vmatprep.subr.mxu0 0.0
    %v4110 = vand.u32 %v3693, 4294901760
    %4111 = vmatpush1.msra.mxu0 %v4110
    %4112 = vmatprep.subr.mxu0 0.0
    %v4113 = vand.u32 %v3694, 4294901760
    %4114 = vmatpush1.msra.mxu0 %v4113
    %4115 = vmatprep.subr.mxu0 0.0
    %v4116 = vand.u32 %v3695, 4294901760
    %4117 = vmatpush1.msra.mxu0 %v4116
    %4118 = vmatprep.subr.mxu0 0.0
    %v4119 = vand.u32 %v3696, 4294901760
    %4120 = vmatpush1.msra.mxu0 %v4119
    %4121 = vmatprep.subr.mxu0 0.0
    %v4122 = vand.u32 %v3697, 4294901760
    %4123 = vmatpush1.msra.mxu0 %v4122
    %4124 = vmatprep.subr.mxu0 0.0
    %v4125 = vand.u32 %v3698, 4294901760
    %4126 = vmatpush1.msra.mxu0 %v4125
    %4127 = vmatprep.subr.mxu0 0.0
    %v4128 = vand.u32 %v3699, 4294901760
    %4129 = vmatpush1.msra.mxu0 %v4128
    %4130 = vmatprep.subr.mxu0 0.0
    %v4131 = vand.u32 %v3700, 4294901760
    %4132 = vmatpush1.msra.mxu0 %v4131
    %4133 = vmatprep.subr.mxu0 0.0
    %v4134 = vand.u32 %v3701, 4294901760
    %4135 = vmatpush1.msra.mxu0 %v4134
    %4136 = vmatprep.subr.mxu0 0.0
    %v4137 = vand.u32 %v3702, 4294901760
    %4138 = vmatpush1.msra.mxu0 %v4137
    %4139 = vmatprep.subr.mxu0 0.0
    %v4140 = vand.u32 %v3703, 4294901760
    %4141 = vmatpush1.msra.mxu0 %v4140
    %4142 = vmatprep.subr.mxu0 0.0
    %v4143 = vand.u32 %v3704, 4294901760
    %4144 = vmatpush1.msra.mxu0 %v4143
    %4145 = vmatprep.subr.mxu0 0.0
    %4146 = vmatpush1.msra.mxu0 0.0
    %4147 = vmatprep.subr.mxu0 0.0
    %4148 = vmatpush1.msra.mxu0 0.0
    %4149 = vmatprep.subr.mxu0 0.0
    %4150 = vmatpush1.msra.mxu0 0.0
    %4151 = vmatprep.subr.mxu0 0.0
    %4152 = vmatpush1.msra.mxu0 0.0
    %4153 = vmatprep.subr.mxu0 0.0
    %4154 = vmatpush1.msra.mxu0 0.0
    %4155 = vmatprep.subr.mxu0 0.0
    %4156 = vmatpush1.msra.mxu0 0.0
    %4157 = vmatprep.subr.mxu0 0.0
    %4158 = vmatpush1.msra.mxu0 0.0
    %4159 = vmatprep.subr.mxu0 0.0
    %4160 = vmatpush1.msra.mxu0 0.0
    %4161 = vmatprep.subr.mxu0 0.0
    %4162 = vmatpush1.msra.mxu0 0.0
    %4163 = vmatprep.subr.mxu0 0.0
    %4164 = vmatpush1.msra.mxu0 0.0
    %4165 = vmatprep.subr.mxu0 0.0
    %4166 = vmatpush1.msra.mxu0 0.0
    %4167 = vmatprep.subr.mxu0 0.0
    %4168 = vmatpush1.msra.mxu0 0.0
    %4169 = vmatprep.subr.mxu0 0.0
    %4170 = vmatpush1.msra.mxu0 0.0
    %4171 = vmatprep.subr.mxu0 0.0
    %4172 = vmatpush1.msra.mxu0 0.0
    %4173 = vmatprep.subr.mxu0 0.0
    %4174 = vmatpush1.msra.mxu0 0.0
    %4175 = vmatprep.subr.mxu0 0.0
    %4176 = vmatpush1.msra.mxu0 0.0
    %4177 = vmatprep.mubr.f32.mxu0 0.0
    %v4178 = vand.u32 %v3686, 4294901760
    %v4179 = vsub.f32 %v3686, %v4178
    %v4180 = vand.u32 %v4179, 4294901760
    %4181 = vmatmul.mubr.f32.gmra.mrb[0].mxu0 %v4180
    %v4182 = vpop.f32.mrb[0].mxu0
    %v4183 = vadd.f32 %v4080, %v4182
    %v4184 = vpop.f32.mrb[0].mxu0
    %4185 = vmatprep.mubr.f32.mxu0 0.0
    %v4186 = vand.u32 %v3687, 4294901760
    %v4187 = vsub.f32 %v3687, %v4186
    %v4188 = vand.u32 %v4187, 4294901760
    %4189 = vmatmul.mubr.f32.gmra.mrb[0].mxu0 %v4188
    %v4190 = vpop.f32.mrb[0].mxu0
    %v4191 = vadd.f32 %v4087, %v4190
    %v4192 = vpop.f32.mrb[0].mxu0
    %4193 = vmatprep.mubr.f32.mxu0 0.0
    %v4194 = vand.u32 %v3688, 4294901760
    %v4195 = vsub.f32 %v3688, %v4194
    %v4196 = vand.u32 %v4195, 4294901760
    %4197 = vmatmul.mubr.f32.gmra.mrb[0].mxu0 %v4196
    %v4198 = vpop.f32.mrb[0].mxu0
    %v4199 = vadd.f32 %v4094, %v4198
    %v4200 = vpop.f32.mrb[0].mxu0
    %4201 = vdwg.mxu0
    %4202 = vmatprep.subr.mxu0 0.0
    %v4203 = vand.u32 %v3689, 4294901760
    %v4204 = vsub.f32 %v3689, %v4203
    %v4205 = vand.u32 %v4204, 4294901760
    %4206 = vmatpush1.msra.mxu0 %v4205
    %4207 = vmatprep.subr.mxu0 0.0
    %v4208 = vand.u32 %v3690, 4294901760
    %v4209 = vsub.f32 %v3690, %v4208
    %v4210 = vand.u32 %v4209, 4294901760
    %4211 = vmatpush1.msra.mxu0 %v4210
    %4212 = vmatprep.subr.mxu0 0.0
    %v4213 = vand.u32 %v3691, 4294901760
    %v4214 = vsub.f32 %v3691, %v4213
    %v4215 = vand.u32 %v4214, 4294901760
    %4216 = vmatpush1.msra.mxu0 %v4215
    %4217 = vmatprep.subr.mxu0 0.0
    %v4218 = vand.u32 %v3692, 4294901760
    %v4219 = vsub.f32 %v3692, %v4218
    %v4220 = vand.u32 %v4219, 4294901760
    %4221 = vmatpush1.msra.mxu0 %v4220
    %4222 = vmatprep.subr.mxu0 0.0
    %v4223 = vand.u32 %v3693, 4294901760
    %v4224 = vsub.f32 %v3693, %v4223
    %v4225 = vand.u32 %v4224, 4294901760
    %4226 = vmatpush1.msra.mxu0 %v4225
    %4227 = vmatprep.subr.mxu0 0.0
    %v4228 = vand.u32 %v3694, 4294901760
    %v4229 = vsub.f32 %v3694, %v4228
    %v4230 = vand.u32 %v4229, 4294901760
    %4231 = vmatpush1.msra.mxu0 %v4230
    %4232 = vmatprep.subr.mxu0 0.0
    %v4233 = vand.u32 %v3695, 4294901760
    %v4234 = vsub.f32 %v3695, %v4233
    %v4235 = vand.u32 %v4234, 4294901760
    %4236 = vmatpush1.msra.mxu0 %v4235
    %4237 = vmatprep.subr.mxu0 0.0
    %v4238 = vand.u32 %v3696, 4294901760
    %v4239 = vsub.f32 %v3696, %v4238
    %v4240 = vand.u32 %v4239, 4294901760
    %4241 = vmatpush1.msra.mxu0 %v4240
    %4242 = vmatprep.subr.mxu0 0.0
    %v4243 = vand.u32 %v3697, 4294901760
    %v4244 = vsub.f32 %v3697, %v4243
    %v4245 = vand.u32 %v4244, 4294901760
    %4246 = vmatpush1.msra.mxu0 %v4245
    %4247 = vmatprep.subr.mxu0 0.0
    %v4248 = vand.u32 %v3698, 4294901760
    %v4249 = vsub.f32 %v3698, %v4248
    %v4250 = vand.u32 %v4249, 4294901760
    %4251 = vmatpush1.msra.mxu0 %v4250
    %4252 = vmatprep.subr.mxu0 0.0
    %v4253 = vand.u32 %v3699, 4294901760
    %v4254 = vsub.f32 %v3699, %v4253
    %v4255 = vand.u32 %v4254, 4294901760
    %4256 = vmatpush1.msra.mxu0 %v4255
    %4257 = vmatprep.subr.mxu0 0.0
    %v4258 = vand.u32 %v3700, 4294901760
    %v4259 = vsub.f32 %v3700, %v4258
    %v4260 = vand.u32 %v4259, 4294901760
    %4261 = vmatpush1.msra.mxu0 %v4260
    %4262 = vmatprep.subr.mxu0 0.0
    %v4263 = vand.u32 %v3701, 4294901760
    %v4264 = vsub.f32 %v3701, %v4263
    %v4265 = vand.u32 %v4264, 4294901760
    %4266 = vmatpush1.msra.mxu0 %v4265
    %4267 = vmatprep.subr.mxu0 0.0
    %v4268 = vand.u32 %v3702, 4294901760
    %v4269 = vsub.f32 %v3702, %v4268
    %v4270 = vand.u32 %v4269, 4294901760
    %4271 = vmatpush1.msra.mxu0 %v4270
    %4272 = vmatprep.subr.mxu0 0.0
    %v4273 = vand.u32 %v3703, 4294901760
    %v4274 = vsub.f32 %v3703, %v4273
    %v4275 = vand.u32 %v4274, 4294901760
    %4276 = vmatpush1.msra.mxu0 %v4275
    %4277 = vmatprep.subr.mxu0 0.0
    %v4278 = vand.u32 %v3704, 4294901760
    %v4279 = vsub.f32 %v3704, %v4278
    %v4280 = vand.u32 %v4279, 4294901760
    %4281 = vmatpush1.msra.mxu0 %v4280
    %4282 = vmatprep.subr.mxu0 0.0
    %4283 = vmatpush1.msra.mxu0 0.0
    %4284 = vmatprep.subr.mxu0 0.0
    %4285 = vmatpush1.msra.mxu0 0.0
    %4286 = vmatprep.subr.mxu0 0.0
    %4287 = vmatpush1.msra.mxu0 0.0
    %4288 = vmatprep.subr.mxu0 0.0
    %4289 = vmatpush1.msra.mxu0 0.0
    %4290 = vmatprep.subr.mxu0 0.0
    %4291 = vmatpush1.msra.mxu0 0.0
    %4292 = vmatprep.subr.mxu0 0.0
    %4293 = vmatpush1.msra.mxu0 0.0
    %4294 = vmatprep.subr.mxu0 0.0
    %4295 = vmatpush1.msra.mxu0 0.0
    %4296 = vmatprep.subr.mxu0 0.0
    %4297 = vmatpush1.msra.mxu0 0.0
    %4298 = vmatprep.subr.mxu0 0.0
    %4299 = vmatpush1.msra.mxu0 0.0
    %4300 = vmatprep.subr.mxu0 0.0
    %4301 = vmatpush1.msra.mxu0 0.0
    %4302 = vmatprep.subr.mxu0 0.0
    %4303 = vmatpush1.msra.mxu0 0.0
    %4304 = vmatprep.subr.mxu0 0.0
    %4305 = vmatpush1.msra.mxu0 0.0
    %4306 = vmatprep.subr.mxu0 0.0
    %4307 = vmatpush1.msra.mxu0 0.0
    %4308 = vmatprep.subr.mxu0 0.0
    %4309 = vmatpush1.msra.mxu0 0.0
    %4310 = vmatprep.subr.mxu0 0.0
    %4311 = vmatpush1.msra.mxu0 0.0
    %4312 = vmatprep.subr.mxu0 0.0
    %4313 = vmatpush1.msra.mxu0 0.0
    %4314 = vmatprep.mubr.f32.mxu0 0.0
    %v4315 = vand.u32 %v3686, 4294901760
    %4316 = vmatmul.mubr.f32.gmra.mrb[0].mxu0 %v4315
    %v4317 = vpop.f32.mrb[0].mxu0
    %v4318 = vadd.f32 %v4183, %v4317
    %v4319 = vpop.f32.mrb[0].mxu0
    %4320 = vmatprep.mubr.f32.mxu0 0.0
    %v4321 = vand.u32 %v3687, 4294901760
    %4322 = vmatmul.mubr.f32.gmra.mrb[0].mxu0 %v4321
    %v4323 = vpop.f32.mrb[0].mxu0
    %v4324 = vadd.f32 %v4191, %v4323
    %v4325 = vpop.f32.mrb[0].mxu0
    %4326 = vmatprep.mubr.f32.mxu0 0.0
    %v4327 = vand.u32 %v3688, 4294901760
    %4328 = vmatmul.mubr.f32.gmra.mrb[0].mxu0 %v4327
    %v4329 = vpop.f32.mrb[0].mxu0
    %v4330 = vadd.f32 %v4199, %v4329
    %v4331 = vpop.f32.mrb[0].mxu0
    %4332 = vdwg.mxu0
    %4333 = vmatprep.subr.mxu0 0.0
    %v4334 = vand.u32 %v3689, 4294901760
    %4335 = vmatpush1.msra.mxu0 %v4334
    %4336 = vmatprep.subr.mxu0 0.0
    %v4337 = vand.u32 %v3690, 4294901760
    %4338 = vmatpush1.msra.mxu0 %v4337
    %4339 = vmatprep.subr.mxu0 0.0
    %v4340 = vand.u32 %v3691, 4294901760
    %4341 = vmatpush1.msra.mxu0 %v4340
    %4342 = vmatprep.subr.mxu0 0.0
    %v4343 = vand.u32 %v3692, 4294901760
    %4344 = vmatpush1.msra.mxu0 %v4343
    %4345 = vmatprep.subr.mxu0 0.0
    %v4346 = vand.u32 %v3693, 4294901760
    %4347 = vmatpush1.msra.mxu0 %v4346
    %4348 = vmatprep.subr.mxu0 0.0
    %v4349 = vand.u32 %v3694, 4294901760
    %4350 = vmatpush1.msra.mxu0 %v4349
    %4351 = vmatprep.subr.mxu0 0.0
    %v4352 = vand.u32 %v3695, 4294901760
    %4353 = vmatpush1.msra.mxu0 %v4352
    %4354 = vmatprep.subr.mxu0 0.0
    %v4355 = vand.u32 %v3696, 4294901760
    %4356 = vmatpush1.msra.mxu0 %v4355
    %4357 = vmatprep.subr.mxu0 0.0
    %v4358 = vand.u32 %v3697, 4294901760
    %4359 = vmatpush1.msra.mxu0 %v4358
    %4360 = vmatprep.subr.mxu0 0.0
    %v4361 = vand.u32 %v3698, 4294901760
    %4362 = vmatpush1.msra.mxu0 %v4361
    %4363 = vmatprep.subr.mxu0 0.0
    %v4364 = vand.u32 %v3699, 4294901760
    %4365 = vmatpush1.msra.mxu0 %v4364
    %4366 = vmatprep.subr.mxu0 0.0
    %v4367 = vand.u32 %v3700, 4294901760
    %4368 = vmatpush1.msra.mxu0 %v4367
    %4369 = vmatprep.subr.mxu0 0.0
    %v4370 = vand.u32 %v3701, 4294901760
    %4371 = vmatpush1.msra.mxu0 %v4370
    %4372 = vmatprep.subr.mxu0 0.0
    %v4373 = vand.u32 %v3702, 4294901760
    %4374 = vmatpush1.msra.mxu0 %v4373
    %4375 = vmatprep.subr.mxu0 0.0
    %v4376 = vand.u32 %v3703, 4294901760
    %4377 = vmatpush1.msra.mxu0 %v4376
    %4378 = vmatprep.subr.mxu0 0.0
    %v4379 = vand.u32 %v3704, 4294901760
    %4380 = vmatpush1.msra.mxu0 %v4379
    %4381 = vmatprep.subr.mxu0 0.0
    %4382 = vmatpush1.msra.mxu0 0.0
    %4383 = vmatprep.subr.mxu0 0.0
    %4384 = vmatpush1.msra.mxu0 0.0
    %4385 = vmatprep.subr.mxu0 0.0
    %4386 = vmatpush1.msra.mxu0 0.0
    %4387 = vmatprep.subr.mxu0 0.0
    %4388 = vmatpush1.msra.mxu0 0.0
    %4389 = vmatprep.subr.mxu0 0.0
    %4390 = vmatpush1.msra.mxu0 0.0
    %4391 = vmatprep.subr.mxu0 0.0
    %4392 = vmatpush1.msra.mxu0 0.0
    %4393 = vmatprep.subr.mxu0 0.0
    %4394 = vmatpush1.msra.mxu0 0.0
    %4395 = vmatprep.subr.mxu0 0.0
    %4396 = vmatpush1.msra.mxu0 0.0
    %4397 = vmatprep.subr.mxu0 0.0
    %4398 = vmatpush1.msra.mxu0 0.0
    %4399 = vmatprep.subr.mxu0 0.0
    %4400 = vmatpush1.msra.mxu0 0.0
    %4401 = vmatprep.subr.mxu0 0.0
    %4402 = vmatpush1.msra.mxu0 0.0
    %4403 = vmatprep.subr.mxu0 0.0
    %4404 = vmatpush1.msra.mxu0 0.0
    %4405 = vmatprep.subr.mxu0 0.0
    %4406 = vmatpush1.msra.mxu0 0.0
    %4407 = vmatprep.subr.mxu0 0.0
    %4408 = vmatpush1.msra.mxu0 0.0
    %4409 = vmatprep.subr.mxu0 0.0
    %4410 = vmatpush1.msra.mxu0 0.0
    %4411 = vmatprep.subr.mxu0 0.0
    %4412 = vmatpush1.msra.mxu0 0.0
    %4413 = vmatprep.mubr.f32.mxu0 0.0
    %v4414 = vand.u32 %v3686, 4294901760
    %4415 = vmatmul.mubr.f32.gmra.mrb[0].mxu0 %v4414
    %v4416 = vpop.f32.mrb[0].mxu0
    %v4417 = vadd.f32 %v4318, %v4416
    %v4418 = vpop.f32.mrb[0].mxu0
    %4419 = vmatprep.mubr.f32.mxu0 0.0
    %v4420 = vand.u32 %v3687, 4294901760
    %4421 = vmatmul.mubr.f32.gmra.mrb[0].mxu0 %v4420
    %v4422 = vpop.f32.mrb[0].mxu0
    %v4423 = vadd.f32 %v4324, %v4422
    %v4424 = vpop.f32.mrb[0].mxu0
    %4425 = vmatprep.mubr.f32.mxu0 0.0
    %v4426 = vand.u32 %v3688, 4294901760
    %4427 = vmatmul.mubr.f32.gmra.mrb[0].mxu0 %v4426
    %v4428 = vpop.f32.mrb[0].mxu0
    %v4429 = vadd.f32 %v4330, %v4428
    %v4430 = vpop.f32.mrb[0].mxu0
    %4431 = vdwg.mxu0
    %v4432 = vadd.f32 %v792, %v4417
    %v4433 = vadd.f32 %v798, %v4423
    %v4434 = vadd.f32 %v804, %v4429
    %v4435 = vld [vmem:[%s5] sm:$0xff]
    %v4436 = vld [vmem:[%s5 + $0x8] sm:$0xff]
    %v4437 = vld [vmem:[%s5 + $0x10] sm:$0xff]
    %v4438 = vld [vmem:[%s5 + $0x18] sm:$0xff]
    %v4439 = vld [vmem:[%s5 + $0x20] sm:$0xff]
    %v4440 = vld [vmem:[%s5 + $0x28] sm:$0xff]
    %v4441 = vld [vmem:[%s5 + $0x30] sm:$0xff]
    %v4442 = vld [vmem:[%s5 + $0x38] sm:$0xff]
    %v4443 = vld [vmem:[%s5 + $0x40] sm:$0xff]
    %v4444 = vld [vmem:[%s5 + $0x48] sm:$0xff]
    %v4445 = vld [vmem:[%s5 + $0x50] sm:$0xff]
    %v4446 = vld [vmem:[%s5 + $0x58] sm:$0xff]
    %v4447 = vld [vmem:[%s5 + $0x60] sm:$0xff]
    %v4448 = vld [vmem:[%s5 + $0x68] sm:$0xff]
    %v4449 = vld [vmem:[%s5 + $0x70] sm:$0xff]
    %v4450 = vld [vmem:[%s5 + $0x78] sm:$0xff]
    %v4451 = vld [vmem:[%s5 + $0x80] sm:$0xff]
    %v4452 = vld [vmem:[%s5 + $0x88] sm:$0xff]
    %v4453 = vld [vmem:[%s5 + $0x90] sm:$0xff]
    %v4454 = vld [vmem:[%s5 + $0x98] sm:$0xff]
    %v4455 = vld [vmem:[%s5 + $0xa0] sm:$0xff]
    %v4456 = vld [vmem:[%s5 + $0xa8] sm:$0xff]
    %v4457 = vld [vmem:[%s5 + $0xb0] sm:$0xff]
    %v4458 = vld [vmem:[%s5 + $0xb8] sm:$0xff]
    %v4459 = vld [vmem:[%s5 + $0xc0] sm:$0xff]
    %v4460 = vld [vmem:[%s5 + $0xc8] sm:$0xff]
    %v4461 = vld [vmem:[%s5 + $0xd0] sm:$0xff]
    %v4462 = vld [vmem:[%s5 + $0xd8] sm:$0xff]
    %v4463 = vld [vmem:[%s5 + $0xe0] sm:$0xff]
    %v4464 = vld [vmem:[%s5 + $0xe8] sm:$0xff]
    %v4465 = vld [vmem:[%s5 + $0xf0] sm:$0xff]
    %v4466 = vld [vmem:[%s5 + $0xf8] sm:$0xff]
    %v4467 = vld [vmem:[%s5 + $0x100] sm:$0xff]
    %v4468 = vld [vmem:[%s5 + $0x108] sm:$0xff]
    %v4469 = vld [vmem:[%s5 + $0x110] sm:$0xff]
    %v4470 = vld [vmem:[%s5 + $0x118] sm:$0xff]
    %v4471 = vld [vmem:[%s5 + $0x120] sm:$0xff]
    %v4472 = vld [vmem:[%s5 + $0x128] sm:$0xff]
    %v4473 = vld [vmem:[%s5 + $0x130] sm:$0xff]
    %v4474 = vld [vmem:[%s5 + $0x138] sm:$0xff]
    %v4475 = vld [vmem:[%s5 + $0x140] sm:$0xff]
    %v4476 = vld [vmem:[%s5 + $0x148] sm:$0xff]
    %v4477 = vld [vmem:[%s5 + $0x150] sm:$0xff]
    %v4478 = vld [vmem:[%s5 + $0x158] sm:$0xff]
    %v4479 = vld [vmem:[%s5 + $0x160] sm:$0xff]
    %v4480 = vld [vmem:[%s5 + $0x168] sm:$0xff]
    %v4481 = vld [vmem:[%s5 + $0x170] sm:$0xff]
    %v4482 = vld [vmem:[%s5 + $0x178] sm:$0xff]
    %v4483 = vld [vmem:[%s6] sm:$0x1]
    %v4484 = vand.u32 %v4436, 4294901760
    %4485 = vmatprep.subr.mxu0 %v4484
    %v4486 = vand.u32 %v4435, 4294901760
    %4487 = vmatpush1.msra.mxu0 %v4486
    %v4488 = vand.u32 %v4439, 4294901760
    %4489 = vmatprep.subr.mxu0 %v4488
    %v4490 = vand.u32 %v4438, 4294901760
    %4491 = vmatpush1.msra.mxu0 %v4490
    %v4492 = vand.u32 %v4442, 4294901760
    %4493 = vmatprep.subr.mxu0 %v4492
    %v4494 = vand.u32 %v4441, 4294901760
    %4495 = vmatpush1.msra.mxu0 %v4494
    %v4496 = vand.u32 %v4445, 4294901760
    %4497 = vmatprep.subr.mxu0 %v4496
    %v4498 = vand.u32 %v4444, 4294901760
    %4499 = vmatpush1.msra.mxu0 %v4498
    %v4500 = vand.u32 %v4448, 4294901760
    %4501 = vmatprep.subr.mxu0 %v4500
    %v4502 = vand.u32 %v4447, 4294901760
    %4503 = vmatpush1.msra.mxu0 %v4502
    %v4504 = vand.u32 %v4451, 4294901760
    %4505 = vmatprep.subr.mxu0 %v4504
    %v4506 = vand.u32 %v4450, 4294901760
    %4507 = vmatpush1.msra.mxu0 %v4506
    %v4508 = vand.u32 %v4454, 4294901760
    %4509 = vmatprep.subr.mxu0 %v4508
    %v4510 = vand.u32 %v4453, 4294901760
    %4511 = vmatpush1.msra.mxu0 %v4510
    %v4512 = vand.u32 %v4457, 4294901760
    %4513 = vmatprep.subr.mxu0 %v4512
    %v4514 = vand.u32 %v4456, 4294901760
    %4515 = vmatpush1.msra.mxu0 %v4514
    %v4516 = vand.u32 %v4460, 4294901760
    %4517 = vmatprep.subr.mxu0 %v4516
    %v4518 = vand.u32 %v4459, 4294901760
    %4519 = vmatpush1.msra.mxu0 %v4518
    %v4520 = vand.u32 %v4463, 4294901760
    %4521 = vmatprep.subr.mxu0 %v4520
    %v4522 = vand.u32 %v4462, 4294901760
    %4523 = vmatpush1.msra.mxu0 %v4522
    %v4524 = vand.u32 %v4466, 4294901760
    %4525 = vmatprep.subr.mxu0 %v4524
    %v4526 = vand.u32 %v4465, 4294901760
    %4527 = vmatpush1.msra.mxu0 %v4526
    %v4528 = vand.u32 %v4469, 4294901760
    %4529 = vmatprep.subr.mxu0 %v4528
    %v4530 = vand.u32 %v4468, 4294901760
    %4531 = vmatpush1.msra.mxu0 %v4530
    %v4532 = vand.u32 %v4472, 4294901760
    %4533 = vmatprep.subr.mxu0 %v4532
    %v4534 = vand.u32 %v4471, 4294901760
    %4535 = vmatpush1.msra.mxu0 %v4534
    %v4536 = vand.u32 %v4475, 4294901760
    %4537 = vmatprep.subr.mxu0 %v4536
    %v4538 = vand.u32 %v4474, 4294901760
    %4539 = vmatpush1.msra.mxu0 %v4538
    %v4540 = vand.u32 %v4478, 4294901760
    %4541 = vmatprep.subr.mxu0 %v4540
    %v4542 = vand.u32 %v4477, 4294901760
    %4543 = vmatpush1.msra.mxu0 %v4542
    %v4544 = vand.u32 %v4481, 4294901760
    %4545 = vmatprep.subr.mxu0 %v4544
    %v4546 = vand.u32 %v4480, 4294901760
    %4547 = vmatpush1.msra.mxu0 %v4546
    %4548 = vmatprep.subr.mxu0 0.0
    %4549 = vmatpush1.msra.mxu0 0.0
    %4550 = vmatprep.subr.mxu0 0.0
    %4551 = vmatpush1.msra.mxu0 0.0
    %4552 = vmatprep.subr.mxu0 0.0
    %4553 = vmatpush1.msra.mxu0 0.0
    %4554 = vmatprep.subr.mxu0 0.0
    %4555 = vmatpush1.msra.mxu0 0.0
    %4556 = vmatprep.subr.mxu0 0.0
    %4557 = vmatpush1.msra.mxu0 0.0
    %4558 = vmatprep.subr.mxu0 0.0
    %4559 = vmatpush1.msra.mxu0 0.0
    %4560 = vmatprep.subr.mxu0 0.0
    %4561 = vmatpush1.msra.mxu0 0.0
    %4562 = vmatprep.subr.mxu0 0.0
    %4563 = vmatpush1.msra.mxu0 0.0
    %4564 = vmatprep.subr.mxu0 0.0
    %4565 = vmatpush1.msra.mxu0 0.0
    %4566 = vmatprep.subr.mxu0 0.0
    %4567 = vmatpush1.msra.mxu0 0.0
    %4568 = vmatprep.subr.mxu0 0.0
    %4569 = vmatpush1.msra.mxu0 0.0
    %4570 = vmatprep.subr.mxu0 0.0
    %4571 = vmatpush1.msra.mxu0 0.0
    %4572 = vmatprep.subr.mxu0 0.0
    %4573 = vmatpush1.msra.mxu0 0.0
    %4574 = vmatprep.subr.mxu0 0.0
    %4575 = vmatpush1.msra.mxu0 0.0
    %4576 = vmatprep.subr.mxu0 0.0
    %4577 = vmatpush1.msra.mxu0 0.0
    %4578 = vmatprep.subr.mxu0 0.0
    %4579 = vmatpush1.msra.mxu0 0.0
    %4580 = vmatprep.mubr.f32.mxu0 0.0
    %v4581 = vand.u32 %v3686, 4294901760
    %v4582 = vsub.f32 %v3686, %v4581
    %v4583 = vand.u32 %v4582, 4294901760
    %v4584 = vsub.f32 %v4582, %v4583
    %v4585 = vand.u32 %v4584, 4294901760
    %4586 = vmatmul.mubr.f32.gmra.mrb[0].mxu0 %v4585
    %v4587 = vpop.f32.mrb[0].mxu0
    %v4588 = vadd.f32 0.0, %v4587
    %v4589 = vpop.f32.mrb[0].mxu0
    %v4590 = vadd.f32 0.0, %v4589
    %4591 = vmatprep.mubr.f32.mxu0 0.0
    %v4592 = vand.u32 %v3687, 4294901760
    %v4593 = vsub.f32 %v3687, %v4592
    %v4594 = vand.u32 %v4593, 4294901760
    %v4595 = vsub.f32 %v4593, %v4594
    %v4596 = vand.u32 %v4595, 4294901760
    %4597 = vmatmul.mubr.f32.gmra.mrb[0].mxu0 %v4596
    %v4598 = vpop.f32.mrb[0].mxu0
    %v4599 = vadd.f32 0.0, %v4598
    %v4600 = vpop.f32.mrb[0].mxu0
    %v4601 = vadd.f32 0.0, %v4600
    %4602 = vmatprep.mubr.f32.mxu0 0.0
    %v4603 = vand.u32 %v3688, 4294901760
    %v4604 = vsub.f32 %v3688, %v4603
    %v4605 = vand.u32 %v4604, 4294901760
    %v4606 = vsub.f32 %v4604, %v4605
    %v4607 = vand.u32 %v4606, 4294901760
    %4608 = vmatmul.mubr.f32.gmra.mrb[0].mxu0 %v4607
    %v4609 = vpop.f32.mrb[0].mxu0
    %v4610 = vadd.f32 0.0, %v4609
    %v4611 = vpop.f32.mrb[0].mxu0
    %v4612 = vadd.f32 0.0, %v4611
    %4613 = vdwg.mxu0
    %v4614 = vand.u32 %v4436, 4294901760
    %v4615 = vsub.f32 %v4436, %v4614
    %v4616 = vand.u32 %v4615, 4294901760
    %v4617 = vsub.f32 %v4615, %v4616
    %v4618 = vand.u32 %v4617, 4294901760
    %4619 = vmatprep.subr.mxu0 %v4618
    %v4620 = vand.u32 %v4435, 4294901760
    %v4621 = vsub.f32 %v4435, %v4620
    %v4622 = vand.u32 %v4621, 4294901760
    %v4623 = vsub.f32 %v4621, %v4622
    %v4624 = vand.u32 %v4623, 4294901760
    %4625 = vmatpush1.msra.mxu0 %v4624
    %v4626 = vand.u32 %v4439, 4294901760
    %v4627 = vsub.f32 %v4439, %v4626
    %v4628 = vand.u32 %v4627, 4294901760
    %v4629 = vsub.f32 %v4627, %v4628
    %v4630 = vand.u32 %v4629, 4294901760
    %4631 = vmatprep.subr.mxu0 %v4630
    %v4632 = vand.u32 %v4438, 4294901760
    %v4633 = vsub.f32 %v4438, %v4632
    %v4634 = vand.u32 %v4633, 4294901760
    %v4635 = vsub.f32 %v4633, %v4634
    %v4636 = vand.u32 %v4635, 4294901760
    %4637 = vmatpush1.msra.mxu0 %v4636
    %v4638 = vand.u32 %v4442, 4294901760
    %v4639 = vsub.f32 %v4442, %v4638
    %v4640 = vand.u32 %v4639, 4294901760
    %v4641 = vsub.f32 %v4639, %v4640
    %v4642 = vand.u32 %v4641, 4294901760
    %4643 = vmatprep.subr.mxu0 %v4642
    %v4644 = vand.u32 %v4441, 4294901760
    %v4645 = vsub.f32 %v4441, %v4644
    %v4646 = vand.u32 %v4645, 4294901760
    %v4647 = vsub.f32 %v4645, %v4646
    %v4648 = vand.u32 %v4647, 4294901760
    %4649 = vmatpush1.msra.mxu0 %v4648
    %v4650 = vand.u32 %v4445, 4294901760
    %v4651 = vsub.f32 %v4445, %v4650
    %v4652 = vand.u32 %v4651, 4294901760
    %v4653 = vsub.f32 %v4651, %v4652
    %v4654 = vand.u32 %v4653, 4294901760
    %4655 = vmatprep.subr.mxu0 %v4654
    %v4656 = vand.u32 %v4444, 4294901760
    %v4657 = vsub.f32 %v4444, %v4656
    %v4658 = vand.u32 %v4657, 4294901760
    %v4659 = vsub.f32 %v4657, %v4658
    %v4660 = vand.u32 %v4659, 4294901760
    %4661 = vmatpush1.msra.mxu0 %v4660
    %v4662 = vand.u32 %v4448, 4294901760
    %v4663 = vsub.f32 %v4448, %v4662
    %v4664 = vand.u32 %v4663, 4294901760
    %v4665 = vsub.f32 %v4663, %v4664
    %v4666 = vand.u32 %v4665, 4294901760
    %4667 = vmatprep.subr.mxu0 %v4666
    %v4668 = vand.u32 %v4447, 4294901760
    %v4669 = vsub.f32 %v4447, %v4668
    %v4670 = vand.u32 %v4669, 4294901760
    %v4671 = vsub.f32 %v4669, %v4670
    %v4672 = vand.u32 %v4671, 4294901760
    %4673 = vmatpush1.msra.mxu0 %v4672
    %v4674 = vand.u32 %v4451, 4294901760
    %v4675 = vsub.f32 %v4451, %v4674
    %v4676 = vand.u32 %v4675, 4294901760
    %v4677 = vsub.f32 %v4675, %v4676
    %v4678 = vand.u32 %v4677, 4294901760
    %4679 = vmatprep.subr.mxu0 %v4678
    %v4680 = vand.u32 %v4450, 4294901760
    %v4681 = vsub.f32 %v4450, %v4680
    %v4682 = vand.u32 %v4681, 4294901760
    %v4683 = vsub.f32 %v4681, %v4682
    %v4684 = vand.u32 %v4683, 4294901760
    %4685 = vmatpush1.msra.mxu0 %v4684
    %v4686 = vand.u32 %v4454, 4294901760
    %v4687 = vsub.f32 %v4454, %v4686
    %v4688 = vand.u32 %v4687, 4294901760
    %v4689 = vsub.f32 %v4687, %v4688
    %v4690 = vand.u32 %v4689, 4294901760
    %4691 = vmatprep.subr.mxu0 %v4690
    %v4692 = vand.u32 %v4453, 4294901760
    %v4693 = vsub.f32 %v4453, %v4692
    %v4694 = vand.u32 %v4693, 4294901760
    %v4695 = vsub.f32 %v4693, %v4694
    %v4696 = vand.u32 %v4695, 4294901760
    %4697 = vmatpush1.msra.mxu0 %v4696
    %v4698 = vand.u32 %v4457, 4294901760
    %v4699 = vsub.f32 %v4457, %v4698
    %v4700 = vand.u32 %v4699, 4294901760
    %v4701 = vsub.f32 %v4699, %v4700
    %v4702 = vand.u32 %v4701, 4294901760
    %4703 = vmatprep.subr.mxu0 %v4702
    %v4704 = vand.u32 %v4456, 4294901760
    %v4705 = vsub.f32 %v4456, %v4704
    %v4706 = vand.u32 %v4705, 4294901760
    %v4707 = vsub.f32 %v4705, %v4706
    %v4708 = vand.u32 %v4707, 4294901760
    %4709 = vmatpush1.msra.mxu0 %v4708
    %v4710 = vand.u32 %v4460, 4294901760
    %v4711 = vsub.f32 %v4460, %v4710
    %v4712 = vand.u32 %v4711, 4294901760
    %v4713 = vsub.f32 %v4711, %v4712
    %v4714 = vand.u32 %v4713, 4294901760
    %4715 = vmatprep.subr.mxu0 %v4714
    %v4716 = vand.u32 %v4459, 4294901760
    %v4717 = vsub.f32 %v4459, %v4716
    %v4718 = vand.u32 %v4717, 4294901760
    %v4719 = vsub.f32 %v4717, %v4718
    %v4720 = vand.u32 %v4719, 4294901760
    %4721 = vmatpush1.msra.mxu0 %v4720
    %v4722 = vand.u32 %v4463, 4294901760
    %v4723 = vsub.f32 %v4463, %v4722
    %v4724 = vand.u32 %v4723, 4294901760
    %v4725 = vsub.f32 %v4723, %v4724
    %v4726 = vand.u32 %v4725, 4294901760
    %4727 = vmatprep.subr.mxu0 %v4726
    %v4728 = vand.u32 %v4462, 4294901760
    %v4729 = vsub.f32 %v4462, %v4728
    %v4730 = vand.u32 %v4729, 4294901760
    %v4731 = vsub.f32 %v4729, %v4730
    %v4732 = vand.u32 %v4731, 4294901760
    %4733 = vmatpush1.msra.mxu0 %v4732
    %v4734 = vand.u32 %v4466, 4294901760
    %v4735 = vsub.f32 %v4466, %v4734
    %v4736 = vand.u32 %v4735, 4294901760
    %v4737 = vsub.f32 %v4735, %v4736
    %v4738 = vand.u32 %v4737, 4294901760
    %4739 = vmatprep.subr.mxu0 %v4738
    %v4740 = vand.u32 %v4465, 4294901760
    %v4741 = vsub.f32 %v4465, %v4740
    %v4742 = vand.u32 %v4741, 4294901760
    %v4743 = vsub.f32 %v4741, %v4742
    %v4744 = vand.u32 %v4743, 4294901760
    %4745 = vmatpush1.msra.mxu0 %v4744
    %v4746 = vand.u32 %v4469, 4294901760
    %v4747 = vsub.f32 %v4469, %v4746
    %v4748 = vand.u32 %v4747, 4294901760
    %v4749 = vsub.f32 %v4747, %v4748
    %v4750 = vand.u32 %v4749, 4294901760
    %4751 = vmatprep.subr.mxu0 %v4750
    %v4752 = vand.u32 %v4468, 4294901760
    %v4753 = vsub.f32 %v4468, %v4752
    %v4754 = vand.u32 %v4753, 4294901760
    %v4755 = vsub.f32 %v4753, %v4754
    %v4756 = vand.u32 %v4755, 4294901760
    %4757 = vmatpush1.msra.mxu0 %v4756
    %v4758 = vand.u32 %v4472, 4294901760
    %v4759 = vsub.f32 %v4472, %v4758
    %v4760 = vand.u32 %v4759, 4294901760
    %v4761 = vsub.f32 %v4759, %v4760
    %v4762 = vand.u32 %v4761, 4294901760
    %4763 = vmatprep.subr.mxu0 %v4762
    %v4764 = vand.u32 %v4471, 4294901760
    %v4765 = vsub.f32 %v4471, %v4764
    %v4766 = vand.u32 %v4765, 4294901760
    %v4767 = vsub.f32 %v4765, %v4766
    %v4768 = vand.u32 %v4767, 4294901760
    %4769 = vmatpush1.msra.mxu0 %v4768
    %v4770 = vand.u32 %v4475, 4294901760
    %v4771 = vsub.f32 %v4475, %v4770
    %v4772 = vand.u32 %v4771, 4294901760
    %v4773 = vsub.f32 %v4771, %v4772
    %v4774 = vand.u32 %v4773, 4294901760
    %4775 = vmatprep.subr.mxu0 %v4774
    %v4776 = vand.u32 %v4474, 4294901760
    %v4777 = vsub.f32 %v4474, %v4776
    %v4778 = vand.u32 %v4777, 4294901760
    %v4779 = vsub.f32 %v4777, %v4778
    %v4780 = vand.u32 %v4779, 4294901760
    %4781 = vmatpush1.msra.mxu0 %v4780
    %v4782 = vand.u32 %v4478, 4294901760
    %v4783 = vsub.f32 %v4478, %v4782
    %v4784 = vand.u32 %v4783, 4294901760
    %v4785 = vsub.f32 %v4783, %v4784
    %v4786 = vand.u32 %v4785, 4294901760
    %4787 = vmatprep.subr.mxu0 %v4786
    %v4788 = vand.u32 %v4477, 4294901760
    %v4789 = vsub.f32 %v4477, %v4788
    %v4790 = vand.u32 %v4789, 4294901760
    %v4791 = vsub.f32 %v4789, %v4790
    %v4792 = vand.u32 %v4791, 4294901760
    %4793 = vmatpush1.msra.mxu0 %v4792
    %v4794 = vand.u32 %v4481, 4294901760
    %v4795 = vsub.f32 %v4481, %v4794
    %v4796 = vand.u32 %v4795, 4294901760
    %v4797 = vsub.f32 %v4795, %v4796
    %v4798 = vand.u32 %v4797, 4294901760
    %4799 = vmatprep.subr.mxu0 %v4798
    %v4800 = vand.u32 %v4480, 4294901760
    %v4801 = vsub.f32 %v4480, %v4800
    %v4802 = vand.u32 %v4801, 4294901760
    %v4803 = vsub.f32 %v4801, %v4802
    %v4804 = vand.u32 %v4803, 4294901760
    %4805 = vmatpush1.msra.mxu0 %v4804
    %4806 = vmatprep.subr.mxu0 0.0
    %4807 = vmatpush1.msra.mxu0 0.0
    %4808 = vmatprep.subr.mxu0 0.0
    %4809 = vmatpush1.msra.mxu0 0.0
    %4810 = vmatprep.subr.mxu0 0.0
    %4811 = vmatpush1.msra.mxu0 0.0
    %4812 = vmatprep.subr.mxu0 0.0
    %4813 = vmatpush1.msra.mxu0 0.0
    %4814 = vmatprep.subr.mxu0 0.0
    %4815 = vmatpush1.msra.mxu0 0.0
    %4816 = vmatprep.subr.mxu0 0.0
    %4817 = vmatpush1.msra.mxu0 0.0
    %4818 = vmatprep.subr.mxu0 0.0
    %4819 = vmatpush1.msra.mxu0 0.0
    %4820 = vmatprep.subr.mxu0 0.0
    %4821 = vmatpush1.msra.mxu0 0.0
    %4822 = vmatprep.subr.mxu0 0.0
    %4823 = vmatpush1.msra.mxu0 0.0
    %4824 = vmatprep.subr.mxu0 0.0
    %4825 = vmatpush1.msra.mxu0 0.0
    %4826 = vmatprep.subr.mxu0 0.0
    %4827 = vmatpush1.msra.mxu0 0.0
    %4828 = vmatprep.subr.mxu0 0.0
    %4829 = vmatpush1.msra.mxu0 0.0
    %4830 = vmatprep.subr.mxu0 0.0
    %4831 = vmatpush1.msra.mxu0 0.0
    %4832 = vmatprep.subr.mxu0 0.0
    %4833 = vmatpush1.msra.mxu0 0.0
    %4834 = vmatprep.subr.mxu0 0.0
    %4835 = vmatpush1.msra.mxu0 0.0
    %4836 = vmatprep.subr.mxu0 0.0
    %4837 = vmatpush1.msra.mxu0 0.0
    %4838 = vmatprep.mubr.f32.mxu0 0.0
    %v4839 = vand.u32 %v3686, 4294901760
    %4840 = vmatmul.mubr.f32.gmra.mrb[0].mxu0 %v4839
    %v4841 = vpop.f32.mrb[0].mxu0
    %v4842 = vadd.f32 %v4588, %v4841
    %v4843 = vpop.f32.mrb[0].mxu0
    %v4844 = vadd.f32 %v4590, %v4843
    %4845 = vmatprep.mubr.f32.mxu0 0.0
    %v4846 = vand.u32 %v3687, 4294901760
    %4847 = vmatmul.mubr.f32.gmra.mrb[0].mxu0 %v4846
    %v4848 = vpop.f32.mrb[0].mxu0
    %v4849 = vadd.f32 %v4599, %v4848
    %v4850 = vpop.f32.mrb[0].mxu0
    %v4851 = vadd.f32 %v4601, %v4850
    %4852 = vmatprep.mubr.f32.mxu0 0.0
    %v4853 = vand.u32 %v3688, 4294901760
    %4854 = vmatmul.mubr.f32.gmra.mrb[0].mxu0 %v4853
    %v4855 = vpop.f32.mrb[0].mxu0
    %v4856 = vadd.f32 %v4610, %v4855
    %v4857 = vpop.f32.mrb[0].mxu0
    %v4858 = vadd.f32 %v4612, %v4857
    %4859 = vdwg.mxu0
    %v4860 = vand.u32 %v4436, 4294901760
    %v4861 = vsub.f32 %v4436, %v4860
    %4862 = vmatprep.subr.mxu0 %v4861
    %v4863 = vand.u32 %v4435, 4294901760
    %v4864 = vsub.f32 %v4435, %v4863
    %4865 = vmatpush1.msra.mxu0 %v4864
    %v4866 = vand.u32 %v4439, 4294901760
    %v4867 = vsub.f32 %v4439, %v4866
    %4868 = vmatprep.subr.mxu0 %v4867
    %v4869 = vand.u32 %v4438, 4294901760
    %v4870 = vsub.f32 %v4438, %v4869
    %4871 = vmatpush1.msra.mxu0 %v4870
    %v4872 = vand.u32 %v4442, 4294901760
    %v4873 = vsub.f32 %v4442, %v4872
    %4874 = vmatprep.subr.mxu0 %v4873
    %v4875 = vand.u32 %v4441, 4294901760
    %v4876 = vsub.f32 %v4441, %v4875
    %4877 = vmatpush1.msra.mxu0 %v4876
    %v4878 = vand.u32 %v4445, 4294901760
    %v4879 = vsub.f32 %v4445, %v4878
    %4880 = vmatprep.subr.mxu0 %v4879
    %v4881 = vand.u32 %v4444, 4294901760
    %v4882 = vsub.f32 %v4444, %v4881
    %4883 = vmatpush1.msra.mxu0 %v4882
    %v4884 = vand.u32 %v4448, 4294901760
    %v4885 = vsub.f32 %v4448, %v4884
    %4886 = vmatprep.subr.mxu0 %v4885
    %v4887 = vand.u32 %v4447, 4294901760
    %v4888 = vsub.f32 %v4447, %v4887
    %4889 = vmatpush1.msra.mxu0 %v4888
    %v4890 = vand.u32 %v4451, 4294901760
    %v4891 = vsub.f32 %v4451, %v4890
    %4892 = vmatprep.subr.mxu0 %v4891
    %v4893 = vand.u32 %v4450, 4294901760
    %v4894 = vsub.f32 %v4450, %v4893
    %4895 = vmatpush1.msra.mxu0 %v4894
    %v4896 = vand.u32 %v4454, 4294901760
    %v4897 = vsub.f32 %v4454, %v4896
    %4898 = vmatprep.subr.mxu0 %v4897
    %v4899 = vand.u32 %v4453, 4294901760
    %v4900 = vsub.f32 %v4453, %v4899
    %4901 = vmatpush1.msra.mxu0 %v4900
    %v4902 = vand.u32 %v4457, 4294901760
    %v4903 = vsub.f32 %v4457, %v4902
    %4904 = vmatprep.subr.mxu0 %v4903
    %v4905 = vand.u32 %v4456, 4294901760
    %v4906 = vsub.f32 %v4456, %v4905
    %4907 = vmatpush1.msra.mxu0 %v4906
    %v4908 = vand.u32 %v4460, 4294901760
    %v4909 = vsub.f32 %v4460, %v4908
    %4910 = vmatprep.subr.mxu0 %v4909
    %v4911 = vand.u32 %v4459, 4294901760
    %v4912 = vsub.f32 %v4459, %v4911
    %4913 = vmatpush1.msra.mxu0 %v4912
    %v4914 = vand.u32 %v4463, 4294901760
    %v4915 = vsub.f32 %v4463, %v4914
    %4916 = vmatprep.subr.mxu0 %v4915
    %v4917 = vand.u32 %v4462, 4294901760
    %v4918 = vsub.f32 %v4462, %v4917
    %4919 = vmatpush1.msra.mxu0 %v4918
    %v4920 = vand.u32 %v4466, 4294901760
    %v4921 = vsub.f32 %v4466, %v4920
    %4922 = vmatprep.subr.mxu0 %v4921
    %v4923 = vand.u32 %v4465, 4294901760
    %v4924 = vsub.f32 %v4465, %v4923
    %4925 = vmatpush1.msra.mxu0 %v4924
    %v4926 = vand.u32 %v4469, 4294901760
    %v4927 = vsub.f32 %v4469, %v4926
    %4928 = vmatprep.subr.mxu0 %v4927
    %v4929 = vand.u32 %v4468, 4294901760
    %v4930 = vsub.f32 %v4468, %v4929
    %4931 = vmatpush1.msra.mxu0 %v4930
    %v4932 = vand.u32 %v4472, 4294901760
    %v4933 = vsub.f32 %v4472, %v4932
    %4934 = vmatprep.subr.mxu0 %v4933
    %v4935 = vand.u32 %v4471, 4294901760
    %v4936 = vsub.f32 %v4471, %v4935
    %4937 = vmatpush1.msra.mxu0 %v4936
    %v4938 = vand.u32 %v4475, 4294901760
    %v4939 = vsub.f32 %v4475, %v4938
    %4940 = vmatprep.subr.mxu0 %v4939
    %v4941 = vand.u32 %v4474, 4294901760
    %v4942 = vsub.f32 %v4474, %v4941
    %4943 = vmatpush1.msra.mxu0 %v4942
    %v4944 = vand.u32 %v4478, 4294901760
    %v4945 = vsub.f32 %v4478, %v4944
    %4946 = vmatprep.subr.mxu0 %v4945
    %v4947 = vand.u32 %v4477, 4294901760
    %v4948 = vsub.f32 %v4477, %v4947
    %4949 = vmatpush1.msra.mxu0 %v4948
    %v4950 = vand.u32 %v4481, 4294901760
    %v4951 = vsub.f32 %v4481, %v4950
    %4952 = vmatprep.subr.mxu0 %v4951
    %v4953 = vand.u32 %v4480, 4294901760
    %v4954 = vsub.f32 %v4480, %v4953
    %4955 = vmatpush1.msra.mxu0 %v4954
    %4956 = vmatprep.subr.mxu0 0.0
    %4957 = vmatpush1.msra.mxu0 0.0
    %4958 = vmatprep.subr.mxu0 0.0
    %4959 = vmatpush1.msra.mxu0 0.0
    %4960 = vmatprep.subr.mxu0 0.0
    %4961 = vmatpush1.msra.mxu0 0.0
    %4962 = vmatprep.subr.mxu0 0.0
    %4963 = vmatpush1.msra.mxu0 0.0
    %4964 = vmatprep.subr.mxu0 0.0
    %4965 = vmatpush1.msra.mxu0 0.0
    %4966 = vmatprep.subr.mxu0 0.0
    %4967 = vmatpush1.msra.mxu0 0.0
    %4968 = vmatprep.subr.mxu0 0.0
    %4969 = vmatpush1.msra.mxu0 0.0
    %4970 = vmatprep.subr.mxu0 0.0
    %4971 = vmatpush1.msra.mxu0 0.0
    %4972 = vmatprep.subr.mxu0 0.0
    %4973 = vmatpush1.msra.mxu0 0.0
    %4974 = vmatprep.subr.mxu0 0.0
    %4975 = vmatpush1.msra.mxu0 0.0
    %4976 = vmatprep.subr.mxu0 0.0
    %4977 = vmatpush1.msra.mxu0 0.0
    %4978 = vmatprep.subr.mxu0 0.0
    %4979 = vmatpush1.msra.mxu0 0.0
    %4980 = vmatprep.subr.mxu0 0.0
    %4981 = vmatpush1.msra.mxu0 0.0
    %4982 = vmatprep.subr.mxu0 0.0
    %4983 = vmatpush1.msra.mxu0 0.0
    %4984 = vmatprep.subr.mxu0 0.0
    %4985 = vmatpush1.msra.mxu0 0.0
    %4986 = vmatprep.subr.mxu0 0.0
    %4987 = vmatpush1.msra.mxu0 0.0
    %4988 = vmatprep.mubr.f32.mxu0 0.0
    %v4989 = vand.u32 %v3686, 4294901760
    %v4990 = vsub.f32 %v3686, %v4989
    %4991 = vmatmul.mubr.f32.gmra.mrb[0].mxu0 %v4990
    %v4992 = vpop.f32.mrb[0].mxu0
    %v4993 = vadd.f32 %v4842, %v4992
    %v4994 = vpop.f32.mrb[0].mxu0
    %v4995 = vadd.f32 %v4844, %v4994
    %4996 = vmatprep.mubr.f32.mxu0 0.0
    %v4997 = vand.u32 %v3687, 4294901760
    %v4998 = vsub.f32 %v3687, %v4997
    %4999 = vmatmul.mubr.f32.gmra.mrb[0].mxu0 %v4998
    %v5000 = vpop.f32.mrb[0].mxu0
    %v5001 = vadd.f32 %v4849, %v5000
    %v5002 = vpop.f32.mrb[0].mxu0
    %v5003 = vadd.f32 %v4851, %v5002
    %5004 = vmatprep.mubr.f32.mxu0 0.0
    %v5005 = vand.u32 %v3688, 4294901760
    %v5006 = vsub.f32 %v3688, %v5005
    %5007 = vmatmul.mubr.f32.gmra.mrb[0].mxu0 %v5006
    %v5008 = vpop.f32.mrb[0].mxu0
    %v5009 = vadd.f32 %v4856, %v5008
    %v5010 = vpop.f32.mrb[0].mxu0
    %v5011 = vadd.f32 %v4858, %v5010
    %5012 = vdwg.mxu0
    %v5013 = vand.u32 %v4436, 4294901760
    %5014 = vmatprep.subr.mxu0 %v5013
    %v5015 = vand.u32 %v4435, 4294901760
    %5016 = vmatpush1.msra.mxu0 %v5015
    %v5017 = vand.u32 %v4439, 4294901760
    %5018 = vmatprep.subr.mxu0 %v5017
    %v5019 = vand.u32 %v4438, 4294901760
    %5020 = vmatpush1.msra.mxu0 %v5019
    %v5021 = vand.u32 %v4442, 4294901760
    %5022 = vmatprep.subr.mxu0 %v5021
    %v5023 = vand.u32 %v4441, 4294901760
    %5024 = vmatpush1.msra.mxu0 %v5023
    %v5025 = vand.u32 %v4445, 4294901760
    %5026 = vmatprep.subr.mxu0 %v5025
    %v5027 = vand.u32 %v4444, 4294901760
    %5028 = vmatpush1.msra.mxu0 %v5027
    %v5029 = vand.u32 %v4448, 4294901760
    %5030 = vmatprep.subr.mxu0 %v5029
    %v5031 = vand.u32 %v4447, 4294901760
    %5032 = vmatpush1.msra.mxu0 %v5031
    %v5033 = vand.u32 %v4451, 4294901760
    %5034 = vmatprep.subr.mxu0 %v5033
    %v5035 = vand.u32 %v4450, 4294901760
    %5036 = vmatpush1.msra.mxu0 %v5035
    %v5037 = vand.u32 %v4454, 4294901760
    %5038 = vmatprep.subr.mxu0 %v5037
    %v5039 = vand.u32 %v4453, 4294901760
    %5040 = vmatpush1.msra.mxu0 %v5039
    %v5041 = vand.u32 %v4457, 4294901760
    %5042 = vmatprep.subr.mxu0 %v5041
    %v5043 = vand.u32 %v4456, 4294901760
    %5044 = vmatpush1.msra.mxu0 %v5043
    %v5045 = vand.u32 %v4460, 4294901760
    %5046 = vmatprep.subr.mxu0 %v5045
    %v5047 = vand.u32 %v4459, 4294901760
    %5048 = vmatpush1.msra.mxu0 %v5047
    %v5049 = vand.u32 %v4463, 4294901760
    %5050 = vmatprep.subr.mxu0 %v5049
    %v5051 = vand.u32 %v4462, 4294901760
    %5052 = vmatpush1.msra.mxu0 %v5051
    %v5053 = vand.u32 %v4466, 4294901760
    %5054 = vmatprep.subr.mxu0 %v5053
    %v5055 = vand.u32 %v4465, 4294901760
    %5056 = vmatpush1.msra.mxu0 %v5055
    %v5057 = vand.u32 %v4469, 4294901760
    %5058 = vmatprep.subr.mxu0 %v5057
    %v5059 = vand.u32 %v4468, 4294901760
    %5060 = vmatpush1.msra.mxu0 %v5059
    %v5061 = vand.u32 %v4472, 4294901760
    %5062 = vmatprep.subr.mxu0 %v5061
    %v5063 = vand.u32 %v4471, 4294901760
    %5064 = vmatpush1.msra.mxu0 %v5063
    %v5065 = vand.u32 %v4475, 4294901760
    %5066 = vmatprep.subr.mxu0 %v5065
    %v5067 = vand.u32 %v4474, 4294901760
    %5068 = vmatpush1.msra.mxu0 %v5067
    %v5069 = vand.u32 %v4478, 4294901760
    %5070 = vmatprep.subr.mxu0 %v5069
    %v5071 = vand.u32 %v4477, 4294901760
    %5072 = vmatpush1.msra.mxu0 %v5071
    %v5073 = vand.u32 %v4481, 4294901760
    %5074 = vmatprep.subr.mxu0 %v5073
    %v5075 = vand.u32 %v4480, 4294901760
    %5076 = vmatpush1.msra.mxu0 %v5075
    %5077 = vmatprep.subr.mxu0 0.0
    %5078 = vmatpush1.msra.mxu0 0.0
    %5079 = vmatprep.subr.mxu0 0.0
    %5080 = vmatpush1.msra.mxu0 0.0
    %5081 = vmatprep.subr.mxu0 0.0
    %5082 = vmatpush1.msra.mxu0 0.0
    %5083 = vmatprep.subr.mxu0 0.0
    %5084 = vmatpush1.msra.mxu0 0.0
    %5085 = vmatprep.subr.mxu0 0.0
    %5086 = vmatpush1.msra.mxu0 0.0
    %5087 = vmatprep.subr.mxu0 0.0
    %5088 = vmatpush1.msra.mxu0 0.0
    %5089 = vmatprep.subr.mxu0 0.0
    %5090 = vmatpush1.msra.mxu0 0.0
    %5091 = vmatprep.subr.mxu0 0.0
    %5092 = vmatpush1.msra.mxu0 0.0
    %5093 = vmatprep.subr.mxu0 0.0
    %5094 = vmatpush1.msra.mxu0 0.0
    %5095 = vmatprep.subr.mxu0 0.0
    %5096 = vmatpush1.msra.mxu0 0.0
    %5097 = vmatprep.subr.mxu0 0.0
    %5098 = vmatpush1.msra.mxu0 0.0
    %5099 = vmatprep.subr.mxu0 0.0
    %5100 = vmatpush1.msra.mxu0 0.0
    %5101 = vmatprep.subr.mxu0 0.0
    %5102 = vmatpush1.msra.mxu0 0.0
    %5103 = vmatprep.subr.mxu0 0.0
    %5104 = vmatpush1.msra.mxu0 0.0
    %5105 = vmatprep.subr.mxu0 0.0
    %5106 = vmatpush1.msra.mxu0 0.0
    %5107 = vmatprep.subr.mxu0 0.0
    %5108 = vmatpush1.msra.mxu0 0.0
    %5109 = vmatprep.mubr.f32.mxu0 0.0
    %v5110 = vand.u32 %v3686, 4294901760
    %v5111 = vsub.f32 %v3686, %v5110
    %v5112 = vand.u32 %v5111, 4294901760
    %5113 = vmatmul.mubr.f32.gmra.mrb[0].mxu0 %v5112
    %v5114 = vpop.f32.mrb[0].mxu0
    %v5115 = vadd.f32 %v4993, %v5114
    %v5116 = vpop.f32.mrb[0].mxu0
    %v5117 = vadd.f32 %v4995, %v5116
    %5118 = vmatprep.mubr.f32.mxu0 0.0
    %v5119 = vand.u32 %v3687, 4294901760
    %v5120 = vsub.f32 %v3687, %v5119
    %v5121 = vand.u32 %v5120, 4294901760
    %5122 = vmatmul.mubr.f32.gmra.mrb[0].mxu0 %v5121
    %v5123 = vpop.f32.mrb[0].mxu0
    %v5124 = vadd.f32 %v5001, %v5123
    %v5125 = vpop.f32.mrb[0].mxu0
    %v5126 = vadd.f32 %v5003, %v5125
    %5127 = vmatprep.mubr.f32.mxu0 0.0
    %v5128 = vand.u32 %v3688, 4294901760
    %v5129 = vsub.f32 %v3688, %v5128
    %v5130 = vand.u32 %v5129, 4294901760
    %5131 = vmatmul.mubr.f32.gmra.mrb[0].mxu0 %v5130
    %v5132 = vpop.f32.mrb[0].mxu0
    %v5133 = vadd.f32 %v5009, %v5132
    %v5134 = vpop.f32.mrb[0].mxu0
    %v5135 = vadd.f32 %v5011, %v5134
    %5136 = vdwg.mxu0
    %v5137 = vand.u32 %v4436, 4294901760
    %v5138 = vsub.f32 %v4436, %v5137
    %v5139 = vand.u32 %v5138, 4294901760
    %5140 = vmatprep.subr.mxu0 %v5139
    %v5141 = vand.u32 %v4435, 4294901760
    %v5142 = vsub.f32 %v4435, %v5141
    %v5143 = vand.u32 %v5142, 4294901760
    %5144 = vmatpush1.msra.mxu0 %v5143
    %v5145 = vand.u32 %v4439, 4294901760
    %v5146 = vsub.f32 %v4439, %v5145
    %v5147 = vand.u32 %v5146, 4294901760
    %5148 = vmatprep.subr.mxu0 %v5147
    %v5149 = vand.u32 %v4438, 4294901760
    %v5150 = vsub.f32 %v4438, %v5149
    %v5151 = vand.u32 %v5150, 4294901760
    %5152 = vmatpush1.msra.mxu0 %v5151
    %v5153 = vand.u32 %v4442, 4294901760
    %v5154 = vsub.f32 %v4442, %v5153
    %v5155 = vand.u32 %v5154, 4294901760
    %5156 = vmatprep.subr.mxu0 %v5155
    %v5157 = vand.u32 %v4441, 4294901760
    %v5158 = vsub.f32 %v4441, %v5157
    %v5159 = vand.u32 %v5158, 4294901760
    %5160 = vmatpush1.msra.mxu0 %v5159
    %v5161 = vand.u32 %v4445, 4294901760
    %v5162 = vsub.f32 %v4445, %v5161
    %v5163 = vand.u32 %v5162, 4294901760
    %5164 = vmatprep.subr.mxu0 %v5163
    %v5165 = vand.u32 %v4444, 4294901760
    %v5166 = vsub.f32 %v4444, %v5165
    %v5167 = vand.u32 %v5166, 4294901760
    %5168 = vmatpush1.msra.mxu0 %v5167
    %v5169 = vand.u32 %v4448, 4294901760
    %v5170 = vsub.f32 %v4448, %v5169
    %v5171 = vand.u32 %v5170, 4294901760
    %5172 = vmatprep.subr.mxu0 %v5171
    %v5173 = vand.u32 %v4447, 4294901760
    %v5174 = vsub.f32 %v4447, %v5173
    %v5175 = vand.u32 %v5174, 4294901760
    %5176 = vmatpush1.msra.mxu0 %v5175
    %v5177 = vand.u32 %v4451, 4294901760
    %v5178 = vsub.f32 %v4451, %v5177
    %v5179 = vand.u32 %v5178, 4294901760
    %5180 = vmatprep.subr.mxu0 %v5179
    %v5181 = vand.u32 %v4450, 4294901760
    %v5182 = vsub.f32 %v4450, %v5181
    %v5183 = vand.u32 %v5182, 4294901760
    %5184 = vmatpush1.msra.mxu0 %v5183
    %v5185 = vand.u32 %v4454, 4294901760
    %v5186 = vsub.f32 %v4454, %v5185
    %v5187 = vand.u32 %v5186, 4294901760
    %5188 = vmatprep.subr.mxu0 %v5187
    %v5189 = vand.u32 %v4453, 4294901760
    %v5190 = vsub.f32 %v4453, %v5189
    %v5191 = vand.u32 %v5190, 4294901760
    %5192 = vmatpush1.msra.mxu0 %v5191
    %v5193 = vand.u32 %v4457, 4294901760
    %v5194 = vsub.f32 %v4457, %v5193
    %v5195 = vand.u32 %v5194, 4294901760
    %5196 = vmatprep.subr.mxu0 %v5195
    %v5197 = vand.u32 %v4456, 4294901760
    %v5198 = vsub.f32 %v4456, %v5197
    %v5199 = vand.u32 %v5198, 4294901760
    %5200 = vmatpush1.msra.mxu0 %v5199
    %v5201 = vand.u32 %v4460, 4294901760
    %v5202 = vsub.f32 %v4460, %v5201
    %v5203 = vand.u32 %v5202, 4294901760
    %5204 = vmatprep.subr.mxu0 %v5203
    %v5205 = vand.u32 %v4459, 4294901760
    %v5206 = vsub.f32 %v4459, %v5205
    %v5207 = vand.u32 %v5206, 4294901760
    %5208 = vmatpush1.msra.mxu0 %v5207
    %v5209 = vand.u32 %v4463, 4294901760
    %v5210 = vsub.f32 %v4463, %v5209
    %v5211 = vand.u32 %v5210, 4294901760
    %5212 = vmatprep.subr.mxu0 %v5211
    %v5213 = vand.u32 %v4462, 4294901760
    %v5214 = vsub.f32 %v4462, %v5213
    %v5215 = vand.u32 %v5214, 4294901760
    %5216 = vmatpush1.msra.mxu0 %v5215
    %v5217 = vand.u32 %v4466, 4294901760
    %v5218 = vsub.f32 %v4466, %v5217
    %v5219 = vand.u32 %v5218, 4294901760
    %5220 = vmatprep.subr.mxu0 %v5219
    %v5221 = vand.u32 %v4465, 4294901760
    %v5222 = vsub.f32 %v4465, %v5221
    %v5223 = vand.u32 %v5222, 4294901760
    %5224 = vmatpush1.msra.mxu0 %v5223
    %v5225 = vand.u32 %v4469, 4294901760
    %v5226 = vsub.f32 %v4469, %v5225
    %v5227 = vand.u32 %v5226, 4294901760
    %5228 = vmatprep.subr.mxu0 %v5227
    %v5229 = vand.u32 %v4468, 4294901760
    %v5230 = vsub.f32 %v4468, %v5229
    %v5231 = vand.u32 %v5230, 4294901760
    %5232 = vmatpush1.msra.mxu0 %v5231
    %v5233 = vand.u32 %v4472, 4294901760
    %v5234 = vsub.f32 %v4472, %v5233
    %v5235 = vand.u32 %v5234, 4294901760
    %5236 = vmatprep.subr.mxu0 %v5235
    %v5237 = vand.u32 %v4471, 4294901760
    %v5238 = vsub.f32 %v4471, %v5237
    %v5239 = vand.u32 %v5238, 4294901760
    %5240 = vmatpush1.msra.mxu0 %v5239
    %v5241 = vand.u32 %v4475, 4294901760
    %v5242 = vsub.f32 %v4475, %v5241
    %v5243 = vand.u32 %v5242, 4294901760
    %5244 = vmatprep.subr.mxu0 %v5243
    %v5245 = vand.u32 %v4474, 4294901760
    %v5246 = vsub.f32 %v4474, %v5245
    %v5247 = vand.u32 %v5246, 4294901760
    %5248 = vmatpush1.msra.mxu0 %v5247
    %v5249 = vand.u32 %v4478, 4294901760
    %v5250 = vsub.f32 %v4478, %v5249
    %v5251 = vand.u32 %v5250, 4294901760
    %5252 = vmatprep.subr.mxu0 %v5251
    %v5253 = vand.u32 %v4477, 4294901760
    %v5254 = vsub.f32 %v4477, %v5253
    %v5255 = vand.u32 %v5254, 4294901760
    %5256 = vmatpush1.msra.mxu0 %v5255
    %v5257 = vand.u32 %v4481, 4294901760
    %v5258 = vsub.f32 %v4481, %v5257
    %v5259 = vand.u32 %v5258, 4294901760
    %5260 = vmatprep.subr.mxu0 %v5259
    %v5261 = vand.u32 %v4480, 4294901760
    %v5262 = vsub.f32 %v4480, %v5261
    %v5263 = vand.u32 %v5262, 4294901760
    %5264 = vmatpush1.msra.mxu0 %v5263
    %5265 = vmatprep.subr.mxu0 0.0
    %5266 = vmatpush1.msra.mxu0 0.0
    %5267 = vmatprep.subr.mxu0 0.0
    %5268 = vmatpush1.msra.mxu0 0.0
    %5269 = vmatprep.subr.mxu0 0.0
    %5270 = vmatpush1.msra.mxu0 0.0
    %5271 = vmatprep.subr.mxu0 0.0
    %5272 = vmatpush1.msra.mxu0 0.0
    %5273 = vmatprep.subr.mxu0 0.0
    %5274 = vmatpush1.msra.mxu0 0.0
    %5275 = vmatprep.subr.mxu0 0.0
    %5276 = vmatpush1.msra.mxu0 0.0
    %5277 = vmatprep.subr.mxu0 0.0
    %5278 = vmatpush1.msra.mxu0 0.0
    %5279 = vmatprep.subr.mxu0 0.0
    %5280 = vmatpush1.msra.mxu0 0.0
    %5281 = vmatprep.subr.mxu0 0.0
    %5282 = vmatpush1.msra.mxu0 0.0
    %5283 = vmatprep.subr.mxu0 0.0
    %5284 = vmatpush1.msra.mxu0 0.0
    %5285 = vmatprep.subr.mxu0 0.0
    %5286 = vmatpush1.msra.mxu0 0.0
    %5287 = vmatprep.subr.mxu0 0.0
    %5288 = vmatpush1.msra.mxu0 0.0
    %5289 = vmatprep.subr.mxu0 0.0
    %5290 = vmatpush1.msra.mxu0 0.0
    %5291 = vmatprep.subr.mxu0 0.0
    %5292 = vmatpush1.msra.mxu0 0.0
    %5293 = vmatprep.subr.mxu0 0.0
    %5294 = vmatpush1.msra.mxu0 0.0
    %5295 = vmatprep.subr.mxu0 0.0
    %5296 = vmatpush1.msra.mxu0 0.0
    %5297 = vmatprep.mubr.f32.mxu0 0.0
    %v5298 = vand.u32 %v3686, 4294901760
    %5299 = vmatmul.mubr.f32.gmra.mrb[0].mxu0 %v5298
    %v5300 = vpop.f32.mrb[0].mxu0
    %v5301 = vadd.f32 %v5115, %v5300
    %v5302 = vpop.f32.mrb[0].mxu0
    %v5303 = vadd.f32 %v5117, %v5302
    %5304 = vmatprep.mubr.f32.mxu0 0.0
    %v5305 = vand.u32 %v3687, 4294901760
    %5306 = vmatmul.mubr.f32.gmra.mrb[0].mxu0 %v5305
    %v5307 = vpop.f32.mrb[0].mxu0
    %v5308 = vadd.f32 %v5124, %v5307
    %v5309 = vpop.f32.mrb[0].mxu0
    %v5310 = vadd.f32 %v5126, %v5309
    %5311 = vmatprep.mubr.f32.mxu0 0.0
    %v5312 = vand.u32 %v3688, 4294901760
    %5313 = vmatmul.mubr.f32.gmra.mrb[0].mxu0 %v5312
    %v5314 = vpop.f32.mrb[0].mxu0
    %v5315 = vadd.f32 %v5133, %v5314
    %v5316 = vpop.f32.mrb[0].mxu0
    %v5317 = vadd.f32 %v5135, %v5316
    %5318 = vdwg.mxu0
    %v5319 = vand.u32 %v4436, 4294901760
    %5320 = vmatprep.subr.mxu0 %v5319
    %v5321 = vand.u32 %v4435, 4294901760
    %5322 = vmatpush1.msra.mxu0 %v5321
    %v5323 = vand.u32 %v4439, 4294901760
    %5324 = vmatprep.subr.mxu0 %v5323
    %v5325 = vand.u32 %v4438, 4294901760
    %5326 = vmatpush1.msra.mxu0 %v5325
    %v5327 = vand.u32 %v4442, 4294901760
    %5328 = vmatprep.subr.mxu0 %v5327
    %v5329 = vand.u32 %v4441, 4294901760
    %5330 = vmatpush1.msra.mxu0 %v5329
    %v5331 = vand.u32 %v4445, 4294901760
    %5332 = vmatprep.subr.mxu0 %v5331
    %v5333 = vand.u32 %v4444, 4294901760
    %5334 = vmatpush1.msra.mxu0 %v5333
    %v5335 = vand.u32 %v4448, 4294901760
    %5336 = vmatprep.subr.mxu0 %v5335
    %v5337 = vand.u32 %v4447, 4294901760
    %5338 = vmatpush1.msra.mxu0 %v5337
    %v5339 = vand.u32 %v4451, 4294901760
    %5340 = vmatprep.subr.mxu0 %v5339
    %v5341 = vand.u32 %v4450, 4294901760
    %5342 = vmatpush1.msra.mxu0 %v5341
    %v5343 = vand.u32 %v4454, 4294901760
    %5344 = vmatprep.subr.mxu0 %v5343
    %v5345 = vand.u32 %v4453, 4294901760
    %5346 = vmatpush1.msra.mxu0 %v5345
    %v5347 = vand.u32 %v4457, 4294901760
    %5348 = vmatprep.subr.mxu0 %v5347
    %v5349 = vand.u32 %v4456, 4294901760
    %5350 = vmatpush1.msra.mxu0 %v5349
    %v5351 = vand.u32 %v4460, 4294901760
    %5352 = vmatprep.subr.mxu0 %v5351
    %v5353 = vand.u32 %v4459, 4294901760
    %5354 = vmatpush1.msra.mxu0 %v5353
    %v5355 = vand.u32 %v4463, 4294901760
    %5356 = vmatprep.subr.mxu0 %v5355
    %v5357 = vand.u32 %v4462, 4294901760
    %5358 = vmatpush1.msra.mxu0 %v5357
    %v5359 = vand.u32 %v4466, 4294901760
    %5360 = vmatprep.subr.mxu0 %v5359
    %v5361 = vand.u32 %v4465, 4294901760
    %5362 = vmatpush1.msra.mxu0 %v5361
    %v5363 = vand.u32 %v4469, 4294901760
    %5364 = vmatprep.subr.mxu0 %v5363
    %v5365 = vand.u32 %v4468, 4294901760
    %5366 = vmatpush1.msra.mxu0 %v5365
    %v5367 = vand.u32 %v4472, 4294901760
    %5368 = vmatprep.subr.mxu0 %v5367
    %v5369 = vand.u32 %v4471, 4294901760
    %5370 = vmatpush1.msra.mxu0 %v5369
    %v5371 = vand.u32 %v4475, 4294901760
    %5372 = vmatprep.subr.mxu0 %v5371
    %v5373 = vand.u32 %v4474, 4294901760
    %5374 = vmatpush1.msra.mxu0 %v5373
    %v5375 = vand.u32 %v4478, 4294901760
    %5376 = vmatprep.subr.mxu0 %v5375
    %v5377 = vand.u32 %v4477, 4294901760
    %5378 = vmatpush1.msra.mxu0 %v5377
    %v5379 = vand.u32 %v4481, 4294901760
    %5380 = vmatprep.subr.mxu0 %v5379
    %v5381 = vand.u32 %v4480, 4294901760
    %5382 = vmatpush1.msra.mxu0 %v5381
    %5383 = vmatprep.subr.mxu0 0.0
    %5384 = vmatpush1.msra.mxu0 0.0
    %5385 = vmatprep.subr.mxu0 0.0
    %5386 = vmatpush1.msra.mxu0 0.0
    %5387 = vmatprep.subr.mxu0 0.0
    %5388 = vmatpush1.msra.mxu0 0.0
    %5389 = vmatprep.subr.mxu0 0.0
    %5390 = vmatpush1.msra.mxu0 0.0
    %5391 = vmatprep.subr.mxu0 0.0
    %5392 = vmatpush1.msra.mxu0 0.0
    %5393 = vmatprep.subr.mxu0 0.0
    %5394 = vmatpush1.msra.mxu0 0.0
    %5395 = vmatprep.subr.mxu0 0.0
    %5396 = vmatpush1.msra.mxu0 0.0
    %5397 = vmatprep.subr.mxu0 0.0
    %5398 = vmatpush1.msra.mxu0 0.0
    %5399 = vmatprep.subr.mxu0 0.0
    %5400 = vmatpush1.msra.mxu0 0.0
    %5401 = vmatprep.subr.mxu0 0.0
    %5402 = vmatpush1.msra.mxu0 0.0
    %5403 = vmatprep.subr.mxu0 0.0
    %5404 = vmatpush1.msra.mxu0 0.0
    %5405 = vmatprep.subr.mxu0 0.0
    %5406 = vmatpush1.msra.mxu0 0.0
    %5407 = vmatprep.subr.mxu0 0.0
    %5408 = vmatpush1.msra.mxu0 0.0
    %5409 = vmatprep.subr.mxu0 0.0
    %5410 = vmatpush1.msra.mxu0 0.0
    %5411 = vmatprep.subr.mxu0 0.0
    %5412 = vmatpush1.msra.mxu0 0.0
    %5413 = vmatprep.subr.mxu0 0.0
    %5414 = vmatpush1.msra.mxu0 0.0
    %5415 = vmatprep.mubr.f32.mxu0 0.0
    %v5416 = vand.u32 %v3686, 4294901760
    %5417 = vmatmul.mubr.f32.gmra.mrb[0].mxu0 %v5416
    %v5418 = vpop.f32.mrb[0].mxu0
    %v5419 = vadd.f32 %v5301, %v5418
    %v5420 = vpop.f32.mrb[0].mxu0
    %v5421 = vadd.f32 %v5303, %v5420
    %5422 = vmatprep.mubr.f32.mxu0 0.0
    %v5423 = vand.u32 %v3687, 4294901760
    %5424 = vmatmul.mubr.f32.gmra.mrb[0].mxu0 %v5423
    %v5425 = vpop.f32.mrb[0].mxu0
    %v5426 = vadd.f32 %v5308, %v5425
    %v5427 = vpop.f32.mrb[0].mxu0
    %v5428 = vadd.f32 %v5310, %v5427
    %5429 = vmatprep.mubr.f32.mxu0 0.0
    %v5430 = vand.u32 %v3688, 4294901760
    %5431 = vmatmul.mubr.f32.gmra.mrb[0].mxu0 %v5430
    %v5432 = vpop.f32.mrb[0].mxu0
    %v5433 = vadd.f32 %v5315, %v5432
    %v5434 = vpop.f32.mrb[0].mxu0
    %v5435 = vadd.f32 %v5317, %v5434
    %5436 = vdwg.mxu0
    %5437 = vmatprep.subr.mxu0 0.0
    %v5438 = vand.u32 %v4437, 4294901760
    %5439 = vmatpush1.msra.mxu0 %v5438
    %5440 = vmatprep.subr.mxu0 0.0
    %v5441 = vand.u32 %v4440, 4294901760
    %5442 = vmatpush1.msra.mxu0 %v5441
    %5443 = vmatprep.subr.mxu0 0.0
    %v5444 = vand.u32 %v4443, 4294901760
    %5445 = vmatpush1.msra.mxu0 %v5444
    %5446 = vmatprep.subr.mxu0 0.0
    %v5447 = vand.u32 %v4446, 4294901760
    %5448 = vmatpush1.msra.mxu0 %v5447
    %5449 = vmatprep.subr.mxu0 0.0
    %v5450 = vand.u32 %v4449, 4294901760
    %5451 = vmatpush1.msra.mxu0 %v5450
    %5452 = vmatprep.subr.mxu0 0.0
    %v5453 = vand.u32 %v4452, 4294901760
    %5454 = vmatpush1.msra.mxu0 %v5453
    %5455 = vmatprep.subr.mxu0 0.0
    %v5456 = vand.u32 %v4455, 4294901760
    %5457 = vmatpush1.msra.mxu0 %v5456
    %5458 = vmatprep.subr.mxu0 0.0
    %v5459 = vand.u32 %v4458, 4294901760
    %5460 = vmatpush1.msra.mxu0 %v5459
    %5461 = vmatprep.subr.mxu0 0.0
    %v5462 = vand.u32 %v4461, 4294901760
    %5463 = vmatpush1.msra.mxu0 %v5462
    %5464 = vmatprep.subr.mxu0 0.0
    %v5465 = vand.u32 %v4464, 4294901760
    %5466 = vmatpush1.msra.mxu0 %v5465
    %5467 = vmatprep.subr.mxu0 0.0
    %v5468 = vand.u32 %v4467, 4294901760
    %5469 = vmatpush1.msra.mxu0 %v5468
    %5470 = vmatprep.subr.mxu0 0.0
    %v5471 = vand.u32 %v4470, 4294901760
    %5472 = vmatpush1.msra.mxu0 %v5471
    %5473 = vmatprep.subr.mxu0 0.0
    %v5474 = vand.u32 %v4473, 4294901760
    %5475 = vmatpush1.msra.mxu0 %v5474
    %5476 = vmatprep.subr.mxu0 0.0
    %v5477 = vand.u32 %v4476, 4294901760
    %5478 = vmatpush1.msra.mxu0 %v5477
    %5479 = vmatprep.subr.mxu0 0.0
    %v5480 = vand.u32 %v4479, 4294901760
    %5481 = vmatpush1.msra.mxu0 %v5480
    %5482 = vmatprep.subr.mxu0 0.0
    %v5483 = vand.u32 %v4482, 4294901760
    %5484 = vmatpush1.msra.mxu0 %v5483
    %5485 = vmatprep.subr.mxu0 0.0
    %5486 = vmatpush1.msra.mxu0 0.0
    %5487 = vmatprep.subr.mxu0 0.0
    %5488 = vmatpush1.msra.mxu0 0.0
    %5489 = vmatprep.subr.mxu0 0.0
    %5490 = vmatpush1.msra.mxu0 0.0
    %5491 = vmatprep.subr.mxu0 0.0
    %5492 = vmatpush1.msra.mxu0 0.0
    %5493 = vmatprep.subr.mxu0 0.0
    %5494 = vmatpush1.msra.mxu0 0.0
    %5495 = vmatprep.subr.mxu0 0.0
    %5496 = vmatpush1.msra.mxu0 0.0
    %5497 = vmatprep.subr.mxu0 0.0
    %5498 = vmatpush1.msra.mxu0 0.0
    %5499 = vmatprep.subr.mxu0 0.0
    %5500 = vmatpush1.msra.mxu0 0.0
    %5501 = vmatprep.subr.mxu0 0.0
    %5502 = vmatpush1.msra.mxu0 0.0
    %5503 = vmatprep.subr.mxu0 0.0
    %5504 = vmatpush1.msra.mxu0 0.0
    %5505 = vmatprep.subr.mxu0 0.0
    %5506 = vmatpush1.msra.mxu0 0.0
    %5507 = vmatprep.subr.mxu0 0.0
    %5508 = vmatpush1.msra.mxu0 0.0
    %5509 = vmatprep.subr.mxu0 0.0
    %5510 = vmatpush1.msra.mxu0 0.0
    %5511 = vmatprep.subr.mxu0 0.0
    %5512 = vmatpush1.msra.mxu0 0.0
    %5513 = vmatprep.subr.mxu0 0.0
    %5514 = vmatpush1.msra.mxu0 0.0
    %5515 = vmatprep.subr.mxu0 0.0
    %5516 = vmatpush1.msra.mxu0 0.0
    %5517 = vmatprep.mubr.f32.mxu0 0.0
    %v5518 = vand.u32 %v3686, 4294901760
    %v5519 = vsub.f32 %v3686, %v5518
    %v5520 = vand.u32 %v5519, 4294901760
    %v5521 = vsub.f32 %v5519, %v5520
    %v5522 = vand.u32 %v5521, 4294901760
    %5523 = vmatmul.mubr.f32.gmra.mrb[0].mxu0 %v5522
    %v5524 = vpop.f32.mrb[0].mxu0
    %v5525 = vadd.f32 0.0, %v5524
    %v5526 = vpop.f32.mrb[0].mxu0
    %5527 = vmatprep.mubr.f32.mxu0 0.0
    %v5528 = vand.u32 %v3687, 4294901760
    %v5529 = vsub.f32 %v3687, %v5528
    %v5530 = vand.u32 %v5529, 4294901760
    %v5531 = vsub.f32 %v5529, %v5530
    %v5532 = vand.u32 %v5531, 4294901760
    %5533 = vmatmul.mubr.f32.gmra.mrb[0].mxu0 %v5532
    %v5534 = vpop.f32.mrb[0].mxu0
    %v5535 = vadd.f32 0.0, %v5534
    %v5536 = vpop.f32.mrb[0].mxu0
    %5537 = vmatprep.mubr.f32.mxu0 0.0
    %v5538 = vand.u32 %v3688, 4294901760
    %v5539 = vsub.f32 %v3688, %v5538
    %v5540 = vand.u32 %v5539, 4294901760
    %v5541 = vsub.f32 %v5539, %v5540
    %v5542 = vand.u32 %v5541, 4294901760
    %5543 = vmatmul.mubr.f32.gmra.mrb[0].mxu0 %v5542
    %v5544 = vpop.f32.mrb[0].mxu0
    %v5545 = vadd.f32 0.0, %v5544
    %v5546 = vpop.f32.mrb[0].mxu0
    %5547 = vdwg.mxu0
    %5548 = vmatprep.subr.mxu0 0.0
    %v5549 = vand.u32 %v4437, 4294901760
    %v5550 = vsub.f32 %v4437, %v5549
    %v5551 = vand.u32 %v5550, 4294901760
    %v5552 = vsub.f32 %v5550, %v5551
    %v5553 = vand.u32 %v5552, 4294901760
    %5554 = vmatpush1.msra.mxu0 %v5553
    %5555 = vmatprep.subr.mxu0 0.0
    %v5556 = vand.u32 %v4440, 4294901760
    %v5557 = vsub.f32 %v4440, %v5556
    %v5558 = vand.u32 %v5557, 4294901760
    %v5559 = vsub.f32 %v5557, %v5558
    %v5560 = vand.u32 %v5559, 4294901760
    %5561 = vmatpush1.msra.mxu0 %v5560
    %5562 = vmatprep.subr.mxu0 0.0
    %v5563 = vand.u32 %v4443, 4294901760
    %v5564 = vsub.f32 %v4443, %v5563
    %v5565 = vand.u32 %v5564, 4294901760
    %v5566 = vsub.f32 %v5564, %v5565
    %v5567 = vand.u32 %v5566, 4294901760
    %5568 = vmatpush1.msra.mxu0 %v5567
    %5569 = vmatprep.subr.mxu0 0.0
    %v5570 = vand.u32 %v4446, 4294901760
    %v5571 = vsub.f32 %v4446, %v5570
    %v5572 = vand.u32 %v5571, 4294901760
    %v5573 = vsub.f32 %v5571, %v5572
    %v5574 = vand.u32 %v5573, 4294901760
    %5575 = vmatpush1.msra.mxu0 %v5574
    %5576 = vmatprep.subr.mxu0 0.0
    %v5577 = vand.u32 %v4449, 4294901760
    %v5578 = vsub.f32 %v4449, %v5577
    %v5579 = vand.u32 %v5578, 4294901760
    %v5580 = vsub.f32 %v5578, %v5579
    %v5581 = vand.u32 %v5580, 4294901760
    %5582 = vmatpush1.msra.mxu0 %v5581
    %5583 = vmatprep.subr.mxu0 0.0
    %v5584 = vand.u32 %v4452, 4294901760
    %v5585 = vsub.f32 %v4452, %v5584
    %v5586 = vand.u32 %v5585, 4294901760
    %v5587 = vsub.f32 %v5585, %v5586
    %v5588 = vand.u32 %v5587, 4294901760
    %5589 = vmatpush1.msra.mxu0 %v5588
    %5590 = vmatprep.subr.mxu0 0.0
    %v5591 = vand.u32 %v4455, 4294901760
    %v5592 = vsub.f32 %v4455, %v5591
    %v5593 = vand.u32 %v5592, 4294901760
    %v5594 = vsub.f32 %v5592, %v5593
    %v5595 = vand.u32 %v5594, 4294901760
    %5596 = vmatpush1.msra.mxu0 %v5595
    %5597 = vmatprep.subr.mxu0 0.0
    %v5598 = vand.u32 %v4458, 4294901760
    %v5599 = vsub.f32 %v4458, %v5598
    %v5600 = vand.u32 %v5599, 4294901760
    %v5601 = vsub.f32 %v5599, %v5600
    %v5602 = vand.u32 %v5601, 4294901760
    %5603 = vmatpush1.msra.mxu0 %v5602
    %5604 = vmatprep.subr.mxu0 0.0
    %v5605 = vand.u32 %v4461, 4294901760
    %v5606 = vsub.f32 %v4461, %v5605
    %v5607 = vand.u32 %v5606, 4294901760
    %v5608 = vsub.f32 %v5606, %v5607
    %v5609 = vand.u32 %v5608, 4294901760
    %5610 = vmatpush1.msra.mxu0 %v5609
    %5611 = vmatprep.subr.mxu0 0.0
    %v5612 = vand.u32 %v4464, 4294901760
    %v5613 = vsub.f32 %v4464, %v5612
    %v5614 = vand.u32 %v5613, 4294901760
    %v5615 = vsub.f32 %v5613, %v5614
    %v5616 = vand.u32 %v5615, 4294901760
    %5617 = vmatpush1.msra.mxu0 %v5616
    %5618 = vmatprep.subr.mxu0 0.0
    %v5619 = vand.u32 %v4467, 4294901760
    %v5620 = vsub.f32 %v4467, %v5619
    %v5621 = vand.u32 %v5620, 4294901760
    %v5622 = vsub.f32 %v5620, %v5621
    %v5623 = vand.u32 %v5622, 4294901760
    %5624 = vmatpush1.msra.mxu0 %v5623
    %5625 = vmatprep.subr.mxu0 0.0
    %v5626 = vand.u32 %v4470, 4294901760
    %v5627 = vsub.f32 %v4470, %v5626
    %v5628 = vand.u32 %v5627, 4294901760
    %v5629 = vsub.f32 %v5627, %v5628
    %v5630 = vand.u32 %v5629, 4294901760
    %5631 = vmatpush1.msra.mxu0 %v5630
    %5632 = vmatprep.subr.mxu0 0.0
    %v5633 = vand.u32 %v4473, 4294901760
    %v5634 = vsub.f32 %v4473, %v5633
    %v5635 = vand.u32 %v5634, 4294901760
    %v5636 = vsub.f32 %v5634, %v5635
    %v5637 = vand.u32 %v5636, 4294901760
    %5638 = vmatpush1.msra.mxu0 %v5637
    %5639 = vmatprep.subr.mxu0 0.0
    %v5640 = vand.u32 %v4476, 4294901760
    %v5641 = vsub.f32 %v4476, %v5640
    %v5642 = vand.u32 %v5641, 4294901760
    %v5643 = vsub.f32 %v5641, %v5642
    %v5644 = vand.u32 %v5643, 4294901760
    %5645 = vmatpush1.msra.mxu0 %v5644
    %5646 = vmatprep.subr.mxu0 0.0
    %v5647 = vand.u32 %v4479, 4294901760
    %v5648 = vsub.f32 %v4479, %v5647
    %v5649 = vand.u32 %v5648, 4294901760
    %v5650 = vsub.f32 %v5648, %v5649
    %v5651 = vand.u32 %v5650, 4294901760
    %5652 = vmatpush1.msra.mxu0 %v5651
    %5653 = vmatprep.subr.mxu0 0.0
    %v5654 = vand.u32 %v4482, 4294901760
    %v5655 = vsub.f32 %v4482, %v5654
    %v5656 = vand.u32 %v5655, 4294901760
    %v5657 = vsub.f32 %v5655, %v5656
    %v5658 = vand.u32 %v5657, 4294901760
    %5659 = vmatpush1.msra.mxu0 %v5658
    %5660 = vmatprep.subr.mxu0 0.0
    %5661 = vmatpush1.msra.mxu0 0.0
    %5662 = vmatprep.subr.mxu0 0.0
    %5663 = vmatpush1.msra.mxu0 0.0
    %5664 = vmatprep.subr.mxu0 0.0
    %5665 = vmatpush1.msra.mxu0 0.0
    %5666 = vmatprep.subr.mxu0 0.0
    %5667 = vmatpush1.msra.mxu0 0.0
    %5668 = vmatprep.subr.mxu0 0.0
    %5669 = vmatpush1.msra.mxu0 0.0
    %5670 = vmatprep.subr.mxu0 0.0
    %5671 = vmatpush1.msra.mxu0 0.0
    %5672 = vmatprep.subr.mxu0 0.0
    %5673 = vmatpush1.msra.mxu0 0.0
    %5674 = vmatprep.subr.mxu0 0.0
    %5675 = vmatpush1.msra.mxu0 0.0
    %5676 = vmatprep.subr.mxu0 0.0
    %5677 = vmatpush1.msra.mxu0 0.0
    %5678 = vmatprep.subr.mxu0 0.0
    %5679 = vmatpush1.msra.mxu0 0.0
    %5680 = vmatprep.subr.mxu0 0.0
    %5681 = vmatpush1.msra.mxu0 0.0
    %5682 = vmatprep.subr.mxu0 0.0
    %5683 = vmatpush1.msra.mxu0 0.0
    %5684 = vmatprep.subr.mxu0 0.0
    %5685 = vmatpush1.msra.mxu0 0.0
    %5686 = vmatprep.subr.mxu0 0.0
    %5687 = vmatpush1.msra.mxu0 0.0
    %5688 = vmatprep.subr.mxu0 0.0
    %5689 = vmatpush1.msra.mxu0 0.0
    %5690 = vmatprep.subr.mxu0 0.0
    %5691 = vmatpush1.msra.mxu0 0.0
    %5692 = vmatprep.mubr.f32.mxu0 0.0
    %v5693 = vand.u32 %v3686, 4294901760
    %5694 = vmatmul.mubr.f32.gmra.mrb[0].mxu0 %v5693
    %v5695 = vpop.f32.mrb[0].mxu0
    %v5696 = vadd.f32 %v5525, %v5695
    %v5697 = vpop.f32.mrb[0].mxu0
    %5698 = vmatprep.mubr.f32.mxu0 0.0
    %v5699 = vand.u32 %v3687, 4294901760
    %5700 = vmatmul.mubr.f32.gmra.mrb[0].mxu0 %v5699
    %v5701 = vpop.f32.mrb[0].mxu0
    %v5702 = vadd.f32 %v5535, %v5701
    %v5703 = vpop.f32.mrb[0].mxu0
    %5704 = vmatprep.mubr.f32.mxu0 0.0
    %v5705 = vand.u32 %v3688, 4294901760
    %5706 = vmatmul.mubr.f32.gmra.mrb[0].mxu0 %v5705
    %v5707 = vpop.f32.mrb[0].mxu0
    %v5708 = vadd.f32 %v5545, %v5707
    %v5709 = vpop.f32.mrb[0].mxu0
    %5710 = vdwg.mxu0
    %5711 = vmatprep.subr.mxu0 0.0
    %v5712 = vand.u32 %v4437, 4294901760
    %v5713 = vsub.f32 %v4437, %v5712
    %5714 = vmatpush1.msra.mxu0 %v5713
    %5715 = vmatprep.subr.mxu0 0.0
    %v5716 = vand.u32 %v4440, 4294901760
    %v5717 = vsub.f32 %v4440, %v5716
    %5718 = vmatpush1.msra.mxu0 %v5717
    %5719 = vmatprep.subr.mxu0 0.0
    %v5720 = vand.u32 %v4443, 4294901760
    %v5721 = vsub.f32 %v4443, %v5720
    %5722 = vmatpush1.msra.mxu0 %v5721
    %5723 = vmatprep.subr.mxu0 0.0
    %v5724 = vand.u32 %v4446, 4294901760
    %v5725 = vsub.f32 %v4446, %v5724
    %5726 = vmatpush1.msra.mxu0 %v5725
    %5727 = vmatprep.subr.mxu0 0.0
    %v5728 = vand.u32 %v4449, 4294901760
    %v5729 = vsub.f32 %v4449, %v5728
    %5730 = vmatpush1.msra.mxu0 %v5729
    %5731 = vmatprep.subr.mxu0 0.0
    %v5732 = vand.u32 %v4452, 4294901760
    %v5733 = vsub.f32 %v4452, %v5732
    %5734 = vmatpush1.msra.mxu0 %v5733
    %5735 = vmatprep.subr.mxu0 0.0
    %v5736 = vand.u32 %v4455, 4294901760
    %v5737 = vsub.f32 %v4455, %v5736
    %5738 = vmatpush1.msra.mxu0 %v5737
    %5739 = vmatprep.subr.mxu0 0.0
    %v5740 = vand.u32 %v4458, 4294901760
    %v5741 = vsub.f32 %v4458, %v5740
    %5742 = vmatpush1.msra.mxu0 %v5741
    %5743 = vmatprep.subr.mxu0 0.0
    %v5744 = vand.u32 %v4461, 4294901760
    %v5745 = vsub.f32 %v4461, %v5744
    %5746 = vmatpush1.msra.mxu0 %v5745
    %5747 = vmatprep.subr.mxu0 0.0
    %v5748 = vand.u32 %v4464, 4294901760
    %v5749 = vsub.f32 %v4464, %v5748
    %5750 = vmatpush1.msra.mxu0 %v5749
    %5751 = vmatprep.subr.mxu0 0.0
    %v5752 = vand.u32 %v4467, 4294901760
    %v5753 = vsub.f32 %v4467, %v5752
    %5754 = vmatpush1.msra.mxu0 %v5753
    %5755 = vmatprep.subr.mxu0 0.0
    %v5756 = vand.u32 %v4470, 4294901760
    %v5757 = vsub.f32 %v4470, %v5756
    %5758 = vmatpush1.msra.mxu0 %v5757
    %5759 = vmatprep.subr.mxu0 0.0
    %v5760 = vand.u32 %v4473, 4294901760
    %v5761 = vsub.f32 %v4473, %v5760
    %5762 = vmatpush1.msra.mxu0 %v5761
    %5763 = vmatprep.subr.mxu0 0.0
    %v5764 = vand.u32 %v4476, 4294901760
    %v5765 = vsub.f32 %v4476, %v5764
    %5766 = vmatpush1.msra.mxu0 %v5765
    %5767 = vmatprep.subr.mxu0 0.0
    %v5768 = vand.u32 %v4479, 4294901760
    %v5769 = vsub.f32 %v4479, %v5768
    %5770 = vmatpush1.msra.mxu0 %v5769
    %5771 = vmatprep.subr.mxu0 0.0
    %v5772 = vand.u32 %v4482, 4294901760
    %v5773 = vsub.f32 %v4482, %v5772
    %5774 = vmatpush1.msra.mxu0 %v5773
    %5775 = vmatprep.subr.mxu0 0.0
    %5776 = vmatpush1.msra.mxu0 0.0
    %5777 = vmatprep.subr.mxu0 0.0
    %5778 = vmatpush1.msra.mxu0 0.0
    %5779 = vmatprep.subr.mxu0 0.0
    %5780 = vmatpush1.msra.mxu0 0.0
    %5781 = vmatprep.subr.mxu0 0.0
    %5782 = vmatpush1.msra.mxu0 0.0
    %5783 = vmatprep.subr.mxu0 0.0
    %5784 = vmatpush1.msra.mxu0 0.0
    %5785 = vmatprep.subr.mxu0 0.0
    %5786 = vmatpush1.msra.mxu0 0.0
    %5787 = vmatprep.subr.mxu0 0.0
    %5788 = vmatpush1.msra.mxu0 0.0
    %5789 = vmatprep.subr.mxu0 0.0
    %5790 = vmatpush1.msra.mxu0 0.0
    %5791 = vmatprep.subr.mxu0 0.0
    %5792 = vmatpush1.msra.mxu0 0.0
    %5793 = vmatprep.subr.mxu0 0.0
    %5794 = vmatpush1.msra.mxu0 0.0
    %5795 = vmatprep.subr.mxu0 0.0
    %5796 = vmatpush1.msra.mxu0 0.0
    %5797 = vmatprep.subr.mxu0 0.0
    %5798 = vmatpush1.msra.mxu0 0.0
    %5799 = vmatprep.subr.mxu0 0.0
    %5800 = vmatpush1.msra.mxu0 0.0
    %5801 = vmatprep.subr.mxu0 0.0
    %5802 = vmatpush1.msra.mxu0 0.0
    %5803 = vmatprep.subr.mxu0 0.0
    %5804 = vmatpush1.msra.mxu0 0.0
    %5805 = vmatprep.subr.mxu0 0.0
    %5806 = vmatpush1.msra.mxu0 0.0
    %5807 = vmatprep.mubr.f32.mxu0 0.0
    %v5808 = vand.u32 %v3686, 4294901760
    %v5809 = vsub.f32 %v3686, %v5808
    %5810 = vmatmul.mubr.f32.gmra.mrb[0].mxu0 %v5809
    %v5811 = vpop.f32.mrb[0].mxu0
    %v5812 = vadd.f32 %v5696, %v5811
    %v5813 = vpop.f32.mrb[0].mxu0
    %5814 = vmatprep.mubr.f32.mxu0 0.0
    %v5815 = vand.u32 %v3687, 4294901760
    %v5816 = vsub.f32 %v3687, %v5815
    %5817 = vmatmul.mubr.f32.gmra.mrb[0].mxu0 %v5816
    %v5818 = vpop.f32.mrb[0].mxu0
    %v5819 = vadd.f32 %v5702, %v5818
    %v5820 = vpop.f32.mrb[0].mxu0
    %5821 = vmatprep.mubr.f32.mxu0 0.0
    %v5822 = vand.u32 %v3688, 4294901760
    %v5823 = vsub.f32 %v3688, %v5822
    %5824 = vmatmul.mubr.f32.gmra.mrb[0].mxu0 %v5823
    %v5825 = vpop.f32.mrb[0].mxu0
    %v5826 = vadd.f32 %v5708, %v5825
    %v5827 = vpop.f32.mrb[0].mxu0
    %5828 = vdwg.mxu0
    %5829 = vmatprep.subr.mxu0 0.0
    %v5830 = vand.u32 %v4437, 4294901760
    %5831 = vmatpush1.msra.mxu0 %v5830
    %5832 = vmatprep.subr.mxu0 0.0
    %v5833 = vand.u32 %v4440, 4294901760
    %5834 = vmatpush1.msra.mxu0 %v5833
    %5835 = vmatprep.subr.mxu0 0.0
    %v5836 = vand.u32 %v4443, 4294901760
    %5837 = vmatpush1.msra.mxu0 %v5836
    %5838 = vmatprep.subr.mxu0 0.0
    %v5839 = vand.u32 %v4446, 4294901760
    %5840 = vmatpush1.msra.mxu0 %v5839
    %5841 = vmatprep.subr.mxu0 0.0
    %v5842 = vand.u32 %v4449, 4294901760
    %5843 = vmatpush1.msra.mxu0 %v5842
    %5844 = vmatprep.subr.mxu0 0.0
    %v5845 = vand.u32 %v4452, 4294901760
    %5846 = vmatpush1.msra.mxu0 %v5845
    %5847 = vmatprep.subr.mxu0 0.0
    %v5848 = vand.u32 %v4455, 4294901760
    %5849 = vmatpush1.msra.mxu0 %v5848
    %5850 = vmatprep.subr.mxu0 0.0
    %v5851 = vand.u32 %v4458, 4294901760
    %5852 = vmatpush1.msra.mxu0 %v5851
    %5853 = vmatprep.subr.mxu0 0.0
    %v5854 = vand.u32 %v4461, 4294901760
    %5855 = vmatpush1.msra.mxu0 %v5854
    %5856 = vmatprep.subr.mxu0 0.0
    %v5857 = vand.u32 %v4464, 4294901760
    %5858 = vmatpush1.msra.mxu0 %v5857
    %5859 = vmatprep.subr.mxu0 0.0
    %v5860 = vand.u32 %v4467, 4294901760
    %5861 = vmatpush1.msra.mxu0 %v5860
    %5862 = vmatprep.subr.mxu0 0.0
    %v5863 = vand.u32 %v4470, 4294901760
    %5864 = vmatpush1.msra.mxu0 %v5863
    %5865 = vmatprep.subr.mxu0 0.0
    %v5866 = vand.u32 %v4473, 4294901760
    %5867 = vmatpush1.msra.mxu0 %v5866
    %5868 = vmatprep.subr.mxu0 0.0
    %v5869 = vand.u32 %v4476, 4294901760
    %5870 = vmatpush1.msra.mxu0 %v5869
    %5871 = vmatprep.subr.mxu0 0.0
    %v5872 = vand.u32 %v4479, 4294901760
    %5873 = vmatpush1.msra.mxu0 %v5872
    %5874 = vmatprep.subr.mxu0 0.0
    %v5875 = vand.u32 %v4482, 4294901760
    %5876 = vmatpush1.msra.mxu0 %v5875
    %5877 = vmatprep.subr.mxu0 0.0
    %5878 = vmatpush1.msra.mxu0 0.0
    %5879 = vmatprep.subr.mxu0 0.0
    %5880 = vmatpush1.msra.mxu0 0.0
    %5881 = vmatprep.subr.mxu0 0.0
    %5882 = vmatpush1.msra.mxu0 0.0
    %5883 = vmatprep.subr.mxu0 0.0
    %5884 = vmatpush1.msra.mxu0 0.0
    %5885 = vmatprep.subr.mxu0 0.0
    %5886 = vmatpush1.msra.mxu0 0.0
    %5887 = vmatprep.subr.mxu0 0.0
    %5888 = vmatpush1.msra.mxu0 0.0
    %5889 = vmatprep.subr.mxu0 0.0
    %5890 = vmatpush1.msra.mxu0 0.0
    %5891 = vmatprep.subr.mxu0 0.0
    %5892 = vmatpush1.msra.mxu0 0.0
    %5893 = vmatprep.subr.mxu0 0.0
    %5894 = vmatpush1.msra.mxu0 0.0
    %5895 = vmatprep.subr.mxu0 0.0
    %5896 = vmatpush1.msra.mxu0 0.0
    %5897 = vmatprep.subr.mxu0 0.0
    %5898 = vmatpush1.msra.mxu0 0.0
    %5899 = vmatprep.subr.mxu0 0.0
    %5900 = vmatpush1.msra.mxu0 0.0
    %5901 = vmatprep.subr.mxu0 0.0
    %5902 = vmatpush1.msra.mxu0 0.0
    %5903 = vmatprep.subr.mxu0 0.0
    %5904 = vmatpush1.msra.mxu0 0.0
    %5905 = vmatprep.subr.mxu0 0.0
    %5906 = vmatpush1.msra.mxu0 0.0
    %5907 = vmatprep.subr.mxu0 0.0
    %5908 = vmatpush1.msra.mxu0 0.0
    %5909 = vmatprep.mubr.f32.mxu0 0.0
    %v5910 = vand.u32 %v3686, 4294901760
    %v5911 = vsub.f32 %v3686, %v5910
    %v5912 = vand.u32 %v5911, 4294901760
    %5913 = vmatmul.mubr.f32.gmra.mrb[0].mxu0 %v5912
    %v5914 = vpop.f32.mrb[0].mxu0
    %v5915 = vadd.f32 %v5812, %v5914
    %v5916 = vpop.f32.mrb[0].mxu0
    %5917 = vmatprep.mubr.f32.mxu0 0.0
    %v5918 = vand.u32 %v3687, 4294901760
    %v5919 = vsub.f32 %v3687, %v5918
    %v5920 = vand.u32 %v5919, 4294901760
    %5921 = vmatmul.mubr.f32.gmra.mrb[0].mxu0 %v5920
    %v5922 = vpop.f32.mrb[0].mxu0
    %v5923 = vadd.f32 %v5819, %v5922
    %v5924 = vpop.f32.mrb[0].mxu0
    %5925 = vmatprep.mubr.f32.mxu0 0.0
    %v5926 = vand.u32 %v3688, 4294901760
    %v5927 = vsub.f32 %v3688, %v5926
    %v5928 = vand.u32 %v5927, 4294901760
    %5929 = vmatmul.mubr.f32.gmra.mrb[0].mxu0 %v5928
    %v5930 = vpop.f32.mrb[0].mxu0
    %v5931 = vadd.f32 %v5826, %v5930
    %v5932 = vpop.f32.mrb[0].mxu0
    %5933 = vdwg.mxu0
    %5934 = vmatprep.subr.mxu0 0.0
    %v5935 = vand.u32 %v4437, 4294901760
    %v5936 = vsub.f32 %v4437, %v5935
    %v5937 = vand.u32 %v5936, 4294901760
    %5938 = vmatpush1.msra.mxu0 %v5937
    %5939 = vmatprep.subr.mxu0 0.0
    %v5940 = vand.u32 %v4440, 4294901760
    %v5941 = vsub.f32 %v4440, %v5940
    %v5942 = vand.u32 %v5941, 4294901760
    %5943 = vmatpush1.msra.mxu0 %v5942
    %5944 = vmatprep.subr.mxu0 0.0
    %v5945 = vand.u32 %v4443, 4294901760
    %v5946 = vsub.f32 %v4443, %v5945
    %v5947 = vand.u32 %v5946, 4294901760
    %5948 = vmatpush1.msra.mxu0 %v5947
    %5949 = vmatprep.subr.mxu0 0.0
    %v5950 = vand.u32 %v4446, 4294901760
    %v5951 = vsub.f32 %v4446, %v5950
    %v5952 = vand.u32 %v5951, 4294901760
    %5953 = vmatpush1.msra.mxu0 %v5952
    %5954 = vmatprep.subr.mxu0 0.0
    %v5955 = vand.u32 %v4449, 4294901760
    %v5956 = vsub.f32 %v4449, %v5955
    %v5957 = vand.u32 %v5956, 4294901760
    %5958 = vmatpush1.msra.mxu0 %v5957
    %5959 = vmatprep.subr.mxu0 0.0
    %v5960 = vand.u32 %v4452, 4294901760
    %v5961 = vsub.f32 %v4452, %v5960
    %v5962 = vand.u32 %v5961, 4294901760
    %5963 = vmatpush1.msra.mxu0 %v5962
    %5964 = vmatprep.subr.mxu0 0.0
    %v5965 = vand.u32 %v4455, 4294901760
    %v5966 = vsub.f32 %v4455, %v5965
    %v5967 = vand.u32 %v5966, 4294901760
    %5968 = vmatpush1.msra.mxu0 %v5967
    %5969 = vmatprep.subr.mxu0 0.0
    %v5970 = vand.u32 %v4458, 4294901760
    %v5971 = vsub.f32 %v4458, %v5970
    %v5972 = vand.u32 %v5971, 4294901760
    %5973 = vmatpush1.msra.mxu0 %v5972
    %5974 = vmatprep.subr.mxu0 0.0
    %v5975 = vand.u32 %v4461, 4294901760
    %v5976 = vsub.f32 %v4461, %v5975
    %v5977 = vand.u32 %v5976, 4294901760
    %5978 = vmatpush1.msra.mxu0 %v5977
    %5979 = vmatprep.subr.mxu0 0.0
    %v5980 = vand.u32 %v4464, 4294901760
    %v5981 = vsub.f32 %v4464, %v5980
    %v5982 = vand.u32 %v5981, 4294901760
    %5983 = vmatpush1.msra.mxu0 %v5982
    %5984 = vmatprep.subr.mxu0 0.0
    %v5985 = vand.u32 %v4467, 4294901760
    %v5986 = vsub.f32 %v4467, %v5985
    %v5987 = vand.u32 %v5986, 4294901760
    %5988 = vmatpush1.msra.mxu0 %v5987
    %5989 = vmatprep.subr.mxu0 0.0
    %v5990 = vand.u32 %v4470, 4294901760
    %v5991 = vsub.f32 %v4470, %v5990
    %v5992 = vand.u32 %v5991, 4294901760
    %5993 = vmatpush1.msra.mxu0 %v5992
    %5994 = vmatprep.subr.mxu0 0.0
    %v5995 = vand.u32 %v4473, 4294901760
    %v5996 = vsub.f32 %v4473, %v5995
    %v5997 = vand.u32 %v5996, 4294901760
    %5998 = vmatpush1.msra.mxu0 %v5997
    %5999 = vmatprep.subr.mxu0 0.0
    %v6000 = vand.u32 %v4476, 4294901760
    %v6001 = vsub.f32 %v4476, %v6000
    %v6002 = vand.u32 %v6001, 4294901760
    %6003 = vmatpush1.msra.mxu0 %v6002
    %6004 = vmatprep.subr.mxu0 0.0
    %v6005 = vand.u32 %v4479, 4294901760
    %v6006 = vsub.f32 %v4479, %v6005
    %v6007 = vand.u32 %v6006, 4294901760
    %6008 = vmatpush1.msra.mxu0 %v6007
    %6009 = vmatprep.subr.mxu0 0.0
    %v6010 = vand.u32 %v4482, 4294901760
    %v6011 = vsub.f32 %v4482, %v6010
    %v6012 = vand.u32 %v6011, 4294901760
    %6013 = vmatpush1.msra.mxu0 %v6012
    %6014 = vmatprep.subr.mxu0 0.0
    %6015 = vmatpush1.msra.mxu0 0.0
    %6016 = vmatprep.subr.mxu0 0.0
    %6017 = vmatpush1.msra.mxu0 0.0
    %6018 = vmatprep.subr.mxu0 0.0
    %6019 = vmatpush1.msra.mxu0 0.0
    %6020 = vmatprep.subr.mxu0 0.0
    %6021 = vmatpush1.msra.mxu0 0.0
    %6022 = vmatprep.subr.mxu0 0.0
    %6023 = vmatpush1.msra.mxu0 0.0
    %6024 = vmatprep.subr.mxu0 0.0
    %6025 = vmatpush1.msra.mxu0 0.0
    %6026 = vmatprep.subr.mxu0 0.0
    %6027 = vmatpush1.msra.mxu0 0.0
    %6028 = vmatprep.subr.mxu0 0.0
    %6029 = vmatpush1.msra.mxu0 0.0
    %6030 = vmatprep.subr.mxu0 0.0
    %6031 = vmatpush1.msra.mxu0 0.0
    %6032 = vmatprep.subr.mxu0 0.0
    %6033 = vmatpush1.msra.mxu0 0.0
    %6034 = vmatprep.subr.mxu0 0.0
    %6035 = vmatpush1.msra.mxu0 0.0
    %6036 = vmatprep.subr.mxu0 0.0
    %6037 = vmatpush1.msra.mxu0 0.0
    %6038 = vmatprep.subr.mxu0 0.0
    %6039 = vmatpush1.msra.mxu0 0.0
    %6040 = vmatprep.subr.mxu0 0.0
    %6041 = vmatpush1.msra.mxu0 0.0
    %6042 = vmatprep.subr.mxu0 0.0
    %6043 = vmatpush1.msra.mxu0 0.0
    %6044 = vmatprep.subr.mxu0 0.0
    %6045 = vmatpush1.msra.mxu0 0.0
    %6046 = vmatprep.mubr.f32.mxu0 0.0
    %v6047 = vand.u32 %v3686, 4294901760
    %6048 = vmatmul.mubr.f32.gmra.mrb[0].mxu0 %v6047
    %v6049 = vpop.f32.mrb[0].mxu0
    %v6050 = vadd.f32 %v5915, %v6049
    %v6051 = vpop.f32.mrb[0].mxu0
    %6052 = vmatprep.mubr.f32.mxu0 0.0
    %v6053 = vand.u32 %v3687, 4294901760
    %6054 = vmatmul.mubr.f32.gmra.mrb[0].mxu0 %v6053
    %v6055 = vpop.f32.mrb[0].mxu0
    %v6056 = vadd.f32 %v5923, %v6055
    %v6057 = vpop.f32.mrb[0].mxu0
    %6058 = vmatprep.mubr.f32.mxu0 0.0
    %v6059 = vand.u32 %v3688, 4294901760
    %6060 = vmatmul.mubr.f32.gmra.mrb[0].mxu0 %v6059
    %v6061 = vpop.f32.mrb[0].mxu0
    %v6062 = vadd.f32 %v5931, %v6061
    %v6063 = vpop.f32.mrb[0].mxu0
    %6064 = vdwg.mxu0
    %6065 = vmatprep.subr.mxu0 0.0
    %v6066 = vand.u32 %v4437, 4294901760
    %6067 = vmatpush1.msra.mxu0 %v6066
    %6068 = vmatprep.subr.mxu0 0.0
    %v6069 = vand.u32 %v4440, 4294901760
    %6070 = vmatpush1.msra.mxu0 %v6069
    %6071 = vmatprep.subr.mxu0 0.0
    %v6072 = vand.u32 %v4443, 4294901760
    %6073 = vmatpush1.msra.mxu0 %v6072
    %6074 = vmatprep.subr.mxu0 0.0
    %v6075 = vand.u32 %v4446, 4294901760
    %6076 = vmatpush1.msra.mxu0 %v6075
    %6077 = vmatprep.subr.mxu0 0.0
    %v6078 = vand.u32 %v4449, 4294901760
    %6079 = vmatpush1.msra.mxu0 %v6078
    %6080 = vmatprep.subr.mxu0 0.0
    %v6081 = vand.u32 %v4452, 4294901760
    %6082 = vmatpush1.msra.mxu0 %v6081
    %6083 = vmatprep.subr.mxu0 0.0
    %v6084 = vand.u32 %v4455, 4294901760
    %6085 = vmatpush1.msra.mxu0 %v6084
    %6086 = vmatprep.subr.mxu0 0.0
    %v6087 = vand.u32 %v4458, 4294901760
    %6088 = vmatpush1.msra.mxu0 %v6087
    %6089 = vmatprep.subr.mxu0 0.0
    %v6090 = vand.u32 %v4461, 4294901760
    %6091 = vmatpush1.msra.mxu0 %v6090
    %6092 = vmatprep.subr.mxu0 0.0
    %v6093 = vand.u32 %v4464, 4294901760
    %6094 = vmatpush1.msra.mxu0 %v6093
    %6095 = vmatprep.subr.mxu0 0.0
    %v6096 = vand.u32 %v4467, 4294901760
    %6097 = vmatpush1.msra.mxu0 %v6096
    %6098 = vmatprep.subr.mxu0 0.0
    %v6099 = vand.u32 %v4470, 4294901760
    %6100 = vmatpush1.msra.mxu0 %v6099
    %6101 = vmatprep.subr.mxu0 0.0
    %v6102 = vand.u32 %v4473, 4294901760
    %6103 = vmatpush1.msra.mxu0 %v6102
    %6104 = vmatprep.subr.mxu0 0.0
    %v6105 = vand.u32 %v4476, 4294901760
    %6106 = vmatpush1.msra.mxu0 %v6105
    %6107 = vmatprep.subr.mxu0 0.0
    %v6108 = vand.u32 %v4479, 4294901760
    %6109 = vmatpush1.msra.mxu0 %v6108
    %6110 = vmatprep.subr.mxu0 0.0
    %v6111 = vand.u32 %v4482, 4294901760
    %6112 = vmatpush1.msra.mxu0 %v6111
    %6113 = vmatprep.subr.mxu0 0.0
    %6114 = vmatpush1.msra.mxu0 0.0
    %6115 = vmatprep.subr.mxu0 0.0
    %6116 = vmatpush1.msra.mxu0 0.0
    %6117 = vmatprep.subr.mxu0 0.0
    %6118 = vmatpush1.msra.mxu0 0.0
    %6119 = vmatprep.subr.mxu0 0.0
    %6120 = vmatpush1.msra.mxu0 0.0
    %6121 = vmatprep.subr.mxu0 0.0
    %6122 = vmatpush1.msra.mxu0 0.0
    %6123 = vmatprep.subr.mxu0 0.0
    %6124 = vmatpush1.msra.mxu0 0.0
    %6125 = vmatprep.subr.mxu0 0.0
    %6126 = vmatpush1.msra.mxu0 0.0
    %6127 = vmatprep.subr.mxu0 0.0
    %6128 = vmatpush1.msra.mxu0 0.0
    %6129 = vmatprep.subr.mxu0 0.0
    %6130 = vmatpush1.msra.mxu0 0.0
    %6131 = vmatprep.subr.mxu0 0.0
    %6132 = vmatpush1.msra.mxu0 0.0
    %6133 = vmatprep.subr.mxu0 0.0
    %6134 = vmatpush1.msra.mxu0 0.0
    %6135 = vmatprep.subr.mxu0 0.0
    %6136 = vmatpush1.msra.mxu0 0.0
    %6137 = vmatprep.subr.mxu0 0.0
    %6138 = vmatpush1.msra.mxu0 0.0
    %6139 = vmatprep.subr.mxu0 0.0
    %6140 = vmatpush1.msra.mxu0 0.0
    %6141 = vmatprep.subr.mxu0 0.0
    %6142 = vmatpush1.msra.mxu0 0.0
    %6143 = vmatprep.subr.mxu0 0.0
    %6144 = vmatpush1.msra.mxu0 0.0
    %6145 = vmatprep.mubr.f32.mxu0 0.0
    %v6146 = vand.u32 %v3686, 4294901760
    %6147 = vmatmul.mubr.f32.gmra.mrb[0].mxu0 %v6146
    %v6148 = vpop.f32.mrb[0].mxu0
    %v6149 = vadd.f32 %v6050, %v6148
    %v6150 = vpop.f32.mrb[0].mxu0
    %6151 = vmatprep.mubr.f32.mxu0 0.0
    %v6152 = vand.u32 %v3687, 4294901760
    %6153 = vmatmul.mubr.f32.gmra.mrb[0].mxu0 %v6152
    %v6154 = vpop.f32.mrb[0].mxu0
    %v6155 = vadd.f32 %v6056, %v6154
    %v6156 = vpop.f32.mrb[0].mxu0
    %6157 = vmatprep.mubr.f32.mxu0 0.0
    %v6158 = vand.u32 %v3688, 4294901760
    %6159 = vmatmul.mubr.f32.gmra.mrb[0].mxu0 %v6158
    %v6160 = vpop.f32.mrb[0].mxu0
    %v6161 = vadd.f32 %v6062, %v6160
    %v6162 = vpop.f32.mrb[0].mxu0
    %6163 = vdwg.mxu0
    %v6165 = vlaneseq
    %v6166 = vshrl.u32 %v6165, 7
    %v6167 = vsub.s32 0, %v6166
    %v6168 = vrot.slane %v4483, %v6167
    %v6170 = vadd.f32 %v6149, %v6168
    %v6171 = vadd.f32 %v6155, %v6168
    %v6172 = vadd.f32 %v6161, %v6168
    %6173 = vmatprep.subr.mxu0 0.0
    %v6174 = vand.u32 %v5419, 4294901760
    %6175 = vmatpush1.msra.mxu0 %v6174
    %6176 = vmatprep.subr.mxu0 0.0
    %v6177 = vand.u32 %v5426, 4294901760
    %6178 = vmatpush1.msra.mxu0 %v6177
    %6179 = vmatprep.subr.mxu0 0.0
    %v6180 = vand.u32 %v5433, 4294901760
    %6181 = vmatpush1.msra.mxu0 %v6180
    %6182 = vmatprep.subr.mxu0 0.0
    %6183 = vmatpush1.msra.mxu0 0.0
    %6184 = vmatprep.subr.mxu0 0.0
    %6185 = vmatpush1.msra.mxu0 0.0
    %6186 = vmatprep.subr.mxu0 0.0
    %6187 = vmatpush1.msra.mxu0 0.0
    %6188 = vmatprep.subr.mxu0 0.0
    %6189 = vmatpush1.msra.mxu0 0.0
    %6190 = vmatprep.subr.mxu0 0.0
    %6191 = vmatpush1.msra.mxu0 0.0
    %6192 = vmatprep.subr.mxu0 0.0
    %6193 = vmatpush1.msra.mxu0 0.0
    %6194 = vmatprep.subr.mxu0 0.0
    %6195 = vmatpush1.msra.mxu0 0.0
    %6196 = vmatprep.subr.mxu0 0.0
    %6197 = vmatpush1.msra.mxu0 0.0
    %6198 = vmatprep.subr.mxu0 0.0
    %6199 = vmatpush1.msra.mxu0 0.0
    %6200 = vmatprep.subr.mxu0 0.0
    %6201 = vmatpush1.msra.mxu0 0.0
    %6202 = vmatprep.subr.mxu0 0.0
    %6203 = vmatpush1.msra.mxu0 0.0
    %6204 = vmatprep.subr.mxu0 0.0
    %6205 = vmatpush1.msra.mxu0 0.0
    %6206 = vmatprep.subr.mxu0 0.0
    %6207 = vmatpush1.msra.mxu0 0.0
    %6208 = vmatprep.subr.mxu0 0.0
    %6209 = vmatpush1.msra.mxu0 0.0
    %6210 = vmatprep.subr.mxu0 0.0
    %6211 = vmatpush1.msra.mxu0 0.0
    %6212 = vmatprep.subr.mxu0 0.0
    %6213 = vmatpush1.msra.mxu0 0.0
    %6214 = vmatprep.subr.mxu0 0.0
    %6215 = vmatpush1.msra.mxu0 0.0
    %6216 = vmatprep.subr.mxu0 0.0
    %6217 = vmatpush1.msra.mxu0 0.0
    %6218 = vmatprep.subr.mxu0 0.0
    %6219 = vmatpush1.msra.mxu0 0.0
    %6220 = vmatprep.subr.mxu0 0.0
    %6221 = vmatpush1.msra.mxu0 0.0
    %6222 = vmatprep.subr.mxu0 0.0
    %6223 = vmatpush1.msra.mxu0 0.0
    %6224 = vmatprep.subr.mxu0 0.0
    %6225 = vmatpush1.msra.mxu0 0.0
    %6226 = vmatprep.subr.mxu0 0.0
    %6227 = vmatpush1.msra.mxu0 0.0
    %6228 = vmatprep.subr.mxu0 0.0
    %6229 = vmatpush1.msra.mxu0 0.0
    %6230 = vmatprep.subr.mxu0 0.0
    %6231 = vmatpush1.msra.mxu0 0.0
    %6232 = vmatprep.subr.mxu0 0.0
    %6233 = vmatpush1.msra.mxu0 0.0
    %6234 = vmatprep.subr.mxu0 0.0
    %6235 = vmatpush1.msra.mxu0 0.0
    %6236 = vmatprep.subr.mxu0 0.0
    %6237 = vmatpush1.msra.mxu0 0.0
    %6238 = vmatprep.subr.mxu0 0.0
    %6239 = vmatpush1.msra.mxu0 0.0
    %6240 = vmatprep.mubr.f32.mxu0 0.0
    %v6241 = vand.u32 %v2547, 4294901760
    %v6242 = vsub.f32 %v2547, %v6241
    %v6243 = vand.u32 %v6242, 4294901760
    %v6244 = vsub.f32 %v6242, %v6243
    %v6245 = vand.u32 %v6244, 4294901760
    %6246 = vmatmul.mubr.f32.gmra.mrb[0].mxu0 %v6245
    %v6247 = vpop.f32.mrb[0].mxu0
    %v6248 = vadd.f32 0.0, %v6247
    %v6249 = vpop.f32.mrb[0].mxu0
    %6250 = vmatprep.mubr.f32.mxu0 0.0
    %v6251 = vand.u32 %v2550, 4294901760
    %v6252 = vsub.f32 %v2550, %v6251
    %v6253 = vand.u32 %v6252, 4294901760
    %v6254 = vsub.f32 %v6252, %v6253
    %v6255 = vand.u32 %v6254, 4294901760
    %6256 = vmatmul.mubr.f32.gmra.mrb[0].mxu0 %v6255
    %v6257 = vpop.f32.mrb[0].mxu0
    %v6258 = vadd.f32 0.0, %v6257
    %v6259 = vpop.f32.mrb[0].mxu0
    %6260 = vmatprep.mubr.f32.mxu0 0.0
    %v6261 = vand.u32 %v2553, 4294901760
    %v6262 = vsub.f32 %v2553, %v6261
    %v6263 = vand.u32 %v6262, 4294901760
    %v6264 = vsub.f32 %v6262, %v6263
    %v6265 = vand.u32 %v6264, 4294901760
    %6266 = vmatmul.mubr.f32.gmra.mrb[0].mxu0 %v6265
    %v6267 = vpop.f32.mrb[0].mxu0
    %v6268 = vadd.f32 0.0, %v6267
    %v6269 = vpop.f32.mrb[0].mxu0
    %6270 = vdwg.mxu0
    %6271 = vmatprep.subr.mxu0 0.0
    %v6272 = vand.u32 %v5419, 4294901760
    %v6273 = vsub.f32 %v5419, %v6272
    %v6274 = vand.u32 %v6273, 4294901760
    %v6275 = vsub.f32 %v6273, %v6274
    %v6276 = vand.u32 %v6275, 4294901760
    %6277 = vmatpush1.msra.mxu0 %v6276
    %6278 = vmatprep.subr.mxu0 0.0
    %v6279 = vand.u32 %v5426, 4294901760
    %v6280 = vsub.f32 %v5426, %v6279
    %v6281 = vand.u32 %v6280, 4294901760
    %v6282 = vsub.f32 %v6280, %v6281
    %v6283 = vand.u32 %v6282, 4294901760
    %6284 = vmatpush1.msra.mxu0 %v6283
    %6285 = vmatprep.subr.mxu0 0.0
    %v6286 = vand.u32 %v5433, 4294901760
    %v6287 = vsub.f32 %v5433, %v6286
    %v6288 = vand.u32 %v6287, 4294901760
    %v6289 = vsub.f32 %v6287, %v6288
    %v6290 = vand.u32 %v6289, 4294901760
    %6291 = vmatpush1.msra.mxu0 %v6290
    %6292 = vmatprep.subr.mxu0 0.0
    %6293 = vmatpush1.msra.mxu0 0.0
    %6294 = vmatprep.subr.mxu0 0.0
    %6295 = vmatpush1.msra.mxu0 0.0
    %6296 = vmatprep.subr.mxu0 0.0
    %6297 = vmatpush1.msra.mxu0 0.0
    %6298 = vmatprep.subr.mxu0 0.0
    %6299 = vmatpush1.msra.mxu0 0.0
    %6300 = vmatprep.subr.mxu0 0.0
    %6301 = vmatpush1.msra.mxu0 0.0
    %6302 = vmatprep.subr.mxu0 0.0
    %6303 = vmatpush1.msra.mxu0 0.0
    %6304 = vmatprep.subr.mxu0 0.0
    %6305 = vmatpush1.msra.mxu0 0.0
    %6306 = vmatprep.subr.mxu0 0.0
    %6307 = vmatpush1.msra.mxu0 0.0
    %6308 = vmatprep.subr.mxu0 0.0
    %6309 = vmatpush1.msra.mxu0 0.0
    %6310 = vmatprep.subr.mxu0 0.0
    %6311 = vmatpush1.msra.mxu0 0.0
    %6312 = vmatprep.subr.mxu0 0.0
    %6313 = vmatpush1.msra.mxu0 0.0
    %6314 = vmatprep.subr.mxu0 0.0
    %6315 = vmatpush1.msra.mxu0 0.0
    %6316 = vmatprep.subr.mxu0 0.0
    %6317 = vmatpush1.msra.mxu0 0.0
    %6318 = vmatprep.subr.mxu0 0.0
    %6319 = vmatpush1.msra.mxu0 0.0
    %6320 = vmatprep.subr.mxu0 0.0
    %6321 = vmatpush1.msra.mxu0 0.0
    %6322 = vmatprep.subr.mxu0 0.0
    %6323 = vmatpush1.msra.mxu0 0.0
    %6324 = vmatprep.subr.mxu0 0.0
    %6325 = vmatpush1.msra.mxu0 0.0
    %6326 = vmatprep.subr.mxu0 0.0
    %6327 = vmatpush1.msra.mxu0 0.0
    %6328 = vmatprep.subr.mxu0 0.0
    %6329 = vmatpush1.msra.mxu0 0.0
    %6330 = vmatprep.subr.mxu0 0.0
    %6331 = vmatpush1.msra.mxu0 0.0
    %6332 = vmatprep.subr.mxu0 0.0
    %6333 = vmatpush1.msra.mxu0 0.0
    %6334 = vmatprep.subr.mxu0 0.0
    %6335 = vmatpush1.msra.mxu0 0.0
    %6336 = vmatprep.subr.mxu0 0.0
    %6337 = vmatpush1.msra.mxu0 0.0
    %6338 = vmatprep.subr.mxu0 0.0
    %6339 = vmatpush1.msra.mxu0 0.0
    %6340 = vmatprep.subr.mxu0 0.0
    %6341 = vmatpush1.msra.mxu0 0.0
    %6342 = vmatprep.subr.mxu0 0.0
    %6343 = vmatpush1.msra.mxu0 0.0
    %6344 = vmatprep.subr.mxu0 0.0
    %6345 = vmatpush1.msra.mxu0 0.0
    %6346 = vmatprep.subr.mxu0 0.0
    %6347 = vmatpush1.msra.mxu0 0.0
    %6348 = vmatprep.subr.mxu0 0.0
    %6349 = vmatpush1.msra.mxu0 0.0
    %6350 = vmatprep.mubr.f32.mxu0 0.0
    %v6351 = vand.u32 %v2547, 4294901760
    %6352 = vmatmul.mubr.f32.gmra.mrb[0].mxu0 %v6351
    %v6353 = vpop.f32.mrb[0].mxu0
    %v6354 = vadd.f32 %v6248, %v6353
    %v6355 = vpop.f32.mrb[0].mxu0
    %6356 = vmatprep.mubr.f32.mxu0 0.0
    %v6357 = vand.u32 %v2550, 4294901760
    %6358 = vmatmul.mubr.f32.gmra.mrb[0].mxu0 %v6357
    %v6359 = vpop.f32.mrb[0].mxu0
    %v6360 = vadd.f32 %v6258, %v6359
    %v6361 = vpop.f32.mrb[0].mxu0
    %6362 = vmatprep.mubr.f32.mxu0 0.0
    %v6363 = vand.u32 %v2553, 4294901760
    %6364 = vmatmul.mubr.f32.gmra.mrb[0].mxu0 %v6363
    %v6365 = vpop.f32.mrb[0].mxu0
    %v6366 = vadd.f32 %v6268, %v6365
    %v6367 = vpop.f32.mrb[0].mxu0
    %6368 = vdwg.mxu0
    %6369 = vmatprep.subr.mxu0 0.0
    %v6370 = vand.u32 %v5419, 4294901760
    %v6371 = vsub.f32 %v5419, %v6370
    %6372 = vmatpush1.msra.mxu0 %v6371
    %6373 = vmatprep.subr.mxu0 0.0
    %v6374 = vand.u32 %v5426, 4294901760
    %v6375 = vsub.f32 %v5426, %v6374
    %6376 = vmatpush1.msra.mxu0 %v6375
    %6377 = vmatprep.subr.mxu0 0.0
    %v6378 = vand.u32 %v5433, 4294901760
    %v6379 = vsub.f32 %v5433, %v6378
    %6380 = vmatpush1.msra.mxu0 %v6379
    %6381 = vmatprep.subr.mxu0 0.0
    %6382 = vmatpush1.msra.mxu0 0.0
    %6383 = vmatprep.subr.mxu0 0.0
    %6384 = vmatpush1.msra.mxu0 0.0
    %6385 = vmatprep.subr.mxu0 0.0
    %6386 = vmatpush1.msra.mxu0 0.0
    %6387 = vmatprep.subr.mxu0 0.0
    %6388 = vmatpush1.msra.mxu0 0.0
    %6389 = vmatprep.subr.mxu0 0.0
    %6390 = vmatpush1.msra.mxu0 0.0
    %6391 = vmatprep.subr.mxu0 0.0
    %6392 = vmatpush1.msra.mxu0 0.0
    %6393 = vmatprep.subr.mxu0 0.0
    %6394 = vmatpush1.msra.mxu0 0.0
    %6395 = vmatprep.subr.mxu0 0.0
    %6396 = vmatpush1.msra.mxu0 0.0
    %6397 = vmatprep.subr.mxu0 0.0
    %6398 = vmatpush1.msra.mxu0 0.0
    %6399 = vmatprep.subr.mxu0 0.0
    %6400 = vmatpush1.msra.mxu0 0.0
    %6401 = vmatprep.subr.mxu0 0.0
    %6402 = vmatpush1.msra.mxu0 0.0
    %6403 = vmatprep.subr.mxu0 0.0
    %6404 = vmatpush1.msra.mxu0 0.0
    %6405 = vmatprep.subr.mxu0 0.0
    %6406 = vmatpush1.msra.mxu0 0.0
    %6407 = vmatprep.subr.mxu0 0.0
    %6408 = vmatpush1.msra.mxu0 0.0
    %6409 = vmatprep.subr.mxu0 0.0
    %6410 = vmatpush1.msra.mxu0 0.0
    %6411 = vmatprep.subr.mxu0 0.0
    %6412 = vmatpush1.msra.mxu0 0.0
    %6413 = vmatprep.subr.mxu0 0.0
    %6414 = vmatpush1.msra.mxu0 0.0
    %6415 = vmatprep.subr.mxu0 0.0
    %6416 = vmatpush1.msra.mxu0 0.0
    %6417 = vmatprep.subr.mxu0 0.0
    %6418 = vmatpush1.msra.mxu0 0.0
    %6419 = vmatprep.subr.mxu0 0.0
    %6420 = vmatpush1.msra.mxu0 0.0
    %6421 = vmatprep.subr.mxu0 0.0
    %6422 = vmatpush1.msra.mxu0 0.0
    %6423 = vmatprep.subr.mxu0 0.0
    %6424 = vmatpush1.msra.mxu0 0.0
    %6425 = vmatprep.subr.mxu0 0.0
    %6426 = vmatpush1.msra.mxu0 0.0
    %6427 = vmatprep.subr.mxu0 0.0
    %6428 = vmatpush1.msra.mxu0 0.0
    %6429 = vmatprep.subr.mxu0 0.0
    %6430 = vmatpush1.msra.mxu0 0.0
    %6431 = vmatprep.subr.mxu0 0.0
    %6432 = vmatpush1.msra.mxu0 0.0
    %6433 = vmatprep.subr.mxu0 0.0
    %6434 = vmatpush1.msra.mxu0 0.0
    %6435 = vmatprep.subr.mxu0 0.0
    %6436 = vmatpush1.msra.mxu0 0.0
    %6437 = vmatprep.subr.mxu0 0.0
    %6438 = vmatpush1.msra.mxu0 0.0
    %6439 = vmatprep.mubr.f32.mxu0 0.0
    %v6440 = vand.u32 %v2547, 4294901760
    %v6441 = vsub.f32 %v2547, %v6440
    %6442 = vmatmul.mubr.f32.gmra.mrb[0].mxu0 %v6441
    %v6443 = vpop.f32.mrb[0].mxu0
    %v6444 = vadd.f32 %v6354, %v6443
    %v6445 = vpop.f32.mrb[0].mxu0
    %6446 = vmatprep.mubr.f32.mxu0 0.0
    %v6447 = vand.u32 %v2550, 4294901760
    %v6448 = vsub.f32 %v2550, %v6447
    %6449 = vmatmul.mubr.f32.gmra.mrb[0].mxu0 %v6448
    %v6450 = vpop.f32.mrb[0].mxu0
    %v6451 = vadd.f32 %v6360, %v6450
    %v6452 = vpop.f32.mrb[0].mxu0
    %6453 = vmatprep.mubr.f32.mxu0 0.0
    %v6454 = vand.u32 %v2553, 4294901760
    %v6455 = vsub.f32 %v2553, %v6454
    %6456 = vmatmul.mubr.f32.gmra.mrb[0].mxu0 %v6455
    %v6457 = vpop.f32.mrb[0].mxu0
    %v6458 = vadd.f32 %v6366, %v6457
    %v6459 = vpop.f32.mrb[0].mxu0
    %6460 = vdwg.mxu0
    %6461 = vmatprep.subr.mxu0 0.0
    %v6462 = vand.u32 %v5419, 4294901760
    %6463 = vmatpush1.msra.mxu0 %v6462
    %6464 = vmatprep.subr.mxu0 0.0
    %v6465 = vand.u32 %v5426, 4294901760
    %6466 = vmatpush1.msra.mxu0 %v6465
    %6467 = vmatprep.subr.mxu0 0.0
    %v6468 = vand.u32 %v5433, 4294901760
    %6469 = vmatpush1.msra.mxu0 %v6468
    %6470 = vmatprep.subr.mxu0 0.0
    %6471 = vmatpush1.msra.mxu0 0.0
    %6472 = vmatprep.subr.mxu0 0.0
    %6473 = vmatpush1.msra.mxu0 0.0
    %6474 = vmatprep.subr.mxu0 0.0
    %6475 = vmatpush1.msra.mxu0 0.0
    %6476 = vmatprep.subr.mxu0 0.0
    %6477 = vmatpush1.msra.mxu0 0.0
    %6478 = vmatprep.subr.mxu0 0.0
    %6479 = vmatpush1.msra.mxu0 0.0
    %6480 = vmatprep.subr.mxu0 0.0
    %6481 = vmatpush1.msra.mxu0 0.0
    %6482 = vmatprep.subr.mxu0 0.0
    %6483 = vmatpush1.msra.mxu0 0.0
    %6484 = vmatprep.subr.mxu0 0.0
    %6485 = vmatpush1.msra.mxu0 0.0
    %6486 = vmatprep.subr.mxu0 0.0
    %6487 = vmatpush1.msra.mxu0 0.0
    %6488 = vmatprep.subr.mxu0 0.0
    %6489 = vmatpush1.msra.mxu0 0.0
    %6490 = vmatprep.subr.mxu0 0.0
    %6491 = vmatpush1.msra.mxu0 0.0
    %6492 = vmatprep.subr.mxu0 0.0
    %6493 = vmatpush1.msra.mxu0 0.0
    %6494 = vmatprep.subr.mxu0 0.0
    %6495 = vmatpush1.msra.mxu0 0.0
    %6496 = vmatprep.subr.mxu0 0.0
    %6497 = vmatpush1.msra.mxu0 0.0
    %6498 = vmatprep.subr.mxu0 0.0
    %6499 = vmatpush1.msra.mxu0 0.0
    %6500 = vmatprep.subr.mxu0 0.0
    %6501 = vmatpush1.msra.mxu0 0.0
    %6502 = vmatprep.subr.mxu0 0.0
    %6503 = vmatpush1.msra.mxu0 0.0
    %6504 = vmatprep.subr.mxu0 0.0
    %6505 = vmatpush1.msra.mxu0 0.0
    %6506 = vmatprep.subr.mxu0 0.0
    %6507 = vmatpush1.msra.mxu0 0.0
    %6508 = vmatprep.subr.mxu0 0.0
    %6509 = vmatpush1.msra.mxu0 0.0
    %6510 = vmatprep.subr.mxu0 0.0
    %6511 = vmatpush1.msra.mxu0 0.0
    %6512 = vmatprep.subr.mxu0 0.0
    %6513 = vmatpush1.msra.mxu0 0.0
    %6514 = vmatprep.subr.mxu0 0.0
    %6515 = vmatpush1.msra.mxu0 0.0
    %6516 = vmatprep.subr.mxu0 0.0
    %6517 = vmatpush1.msra.mxu0 0.0
    %6518 = vmatprep.subr.mxu0 0.0
    %6519 = vmatpush1.msra.mxu0 0.0
    %6520 = vmatprep.subr.mxu0 0.0
    %6521 = vmatpush1.msra.mxu0 0.0
    %6522 = vmatprep.subr.mxu0 0.0
    %6523 = vmatpush1.msra.mxu0 0.0
    %6524 = vmatprep.subr.mxu0 0.0
    %6525 = vmatpush1.msra.mxu0 0.0
    %6526 = vmatprep.subr.mxu0 0.0
    %6527 = vmatpush1.msra.mxu0 0.0
    %6528 = vmatprep.mubr.f32.mxu0 0.0
    %v6529 = vand.u32 %v2547, 4294901760
    %v6530 = vsub.f32 %v2547, %v6529
    %v6531 = vand.u32 %v6530, 4294901760
    %6532 = vmatmul.mubr.f32.gmra.mrb[0].mxu0 %v6531
    %v6533 = vpop.f32.mrb[0].mxu0
    %v6534 = vadd.f32 %v6444, %v6533
    %v6535 = vpop.f32.mrb[0].mxu0
    %6536 = vmatprep.mubr.f32.mxu0 0.0
    %v6537 = vand.u32 %v2550, 4294901760
    %v6538 = vsub.f32 %v2550, %v6537
    %v6539 = vand.u32 %v6538, 4294901760
    %6540 = vmatmul.mubr.f32.gmra.mrb[0].mxu0 %v6539
    %v6541 = vpop.f32.mrb[0].mxu0
    %v6542 = vadd.f32 %v6451, %v6541
    %v6543 = vpop.f32.mrb[0].mxu0
    %6544 = vmatprep.mubr.f32.mxu0 0.0
    %v6545 = vand.u32 %v2553, 4294901760
    %v6546 = vsub.f32 %v2553, %v6545
    %v6547 = vand.u32 %v6546, 4294901760
    %6548 = vmatmul.mubr.f32.gmra.mrb[0].mxu0 %v6547
    %v6549 = vpop.f32.mrb[0].mxu0
    %v6550 = vadd.f32 %v6458, %v6549
    %v6551 = vpop.f32.mrb[0].mxu0
    %6552 = vdwg.mxu0
    %6553 = vmatprep.subr.mxu0 0.0
    %v6554 = vand.u32 %v5419, 4294901760
    %v6555 = vsub.f32 %v5419, %v6554
    %v6556 = vand.u32 %v6555, 4294901760
    %6557 = vmatpush1.msra.mxu0 %v6556
    %6558 = vmatprep.subr.mxu0 0.0
    %v6559 = vand.u32 %v5426, 4294901760
    %v6560 = vsub.f32 %v5426, %v6559
    %v6561 = vand.u32 %v6560, 4294901760
    %6562 = vmatpush1.msra.mxu0 %v6561
    %6563 = vmatprep.subr.mxu0 0.0
    %v6564 = vand.u32 %v5433, 4294901760
    %v6565 = vsub.f32 %v5433, %v6564
    %v6566 = vand.u32 %v6565, 4294901760
    %6567 = vmatpush1.msra.mxu0 %v6566
    %6568 = vmatprep.subr.mxu0 0.0
    %6569 = vmatpush1.msra.mxu0 0.0
    %6570 = vmatprep.subr.mxu0 0.0
    %6571 = vmatpush1.msra.mxu0 0.0
    %6572 = vmatprep.subr.mxu0 0.0
    %6573 = vmatpush1.msra.mxu0 0.0
    %6574 = vmatprep.subr.mxu0 0.0
    %6575 = vmatpush1.msra.mxu0 0.0
    %6576 = vmatprep.subr.mxu0 0.0
    %6577 = vmatpush1.msra.mxu0 0.0
    %6578 = vmatprep.subr.mxu0 0.0
    %6579 = vmatpush1.msra.mxu0 0.0
    %6580 = vmatprep.subr.mxu0 0.0
    %6581 = vmatpush1.msra.mxu0 0.0
    %6582 = vmatprep.subr.mxu0 0.0
    %6583 = vmatpush1.msra.mxu0 0.0
    %6584 = vmatprep.subr.mxu0 0.0
    %6585 = vmatpush1.msra.mxu0 0.0
    %6586 = vmatprep.subr.mxu0 0.0
    %6587 = vmatpush1.msra.mxu0 0.0
    %6588 = vmatprep.subr.mxu0 0.0
    %6589 = vmatpush1.msra.mxu0 0.0
    %6590 = vmatprep.subr.mxu0 0.0
    %6591 = vmatpush1.msra.mxu0 0.0
    %6592 = vmatprep.subr.mxu0 0.0
    %6593 = vmatpush1.msra.mxu0 0.0
    %6594 = vmatprep.subr.mxu0 0.0
    %6595 = vmatpush1.msra.mxu0 0.0
    %6596 = vmatprep.subr.mxu0 0.0
    %6597 = vmatpush1.msra.mxu0 0.0
    %6598 = vmatprep.subr.mxu0 0.0
    %6599 = vmatpush1.msra.mxu0 0.0
    %6600 = vmatprep.subr.mxu0 0.0
    %6601 = vmatpush1.msra.mxu0 0.0
    %6602 = vmatprep.subr.mxu0 0.0
    %6603 = vmatpush1.msra.mxu0 0.0
    %6604 = vmatprep.subr.mxu0 0.0
    %6605 = vmatpush1.msra.mxu0 0.0
    %6606 = vmatprep.subr.mxu0 0.0
    %6607 = vmatpush1.msra.mxu0 0.0
    %6608 = vmatprep.subr.mxu0 0.0
    %6609 = vmatpush1.msra.mxu0 0.0
    %6610 = vmatprep.subr.mxu0 0.0
    %6611 = vmatpush1.msra.mxu0 0.0
    %6612 = vmatprep.subr.mxu0 0.0
    %6613 = vmatpush1.msra.mxu0 0.0
    %6614 = vmatprep.subr.mxu0 0.0
    %6615 = vmatpush1.msra.mxu0 0.0
    %6616 = vmatprep.subr.mxu0 0.0
    %6617 = vmatpush1.msra.mxu0 0.0
    %6618 = vmatprep.subr.mxu0 0.0
    %6619 = vmatpush1.msra.mxu0 0.0
    %6620 = vmatprep.subr.mxu0 0.0
    %6621 = vmatpush1.msra.mxu0 0.0
    %6622 = vmatprep.subr.mxu0 0.0
    %6623 = vmatpush1.msra.mxu0 0.0
    %6624 = vmatprep.subr.mxu0 0.0
    %6625 = vmatpush1.msra.mxu0 0.0
    %6626 = vmatprep.mubr.f32.mxu0 0.0
    %v6627 = vand.u32 %v2547, 4294901760
    %6628 = vmatmul.mubr.f32.gmra.mrb[0].mxu0 %v6627
    %v6629 = vpop.f32.mrb[0].mxu0
    %v6630 = vadd.f32 %v6534, %v6629
    %v6631 = vpop.f32.mrb[0].mxu0
    %6632 = vmatprep.mubr.f32.mxu0 0.0
    %v6633 = vand.u32 %v2550, 4294901760
    %6634 = vmatmul.mubr.f32.gmra.mrb[0].mxu0 %v6633
    %v6635 = vpop.f32.mrb[0].mxu0
    %v6636 = vadd.f32 %v6542, %v6635
    %v6637 = vpop.f32.mrb[0].mxu0
    %6638 = vmatprep.mubr.f32.mxu0 0.0
    %v6639 = vand.u32 %v2553, 4294901760
    %6640 = vmatmul.mubr.f32.gmra.mrb[0].mxu0 %v6639
    %v6641 = vpop.f32.mrb[0].mxu0
    %v6642 = vadd.f32 %v6550, %v6641
    %v6643 = vpop.f32.mrb[0].mxu0
    %6644 = vdwg.mxu0
    %6645 = vmatprep.subr.mxu0 0.0
    %v6646 = vand.u32 %v5419, 4294901760
    %6647 = vmatpush1.msra.mxu0 %v6646
    %6648 = vmatprep.subr.mxu0 0.0
    %v6649 = vand.u32 %v5426, 4294901760
    %6650 = vmatpush1.msra.mxu0 %v6649
    %6651 = vmatprep.subr.mxu0 0.0
    %v6652 = vand.u32 %v5433, 4294901760
    %6653 = vmatpush1.msra.mxu0 %v6652
    %6654 = vmatprep.subr.mxu0 0.0
    %6655 = vmatpush1.msra.mxu0 0.0
    %6656 = vmatprep.subr.mxu0 0.0
    %6657 = vmatpush1.msra.mxu0 0.0
    %6658 = vmatprep.subr.mxu0 0.0
    %6659 = vmatpush1.msra.mxu0 0.0
    %6660 = vmatprep.subr.mxu0 0.0
    %6661 = vmatpush1.msra.mxu0 0.0
    %6662 = vmatprep.subr.mxu0 0.0
    %6663 = vmatpush1.msra.mxu0 0.0
    %6664 = vmatprep.subr.mxu0 0.0
    %6665 = vmatpush1.msra.mxu0 0.0
    %6666 = vmatprep.subr.mxu0 0.0
    %6667 = vmatpush1.msra.mxu0 0.0
    %6668 = vmatprep.subr.mxu0 0.0
    %6669 = vmatpush1.msra.mxu0 0.0
    %6670 = vmatprep.subr.mxu0 0.0
    %6671 = vmatpush1.msra.mxu0 0.0
    %6672 = vmatprep.subr.mxu0 0.0
    %6673 = vmatpush1.msra.mxu0 0.0
    %6674 = vmatprep.subr.mxu0 0.0
    %6675 = vmatpush1.msra.mxu0 0.0
    %6676 = vmatprep.subr.mxu0 0.0
    %6677 = vmatpush1.msra.mxu0 0.0
    %6678 = vmatprep.subr.mxu0 0.0
    %6679 = vmatpush1.msra.mxu0 0.0
    %6680 = vmatprep.subr.mxu0 0.0
    %6681 = vmatpush1.msra.mxu0 0.0
    %6682 = vmatprep.subr.mxu0 0.0
    %6683 = vmatpush1.msra.mxu0 0.0
    %6684 = vmatprep.subr.mxu0 0.0
    %6685 = vmatpush1.msra.mxu0 0.0
    %6686 = vmatprep.subr.mxu0 0.0
    %6687 = vmatpush1.msra.mxu0 0.0
    %6688 = vmatprep.subr.mxu0 0.0
    %6689 = vmatpush1.msra.mxu0 0.0
    %6690 = vmatprep.subr.mxu0 0.0
    %6691 = vmatpush1.msra.mxu0 0.0
    %6692 = vmatprep.subr.mxu0 0.0
    %6693 = vmatpush1.msra.mxu0 0.0
    %6694 = vmatprep.subr.mxu0 0.0
    %6695 = vmatpush1.msra.mxu0 0.0
    %6696 = vmatprep.subr.mxu0 0.0
    %6697 = vmatpush1.msra.mxu0 0.0
    %6698 = vmatprep.subr.mxu0 0.0
    %6699 = vmatpush1.msra.mxu0 0.0
    %6700 = vmatprep.subr.mxu0 0.0
    %6701 = vmatpush1.msra.mxu0 0.0
    %6702 = vmatprep.subr.mxu0 0.0
    %6703 = vmatpush1.msra.mxu0 0.0
    %6704 = vmatprep.subr.mxu0 0.0
    %6705 = vmatpush1.msra.mxu0 0.0
    %6706 = vmatprep.subr.mxu0 0.0
    %6707 = vmatpush1.msra.mxu0 0.0
    %6708 = vmatprep.subr.mxu0 0.0
    %6709 = vmatpush1.msra.mxu0 0.0
    %6710 = vmatprep.subr.mxu0 0.0
    %6711 = vmatpush1.msra.mxu0 0.0
    %6712 = vmatprep.mubr.f32.mxu0 0.0
    %v6713 = vand.u32 %v2547, 4294901760
    %6714 = vmatmul.mubr.f32.gmra.mrb[0].mxu0 %v6713
    %v6715 = vpop.f32.mrb[0].mxu0
    %v6716 = vadd.f32 %v6630, %v6715
    %v6717 = vpop.f32.mrb[0].mxu0
    %6718 = vmatprep.mubr.f32.mxu0 0.0
    %v6719 = vand.u32 %v2550, 4294901760
    %6720 = vmatmul.mubr.f32.gmra.mrb[0].mxu0 %v6719
    %v6721 = vpop.f32.mrb[0].mxu0
    %v6722 = vadd.f32 %v6636, %v6721
    %v6723 = vpop.f32.mrb[0].mxu0
    %6724 = vmatprep.mubr.f32.mxu0 0.0
    %v6725 = vand.u32 %v2553, 4294901760
    %6726 = vmatmul.mubr.f32.gmra.mrb[0].mxu0 %v6725
    %v6727 = vpop.f32.mrb[0].mxu0
    %v6728 = vadd.f32 %v6642, %v6727
    %v6729 = vpop.f32.mrb[0].mxu0
    %6730 = vdwg.mxu0
    %v6731 = vadd.f32 %v6170, %v6716
    %v6732 = vadd.f32 %v6171, %v6722
    %v6733 = vadd.f32 %v6172, %v6728
    %6734 = vmatprep.subr.mxu0 0.0
    %v6735 = vand.u32 %v5421, 4294901760
    %6736 = vmatpush1.msra.mxu0 %v6735
    %6737 = vmatprep.subr.mxu0 0.0
    %v6738 = vand.u32 %v5428, 4294901760
    %6739 = vmatpush1.msra.mxu0 %v6738
    %6740 = vmatprep.subr.mxu0 0.0
    %v6741 = vand.u32 %v5435, 4294901760
    %6742 = vmatpush1.msra.mxu0 %v6741
    %6743 = vmatprep.subr.mxu0 0.0
    %6744 = vmatpush1.msra.mxu0 0.0
    %6745 = vmatprep.subr.mxu0 0.0
    %6746 = vmatpush1.msra.mxu0 0.0
    %6747 = vmatprep.subr.mxu0 0.0
    %6748 = vmatpush1.msra.mxu0 0.0
    %6749 = vmatprep.subr.mxu0 0.0
    %6750 = vmatpush1.msra.mxu0 0.0
    %6751 = vmatprep.subr.mxu0 0.0
    %6752 = vmatpush1.msra.mxu0 0.0
    %6753 = vmatprep.subr.mxu0 0.0
    %6754 = vmatpush1.msra.mxu0 0.0
    %6755 = vmatprep.subr.mxu0 0.0
    %6756 = vmatpush1.msra.mxu0 0.0
    %6757 = vmatprep.subr.mxu0 0.0
    %6758 = vmatpush1.msra.mxu0 0.0
    %6759 = vmatprep.subr.mxu0 0.0
    %6760 = vmatpush1.msra.mxu0 0.0
    %6761 = vmatprep.subr.mxu0 0.0
    %6762 = vmatpush1.msra.mxu0 0.0
    %6763 = vmatprep.subr.mxu0 0.0
    %6764 = vmatpush1.msra.mxu0 0.0
    %6765 = vmatprep.subr.mxu0 0.0
    %6766 = vmatpush1.msra.mxu0 0.0
    %6767 = vmatprep.subr.mxu0 0.0
    %6768 = vmatpush1.msra.mxu0 0.0
    %6769 = vmatprep.subr.mxu0 0.0
    %6770 = vmatpush1.msra.mxu0 0.0
    %6771 = vmatprep.subr.mxu0 0.0
    %6772 = vmatpush1.msra.mxu0 0.0
    %6773 = vmatprep.subr.mxu0 0.0
    %6774 = vmatpush1.msra.mxu0 0.0
    %6775 = vmatprep.subr.mxu0 0.0
    %6776 = vmatpush1.msra.mxu0 0.0
    %6777 = vmatprep.subr.mxu0 0.0
    %6778 = vmatpush1.msra.mxu0 0.0
    %6779 = vmatprep.subr.mxu0 0.0
    %6780 = vmatpush1.msra.mxu0 0.0
    %6781 = vmatprep.subr.mxu0 0.0
    %6782 = vmatpush1.msra.mxu0 0.0
    %6783 = vmatprep.subr.mxu0 0.0
    %6784 = vmatpush1.msra.mxu0 0.0
    %6785 = vmatprep.subr.mxu0 0.0
    %6786 = vmatpush1.msra.mxu0 0.0
    %6787 = vmatprep.subr.mxu0 0.0
    %6788 = vmatpush1.msra.mxu0 0.0
    %6789 = vmatprep.subr.mxu0 0.0
    %6790 = vmatpush1.msra.mxu0 0.0
    %6791 = vmatprep.subr.mxu0 0.0
    %6792 = vmatpush1.msra.mxu0 0.0
    %6793 = vmatprep.subr.mxu0 0.0
    %6794 = vmatpush1.msra.mxu0 0.0
    %6795 = vmatprep.subr.mxu0 0.0
    %6796 = vmatpush1.msra.mxu0 0.0
    %6797 = vmatprep.subr.mxu0 0.0
    %6798 = vmatpush1.msra.mxu0 0.0
    %6799 = vmatprep.subr.mxu0 0.0
    %6800 = vmatpush1.msra.mxu0 0.0
    %6801 = vmatprep.mubr.f32.mxu0 0.0
    %v6802 = vand.u32 %v3117, 4294901760
    %v6803 = vsub.f32 %v3117, %v6802
    %v6804 = vand.u32 %v6803, 4294901760
    %v6805 = vsub.f32 %v6803, %v6804
    %v6806 = vand.u32 %v6805, 4294901760
    %6807 = vmatmul.mubr.f32.gmra.mrb[0].mxu0 %v6806
    %v6808 = vpop.f32.mrb[0].mxu0
    %v6809 = vadd.f32 0.0, %v6808
    %v6810 = vpop.f32.mrb[0].mxu0
    %6811 = vmatprep.mubr.f32.mxu0 0.0
    %v6812 = vand.u32 %v3120, 4294901760
    %v6813 = vsub.f32 %v3120, %v6812
    %v6814 = vand.u32 %v6813, 4294901760
    %v6815 = vsub.f32 %v6813, %v6814
    %v6816 = vand.u32 %v6815, 4294901760
    %6817 = vmatmul.mubr.f32.gmra.mrb[0].mxu0 %v6816
    %v6818 = vpop.f32.mrb[0].mxu0
    %v6819 = vadd.f32 0.0, %v6818
    %v6820 = vpop.f32.mrb[0].mxu0
    %6821 = vmatprep.mubr.f32.mxu0 0.0
    %v6822 = vand.u32 %v3123, 4294901760
    %v6823 = vsub.f32 %v3123, %v6822
    %v6824 = vand.u32 %v6823, 4294901760
    %v6825 = vsub.f32 %v6823, %v6824
    %v6826 = vand.u32 %v6825, 4294901760
    %6827 = vmatmul.mubr.f32.gmra.mrb[0].mxu0 %v6826
    %v6828 = vpop.f32.mrb[0].mxu0
    %v6829 = vadd.f32 0.0, %v6828
    %v6830 = vpop.f32.mrb[0].mxu0
    %6831 = vdwg.mxu0
    %6832 = vmatprep.subr.mxu0 0.0
    %v6833 = vand.u32 %v5421, 4294901760
    %v6834 = vsub.f32 %v5421, %v6833
    %v6835 = vand.u32 %v6834, 4294901760
    %v6836 = vsub.f32 %v6834, %v6835
    %v6837 = vand.u32 %v6836, 4294901760
    %6838 = vmatpush1.msra.mxu0 %v6837
    %6839 = vmatprep.subr.mxu0 0.0
    %v6840 = vand.u32 %v5428, 4294901760
    %v6841 = vsub.f32 %v5428, %v6840
    %v6842 = vand.u32 %v6841, 4294901760
    %v6843 = vsub.f32 %v6841, %v6842
    %v6844 = vand.u32 %v6843, 4294901760
    %6845 = vmatpush1.msra.mxu0 %v6844
    %6846 = vmatprep.subr.mxu0 0.0
    %v6847 = vand.u32 %v5435, 4294901760
    %v6848 = vsub.f32 %v5435, %v6847
    %v6849 = vand.u32 %v6848, 4294901760
    %v6850 = vsub.f32 %v6848, %v6849
    %v6851 = vand.u32 %v6850, 4294901760
    %6852 = vmatpush1.msra.mxu0 %v6851
    %6853 = vmatprep.subr.mxu0 0.0
    %6854 = vmatpush1.msra.mxu0 0.0
    %6855 = vmatprep.subr.mxu0 0.0
    %6856 = vmatpush1.msra.mxu0 0.0
    %6857 = vmatprep.subr.mxu0 0.0
    %6858 = vmatpush1.msra.mxu0 0.0
    %6859 = vmatprep.subr.mxu0 0.0
    %6860 = vmatpush1.msra.mxu0 0.0
    %6861 = vmatprep.subr.mxu0 0.0
    %6862 = vmatpush1.msra.mxu0 0.0
    %6863 = vmatprep.subr.mxu0 0.0
    %6864 = vmatpush1.msra.mxu0 0.0
    %6865 = vmatprep.subr.mxu0 0.0
    %6866 = vmatpush1.msra.mxu0 0.0
    %6867 = vmatprep.subr.mxu0 0.0
    %6868 = vmatpush1.msra.mxu0 0.0
    %6869 = vmatprep.subr.mxu0 0.0
    %6870 = vmatpush1.msra.mxu0 0.0
    %6871 = vmatprep.subr.mxu0 0.0
    %6872 = vmatpush1.msra.mxu0 0.0
    %6873 = vmatprep.subr.mxu0 0.0
    %6874 = vmatpush1.msra.mxu0 0.0
    %6875 = vmatprep.subr.mxu0 0.0
    %6876 = vmatpush1.msra.mxu0 0.0
    %6877 = vmatprep.subr.mxu0 0.0
    %6878 = vmatpush1.msra.mxu0 0.0
    %6879 = vmatprep.subr.mxu0 0.0
    %6880 = vmatpush1.msra.mxu0 0.0
    %6881 = vmatprep.subr.mxu0 0.0
    %6882 = vmatpush1.msra.mxu0 0.0
    %6883 = vmatprep.subr.mxu0 0.0
    %6884 = vmatpush1.msra.mxu0 0.0
    %6885 = vmatprep.subr.mxu0 0.0
    %6886 = vmatpush1.msra.mxu0 0.0
    %6887 = vmatprep.subr.mxu0 0.0
    %6888 = vmatpush1.msra.mxu0 0.0
    %6889 = vmatprep.subr.mxu0 0.0
    %6890 = vmatpush1.msra.mxu0 0.0
    %6891 = vmatprep.subr.mxu0 0.0
    %6892 = vmatpush1.msra.mxu0 0.0
    %6893 = vmatprep.subr.mxu0 0.0
    %6894 = vmatpush1.msra.mxu0 0.0
    %6895 = vmatprep.subr.mxu0 0.0
    %6896 = vmatpush1.msra.mxu0 0.0
    %6897 = vmatprep.subr.mxu0 0.0
    %6898 = vmatpush1.msra.mxu0 0.0
    %6899 = vmatprep.subr.mxu0 0.0
    %6900 = vmatpush1.msra.mxu0 0.0
    %6901 = vmatprep.subr.mxu0 0.0
    %6902 = vmatpush1.msra.mxu0 0.0
    %6903 = vmatprep.subr.mxu0 0.0
    %6904 = vmatpush1.msra.mxu0 0.0
    %6905 = vmatprep.subr.mxu0 0.0
    %6906 = vmatpush1.msra.mxu0 0.0
    %6907 = vmatprep.subr.mxu0 0.0
    %6908 = vmatpush1.msra.mxu0 0.0
    %6909 = vmatprep.subr.mxu0 0.0
    %6910 = vmatpush1.msra.mxu0 0.0
    %6911 = vmatprep.mubr.f32.mxu0 0.0
    %v6912 = vand.u32 %v3117, 4294901760
    %6913 = vmatmul.mubr.f32.gmra.mrb[0].mxu0 %v6912
    %v6914 = vpop.f32.mrb[0].mxu0
    %v6915 = vadd.f32 %v6809, %v6914
    %v6916 = vpop.f32.mrb[0].mxu0
    %6917 = vmatprep.mubr.f32.mxu0 0.0
    %v6918 = vand.u32 %v3120, 4294901760
    %6919 = vmatmul.mubr.f32.gmra.mrb[0].mxu0 %v6918
    %v6920 = vpop.f32.mrb[0].mxu0
    %v6921 = vadd.f32 %v6819, %v6920
    %v6922 = vpop.f32.mrb[0].mxu0
    %6923 = vmatprep.mubr.f32.mxu0 0.0
    %v6924 = vand.u32 %v3123, 4294901760
    %6925 = vmatmul.mubr.f32.gmra.mrb[0].mxu0 %v6924
    %v6926 = vpop.f32.mrb[0].mxu0
    %v6927 = vadd.f32 %v6829, %v6926
    %v6928 = vpop.f32.mrb[0].mxu0
    %6929 = vdwg.mxu0
    %6930 = vmatprep.subr.mxu0 0.0
    %v6931 = vand.u32 %v5421, 4294901760
    %v6932 = vsub.f32 %v5421, %v6931
    %6933 = vmatpush1.msra.mxu0 %v6932
    %6934 = vmatprep.subr.mxu0 0.0
    %v6935 = vand.u32 %v5428, 4294901760
    %v6936 = vsub.f32 %v5428, %v6935
    %6937 = vmatpush1.msra.mxu0 %v6936
    %6938 = vmatprep.subr.mxu0 0.0
    %v6939 = vand.u32 %v5435, 4294901760
    %v6940 = vsub.f32 %v5435, %v6939
    %6941 = vmatpush1.msra.mxu0 %v6940
    %6942 = vmatprep.subr.mxu0 0.0
    %6943 = vmatpush1.msra.mxu0 0.0
    %6944 = vmatprep.subr.mxu0 0.0
    %6945 = vmatpush1.msra.mxu0 0.0
    %6946 = vmatprep.subr.mxu0 0.0
    %6947 = vmatpush1.msra.mxu0 0.0
    %6948 = vmatprep.subr.mxu0 0.0
    %6949 = vmatpush1.msra.mxu0 0.0
    %6950 = vmatprep.subr.mxu0 0.0
    %6951 = vmatpush1.msra.mxu0 0.0
    %6952 = vmatprep.subr.mxu0 0.0
    %6953 = vmatpush1.msra.mxu0 0.0
    %6954 = vmatprep.subr.mxu0 0.0
    %6955 = vmatpush1.msra.mxu0 0.0
    %6956 = vmatprep.subr.mxu0 0.0
    %6957 = vmatpush1.msra.mxu0 0.0
    %6958 = vmatprep.subr.mxu0 0.0
    %6959 = vmatpush1.msra.mxu0 0.0
    %6960 = vmatprep.subr.mxu0 0.0
    %6961 = vmatpush1.msra.mxu0 0.0
    %6962 = vmatprep.subr.mxu0 0.0
    %6963 = vmatpush1.msra.mxu0 0.0
    %6964 = vmatprep.subr.mxu0 0.0
    %6965 = vmatpush1.msra.mxu0 0.0
    %6966 = vmatprep.subr.mxu0 0.0
    %6967 = vmatpush1.msra.mxu0 0.0
    %6968 = vmatprep.subr.mxu0 0.0
    %6969 = vmatpush1.msra.mxu0 0.0
    %6970 = vmatprep.subr.mxu0 0.0
    %6971 = vmatpush1.msra.mxu0 0.0
    %6972 = vmatprep.subr.mxu0 0.0
    %6973 = vmatpush1.msra.mxu0 0.0
    %6974 = vmatprep.subr.mxu0 0.0
    %6975 = vmatpush1.msra.mxu0 0.0
    %6976 = vmatprep.subr.mxu0 0.0
    %6977 = vmatpush1.msra.mxu0 0.0
    %6978 = vmatprep.subr.mxu0 0.0
    %6979 = vmatpush1.msra.mxu0 0.0
    %6980 = vmatprep.subr.mxu0 0.0
    %6981 = vmatpush1.msra.mxu0 0.0
    %6982 = vmatprep.subr.mxu0 0.0
    %6983 = vmatpush1.msra.mxu0 0.0
    %6984 = vmatprep.subr.mxu0 0.0
    %6985 = vmatpush1.msra.mxu0 0.0
    %6986 = vmatprep.subr.mxu0 0.0
    %6987 = vmatpush1.msra.mxu0 0.0
    %6988 = vmatprep.subr.mxu0 0.0
    %6989 = vmatpush1.msra.mxu0 0.0
    %6990 = vmatprep.subr.mxu0 0.0
    %6991 = vmatpush1.msra.mxu0 0.0
    %6992 = vmatprep.subr.mxu0 0.0
    %6993 = vmatpush1.msra.mxu0 0.0
    %6994 = vmatprep.subr.mxu0 0.0
    %6995 = vmatpush1.msra.mxu0 0.0
    %6996 = vmatprep.subr.mxu0 0.0
    %6997 = vmatpush1.msra.mxu0 0.0
    %6998 = vmatprep.subr.mxu0 0.0
    %6999 = vmatpush1.msra.mxu0 0.0
    %7000 = vmatprep.mubr.f32.mxu0 0.0
    %v7001 = vand.u32 %v3117, 4294901760
    %v7002 = vsub.f32 %v3117, %v7001
    %7003 = vmatmul.mubr.f32.gmra.mrb[0].mxu0 %v7002
    %v7004 = vpop.f32.mrb[0].mxu0
    %v7005 = vadd.f32 %v6915, %v7004
    %v7006 = vpop.f32.mrb[0].mxu0
    %7007 = vmatprep.mubr.f32.mxu0 0.0
    %v7008 = vand.u32 %v3120, 4294901760
    %v7009 = vsub.f32 %v3120, %v7008
    %7010 = vmatmul.mubr.f32.gmra.mrb[0].mxu0 %v7009
    %v7011 = vpop.f32.mrb[0].mxu0
    %v7012 = vadd.f32 %v6921, %v7011
    %v7013 = vpop.f32.mrb[0].mxu0
    %7014 = vmatprep.mubr.f32.mxu0 0.0
    %v7015 = vand.u32 %v3123, 4294901760
    %v7016 = vsub.f32 %v3123, %v7015
    %7017 = vmatmul.mubr.f32.gmra.mrb[0].mxu0 %v7016
    %v7018 = vpop.f32.mrb[0].mxu0
    %v7019 = vadd.f32 %v6927, %v7018
    %v7020 = vpop.f32.mrb[0].mxu0
    %7021 = vdwg.mxu0
    %7022 = vmatprep.subr.mxu0 0.0
    %v7023 = vand.u32 %v5421, 4294901760
    %7024 = vmatpush1.msra.mxu0 %v7023
    %7025 = vmatprep.subr.mxu0 0.0
    %v7026 = vand.u32 %v5428, 4294901760
    %7027 = vmatpush1.msra.mxu0 %v7026
    %7028 = vmatprep.subr.mxu0 0.0
    %v7029 = vand.u32 %v5435, 4294901760
    %7030 = vmatpush1.msra.mxu0 %v7029
    %7031 = vmatprep.subr.mxu0 0.0
    %7032 = vmatpush1.msra.mxu0 0.0
    %7033 = vmatprep.subr.mxu0 0.0
    %7034 = vmatpush1.msra.mxu0 0.0
    %7035 = vmatprep.subr.mxu0 0.0
    %7036 = vmatpush1.msra.mxu0 0.0
    %7037 = vmatprep.subr.mxu0 0.0
    %7038 = vmatpush1.msra.mxu0 0.0
    %7039 = vmatprep.subr.mxu0 0.0
    %7040 = vmatpush1.msra.mxu0 0.0
    %7041 = vmatprep.subr.mxu0 0.0
    %7042 = vmatpush1.msra.mxu0 0.0
    %7043 = vmatprep.subr.mxu0 0.0
    %7044 = vmatpush1.msra.mxu0 0.0
    %7045 = vmatprep.subr.mxu0 0.0
    %7046 = vmatpush1.msra.mxu0 0.0
    %7047 = vmatprep.subr.mxu0 0.0
    %7048 = vmatpush1.msra.mxu0 0.0
    %7049 = vmatprep.subr.mxu0 0.0
    %7050 = vmatpush1.msra.mxu0 0.0
    %7051 = vmatprep.subr.mxu0 0.0
    %7052 = vmatpush1.msra.mxu0 0.0
    %7053 = vmatprep.subr.mxu0 0.0
    %7054 = vmatpush1.msra.mxu0 0.0
    %7055 = vmatprep.subr.mxu0 0.0
    %7056 = vmatpush1.msra.mxu0 0.0
    %7057 = vmatprep.subr.mxu0 0.0
    %7058 = vmatpush1.msra.mxu0 0.0
    %7059 = vmatprep.subr.mxu0 0.0
    %7060 = vmatpush1.msra.mxu0 0.0
    %7061 = vmatprep.subr.mxu0 0.0
    %7062 = vmatpush1.msra.mxu0 0.0
    %7063 = vmatprep.subr.mxu0 0.0
    %7064 = vmatpush1.msra.mxu0 0.0
    %7065 = vmatprep.subr.mxu0 0.0
    %7066 = vmatpush1.msra.mxu0 0.0
    %7067 = vmatprep.subr.mxu0 0.0
    %7068 = vmatpush1.msra.mxu0 0.0
    %7069 = vmatprep.subr.mxu0 0.0
    %7070 = vmatpush1.msra.mxu0 0.0
    %7071 = vmatprep.subr.mxu0 0.0
    %7072 = vmatpush1.msra.mxu0 0.0
    %7073 = vmatprep.subr.mxu0 0.0
    %7074 = vmatpush1.msra.mxu0 0.0
    %7075 = vmatprep.subr.mxu0 0.0
    %7076 = vmatpush1.msra.mxu0 0.0
    %7077 = vmatprep.subr.mxu0 0.0
    %7078 = vmatpush1.msra.mxu0 0.0
    %7079 = vmatprep.subr.mxu0 0.0
    %7080 = vmatpush1.msra.mxu0 0.0
    %7081 = vmatprep.subr.mxu0 0.0
    %7082 = vmatpush1.msra.mxu0 0.0
    %7083 = vmatprep.subr.mxu0 0.0
    %7084 = vmatpush1.msra.mxu0 0.0
    %7085 = vmatprep.subr.mxu0 0.0
    %7086 = vmatpush1.msra.mxu0 0.0
    %7087 = vmatprep.subr.mxu0 0.0
    %7088 = vmatpush1.msra.mxu0 0.0
    %7089 = vmatprep.mubr.f32.mxu0 0.0
    %v7090 = vand.u32 %v3117, 4294901760
    %v7091 = vsub.f32 %v3117, %v7090
    %v7092 = vand.u32 %v7091, 4294901760
    %7093 = vmatmul.mubr.f32.gmra.mrb[0].mxu0 %v7092
    %v7094 = vpop.f32.mrb[0].mxu0
    %v7095 = vadd.f32 %v7005, %v7094
    %v7096 = vpop.f32.mrb[0].mxu0
    %7097 = vmatprep.mubr.f32.mxu0 0.0
    %v7098 = vand.u32 %v3120, 4294901760
    %v7099 = vsub.f32 %v3120, %v7098
    %v7100 = vand.u32 %v7099, 4294901760
    %7101 = vmatmul.mubr.f32.gmra.mrb[0].mxu0 %v7100
    %v7102 = vpop.f32.mrb[0].mxu0
    %v7103 = vadd.f32 %v7012, %v7102
    %v7104 = vpop.f32.mrb[0].mxu0
    %7105 = vmatprep.mubr.f32.mxu0 0.0
    %v7106 = vand.u32 %v3123, 4294901760
    %v7107 = vsub.f32 %v3123, %v7106
    %v7108 = vand.u32 %v7107, 4294901760
    %7109 = vmatmul.mubr.f32.gmra.mrb[0].mxu0 %v7108
    %v7110 = vpop.f32.mrb[0].mxu0
    %v7111 = vadd.f32 %v7019, %v7110
    %v7112 = vpop.f32.mrb[0].mxu0
    %7113 = vdwg.mxu0
    %7114 = vmatprep.subr.mxu0 0.0
    %v7115 = vand.u32 %v5421, 4294901760
    %v7116 = vsub.f32 %v5421, %v7115
    %v7117 = vand.u32 %v7116, 4294901760
    %7118 = vmatpush1.msra.mxu0 %v7117
    %7119 = vmatprep.subr.mxu0 0.0
    %v7120 = vand.u32 %v5428, 4294901760
    %v7121 = vsub.f32 %v5428, %v7120
    %v7122 = vand.u32 %v7121, 4294901760
    %7123 = vmatpush1.msra.mxu0 %v7122
    %7124 = vmatprep.subr.mxu0 0.0
    %v7125 = vand.u32 %v5435, 4294901760
    %v7126 = vsub.f32 %v5435, %v7125
    %v7127 = vand.u32 %v7126, 4294901760
    %7128 = vmatpush1.msra.mxu0 %v7127
    %7129 = vmatprep.subr.mxu0 0.0
    %7130 = vmatpush1.msra.mxu0 0.0
    %7131 = vmatprep.subr.mxu0 0.0
    %7132 = vmatpush1.msra.mxu0 0.0
    %7133 = vmatprep.subr.mxu0 0.0
    %7134 = vmatpush1.msra.mxu0 0.0
    %7135 = vmatprep.subr.mxu0 0.0
    %7136 = vmatpush1.msra.mxu0 0.0
    %7137 = vmatprep.subr.mxu0 0.0
    %7138 = vmatpush1.msra.mxu0 0.0
    %7139 = vmatprep.subr.mxu0 0.0
    %7140 = vmatpush1.msra.mxu0 0.0
    %7141 = vmatprep.subr.mxu0 0.0
    %7142 = vmatpush1.msra.mxu0 0.0
    %7143 = vmatprep.subr.mxu0 0.0
    %7144 = vmatpush1.msra.mxu0 0.0
    %7145 = vmatprep.subr.mxu0 0.0
    %7146 = vmatpush1.msra.mxu0 0.0
    %7147 = vmatprep.subr.mxu0 0.0
    %7148 = vmatpush1.msra.mxu0 0.0
    %7149 = vmatprep.subr.mxu0 0.0
    %7150 = vmatpush1.msra.mxu0 0.0
    %7151 = vmatprep.subr.mxu0 0.0
    %7152 = vmatpush1.msra.mxu0 0.0
    %7153 = vmatprep.subr.mxu0 0.0
    %7154 = vmatpush1.msra.mxu0 0.0
    %7155 = vmatprep.subr.mxu0 0.0
    %7156 = vmatpush1.msra.mxu0 0.0
    %7157 = vmatprep.subr.mxu0 0.0
    %7158 = vmatpush1.msra.mxu0 0.0
    %7159 = vmatprep.subr.mxu0 0.0
    %7160 = vmatpush1.msra.mxu0 0.0
    %7161 = vmatprep.subr.mxu0 0.0
    %7162 = vmatpush1.msra.mxu0 0.0
    %7163 = vmatprep.subr.mxu0 0.0
    %7164 = vmatpush1.msra.mxu0 0.0
    %7165 = vmatprep.subr.mxu0 0.0
    %7166 = vmatpush1.msra.mxu0 0.0
    %7167 = vmatprep.subr.mxu0 0.0
    %7168 = vmatpush1.msra.mxu0 0.0
    %7169 = vmatprep.subr.mxu0 0.0
    %7170 = vmatpush1.msra.mxu0 0.0
    %7171 = vmatprep.subr.mxu0 0.0
    %7172 = vmatpush1.msra.mxu0 0.0
    %7173 = vmatprep.subr.mxu0 0.0
    %7174 = vmatpush1.msra.mxu0 0.0
    %7175 = vmatprep.subr.mxu0 0.0
    %7176 = vmatpush1.msra.mxu0 0.0
    %7177 = vmatprep.subr.mxu0 0.0
    %7178 = vmatpush1.msra.mxu0 0.0
    %7179 = vmatprep.subr.mxu0 0.0
    %7180 = vmatpush1.msra.mxu0 0.0
    %7181 = vmatprep.subr.mxu0 0.0
    %7182 = vmatpush1.msra.mxu0 0.0
    %7183 = vmatprep.subr.mxu0 0.0
    %7184 = vmatpush1.msra.mxu0 0.0
    %7185 = vmatprep.subr.mxu0 0.0
    %7186 = vmatpush1.msra.mxu0 0.0
    %7187 = vmatprep.mubr.f32.mxu0 0.0
    %v7188 = vand.u32 %v3117, 4294901760
    %7189 = vmatmul.mubr.f32.gmra.mrb[0].mxu0 %v7188
    %v7190 = vpop.f32.mrb[0].mxu0
    %v7191 = vadd.f32 %v7095, %v7190
    %v7192 = vpop.f32.mrb[0].mxu0
    %7193 = vmatprep.mubr.f32.mxu0 0.0
    %v7194 = vand.u32 %v3120, 4294901760
    %7195 = vmatmul.mubr.f32.gmra.mrb[0].mxu0 %v7194
    %v7196 = vpop.f32.mrb[0].mxu0
    %v7197 = vadd.f32 %v7103, %v7196
    %v7198 = vpop.f32.mrb[0].mxu0
    %7199 = vmatprep.mubr.f32.mxu0 0.0
    %v7200 = vand.u32 %v3123, 4294901760
    %7201 = vmatmul.mubr.f32.gmra.mrb[0].mxu0 %v7200
    %v7202 = vpop.f32.mrb[0].mxu0
    %v7203 = vadd.f32 %v7111, %v7202
    %v7204 = vpop.f32.mrb[0].mxu0
    %7205 = vdwg.mxu0
    %7206 = vmatprep.subr.mxu0 0.0
    %v7207 = vand.u32 %v5421, 4294901760
    %7208 = vmatpush1.msra.mxu0 %v7207
    %7209 = vmatprep.subr.mxu0 0.0
    %v7210 = vand.u32 %v5428, 4294901760
    %7211 = vmatpush1.msra.mxu0 %v7210
    %7212 = vmatprep.subr.mxu0 0.0
    %v7213 = vand.u32 %v5435, 4294901760
    %7214 = vmatpush1.msra.mxu0 %v7213
    %7215 = vmatprep.subr.mxu0 0.0
    %7216 = vmatpush1.msra.mxu0 0.0
    %7217 = vmatprep.subr.mxu0 0.0
    %7218 = vmatpush1.msra.mxu0 0.0
    %7219 = vmatprep.subr.mxu0 0.0
    %7220 = vmatpush1.msra.mxu0 0.0
    %7221 = vmatprep.subr.mxu0 0.0
    %7222 = vmatpush1.msra.mxu0 0.0
    %7223 = vmatprep.subr.mxu0 0.0
    %7224 = vmatpush1.msra.mxu0 0.0
    %7225 = vmatprep.subr.mxu0 0.0
    %7226 = vmatpush1.msra.mxu0 0.0
    %7227 = vmatprep.subr.mxu0 0.0
    %7228 = vmatpush1.msra.mxu0 0.0
    %7229 = vmatprep.subr.mxu0 0.0
    %7230 = vmatpush1.msra.mxu0 0.0
    %7231 = vmatprep.subr.mxu0 0.0
    %7232 = vmatpush1.msra.mxu0 0.0
    %7233 = vmatprep.subr.mxu0 0.0
    %7234 = vmatpush1.msra.mxu0 0.0
    %7235 = vmatprep.subr.mxu0 0.0
    %7236 = vmatpush1.msra.mxu0 0.0
    %7237 = vmatprep.subr.mxu0 0.0
    %7238 = vmatpush1.msra.mxu0 0.0
    %7239 = vmatprep.subr.mxu0 0.0
    %7240 = vmatpush1.msra.mxu0 0.0
    %7241 = vmatprep.subr.mxu0 0.0
    %7242 = vmatpush1.msra.mxu0 0.0
    %7243 = vmatprep.subr.mxu0 0.0
    %7244 = vmatpush1.msra.mxu0 0.0
    %7245 = vmatprep.subr.mxu0 0.0
    %7246 = vmatpush1.msra.mxu0 0.0
    %7247 = vmatprep.subr.mxu0 0.0
    %7248 = vmatpush1.msra.mxu0 0.0
    %7249 = vmatprep.subr.mxu0 0.0
    %7250 = vmatpush1.msra.mxu0 0.0
    %7251 = vmatprep.subr.mxu0 0.0
    %7252 = vmatpush1.msra.mxu0 0.0
    %7253 = vmatprep.subr.mxu0 0.0
    %7254 = vmatpush1.msra.mxu0 0.0
    %7255 = vmatprep.subr.mxu0 0.0
    %7256 = vmatpush1.msra.mxu0 0.0
    %7257 = vmatprep.subr.mxu0 0.0
    %7258 = vmatpush1.msra.mxu0 0.0
    %7259 = vmatprep.subr.mxu0 0.0
    %7260 = vmatpush1.msra.mxu0 0.0
    %7261 = vmatprep.subr.mxu0 0.0
    %7262 = vmatpush1.msra.mxu0 0.0
    %7263 = vmatprep.subr.mxu0 0.0
    %7264 = vmatpush1.msra.mxu0 0.0
    %7265 = vmatprep.subr.mxu0 0.0
    %7266 = vmatpush1.msra.mxu0 0.0
    %7267 = vmatprep.subr.mxu0 0.0
    %7268 = vmatpush1.msra.mxu0 0.0
    %7269 = vmatprep.subr.mxu0 0.0
    %7270 = vmatpush1.msra.mxu0 0.0
    %7271 = vmatprep.subr.mxu0 0.0
    %7272 = vmatpush1.msra.mxu0 0.0
    %7273 = vmatprep.mubr.f32.mxu0 0.0
    %v7274 = vand.u32 %v3117, 4294901760
    %7275 = vmatmul.mubr.f32.gmra.mrb[0].mxu0 %v7274
    %v7276 = vpop.f32.mrb[0].mxu0
    %v7277 = vadd.f32 %v7191, %v7276
    %v7278 = vpop.f32.mrb[0].mxu0
    %7279 = vmatprep.mubr.f32.mxu0 0.0
    %v7280 = vand.u32 %v3120, 4294901760
    %7281 = vmatmul.mubr.f32.gmra.mrb[0].mxu0 %v7280
    %v7282 = vpop.f32.mrb[0].mxu0
    %v7283 = vadd.f32 %v7197, %v7282
    %v7284 = vpop.f32.mrb[0].mxu0
    %7285 = vmatprep.mubr.f32.mxu0 0.0
    %v7286 = vand.u32 %v3123, 4294901760
    %7287 = vmatmul.mubr.f32.gmra.mrb[0].mxu0 %v7286
    %v7288 = vpop.f32.mrb[0].mxu0
    %v7289 = vadd.f32 %v7203, %v7288
    %v7290 = vpop.f32.mrb[0].mxu0
    %7291 = vdwg.mxu0
    %v7292 = vadd.f32 %v6731, %v7277
    %v7293 = vadd.f32 %v6732, %v7283
    %v7294 = vadd.f32 %v6733, %v7289
    %v7295 = vmax.f32 %v7292, 0.0
    %v7296 = vmax.f32 %v7293, 0.0
    %v7297 = vmax.f32 %v7294, 0.0
    %v7298 = vld [vmem:[%s11] sm:$0xff]
    %v7299 = vld [vmem:[%s11 + $0x8] sm:$0xff]
    %v7300 = vld [vmem:[%s11 + $0x10] sm:$0xff]
    %v7301 = vld [vmem:[%s11 + $0x18] sm:$0xff]
    %v7302 = vld [vmem:[%s11 + $0x20] sm:$0xff]
    %v7303 = vld [vmem:[%s11 + $0x28] sm:$0xff]
    %v7304 = vld [vmem:[%s11 + $0x30] sm:$0xff]
    %v7305 = vld [vmem:[%s11 + $0x38] sm:$0xff]
    %v7306 = vld [vmem:[%s11 + $0x40] sm:$0xff]
    %v7307 = vld [vmem:[%s11 + $0x48] sm:$0xff]
    %v7308 = vld [vmem:[%s11 + $0x50] sm:$0xff]
    %v7309 = vld [vmem:[%s11 + $0x58] sm:$0xff]
    %v7310 = vld [vmem:[%s11 + $0x60] sm:$0xff]
    %v7311 = vld [vmem:[%s11 + $0x68] sm:$0xff]
    %v7312 = vld [vmem:[%s11 + $0x70] sm:$0xff]
    %v7313 = vld [vmem:[%s11 + $0x78] sm:$0xff]
    %7314 = vmatprep.subr.mxu0 0.0
    %v7315 = vand.u32 %v7298, 4294901760
    %7316 = vmatpush1.msra.mxu0 %v7315
    %7317 = vmatprep.subr.mxu0 0.0
    %v7318 = vand.u32 %v7299, 4294901760
    %7319 = vmatpush1.msra.mxu0 %v7318
    %7320 = vmatprep.subr.mxu0 0.0
    %v7321 = vand.u32 %v7300, 4294901760
    %7322 = vmatpush1.msra.mxu0 %v7321
    %7323 = vmatprep.subr.mxu0 0.0
    %v7324 = vand.u32 %v7301, 4294901760
    %7325 = vmatpush1.msra.mxu0 %v7324
    %7326 = vmatprep.subr.mxu0 0.0
    %v7327 = vand.u32 %v7302, 4294901760
    %7328 = vmatpush1.msra.mxu0 %v7327
    %7329 = vmatprep.subr.mxu0 0.0
    %v7330 = vand.u32 %v7303, 4294901760
    %7331 = vmatpush1.msra.mxu0 %v7330
    %7332 = vmatprep.subr.mxu0 0.0
    %v7333 = vand.u32 %v7304, 4294901760
    %7334 = vmatpush1.msra.mxu0 %v7333
    %7335 = vmatprep.subr.mxu0 0.0
    %v7336 = vand.u32 %v7305, 4294901760
    %7337 = vmatpush1.msra.mxu0 %v7336
    %7338 = vmatprep.subr.mxu0 0.0
    %v7339 = vand.u32 %v7306, 4294901760
    %7340 = vmatpush1.msra.mxu0 %v7339
    %7341 = vmatprep.subr.mxu0 0.0
    %v7342 = vand.u32 %v7307, 4294901760
    %7343 = vmatpush1.msra.mxu0 %v7342
    %7344 = vmatprep.subr.mxu0 0.0
    %v7345 = vand.u32 %v7308, 4294901760
    %7346 = vmatpush1.msra.mxu0 %v7345
    %7347 = vmatprep.subr.mxu0 0.0
    %v7348 = vand.u32 %v7309, 4294901760
    %7349 = vmatpush1.msra.mxu0 %v7348
    %7350 = vmatprep.subr.mxu0 0.0
    %v7351 = vand.u32 %v7310, 4294901760
    %7352 = vmatpush1.msra.mxu0 %v7351
    %7353 = vmatprep.subr.mxu0 0.0
    %v7354 = vand.u32 %v7311, 4294901760
    %7355 = vmatpush1.msra.mxu0 %v7354
    %7356 = vmatprep.subr.mxu0 0.0
    %v7357 = vand.u32 %v7312, 4294901760
    %7358 = vmatpush1.msra.mxu0 %v7357
    %7359 = vmatprep.subr.mxu0 0.0
    %v7360 = vand.u32 %v7313, 4294901760
    %7361 = vmatpush1.msra.mxu0 %v7360
    %7362 = vmatprep.subr.mxu0 0.0
    %7363 = vmatpush1.msra.mxu0 0.0
    %7364 = vmatprep.subr.mxu0 0.0
    %7365 = vmatpush1.msra.mxu0 0.0
    %7366 = vmatprep.subr.mxu0 0.0
    %7367 = vmatpush1.msra.mxu0 0.0
    %7368 = vmatprep.subr.mxu0 0.0
    %7369 = vmatpush1.msra.mxu0 0.0
    %7370 = vmatprep.subr.mxu0 0.0
    %7371 = vmatpush1.msra.mxu0 0.0
    %7372 = vmatprep.subr.mxu0 0.0
    %7373 = vmatpush1.msra.mxu0 0.0
    %7374 = vmatprep.subr.mxu0 0.0
    %7375 = vmatpush1.msra.mxu0 0.0
    %7376 = vmatprep.subr.mxu0 0.0
    %7377 = vmatpush1.msra.mxu0 0.0
    %7378 = vmatprep.subr.mxu0 0.0
    %7379 = vmatpush1.msra.mxu0 0.0
    %7380 = vmatprep.subr.mxu0 0.0
    %7381 = vmatpush1.msra.mxu0 0.0
    %7382 = vmatprep.subr.mxu0 0.0
    %7383 = vmatpush1.msra.mxu0 0.0
    %7384 = vmatprep.subr.mxu0 0.0
    %7385 = vmatpush1.msra.mxu0 0.0
    %7386 = vmatprep.subr.mxu0 0.0
    %7387 = vmatpush1.msra.mxu0 0.0
    %7388 = vmatprep.subr.mxu0 0.0
    %7389 = vmatpush1.msra.mxu0 0.0
    %7390 = vmatprep.subr.mxu0 0.0
    %7391 = vmatpush1.msra.mxu0 0.0
    %7392 = vmatprep.subr.mxu0 0.0
    %7393 = vmatpush1.msra.mxu0 0.0
    %7394 = vmatprep.mubr.f32.mxu0 0.0
    %v7395 = vand.u32 %v7295, 4294901760
    %v7396 = vsub.f32 %v7295, %v7395
    %v7397 = vand.u32 %v7396, 4294901760
    %v7398 = vsub.f32 %v7396, %v7397
    %v7399 = vand.u32 %v7398, 4294901760
    %7400 = vmatmul.mubr.f32.gmra.mrb[0].mxu0 %v7399
    %v7401 = vpop.f32.mrb[0].mxu0
    %v7402 = vadd.f32 0.0, %v7401
    %v7403 = vpop.f32.mrb[0].mxu0
    %7404 = vmatprep.mubr.f32.mxu0 0.0
    %v7405 = vand.u32 %v7296, 4294901760
    %v7406 = vsub.f32 %v7296, %v7405
    %v7407 = vand.u32 %v7406, 4294901760
    %v7408 = vsub.f32 %v7406, %v7407
    %v7409 = vand.u32 %v7408, 4294901760
    %7410 = vmatmul.mubr.f32.gmra.mrb[0].mxu0 %v7409
    %v7411 = vpop.f32.mrb[0].mxu0
    %v7412 = vadd.f32 0.0, %v7411
    %v7413 = vpop.f32.mrb[0].mxu0
    %7414 = vmatprep.mubr.f32.mxu0 0.0
    %v7415 = vand.u32 %v7297, 4294901760
    %v7416 = vsub.f32 %v7297, %v7415
    %v7417 = vand.u32 %v7416, 4294901760
    %v7418 = vsub.f32 %v7416, %v7417
    %v7419 = vand.u32 %v7418, 4294901760
    %7420 = vmatmul.mubr.f32.gmra.mrb[0].mxu0 %v7419
    %v7421 = vpop.f32.mrb[0].mxu0
    %v7422 = vadd.f32 0.0, %v7421
    %v7423 = vpop.f32.mrb[0].mxu0
    %7424 = vdwg.mxu0
    %7425 = vmatprep.subr.mxu0 0.0
    %v7426 = vand.u32 %v7298, 4294901760
    %v7427 = vsub.f32 %v7298, %v7426
    %v7428 = vand.u32 %v7427, 4294901760
    %v7429 = vsub.f32 %v7427, %v7428
    %v7430 = vand.u32 %v7429, 4294901760
    %7431 = vmatpush1.msra.mxu0 %v7430
    %7432 = vmatprep.subr.mxu0 0.0
    %v7433 = vand.u32 %v7299, 4294901760
    %v7434 = vsub.f32 %v7299, %v7433
    %v7435 = vand.u32 %v7434, 4294901760
    %v7436 = vsub.f32 %v7434, %v7435
    %v7437 = vand.u32 %v7436, 4294901760
    %7438 = vmatpush1.msra.mxu0 %v7437
    %7439 = vmatprep.subr.mxu0 0.0
    %v7440 = vand.u32 %v7300, 4294901760
    %v7441 = vsub.f32 %v7300, %v7440
    %v7442 = vand.u32 %v7441, 4294901760
    %v7443 = vsub.f32 %v7441, %v7442
    %v7444 = vand.u32 %v7443, 4294901760
    %7445 = vmatpush1.msra.mxu0 %v7444
    %7446 = vmatprep.subr.mxu0 0.0
    %v7447 = vand.u32 %v7301, 4294901760
    %v7448 = vsub.f32 %v7301, %v7447
    %v7449 = vand.u32 %v7448, 4294901760
    %v7450 = vsub.f32 %v7448, %v7449
    %v7451 = vand.u32 %v7450, 4294901760
    %7452 = vmatpush1.msra.mxu0 %v7451
    %7453 = vmatprep.subr.mxu0 0.0
    %v7454 = vand.u32 %v7302, 4294901760
    %v7455 = vsub.f32 %v7302, %v7454
    %v7456 = vand.u32 %v7455, 4294901760
    %v7457 = vsub.f32 %v7455, %v7456
    %v7458 = vand.u32 %v7457, 4294901760
    %7459 = vmatpush1.msra.mxu0 %v7458
    %7460 = vmatprep.subr.mxu0 0.0
    %v7461 = vand.u32 %v7303, 4294901760
    %v7462 = vsub.f32 %v7303, %v7461
    %v7463 = vand.u32 %v7462, 4294901760
    %v7464 = vsub.f32 %v7462, %v7463
    %v7465 = vand.u32 %v7464, 4294901760
    %7466 = vmatpush1.msra.mxu0 %v7465
    %7467 = vmatprep.subr.mxu0 0.0
    %v7468 = vand.u32 %v7304, 4294901760
    %v7469 = vsub.f32 %v7304, %v7468
    %v7470 = vand.u32 %v7469, 4294901760
    %v7471 = vsub.f32 %v7469, %v7470
    %v7472 = vand.u32 %v7471, 4294901760
    %7473 = vmatpush1.msra.mxu0 %v7472
    %7474 = vmatprep.subr.mxu0 0.0
    %v7475 = vand.u32 %v7305, 4294901760
    %v7476 = vsub.f32 %v7305, %v7475
    %v7477 = vand.u32 %v7476, 4294901760
    %v7478 = vsub.f32 %v7476, %v7477
    %v7479 = vand.u32 %v7478, 4294901760
    %7480 = vmatpush1.msra.mxu0 %v7479
    %7481 = vmatprep.subr.mxu0 0.0
    %v7482 = vand.u32 %v7306, 4294901760
    %v7483 = vsub.f32 %v7306, %v7482
    %v7484 = vand.u32 %v7483, 4294901760
    %v7485 = vsub.f32 %v7483, %v7484
    %v7486 = vand.u32 %v7485, 4294901760
    %7487 = vmatpush1.msra.mxu0 %v7486
    %7488 = vmatprep.subr.mxu0 0.0
    %v7489 = vand.u32 %v7307, 4294901760
    %v7490 = vsub.f32 %v7307, %v7489
    %v7491 = vand.u32 %v7490, 4294901760
    %v7492 = vsub.f32 %v7490, %v7491
    %v7493 = vand.u32 %v7492, 4294901760
    %7494 = vmatpush1.msra.mxu0 %v7493
    %7495 = vmatprep.subr.mxu0 0.0
    %v7496 = vand.u32 %v7308, 4294901760
    %v7497 = vsub.f32 %v7308, %v7496
    %v7498 = vand.u32 %v7497, 4294901760
    %v7499 = vsub.f32 %v7497, %v7498
    %v7500 = vand.u32 %v7499, 4294901760
    %7501 = vmatpush1.msra.mxu0 %v7500
    %7502 = vmatprep.subr.mxu0 0.0
    %v7503 = vand.u32 %v7309, 4294901760
    %v7504 = vsub.f32 %v7309, %v7503
    %v7505 = vand.u32 %v7504, 4294901760
    %v7506 = vsub.f32 %v7504, %v7505
    %v7507 = vand.u32 %v7506, 4294901760
    %7508 = vmatpush1.msra.mxu0 %v7507
    %7509 = vmatprep.subr.mxu0 0.0
    %v7510 = vand.u32 %v7310, 4294901760
    %v7511 = vsub.f32 %v7310, %v7510
    %v7512 = vand.u32 %v7511, 4294901760
    %v7513 = vsub.f32 %v7511, %v7512
    %v7514 = vand.u32 %v7513, 4294901760
    %7515 = vmatpush1.msra.mxu0 %v7514
    %7516 = vmatprep.subr.mxu0 0.0
    %v7517 = vand.u32 %v7311, 4294901760
    %v7518 = vsub.f32 %v7311, %v7517
    %v7519 = vand.u32 %v7518, 4294901760
    %v7520 = vsub.f32 %v7518, %v7519
    %v7521 = vand.u32 %v7520, 4294901760
    %7522 = vmatpush1.msra.mxu0 %v7521
    %7523 = vmatprep.subr.mxu0 0.0
    %v7524 = vand.u32 %v7312, 4294901760
    %v7525 = vsub.f32 %v7312, %v7524
    %v7526 = vand.u32 %v7525, 4294901760
    %v7527 = vsub.f32 %v7525, %v7526
    %v7528 = vand.u32 %v7527, 4294901760
    %7529 = vmatpush1.msra.mxu0 %v7528
    %7530 = vmatprep.subr.mxu0 0.0
    %v7531 = vand.u32 %v7313, 4294901760
    %v7532 = vsub.f32 %v7313, %v7531
    %v7533 = vand.u32 %v7532, 4294901760
    %v7534 = vsub.f32 %v7532, %v7533
    %v7535 = vand.u32 %v7534, 4294901760
    %7536 = vmatpush1.msra.mxu0 %v7535
    %7537 = vmatprep.subr.mxu0 0.0
    %7538 = vmatpush1.msra.mxu0 0.0
    %7539 = vmatprep.subr.mxu0 0.0
    %7540 = vmatpush1.msra.mxu0 0.0
    %7541 = vmatprep.subr.mxu0 0.0
    %7542 = vmatpush1.msra.mxu0 0.0
    %7543 = vmatprep.subr.mxu0 0.0
    %7544 = vmatpush1.msra.mxu0 0.0
    %7545 = vmatprep.subr.mxu0 0.0
    %7546 = vmatpush1.msra.mxu0 0.0
    %7547 = vmatprep.subr.mxu0 0.0
    %7548 = vmatpush1.msra.mxu0 0.0
    %7549 = vmatprep.subr.mxu0 0.0
    %7550 = vmatpush1.msra.mxu0 0.0
    %7551 = vmatprep.subr.mxu0 0.0
    %7552 = vmatpush1.msra.mxu0 0.0
    %7553 = vmatprep.subr.mxu0 0.0
    %7554 = vmatpush1.msra.mxu0 0.0
    %7555 = vmatprep.subr.mxu0 0.0
    %7556 = vmatpush1.msra.mxu0 0.0
    %7557 = vmatprep.subr.mxu0 0.0
    %7558 = vmatpush1.msra.mxu0 0.0
    %7559 = vmatprep.subr.mxu0 0.0
    %7560 = vmatpush1.msra.mxu0 0.0
    %7561 = vmatprep.subr.mxu0 0.0
    %7562 = vmatpush1.msra.mxu0 0.0
    %7563 = vmatprep.subr.mxu0 0.0
    %7564 = vmatpush1.msra.mxu0 0.0
    %7565 = vmatprep.subr.mxu0 0.0
    %7566 = vmatpush1.msra.mxu0 0.0
    %7567 = vmatprep.subr.mxu0 0.0
    %7568 = vmatpush1.msra.mxu0 0.0
    %7569 = vmatprep.mubr.f32.mxu0 0.0
    %v7570 = vand.u32 %v7295, 4294901760
    %7571 = vmatmul.mubr.f32.gmra.mrb[0].mxu0 %v7570
    %v7572 = vpop.f32.mrb[0].mxu0
    %v7573 = vadd.f32 %v7402, %v7572
    %v7574 = vpop.f32.mrb[0].mxu0
    %7575 = vmatprep.mubr.f32.mxu0 0.0
    %v7576 = vand.u32 %v7296, 4294901760
    %7577 = vmatmul.mubr.f32.gmra.mrb[0].mxu0 %v7576
    %v7578 = vpop.f32.mrb[0].mxu0
    %v7579 = vadd.f32 %v7412, %v7578
    %v7580 = vpop.f32.mrb[0].mxu0
    %7581 = vmatprep.mubr.f32.mxu0 0.0
    %v7582 = vand.u32 %v7297, 4294901760
    %7583 = vmatmul.mubr.f32.gmra.mrb[0].mxu0 %v7582
    %v7584 = vpop.f32.mrb[0].mxu0
    %v7585 = vadd.f32 %v7422, %v7584
    %v7586 = vpop.f32.mrb[0].mxu0
    %7587 = vdwg.mxu0
    %7588 = vmatprep.subr.mxu0 0.0
    %v7589 = vand.u32 %v7298, 4294901760
    %v7590 = vsub.f32 %v7298, %v7589
    %7591 = vmatpush1.msra.mxu0 %v7590
    %7592 = vmatprep.subr.mxu0 0.0
    %v7593 = vand.u32 %v7299, 4294901760
    %v7594 = vsub.f32 %v7299, %v7593
    %7595 = vmatpush1.msra.mxu0 %v7594
    %7596 = vmatprep.subr.mxu0 0.0
    %v7597 = vand.u32 %v7300, 4294901760
    %v7598 = vsub.f32 %v7300, %v7597
    %7599 = vmatpush1.msra.mxu0 %v7598
    %7600 = vmatprep.subr.mxu0 0.0
    %v7601 = vand.u32 %v7301, 4294901760
    %v7602 = vsub.f32 %v7301, %v7601
    %7603 = vmatpush1.msra.mxu0 %v7602
    %7604 = vmatprep.subr.mxu0 0.0
    %v7605 = vand.u32 %v7302, 4294901760
    %v7606 = vsub.f32 %v7302, %v7605
    %7607 = vmatpush1.msra.mxu0 %v7606
    %7608 = vmatprep.subr.mxu0 0.0
    %v7609 = vand.u32 %v7303, 4294901760
    %v7610 = vsub.f32 %v7303, %v7609
    %7611 = vmatpush1.msra.mxu0 %v7610
    %7612 = vmatprep.subr.mxu0 0.0
    %v7613 = vand.u32 %v7304, 4294901760
    %v7614 = vsub.f32 %v7304, %v7613
    %7615 = vmatpush1.msra.mxu0 %v7614
    %7616 = vmatprep.subr.mxu0 0.0
    %v7617 = vand.u32 %v7305, 4294901760
    %v7618 = vsub.f32 %v7305, %v7617
    %7619 = vmatpush1.msra.mxu0 %v7618
    %7620 = vmatprep.subr.mxu0 0.0
    %v7621 = vand.u32 %v7306, 4294901760
    %v7622 = vsub.f32 %v7306, %v7621
    %7623 = vmatpush1.msra.mxu0 %v7622
    %7624 = vmatprep.subr.mxu0 0.0
    %v7625 = vand.u32 %v7307, 4294901760
    %v7626 = vsub.f32 %v7307, %v7625
    %7627 = vmatpush1.msra.mxu0 %v7626
    %7628 = vmatprep.subr.mxu0 0.0
    %v7629 = vand.u32 %v7308, 4294901760
    %v7630 = vsub.f32 %v7308, %v7629
    %7631 = vmatpush1.msra.mxu0 %v7630
    %7632 = vmatprep.subr.mxu0 0.0
    %v7633 = vand.u32 %v7309, 4294901760
    %v7634 = vsub.f32 %v7309, %v7633
    %7635 = vmatpush1.msra.mxu0 %v7634
    %7636 = vmatprep.subr.mxu0 0.0
    %v7637 = vand.u32 %v7310, 4294901760
    %v7638 = vsub.f32 %v7310, %v7637
    %7639 = vmatpush1.msra.mxu0 %v7638
    %7640 = vmatprep.subr.mxu0 0.0
    %v7641 = vand.u32 %v7311, 4294901760
    %v7642 = vsub.f32 %v7311, %v7641
    %7643 = vmatpush1.msra.mxu0 %v7642
    %7644 = vmatprep.subr.mxu0 0.0
    %v7645 = vand.u32 %v7312, 4294901760
    %v7646 = vsub.f32 %v7312, %v7645
    %7647 = vmatpush1.msra.mxu0 %v7646
    %7648 = vmatprep.subr.mxu0 0.0
    %v7649 = vand.u32 %v7313, 4294901760
    %v7650 = vsub.f32 %v7313, %v7649
    %7651 = vmatpush1.msra.mxu0 %v7650
    %7652 = vmatprep.subr.mxu0 0.0
    %7653 = vmatpush1.msra.mxu0 0.0
    %7654 = vmatprep.subr.mxu0 0.0
    %7655 = vmatpush1.msra.mxu0 0.0
    %7656 = vmatprep.subr.mxu0 0.0
    %7657 = vmatpush1.msra.mxu0 0.0
    %7658 = vmatprep.subr.mxu0 0.0
    %7659 = vmatpush1.msra.mxu0 0.0
    %7660 = vmatprep.subr.mxu0 0.0
    %7661 = vmatpush1.msra.mxu0 0.0
    %7662 = vmatprep.subr.mxu0 0.0
    %7663 = vmatpush1.msra.mxu0 0.0
    %7664 = vmatprep.subr.mxu0 0.0
    %7665 = vmatpush1.msra.mxu0 0.0
    %7666 = vmatprep.subr.mxu0 0.0
    %7667 = vmatpush1.msra.mxu0 0.0
    %7668 = vmatprep.subr.mxu0 0.0
    %7669 = vmatpush1.msra.mxu0 0.0
    %7670 = vmatprep.subr.mxu0 0.0
    %7671 = vmatpush1.msra.mxu0 0.0
    %7672 = vmatprep.subr.mxu0 0.0
    %7673 = vmatpush1.msra.mxu0 0.0
    %7674 = vmatprep.subr.mxu0 0.0
    %7675 = vmatpush1.msra.mxu0 0.0
    %7676 = vmatprep.subr.mxu0 0.0
    %7677 = vmatpush1.msra.mxu0 0.0
    %7678 = vmatprep.subr.mxu0 0.0
    %7679 = vmatpush1.msra.mxu0 0.0
    %7680 = vmatprep.subr.mxu0 0.0
    %7681 = vmatpush1.msra.mxu0 0.0
    %7682 = vmatprep.subr.mxu0 0.0
    %7683 = vmatpush1.msra.mxu0 0.0
    %7684 = vmatprep.mubr.f32.mxu0 0.0
    %v7685 = vand.u32 %v7295, 4294901760
    %v7686 = vsub.f32 %v7295, %v7685
    %7687 = vmatmul.mubr.f32.gmra.mrb[0].mxu0 %v7686
    %v7688 = vpop.f32.mrb[0].mxu0
    %v7689 = vadd.f32 %v7573, %v7688
    %v7690 = vpop.f32.mrb[0].mxu0
    %7691 = vmatprep.mubr.f32.mxu0 0.0
    %v7692 = vand.u32 %v7296, 4294901760
    %v7693 = vsub.f32 %v7296, %v7692
    %7694 = vmatmul.mubr.f32.gmra.mrb[0].mxu0 %v7693
    %v7695 = vpop.f32.mrb[0].mxu0
    %v7696 = vadd.f32 %v7579, %v7695
    %v7697 = vpop.f32.mrb[0].mxu0
    %7698 = vmatprep.mubr.f32.mxu0 0.0
    %v7699 = vand.u32 %v7297, 4294901760
    %v7700 = vsub.f32 %v7297, %v7699
    %7701 = vmatmul.mubr.f32.gmra.mrb[0].mxu0 %v7700
    %v7702 = vpop.f32.mrb[0].mxu0
    %v7703 = vadd.f32 %v7585, %v7702
    %v7704 = vpop.f32.mrb[0].mxu0
    %7705 = vdwg.mxu0
    %7706 = vmatprep.subr.mxu0 0.0
    %v7707 = vand.u32 %v7298, 4294901760
    %7708 = vmatpush1.msra.mxu0 %v7707
    %7709 = vmatprep.subr.mxu0 0.0
    %v7710 = vand.u32 %v7299, 4294901760
    %7711 = vmatpush1.msra.mxu0 %v7710
    %7712 = vmatprep.subr.mxu0 0.0
    %v7713 = vand.u32 %v7300, 4294901760
    %7714 = vmatpush1.msra.mxu0 %v7713
    %7715 = vmatprep.subr.mxu0 0.0
    %v7716 = vand.u32 %v7301, 4294901760
    %7717 = vmatpush1.msra.mxu0 %v7716
    %7718 = vmatprep.subr.mxu0 0.0
    %v7719 = vand.u32 %v7302, 4294901760
    %7720 = vmatpush1.msra.mxu0 %v7719
    %7721 = vmatprep.subr.mxu0 0.0
    %v7722 = vand.u32 %v7303, 4294901760
    %7723 = vmatpush1.msra.mxu0 %v7722
    %7724 = vmatprep.subr.mxu0 0.0
    %v7725 = vand.u32 %v7304, 4294901760
    %7726 = vmatpush1.msra.mxu0 %v7725
    %7727 = vmatprep.subr.mxu0 0.0
    %v7728 = vand.u32 %v7305, 4294901760
    %7729 = vmatpush1.msra.mxu0 %v7728
    %7730 = vmatprep.subr.mxu0 0.0
    %v7731 = vand.u32 %v7306, 4294901760
    %7732 = vmatpush1.msra.mxu0 %v7731
    %7733 = vmatprep.subr.mxu0 0.0
    %v7734 = vand.u32 %v7307, 4294901760
    %7735 = vmatpush1.msra.mxu0 %v7734
    %7736 = vmatprep.subr.mxu0 0.0
    %v7737 = vand.u32 %v7308, 4294901760
    %7738 = vmatpush1.msra.mxu0 %v7737
    %7739 = vmatprep.subr.mxu0 0.0
    %v7740 = vand.u32 %v7309, 4294901760
    %7741 = vmatpush1.msra.mxu0 %v7740
    %7742 = vmatprep.subr.mxu0 0.0
    %v7743 = vand.u32 %v7310, 4294901760
    %7744 = vmatpush1.msra.mxu0 %v7743
    %7745 = vmatprep.subr.mxu0 0.0
    %v7746 = vand.u32 %v7311, 4294901760
    %7747 = vmatpush1.msra.mxu0 %v7746
    %7748 = vmatprep.subr.mxu0 0.0
    %v7749 = vand.u32 %v7312, 4294901760
    %7750 = vmatpush1.msra.mxu0 %v7749
    %7751 = vmatprep.subr.mxu0 0.0
    %v7752 = vand.u32 %v7313, 4294901760
    %7753 = vmatpush1.msra.mxu0 %v7752
    %7754 = vmatprep.subr.mxu0 0.0
    %7755 = vmatpush1.msra.mxu0 0.0
    %7756 = vmatprep.subr.mxu0 0.0
    %7757 = vmatpush1.msra.mxu0 0.0
    %7758 = vmatprep.subr.mxu0 0.0
    %7759 = vmatpush1.msra.mxu0 0.0
    %7760 = vmatprep.subr.mxu0 0.0
    %7761 = vmatpush1.msra.mxu0 0.0
    %7762 = vmatprep.subr.mxu0 0.0
    %7763 = vmatpush1.msra.mxu0 0.0
    %7764 = vmatprep.subr.mxu0 0.0
    %7765 = vmatpush1.msra.mxu0 0.0
    %7766 = vmatprep.subr.mxu0 0.0
    %7767 = vmatpush1.msra.mxu0 0.0
    %7768 = vmatprep.subr.mxu0 0.0
    %7769 = vmatpush1.msra.mxu0 0.0
    %7770 = vmatprep.subr.mxu0 0.0
    %7771 = vmatpush1.msra.mxu0 0.0
    %7772 = vmatprep.subr.mxu0 0.0
    %7773 = vmatpush1.msra.mxu0 0.0
    %7774 = vmatprep.subr.mxu0 0.0
    %7775 = vmatpush1.msra.mxu0 0.0
    %7776 = vmatprep.subr.mxu0 0.0
    %7777 = vmatpush1.msra.mxu0 0.0
    %7778 = vmatprep.subr.mxu0 0.0
    %7779 = vmatpush1.msra.mxu0 0.0
    %7780 = vmatprep.subr.mxu0 0.0
    %7781 = vmatpush1.msra.mxu0 0.0
    %7782 = vmatprep.subr.mxu0 0.0
    %7783 = vmatpush1.msra.mxu0 0.0
    %7784 = vmatprep.subr.mxu0 0.0
    %7785 = vmatpush1.msra.mxu0 0.0
    %7786 = vmatprep.mubr.f32.mxu0 0.0
    %v7787 = vand.u32 %v7295, 4294901760
    %v7788 = vsub.f32 %v7295, %v7787
    %v7789 = vand.u32 %v7788, 4294901760
    %7790 = vmatmul.mubr.f32.gmra.mrb[0].mxu0 %v7789
    %v7791 = vpop.f32.mrb[0].mxu0
    %v7792 = vadd.f32 %v7689, %v7791
    %v7793 = vpop.f32.mrb[0].mxu0
    %7794 = vmatprep.mubr.f32.mxu0 0.0
    %v7795 = vand.u32 %v7296, 4294901760
    %v7796 = vsub.f32 %v7296, %v7795
    %v7797 = vand.u32 %v7796, 4294901760
    %7798 = vmatmul.mubr.f32.gmra.mrb[0].mxu0 %v7797
    %v7799 = vpop.f32.mrb[0].mxu0
    %v7800 = vadd.f32 %v7696, %v7799
    %v7801 = vpop.f32.mrb[0].mxu0
    %7802 = vmatprep.mubr.f32.mxu0 0.0
    %v7803 = vand.u32 %v7297, 4294901760
    %v7804 = vsub.f32 %v7297, %v7803
    %v7805 = vand.u32 %v7804, 4294901760
    %7806 = vmatmul.mubr.f32.gmra.mrb[0].mxu0 %v7805
    %v7807 = vpop.f32.mrb[0].mxu0
    %v7808 = vadd.f32 %v7703, %v7807
    %v7809 = vpop.f32.mrb[0].mxu0
    %7810 = vdwg.mxu0
    %7811 = vmatprep.subr.mxu0 0.0
    %v7812 = vand.u32 %v7298, 4294901760
    %v7813 = vsub.f32 %v7298, %v7812
    %v7814 = vand.u32 %v7813, 4294901760
    %7815 = vmatpush1.msra.mxu0 %v7814
    %7816 = vmatprep.subr.mxu0 0.0
    %v7817 = vand.u32 %v7299, 4294901760
    %v7818 = vsub.f32 %v7299, %v7817
    %v7819 = vand.u32 %v7818, 4294901760
    %7820 = vmatpush1.msra.mxu0 %v7819
    %7821 = vmatprep.subr.mxu0 0.0
    %v7822 = vand.u32 %v7300, 4294901760
    %v7823 = vsub.f32 %v7300, %v7822
    %v7824 = vand.u32 %v7823, 4294901760
    %7825 = vmatpush1.msra.mxu0 %v7824
    %7826 = vmatprep.subr.mxu0 0.0
    %v7827 = vand.u32 %v7301, 4294901760
    %v7828 = vsub.f32 %v7301, %v7827
    %v7829 = vand.u32 %v7828, 4294901760
    %7830 = vmatpush1.msra.mxu0 %v7829
    %7831 = vmatprep.subr.mxu0 0.0
    %v7832 = vand.u32 %v7302, 4294901760
    %v7833 = vsub.f32 %v7302, %v7832
    %v7834 = vand.u32 %v7833, 4294901760
    %7835 = vmatpush1.msra.mxu0 %v7834
    %7836 = vmatprep.subr.mxu0 0.0
    %v7837 = vand.u32 %v7303, 4294901760
    %v7838 = vsub.f32 %v7303, %v7837
    %v7839 = vand.u32 %v7838, 4294901760
    %7840 = vmatpush1.msra.mxu0 %v7839
    %7841 = vmatprep.subr.mxu0 0.0
    %v7842 = vand.u32 %v7304, 4294901760
    %v7843 = vsub.f32 %v7304, %v7842
    %v7844 = vand.u32 %v7843, 4294901760
    %7845 = vmatpush1.msra.mxu0 %v7844
    %7846 = vmatprep.subr.mxu0 0.0
    %v7847 = vand.u32 %v7305, 4294901760
    %v7848 = vsub.f32 %v7305, %v7847
    %v7849 = vand.u32 %v7848, 4294901760
    %7850 = vmatpush1.msra.mxu0 %v7849
    %7851 = vmatprep.subr.mxu0 0.0
    %v7852 = vand.u32 %v7306, 4294901760
    %v7853 = vsub.f32 %v7306, %v7852
    %v7854 = vand.u32 %v7853, 4294901760
    %7855 = vmatpush1.msra.mxu0 %v7854
    %7856 = vmatprep.subr.mxu0 0.0
    %v7857 = vand.u32 %v7307, 4294901760
    %v7858 = vsub.f32 %v7307, %v7857
    %v7859 = vand.u32 %v7858, 4294901760
    %7860 = vmatpush1.msra.mxu0 %v7859
    %7861 = vmatprep.subr.mxu0 0.0
    %v7862 = vand.u32 %v7308, 4294901760
    %v7863 = vsub.f32 %v7308, %v7862
    %v7864 = vand.u32 %v7863, 4294901760
    %7865 = vmatpush1.msra.mxu0 %v7864
    %7866 = vmatprep.subr.mxu0 0.0
    %v7867 = vand.u32 %v7309, 4294901760
    %v7868 = vsub.f32 %v7309, %v7867
    %v7869 = vand.u32 %v7868, 4294901760
    %7870 = vmatpush1.msra.mxu0 %v7869
    %7871 = vmatprep.subr.mxu0 0.0
    %v7872 = vand.u32 %v7310, 4294901760
    %v7873 = vsub.f32 %v7310, %v7872
    %v7874 = vand.u32 %v7873, 4294901760
    %7875 = vmatpush1.msra.mxu0 %v7874
    %7876 = vmatprep.subr.mxu0 0.0
    %v7877 = vand.u32 %v7311, 4294901760
    %v7878 = vsub.f32 %v7311, %v7877
    %v7879 = vand.u32 %v7878, 4294901760
    %7880 = vmatpush1.msra.mxu0 %v7879
    %7881 = vmatprep.subr.mxu0 0.0
    %v7882 = vand.u32 %v7312, 4294901760
    %v7883 = vsub.f32 %v7312, %v7882
    %v7884 = vand.u32 %v7883, 4294901760
    %7885 = vmatpush1.msra.mxu0 %v7884
    %7886 = vmatprep.subr.mxu0 0.0
    %v7887 = vand.u32 %v7313, 4294901760
    %v7888 = vsub.f32 %v7313, %v7887
    %v7889 = vand.u32 %v7888, 4294901760
    %7890 = vmatpush1.msra.mxu0 %v7889
    %7891 = vmatprep.subr.mxu0 0.0
    %7892 = vmatpush1.msra.mxu0 0.0
    %7893 = vmatprep.subr.mxu0 0.0
    %7894 = vmatpush1.msra.mxu0 0.0
    %7895 = vmatprep.subr.mxu0 0.0
    %7896 = vmatpush1.msra.mxu0 0.0
    %7897 = vmatprep.subr.mxu0 0.0
    %7898 = vmatpush1.msra.mxu0 0.0
    %7899 = vmatprep.subr.mxu0 0.0
    %7900 = vmatpush1.msra.mxu0 0.0
    %7901 = vmatprep.subr.mxu0 0.0
    %7902 = vmatpush1.msra.mxu0 0.0
    %7903 = vmatprep.subr.mxu0 0.0
    %7904 = vmatpush1.msra.mxu0 0.0
    %7905 = vmatprep.subr.mxu0 0.0
    %7906 = vmatpush1.msra.mxu0 0.0
    %7907 = vmatprep.subr.mxu0 0.0
    %7908 = vmatpush1.msra.mxu0 0.0
    %7909 = vmatprep.subr.mxu0 0.0
    %7910 = vmatpush1.msra.mxu0 0.0
    %7911 = vmatprep.subr.mxu0 0.0
    %7912 = vmatpush1.msra.mxu0 0.0
    %7913 = vmatprep.subr.mxu0 0.0
    %7914 = vmatpush1.msra.mxu0 0.0
    %7915 = vmatprep.subr.mxu0 0.0
    %7916 = vmatpush1.msra.mxu0 0.0
    %7917 = vmatprep.subr.mxu0 0.0
    %7918 = vmatpush1.msra.mxu0 0.0
    %7919 = vmatprep.subr.mxu0 0.0
    %7920 = vmatpush1.msra.mxu0 0.0
    %7921 = vmatprep.subr.mxu0 0.0
    %7922 = vmatpush1.msra.mxu0 0.0
    %7923 = vmatprep.mubr.f32.mxu0 0.0
    %v7924 = vand.u32 %v7295, 4294901760
    %7925 = vmatmul.mubr.f32.gmra.mrb[0].mxu0 %v7924
    %v7926 = vpop.f32.mrb[0].mxu0
    %v7927 = vadd.f32 %v7792, %v7926
    %v7928 = vpop.f32.mrb[0].mxu0
    %7929 = vmatprep.mubr.f32.mxu0 0.0
    %v7930 = vand.u32 %v7296, 4294901760
    %7931 = vmatmul.mubr.f32.gmra.mrb[0].mxu0 %v7930
    %v7932 = vpop.f32.mrb[0].mxu0
    %v7933 = vadd.f32 %v7800, %v7932
    %v7934 = vpop.f32.mrb[0].mxu0
    %7935 = vmatprep.mubr.f32.mxu0 0.0
    %v7936 = vand.u32 %v7297, 4294901760
    %7937 = vmatmul.mubr.f32.gmra.mrb[0].mxu0 %v7936
    %v7938 = vpop.f32.mrb[0].mxu0
    %v7939 = vadd.f32 %v7808, %v7938
    %v7940 = vpop.f32.mrb[0].mxu0
    %7941 = vdwg.mxu0
    %7942 = vmatprep.subr.mxu0 0.0
    %v7943 = vand.u32 %v7298, 4294901760
    %7944 = vmatpush1.msra.mxu0 %v7943
    %7945 = vmatprep.subr.mxu0 0.0
    %v7946 = vand.u32 %v7299, 4294901760
    %7947 = vmatpush1.msra.mxu0 %v7946
    %7948 = vmatprep.subr.mxu0 0.0
    %v7949 = vand.u32 %v7300, 4294901760
    %7950 = vmatpush1.msra.mxu0 %v7949
    %7951 = vmatprep.subr.mxu0 0.0
    %v7952 = vand.u32 %v7301, 4294901760
    %7953 = vmatpush1.msra.mxu0 %v7952
    %7954 = vmatprep.subr.mxu0 0.0
    %v7955 = vand.u32 %v7302, 4294901760
    %7956 = vmatpush1.msra.mxu0 %v7955
    %7957 = vmatprep.subr.mxu0 0.0
    %v7958 = vand.u32 %v7303, 4294901760
    %7959 = vmatpush1.msra.mxu0 %v7958
    %7960 = vmatprep.subr.mxu0 0.0
    %v7961 = vand.u32 %v7304, 4294901760
    %7962 = vmatpush1.msra.mxu0 %v7961
    %7963 = vmatprep.subr.mxu0 0.0
    %v7964 = vand.u32 %v7305, 4294901760
    %7965 = vmatpush1.msra.mxu0 %v7964
    %7966 = vmatprep.subr.mxu0 0.0
    %v7967 = vand.u32 %v7306, 4294901760
    %7968 = vmatpush1.msra.mxu0 %v7967
    %7969 = vmatprep.subr.mxu0 0.0
    %v7970 = vand.u32 %v7307, 4294901760
    %7971 = vmatpush1.msra.mxu0 %v7970
    %7972 = vmatprep.subr.mxu0 0.0
    %v7973 = vand.u32 %v7308, 4294901760
    %7974 = vmatpush1.msra.mxu0 %v7973
    %7975 = vmatprep.subr.mxu0 0.0
    %v7976 = vand.u32 %v7309, 4294901760
    %7977 = vmatpush1.msra.mxu0 %v7976
    %7978 = vmatprep.subr.mxu0 0.0
    %v7979 = vand.u32 %v7310, 4294901760
    %7980 = vmatpush1.msra.mxu0 %v7979
    %7981 = vmatprep.subr.mxu0 0.0
    %v7982 = vand.u32 %v7311, 4294901760
    %7983 = vmatpush1.msra.mxu0 %v7982
    %7984 = vmatprep.subr.mxu0 0.0
    %v7985 = vand.u32 %v7312, 4294901760
    %7986 = vmatpush1.msra.mxu0 %v7985
    %7987 = vmatprep.subr.mxu0 0.0
    %v7988 = vand.u32 %v7313, 4294901760
    %7989 = vmatpush1.msra.mxu0 %v7988
    %7990 = vmatprep.subr.mxu0 0.0
    %7991 = vmatpush1.msra.mxu0 0.0
    %7992 = vmatprep.subr.mxu0 0.0
    %7993 = vmatpush1.msra.mxu0 0.0
    %7994 = vmatprep.subr.mxu0 0.0
    %7995 = vmatpush1.msra.mxu0 0.0
    %7996 = vmatprep.subr.mxu0 0.0
    %7997 = vmatpush1.msra.mxu0 0.0
    %7998 = vmatprep.subr.mxu0 0.0
    %7999 = vmatpush1.msra.mxu0 0.0
    %8000 = vmatprep.subr.mxu0 0.0
    %8001 = vmatpush1.msra.mxu0 0.0
    %8002 = vmatprep.subr.mxu0 0.0
    %8003 = vmatpush1.msra.mxu0 0.0
    %8004 = vmatprep.subr.mxu0 0.0
    %8005 = vmatpush1.msra.mxu0 0.0
    %8006 = vmatprep.subr.mxu0 0.0
    %8007 = vmatpush1.msra.mxu0 0.0
    %8008 = vmatprep.subr.mxu0 0.0
    %8009 = vmatpush1.msra.mxu0 0.0
    %8010 = vmatprep.subr.mxu0 0.0
    %8011 = vmatpush1.msra.mxu0 0.0
    %8012 = vmatprep.subr.mxu0 0.0
    %8013 = vmatpush1.msra.mxu0 0.0
    %8014 = vmatprep.subr.mxu0 0.0
    %8015 = vmatpush1.msra.mxu0 0.0
    %8016 = vmatprep.subr.mxu0 0.0
    %8017 = vmatpush1.msra.mxu0 0.0
    %8018 = vmatprep.subr.mxu0 0.0
    %8019 = vmatpush1.msra.mxu0 0.0
    %8020 = vmatprep.subr.mxu0 0.0
    %8021 = vmatpush1.msra.mxu0 0.0
    %8022 = vmatprep.mubr.f32.mxu0 0.0
    %v8023 = vand.u32 %v7295, 4294901760
    %8024 = vmatmul.mubr.f32.gmra.mrb[0].mxu0 %v8023
    %v8025 = vpop.f32.mrb[0].mxu0
    %v8026 = vadd.f32 %v7927, %v8025
    %v8027 = vpop.f32.mrb[0].mxu0
    %8028 = vmatprep.mubr.f32.mxu0 0.0
    %v8029 = vand.u32 %v7296, 4294901760
    %8030 = vmatmul.mubr.f32.gmra.mrb[0].mxu0 %v8029
    %v8031 = vpop.f32.mrb[0].mxu0
    %v8032 = vadd.f32 %v7933, %v8031
    %v8033 = vpop.f32.mrb[0].mxu0
    %8034 = vmatprep.mubr.f32.mxu0 0.0
    %v8035 = vand.u32 %v7297, 4294901760
    %8036 = vmatmul.mubr.f32.gmra.mrb[0].mxu0 %v8035
    %v8037 = vpop.f32.mrb[0].mxu0
    %v8038 = vadd.f32 %v7939, %v8037
    %v8039 = vpop.f32.mrb[0].mxu0
    %8040 = vdwg.mxu0
    %v8041 = vadd.f32 %v4432, %v8026
    %v8042 = vadd.f32 %v4433, %v8032
    %v8043 = vadd.f32 %v4434, %v8038
    %v8044 = vld [vmem:[%s7] sm:$0xff]
    %v8045 = vld [vmem:[%s7 + $0x8] sm:$0xff]
    %v8046 = vld [vmem:[%s7 + $0x10] sm:$0xff]
    %v8047 = vld [vmem:[%s7 + $0x18] sm:$0xff]
    %v8048 = vld [vmem:[%s7 + $0x20] sm:$0xff]
    %v8049 = vld [vmem:[%s7 + $0x28] sm:$0xff]
    %v8050 = vld [vmem:[%s7 + $0x30] sm:$0xff]
    %v8051 = vld [vmem:[%s7 + $0x38] sm:$0xff]
    %v8052 = vld [vmem:[%s7 + $0x40] sm:$0xff]
    %v8053 = vld [vmem:[%s7 + $0x48] sm:$0xff]
    %v8054 = vld [vmem:[%s7 + $0x50] sm:$0xff]
    %v8055 = vld [vmem:[%s7 + $0x58] sm:$0xff]
    %v8056 = vld [vmem:[%s7 + $0x60] sm:$0xff]
    %v8057 = vld [vmem:[%s7 + $0x68] sm:$0xff]
    %v8058 = vld [vmem:[%s7 + $0x70] sm:$0xff]
    %v8059 = vld [vmem:[%s7 + $0x78] sm:$0xff]
    %v8060 = vld [vmem:[%s7 + $0x80] sm:$0xff]
    %v8061 = vld [vmem:[%s7 + $0x88] sm:$0xff]
    %v8062 = vld [vmem:[%s7 + $0x90] sm:$0xff]
    %v8063 = vld [vmem:[%s7 + $0x98] sm:$0xff]
    %v8064 = vld [vmem:[%s7 + $0xa0] sm:$0xff]
    %v8065 = vld [vmem:[%s7 + $0xa8] sm:$0xff]
    %v8066 = vld [vmem:[%s7 + $0xb0] sm:$0xff]
    %v8067 = vld [vmem:[%s7 + $0xb8] sm:$0xff]
    %v8068 = vld [vmem:[%s7 + $0xc0] sm:$0xff]
    %v8069 = vld [vmem:[%s7 + $0xc8] sm:$0xff]
    %v8070 = vld [vmem:[%s7 + $0xd0] sm:$0xff]
    %v8071 = vld [vmem:[%s7 + $0xd8] sm:$0xff]
    %v8072 = vld [vmem:[%s7 + $0xe0] sm:$0xff]
    %v8073 = vld [vmem:[%s7 + $0xe8] sm:$0xff]
    %v8074 = vld [vmem:[%s7 + $0xf0] sm:$0xff]
    %v8075 = vld [vmem:[%s7 + $0xf8] sm:$0xff]
    %v8076 = vld [vmem:[%s7 + $0x100] sm:$0xff]
    %v8077 = vld [vmem:[%s7 + $0x108] sm:$0xff]
    %v8078 = vld [vmem:[%s7 + $0x110] sm:$0xff]
    %v8079 = vld [vmem:[%s7 + $0x118] sm:$0xff]
    %v8080 = vld [vmem:[%s7 + $0x120] sm:$0xff]
    %v8081 = vld [vmem:[%s7 + $0x128] sm:$0xff]
    %v8082 = vld [vmem:[%s7 + $0x130] sm:$0xff]
    %v8083 = vld [vmem:[%s7 + $0x138] sm:$0xff]
    %v8084 = vld [vmem:[%s7 + $0x140] sm:$0xff]
    %v8085 = vld [vmem:[%s7 + $0x148] sm:$0xff]
    %v8086 = vld [vmem:[%s7 + $0x150] sm:$0xff]
    %v8087 = vld [vmem:[%s7 + $0x158] sm:$0xff]
    %v8088 = vld [vmem:[%s7 + $0x160] sm:$0xff]
    %v8089 = vld [vmem:[%s7 + $0x168] sm:$0xff]
    %v8090 = vld [vmem:[%s7 + $0x170] sm:$0xff]
    %v8091 = vld [vmem:[%s7 + $0x178] sm:$0xff]
    %v8092 = vld [vmem:[%s8] sm:$0x1]
    %v8093 = vand.u32 %v8045, 4294901760
    %8094 = vmatprep.subr.mxu0 %v8093
    %v8095 = vand.u32 %v8044, 4294901760
    %8096 = vmatpush1.msra.mxu0 %v8095
    %v8097 = vand.u32 %v8048, 4294901760
    %8098 = vmatprep.subr.mxu0 %v8097
    %v8099 = vand.u32 %v8047, 4294901760
    %8100 = vmatpush1.msra.mxu0 %v8099
    %v8101 = vand.u32 %v8051, 4294901760
    %8102 = vmatprep.subr.mxu0 %v8101
    %v8103 = vand.u32 %v8050, 4294901760
    %8104 = vmatpush1.msra.mxu0 %v8103
    %v8105 = vand.u32 %v8054, 4294901760
    %8106 = vmatprep.subr.mxu0 %v8105
    %v8107 = vand.u32 %v8053, 4294901760
    %8108 = vmatpush1.msra.mxu0 %v8107
    %v8109 = vand.u32 %v8057, 4294901760
    %8110 = vmatprep.subr.mxu0 %v8109
    %v8111 = vand.u32 %v8056, 4294901760
    %8112 = vmatpush1.msra.mxu0 %v8111
    %v8113 = vand.u32 %v8060, 4294901760
    %8114 = vmatprep.subr.mxu0 %v8113
    %v8115 = vand.u32 %v8059, 4294901760
    %8116 = vmatpush1.msra.mxu0 %v8115
    %v8117 = vand.u32 %v8063, 4294901760
    %8118 = vmatprep.subr.mxu0 %v8117
    %v8119 = vand.u32 %v8062, 4294901760
    %8120 = vmatpush1.msra.mxu0 %v8119
    %v8121 = vand.u32 %v8066, 4294901760
    %8122 = vmatprep.subr.mxu0 %v8121
    %v8123 = vand.u32 %v8065, 4294901760
    %8124 = vmatpush1.msra.mxu0 %v8123
    %v8125 = vand.u32 %v8069, 4294901760
    %8126 = vmatprep.subr.mxu0 %v8125
    %v8127 = vand.u32 %v8068, 4294901760
    %8128 = vmatpush1.msra.mxu0 %v8127
    %v8129 = vand.u32 %v8072, 4294901760
    %8130 = vmatprep.subr.mxu0 %v8129
    %v8131 = vand.u32 %v8071, 4294901760
    %8132 = vmatpush1.msra.mxu0 %v8131
    %v8133 = vand.u32 %v8075, 4294901760
    %8134 = vmatprep.subr.mxu0 %v8133
    %v8135 = vand.u32 %v8074, 4294901760
    %8136 = vmatpush1.msra.mxu0 %v8135
    %v8137 = vand.u32 %v8078, 4294901760
    %8138 = vmatprep.subr.mxu0 %v8137
    %v8139 = vand.u32 %v8077, 4294901760
    %8140 = vmatpush1.msra.mxu0 %v8139
    %v8141 = vand.u32 %v8081, 4294901760
    %8142 = vmatprep.subr.mxu0 %v8141
    %v8143 = vand.u32 %v8080, 4294901760
    %8144 = vmatpush1.msra.mxu0 %v8143
    %v8145 = vand.u32 %v8084, 4294901760
    %8146 = vmatprep.subr.mxu0 %v8145
    %v8147 = vand.u32 %v8083, 4294901760
    %8148 = vmatpush1.msra.mxu0 %v8147
    %v8149 = vand.u32 %v8087, 4294901760
    %8150 = vmatprep.subr.mxu0 %v8149
    %v8151 = vand.u32 %v8086, 4294901760
    %8152 = vmatpush1.msra.mxu0 %v8151
    %v8153 = vand.u32 %v8090, 4294901760
    %8154 = vmatprep.subr.mxu0 %v8153
    %v8155 = vand.u32 %v8089, 4294901760
    %8156 = vmatpush1.msra.mxu0 %v8155
    %8157 = vmatprep.subr.mxu0 0.0
    %8158 = vmatpush1.msra.mxu0 0.0
    %8159 = vmatprep.subr.mxu0 0.0
    %8160 = vmatpush1.msra.mxu0 0.0
    %8161 = vmatprep.subr.mxu0 0.0
    %8162 = vmatpush1.msra.mxu0 0.0
    %8163 = vmatprep.subr.mxu0 0.0
    %8164 = vmatpush1.msra.mxu0 0.0
    %8165 = vmatprep.subr.mxu0 0.0
    %8166 = vmatpush1.msra.mxu0 0.0
    %8167 = vmatprep.subr.mxu0 0.0
    %8168 = vmatpush1.msra.mxu0 0.0
    %8169 = vmatprep.subr.mxu0 0.0
    %8170 = vmatpush1.msra.mxu0 0.0
    %8171 = vmatprep.subr.mxu0 0.0
    %8172 = vmatpush1.msra.mxu0 0.0
    %8173 = vmatprep.subr.mxu0 0.0
    %8174 = vmatpush1.msra.mxu0 0.0
    %8175 = vmatprep.subr.mxu0 0.0
    %8176 = vmatpush1.msra.mxu0 0.0
    %8177 = vmatprep.subr.mxu0 0.0
    %8178 = vmatpush1.msra.mxu0 0.0
    %8179 = vmatprep.subr.mxu0 0.0
    %8180 = vmatpush1.msra.mxu0 0.0
    %8181 = vmatprep.subr.mxu0 0.0
    %8182 = vmatpush1.msra.mxu0 0.0
    %8183 = vmatprep.subr.mxu0 0.0
    %8184 = vmatpush1.msra.mxu0 0.0
    %8185 = vmatprep.subr.mxu0 0.0
    %8186 = vmatpush1.msra.mxu0 0.0
    %8187 = vmatprep.subr.mxu0 0.0
    %8188 = vmatpush1.msra.mxu0 0.0
    %8189 = vmatprep.mubr.f32.mxu0 0.0
    %v8190 = vand.u32 %v7295, 4294901760
    %v8191 = vsub.f32 %v7295, %v8190
    %v8192 = vand.u32 %v8191, 4294901760
    %v8193 = vsub.f32 %v8191, %v8192
    %v8194 = vand.u32 %v8193, 4294901760
    %8195 = vmatmul.mubr.f32.gmra.mrb[0].mxu0 %v8194
    %v8196 = vpop.f32.mrb[0].mxu0
    %v8197 = vadd.f32 0.0, %v8196
    %v8198 = vpop.f32.mrb[0].mxu0
    %v8199 = vadd.f32 0.0, %v8198
    %8200 = vmatprep.mubr.f32.mxu0 0.0
    %v8201 = vand.u32 %v7296, 4294901760
    %v8202 = vsub.f32 %v7296, %v8201
    %v8203 = vand.u32 %v8202, 4294901760
    %v8204 = vsub.f32 %v8202, %v8203
    %v8205 = vand.u32 %v8204, 4294901760
    %8206 = vmatmul.mubr.f32.gmra.mrb[0].mxu0 %v8205
    %v8207 = vpop.f32.mrb[0].mxu0
    %v8208 = vadd.f32 0.0, %v8207
    %v8209 = vpop.f32.mrb[0].mxu0
    %v8210 = vadd.f32 0.0, %v8209
    %8211 = vmatprep.mubr.f32.mxu0 0.0
    %v8212 = vand.u32 %v7297, 4294901760
    %v8213 = vsub.f32 %v7297, %v8212
    %v8214 = vand.u32 %v8213, 4294901760
    %v8215 = vsub.f32 %v8213, %v8214
    %v8216 = vand.u32 %v8215, 4294901760
    %8217 = vmatmul.mubr.f32.gmra.mrb[0].mxu0 %v8216
    %v8218 = vpop.f32.mrb[0].mxu0
    %v8219 = vadd.f32 0.0, %v8218
    %v8220 = vpop.f32.mrb[0].mxu0
    %v8221 = vadd.f32 0.0, %v8220
    %8222 = vdwg.mxu0
    %v8223 = vand.u32 %v8045, 4294901760
    %v8224 = vsub.f32 %v8045, %v8223
    %v8225 = vand.u32 %v8224, 4294901760
    %v8226 = vsub.f32 %v8224, %v8225
    %v8227 = vand.u32 %v8226, 4294901760
    %8228 = vmatprep.subr.mxu0 %v8227
    %v8229 = vand.u32 %v8044, 4294901760
    %v8230 = vsub.f32 %v8044, %v8229
    %v8231 = vand.u32 %v8230, 4294901760
    %v8232 = vsub.f32 %v8230, %v8231
    %v8233 = vand.u32 %v8232, 4294901760
    %8234 = vmatpush1.msra.mxu0 %v8233
    %v8235 = vand.u32 %v8048, 4294901760
    %v8236 = vsub.f32 %v8048, %v8235
    %v8237 = vand.u32 %v8236, 4294901760
    %v8238 = vsub.f32 %v8236, %v8237
    %v8239 = vand.u32 %v8238, 4294901760
    %8240 = vmatprep.subr.mxu0 %v8239
    %v8241 = vand.u32 %v8047, 4294901760
    %v8242 = vsub.f32 %v8047, %v8241
    %v8243 = vand.u32 %v8242, 4294901760
    %v8244 = vsub.f32 %v8242, %v8243
    %v8245 = vand.u32 %v8244, 4294901760
    %8246 = vmatpush1.msra.mxu0 %v8245
    %v8247 = vand.u32 %v8051, 4294901760
    %v8248 = vsub.f32 %v8051, %v8247
    %v8249 = vand.u32 %v8248, 4294901760
    %v8250 = vsub.f32 %v8248, %v8249
    %v8251 = vand.u32 %v8250, 4294901760
    %8252 = vmatprep.subr.mxu0 %v8251
    %v8253 = vand.u32 %v8050, 4294901760
    %v8254 = vsub.f32 %v8050, %v8253
    %v8255 = vand.u32 %v8254, 4294901760
    %v8256 = vsub.f32 %v8254, %v8255
    %v8257 = vand.u32 %v8256, 4294901760
    %8258 = vmatpush1.msra.mxu0 %v8257
    %v8259 = vand.u32 %v8054, 4294901760
    %v8260 = vsub.f32 %v8054, %v8259
    %v8261 = vand.u32 %v8260, 4294901760
    %v8262 = vsub.f32 %v8260, %v8261
    %v8263 = vand.u32 %v8262, 4294901760
    %8264 = vmatprep.subr.mxu0 %v8263
    %v8265 = vand.u32 %v8053, 4294901760
    %v8266 = vsub.f32 %v8053, %v8265
    %v8267 = vand.u32 %v8266, 4294901760
    %v8268 = vsub.f32 %v8266, %v8267
    %v8269 = vand.u32 %v8268, 4294901760
    %8270 = vmatpush1.msra.mxu0 %v8269
    %v8271 = vand.u32 %v8057, 4294901760
    %v8272 = vsub.f32 %v8057, %v8271
    %v8273 = vand.u32 %v8272, 4294901760
    %v8274 = vsub.f32 %v8272, %v8273
    %v8275 = vand.u32 %v8274, 4294901760
    %8276 = vmatprep.subr.mxu0 %v8275
    %v8277 = vand.u32 %v8056, 4294901760
    %v8278 = vsub.f32 %v8056, %v8277
    %v8279 = vand.u32 %v8278, 4294901760
    %v8280 = vsub.f32 %v8278, %v8279
    %v8281 = vand.u32 %v8280, 4294901760
    %8282 = vmatpush1.msra.mxu0 %v8281
    %v8283 = vand.u32 %v8060, 4294901760
    %v8284 = vsub.f32 %v8060, %v8283
    %v8285 = vand.u32 %v8284, 4294901760
    %v8286 = vsub.f32 %v8284, %v8285
    %v8287 = vand.u32 %v8286, 4294901760
    %8288 = vmatprep.subr.mxu0 %v8287
    %v8289 = vand.u32 %v8059, 4294901760
    %v8290 = vsub.f32 %v8059, %v8289
    %v8291 = vand.u32 %v8290, 4294901760
    %v8292 = vsub.f32 %v8290, %v8291
    %v8293 = vand.u32 %v8292, 4294901760
    %8294 = vmatpush1.msra.mxu0 %v8293
    %v8295 = vand.u32 %v8063, 4294901760
    %v8296 = vsub.f32 %v8063, %v8295
    %v8297 = vand.u32 %v8296, 4294901760
    %v8298 = vsub.f32 %v8296, %v8297
    %v8299 = vand.u32 %v8298, 4294901760
    %8300 = vmatprep.subr.mxu0 %v8299
    %v8301 = vand.u32 %v8062, 4294901760
    %v8302 = vsub.f32 %v8062, %v8301
    %v8303 = vand.u32 %v8302, 4294901760
    %v8304 = vsub.f32 %v8302, %v8303
    %v8305 = vand.u32 %v8304, 4294901760
    %8306 = vmatpush1.msra.mxu0 %v8305
    %v8307 = vand.u32 %v8066, 4294901760
    %v8308 = vsub.f32 %v8066, %v8307
    %v8309 = vand.u32 %v8308, 4294901760
    %v8310 = vsub.f32 %v8308, %v8309
    %v8311 = vand.u32 %v8310, 4294901760
    %8312 = vmatprep.subr.mxu0 %v8311
    %v8313 = vand.u32 %v8065, 4294901760
    %v8314 = vsub.f32 %v8065, %v8313
    %v8315 = vand.u32 %v8314, 4294901760
    %v8316 = vsub.f32 %v8314, %v8315
    %v8317 = vand.u32 %v8316, 4294901760
    %8318 = vmatpush1.msra.mxu0 %v8317
    %v8319 = vand.u32 %v8069, 4294901760
    %v8320 = vsub.f32 %v8069, %v8319
    %v8321 = vand.u32 %v8320, 4294901760
    %v8322 = vsub.f32 %v8320, %v8321
    %v8323 = vand.u32 %v8322, 4294901760
    %8324 = vmatprep.subr.mxu0 %v8323
    %v8325 = vand.u32 %v8068, 4294901760
    %v8326 = vsub.f32 %v8068, %v8325
    %v8327 = vand.u32 %v8326, 4294901760
    %v8328 = vsub.f32 %v8326, %v8327
    %v8329 = vand.u32 %v8328, 4294901760
    %8330 = vmatpush1.msra.mxu0 %v8329
    %v8331 = vand.u32 %v8072, 4294901760
    %v8332 = vsub.f32 %v8072, %v8331
    %v8333 = vand.u32 %v8332, 4294901760
    %v8334 = vsub.f32 %v8332, %v8333
    %v8335 = vand.u32 %v8334, 4294901760
    %8336 = vmatprep.subr.mxu0 %v8335
    %v8337 = vand.u32 %v8071, 4294901760
    %v8338 = vsub.f32 %v8071, %v8337
    %v8339 = vand.u32 %v8338, 4294901760
    %v8340 = vsub.f32 %v8338, %v8339
    %v8341 = vand.u32 %v8340, 4294901760
    %8342 = vmatpush1.msra.mxu0 %v8341
    %v8343 = vand.u32 %v8075, 4294901760
    %v8344 = vsub.f32 %v8075, %v8343
    %v8345 = vand.u32 %v8344, 4294901760
    %v8346 = vsub.f32 %v8344, %v8345
    %v8347 = vand.u32 %v8346, 4294901760
    %8348 = vmatprep.subr.mxu0 %v8347
    %v8349 = vand.u32 %v8074, 4294901760
    %v8350 = vsub.f32 %v8074, %v8349
    %v8351 = vand.u32 %v8350, 4294901760
    %v8352 = vsub.f32 %v8350, %v8351
    %v8353 = vand.u32 %v8352, 4294901760
    %8354 = vmatpush1.msra.mxu0 %v8353
    %v8355 = vand.u32 %v8078, 4294901760
    %v8356 = vsub.f32 %v8078, %v8355
    %v8357 = vand.u32 %v8356, 4294901760
    %v8358 = vsub.f32 %v8356, %v8357
    %v8359 = vand.u32 %v8358, 4294901760
    %8360 = vmatprep.subr.mxu0 %v8359
    %v8361 = vand.u32 %v8077, 4294901760
    %v8362 = vsub.f32 %v8077, %v8361
    %v8363 = vand.u32 %v8362, 4294901760
    %v8364 = vsub.f32 %v8362, %v8363
    %v8365 = vand.u32 %v8364, 4294901760
    %8366 = vmatpush1.msra.mxu0 %v8365
    %v8367 = vand.u32 %v8081, 4294901760
    %v8368 = vsub.f32 %v8081, %v8367
    %v8369 = vand.u32 %v8368, 4294901760
    %v8370 = vsub.f32 %v8368, %v8369
    %v8371 = vand.u32 %v8370, 4294901760
    %8372 = vmatprep.subr.mxu0 %v8371
    %v8373 = vand.u32 %v8080, 4294901760
    %v8374 = vsub.f32 %v8080, %v8373
    %v8375 = vand.u32 %v8374, 4294901760
    %v8376 = vsub.f32 %v8374, %v8375
    %v8377 = vand.u32 %v8376, 4294901760
    %8378 = vmatpush1.msra.mxu0 %v8377
    %v8379 = vand.u32 %v8084, 4294901760
    %v8380 = vsub.f32 %v8084, %v8379
    %v8381 = vand.u32 %v8380, 4294901760
    %v8382 = vsub.f32 %v8380, %v8381
    %v8383 = vand.u32 %v8382, 4294901760
    %8384 = vmatprep.subr.mxu0 %v8383
    %v8385 = vand.u32 %v8083, 4294901760
    %v8386 = vsub.f32 %v8083, %v8385
    %v8387 = vand.u32 %v8386, 4294901760
    %v8388 = vsub.f32 %v8386, %v8387
    %v8389 = vand.u32 %v8388, 4294901760
    %8390 = vmatpush1.msra.mxu0 %v8389
    %v8391 = vand.u32 %v8087, 4294901760
    %v8392 = vsub.f32 %v8087, %v8391
    %v8393 = vand.u32 %v8392, 4294901760
    %v8394 = vsub.f32 %v8392, %v8393
    %v8395 = vand.u32 %v8394, 4294901760
    %8396 = vmatprep.subr.mxu0 %v8395
    %v8397 = vand.u32 %v8086, 4294901760
    %v8398 = vsub.f32 %v8086, %v8397
    %v8399 = vand.u32 %v8398, 4294901760
    %v8400 = vsub.f32 %v8398, %v8399
    %v8401 = vand.u32 %v8400, 4294901760
    %8402 = vmatpush1.msra.mxu0 %v8401
    %v8403 = vand.u32 %v8090, 4294901760
    %v8404 = vsub.f32 %v8090, %v8403
    %v8405 = vand.u32 %v8404, 4294901760
    %v8406 = vsub.f32 %v8404, %v8405
    %v8407 = vand.u32 %v8406, 4294901760
    %8408 = vmatprep.subr.mxu0 %v8407
    %v8409 = vand.u32 %v8089, 4294901760
    %v8410 = vsub.f32 %v8089, %v8409
    %v8411 = vand.u32 %v8410, 4294901760
    %v8412 = vsub.f32 %v8410, %v8411
    %v8413 = vand.u32 %v8412, 4294901760
    %8414 = vmatpush1.msra.mxu0 %v8413
    %8415 = vmatprep.subr.mxu0 0.0
    %8416 = vmatpush1.msra.mxu0 0.0
    %8417 = vmatprep.subr.mxu0 0.0
    %8418 = vmatpush1.msra.mxu0 0.0
    %8419 = vmatprep.subr.mxu0 0.0
    %8420 = vmatpush1.msra.mxu0 0.0
    %8421 = vmatprep.subr.mxu0 0.0
    %8422 = vmatpush1.msra.mxu0 0.0
    %8423 = vmatprep.subr.mxu0 0.0
    %8424 = vmatpush1.msra.mxu0 0.0
    %8425 = vmatprep.subr.mxu0 0.0
    %8426 = vmatpush1.msra.mxu0 0.0
    %8427 = vmatprep.subr.mxu0 0.0
    %8428 = vmatpush1.msra.mxu0 0.0
    %8429 = vmatprep.subr.mxu0 0.0
    %8430 = vmatpush1.msra.mxu0 0.0
    %8431 = vmatprep.subr.mxu0 0.0
    %8432 = vmatpush1.msra.mxu0 0.0
    %8433 = vmatprep.subr.mxu0 0.0
    %8434 = vmatpush1.msra.mxu0 0.0
    %8435 = vmatprep.subr.mxu0 0.0
    %8436 = vmatpush1.msra.mxu0 0.0
    %8437 = vmatprep.subr.mxu0 0.0
    %8438 = vmatpush1.msra.mxu0 0.0
    %8439 = vmatprep.subr.mxu0 0.0
    %8440 = vmatpush1.msra.mxu0 0.0
    %8441 = vmatprep.subr.mxu0 0.0
    %8442 = vmatpush1.msra.mxu0 0.0
    %8443 = vmatprep.subr.mxu0 0.0
    %8444 = vmatpush1.msra.mxu0 0.0
    %8445 = vmatprep.subr.mxu0 0.0
    %8446 = vmatpush1.msra.mxu0 0.0
    %8447 = vmatprep.mubr.f32.mxu0 0.0
    %v8448 = vand.u32 %v7295, 4294901760
    %8449 = vmatmul.mubr.f32.gmra.mrb[0].mxu0 %v8448
    %v8450 = vpop.f32.mrb[0].mxu0
    %v8451 = vadd.f32 %v8197, %v8450
    %v8452 = vpop.f32.mrb[0].mxu0
    %v8453 = vadd.f32 %v8199, %v8452
    %8454 = vmatprep.mubr.f32.mxu0 0.0
    %v8455 = vand.u32 %v7296, 4294901760
    %8456 = vmatmul.mubr.f32.gmra.mrb[0].mxu0 %v8455
    %v8457 = vpop.f32.mrb[0].mxu0
    %v8458 = vadd.f32 %v8208, %v8457
    %v8459 = vpop.f32.mrb[0].mxu0
    %v8460 = vadd.f32 %v8210, %v8459
    %8461 = vmatprep.mubr.f32.mxu0 0.0
    %v8462 = vand.u32 %v7297, 4294901760
    %8463 = vmatmul.mubr.f32.gmra.mrb[0].mxu0 %v8462
    %v8464 = vpop.f32.mrb[0].mxu0
    %v8465 = vadd.f32 %v8219, %v8464
    %v8466 = vpop.f32.mrb[0].mxu0
    %v8467 = vadd.f32 %v8221, %v8466
    %8468 = vdwg.mxu0
    %v8469 = vand.u32 %v8045, 4294901760
    %v8470 = vsub.f32 %v8045, %v8469
    %8471 = vmatprep.subr.mxu0 %v8470
    %v8472 = vand.u32 %v8044, 4294901760
    %v8473 = vsub.f32 %v8044, %v8472
    %8474 = vmatpush1.msra.mxu0 %v8473
    %v8475 = vand.u32 %v8048, 4294901760
    %v8476 = vsub.f32 %v8048, %v8475
    %8477 = vmatprep.subr.mxu0 %v8476
    %v8478 = vand.u32 %v8047, 4294901760
    %v8479 = vsub.f32 %v8047, %v8478
    %8480 = vmatpush1.msra.mxu0 %v8479
    %v8481 = vand.u32 %v8051, 4294901760
    %v8482 = vsub.f32 %v8051, %v8481
    %8483 = vmatprep.subr.mxu0 %v8482
    %v8484 = vand.u32 %v8050, 4294901760
    %v8485 = vsub.f32 %v8050, %v8484
    %8486 = vmatpush1.msra.mxu0 %v8485
    %v8487 = vand.u32 %v8054, 4294901760
    %v8488 = vsub.f32 %v8054, %v8487
    %8489 = vmatprep.subr.mxu0 %v8488
    %v8490 = vand.u32 %v8053, 4294901760
    %v8491 = vsub.f32 %v8053, %v8490
    %8492 = vmatpush1.msra.mxu0 %v8491
    %v8493 = vand.u32 %v8057, 4294901760
    %v8494 = vsub.f32 %v8057, %v8493
    %8495 = vmatprep.subr.mxu0 %v8494
    %v8496 = vand.u32 %v8056, 4294901760
    %v8497 = vsub.f32 %v8056, %v8496
    %8498 = vmatpush1.msra.mxu0 %v8497
    %v8499 = vand.u32 %v8060, 4294901760
    %v8500 = vsub.f32 %v8060, %v8499
    %8501 = vmatprep.subr.mxu0 %v8500
    %v8502 = vand.u32 %v8059, 4294901760
    %v8503 = vsub.f32 %v8059, %v8502
    %8504 = vmatpush1.msra.mxu0 %v8503
    %v8505 = vand.u32 %v8063, 4294901760
    %v8506 = vsub.f32 %v8063, %v8505
    %8507 = vmatprep.subr.mxu0 %v8506
    %v8508 = vand.u32 %v8062, 4294901760
    %v8509 = vsub.f32 %v8062, %v8508
    %8510 = vmatpush1.msra.mxu0 %v8509
    %v8511 = vand.u32 %v8066, 4294901760
    %v8512 = vsub.f32 %v8066, %v8511
    %8513 = vmatprep.subr.mxu0 %v8512
    %v8514 = vand.u32 %v8065, 4294901760
    %v8515 = vsub.f32 %v8065, %v8514
    %8516 = vmatpush1.msra.mxu0 %v8515
    %v8517 = vand.u32 %v8069, 4294901760
    %v8518 = vsub.f32 %v8069, %v8517
    %8519 = vmatprep.subr.mxu0 %v8518
    %v8520 = vand.u32 %v8068, 4294901760
    %v8521 = vsub.f32 %v8068, %v8520
    %8522 = vmatpush1.msra.mxu0 %v8521
    %v8523 = vand.u32 %v8072, 4294901760
    %v8524 = vsub.f32 %v8072, %v8523
    %8525 = vmatprep.subr.mxu0 %v8524
    %v8526 = vand.u32 %v8071, 4294901760
    %v8527 = vsub.f32 %v8071, %v8526
    %8528 = vmatpush1.msra.mxu0 %v8527
    %v8529 = vand.u32 %v8075, 4294901760
    %v8530 = vsub.f32 %v8075, %v8529
    %8531 = vmatprep.subr.mxu0 %v8530
    %v8532 = vand.u32 %v8074, 4294901760
    %v8533 = vsub.f32 %v8074, %v8532
    %8534 = vmatpush1.msra.mxu0 %v8533
    %v8535 = vand.u32 %v8078, 4294901760
    %v8536 = vsub.f32 %v8078, %v8535
    %8537 = vmatprep.subr.mxu0 %v8536
    %v8538 = vand.u32 %v8077, 4294901760
    %v8539 = vsub.f32 %v8077, %v8538
    %8540 = vmatpush1.msra.mxu0 %v8539
    %v8541 = vand.u32 %v8081, 4294901760
    %v8542 = vsub.f32 %v8081, %v8541
    %8543 = vmatprep.subr.mxu0 %v8542
    %v8544 = vand.u32 %v8080, 4294901760
    %v8545 = vsub.f32 %v8080, %v8544
    %8546 = vmatpush1.msra.mxu0 %v8545
    %v8547 = vand.u32 %v8084, 4294901760
    %v8548 = vsub.f32 %v8084, %v8547
    %8549 = vmatprep.subr.mxu0 %v8548
    %v8550 = vand.u32 %v8083, 4294901760
    %v8551 = vsub.f32 %v8083, %v8550
    %8552 = vmatpush1.msra.mxu0 %v8551
    %v8553 = vand.u32 %v8087, 4294901760
    %v8554 = vsub.f32 %v8087, %v8553
    %8555 = vmatprep.subr.mxu0 %v8554
    %v8556 = vand.u32 %v8086, 4294901760
    %v8557 = vsub.f32 %v8086, %v8556
    %8558 = vmatpush1.msra.mxu0 %v8557
    %v8559 = vand.u32 %v8090, 4294901760
    %v8560 = vsub.f32 %v8090, %v8559
    %8561 = vmatprep.subr.mxu0 %v8560
    %v8562 = vand.u32 %v8089, 4294901760
    %v8563 = vsub.f32 %v8089, %v8562
    %8564 = vmatpush1.msra.mxu0 %v8563
    %8565 = vmatprep.subr.mxu0 0.0
    %8566 = vmatpush1.msra.mxu0 0.0
    %8567 = vmatprep.subr.mxu0 0.0
    %8568 = vmatpush1.msra.mxu0 0.0
    %8569 = vmatprep.subr.mxu0 0.0
    %8570 = vmatpush1.msra.mxu0 0.0
    %8571 = vmatprep.subr.mxu0 0.0
    %8572 = vmatpush1.msra.mxu0 0.0
    %8573 = vmatprep.subr.mxu0 0.0
    %8574 = vmatpush1.msra.mxu0 0.0
    %8575 = vmatprep.subr.mxu0 0.0
    %8576 = vmatpush1.msra.mxu0 0.0
    %8577 = vmatprep.subr.mxu0 0.0
    %8578 = vmatpush1.msra.mxu0 0.0
    %8579 = vmatprep.subr.mxu0 0.0
    %8580 = vmatpush1.msra.mxu0 0.0
    %8581 = vmatprep.subr.mxu0 0.0
    %8582 = vmatpush1.msra.mxu0 0.0
    %8583 = vmatprep.subr.mxu0 0.0
    %8584 = vmatpush1.msra.mxu0 0.0
    %8585 = vmatprep.subr.mxu0 0.0
    %8586 = vmatpush1.msra.mxu0 0.0
    %8587 = vmatprep.subr.mxu0 0.0
    %8588 = vmatpush1.msra.mxu0 0.0
    %8589 = vmatprep.subr.mxu0 0.0
    %8590 = vmatpush1.msra.mxu0 0.0
    %8591 = vmatprep.subr.mxu0 0.0
    %8592 = vmatpush1.msra.mxu0 0.0
    %8593 = vmatprep.subr.mxu0 0.0
    %8594 = vmatpush1.msra.mxu0 0.0
    %8595 = vmatprep.subr.mxu0 0.0
    %8596 = vmatpush1.msra.mxu0 0.0
    %8597 = vmatprep.mubr.f32.mxu0 0.0
    %v8598 = vand.u32 %v7295, 4294901760
    %v8599 = vsub.f32 %v7295, %v8598
    %8600 = vmatmul.mubr.f32.gmra.mrb[0].mxu0 %v8599
    %v8601 = vpop.f32.mrb[0].mxu0
    %v8602 = vadd.f32 %v8451, %v8601
    %v8603 = vpop.f32.mrb[0].mxu0
    %v8604 = vadd.f32 %v8453, %v8603
    %8605 = vmatprep.mubr.f32.mxu0 0.0
    %v8606 = vand.u32 %v7296, 4294901760
    %v8607 = vsub.f32 %v7296, %v8606
    %8608 = vmatmul.mubr.f32.gmra.mrb[0].mxu0 %v8607
    %v8609 = vpop.f32.mrb[0].mxu0
    %v8610 = vadd.f32 %v8458, %v8609
    %v8611 = vpop.f32.mrb[0].mxu0
    %v8612 = vadd.f32 %v8460, %v8611
    %8613 = vmatprep.mubr.f32.mxu0 0.0
    %v8614 = vand.u32 %v7297, 4294901760
    %v8615 = vsub.f32 %v7297, %v8614
    %8616 = vmatmul.mubr.f32.gmra.mrb[0].mxu0 %v8615
    %v8617 = vpop.f32.mrb[0].mxu0
    %v8618 = vadd.f32 %v8465, %v8617
    %v8619 = vpop.f32.mrb[0].mxu0
    %v8620 = vadd.f32 %v8467, %v8619
    %8621 = vdwg.mxu0
    %v8622 = vand.u32 %v8045, 4294901760
    %8623 = vmatprep.subr.mxu0 %v8622
    %v8624 = vand.u32 %v8044, 4294901760
    %8625 = vmatpush1.msra.mxu0 %v8624
    %v8626 = vand.u32 %v8048, 4294901760
    %8627 = vmatprep.subr.mxu0 %v8626
    %v8628 = vand.u32 %v8047, 4294901760
    %8629 = vmatpush1.msra.mxu0 %v8628
    %v8630 = vand.u32 %v8051, 4294901760
    %8631 = vmatprep.subr.mxu0 %v8630
    %v8632 = vand.u32 %v8050, 4294901760
    %8633 = vmatpush1.msra.mxu0 %v8632
    %v8634 = vand.u32 %v8054, 4294901760
    %8635 = vmatprep.subr.mxu0 %v8634
    %v8636 = vand.u32 %v8053, 4294901760
    %8637 = vmatpush1.msra.mxu0 %v8636
    %v8638 = vand.u32 %v8057, 4294901760
    %8639 = vmatprep.subr.mxu0 %v8638
    %v8640 = vand.u32 %v8056, 4294901760
    %8641 = vmatpush1.msra.mxu0 %v8640
    %v8642 = vand.u32 %v8060, 4294901760
    %8643 = vmatprep.subr.mxu0 %v8642
    %v8644 = vand.u32 %v8059, 4294901760
    %8645 = vmatpush1.msra.mxu0 %v8644
    %v8646 = vand.u32 %v8063, 4294901760
    %8647 = vmatprep.subr.mxu0 %v8646
    %v8648 = vand.u32 %v8062, 4294901760
    %8649 = vmatpush1.msra.mxu0 %v8648
    %v8650 = vand.u32 %v8066, 4294901760
    %8651 = vmatprep.subr.mxu0 %v8650
    %v8652 = vand.u32 %v8065, 4294901760
    %8653 = vmatpush1.msra.mxu0 %v8652
    %v8654 = vand.u32 %v8069, 4294901760
    %8655 = vmatprep.subr.mxu0 %v8654
    %v8656 = vand.u32 %v8068, 4294901760
    %8657 = vmatpush1.msra.mxu0 %v8656
    %v8658 = vand.u32 %v8072, 4294901760
    %8659 = vmatprep.subr.mxu0 %v8658
    %v8660 = vand.u32 %v8071, 4294901760
    %8661 = vmatpush1.msra.mxu0 %v8660
    %v8662 = vand.u32 %v8075, 4294901760
    %8663 = vmatprep.subr.mxu0 %v8662
    %v8664 = vand.u32 %v8074, 4294901760
    %8665 = vmatpush1.msra.mxu0 %v8664
    %v8666 = vand.u32 %v8078, 4294901760
    %8667 = vmatprep.subr.mxu0 %v8666
    %v8668 = vand.u32 %v8077, 4294901760
    %8669 = vmatpush1.msra.mxu0 %v8668
    %v8670 = vand.u32 %v8081, 4294901760
    %8671 = vmatprep.subr.mxu0 %v8670
    %v8672 = vand.u32 %v8080, 4294901760
    %8673 = vmatpush1.msra.mxu0 %v8672
    %v8674 = vand.u32 %v8084, 4294901760
    %8675 = vmatprep.subr.mxu0 %v8674
    %v8676 = vand.u32 %v8083, 4294901760
    %8677 = vmatpush1.msra.mxu0 %v8676
    %v8678 = vand.u32 %v8087, 4294901760
    %8679 = vmatprep.subr.mxu0 %v8678
    %v8680 = vand.u32 %v8086, 4294901760
    %8681 = vmatpush1.msra.mxu0 %v8680
    %v8682 = vand.u32 %v8090, 4294901760
    %8683 = vmatprep.subr.mxu0 %v8682
    %v8684 = vand.u32 %v8089, 4294901760
    %8685 = vmatpush1.msra.mxu0 %v8684
    %8686 = vmatprep.subr.mxu0 0.0
    %8687 = vmatpush1.msra.mxu0 0.0
    %8688 = vmatprep.subr.mxu0 0.0
    %8689 = vmatpush1.msra.mxu0 0.0
    %8690 = vmatprep.subr.mxu0 0.0
    %8691 = vmatpush1.msra.mxu0 0.0
    %8692 = vmatprep.subr.mxu0 0.0
    %8693 = vmatpush1.msra.mxu0 0.0
    %8694 = vmatprep.subr.mxu0 0.0
    %8695 = vmatpush1.msra.mxu0 0.0
    %8696 = vmatprep.subr.mxu0 0.0
    %8697 = vmatpush1.msra.mxu0 0.0
    %8698 = vmatprep.subr.mxu0 0.0
    %8699 = vmatpush1.msra.mxu0 0.0
    %8700 = vmatprep.subr.mxu0 0.0
    %8701 = vmatpush1.msra.mxu0 0.0
    %8702 = vmatprep.subr.mxu0 0.0
    %8703 = vmatpush1.msra.mxu0 0.0
    %8704 = vmatprep.subr.mxu0 0.0
    %8705 = vmatpush1.msra.mxu0 0.0
    %8706 = vmatprep.subr.mxu0 0.0
    %8707 = vmatpush1.msra.mxu0 0.0
    %8708 = vmatprep.subr.mxu0 0.0
    %8709 = vmatpush1.msra.mxu0 0.0
    %8710 = vmatprep.subr.mxu0 0.0
    %8711 = vmatpush1.msra.mxu0 0.0
    %8712 = vmatprep.subr.mxu0 0.0
    %8713 = vmatpush1.msra.mxu0 0.0
    %8714 = vmatprep.subr.mxu0 0.0
    %8715 = vmatpush1.msra.mxu0 0.0
    %8716 = vmatprep.subr.mxu0 0.0
    %8717 = vmatpush1.msra.mxu0 0.0
    %8718 = vmatprep.mubr.f32.mxu0 0.0
    %v8719 = vand.u32 %v7295, 4294901760
    %v8720 = vsub.f32 %v7295, %v8719
    %v8721 = vand.u32 %v8720, 4294901760
    %8722 = vmatmul.mubr.f32.gmra.mrb[0].mxu0 %v8721
    %v8723 = vpop.f32.mrb[0].mxu0
    %v8724 = vadd.f32 %v8602, %v8723
    %v8725 = vpop.f32.mrb[0].mxu0
    %v8726 = vadd.f32 %v8604, %v8725
    %8727 = vmatprep.mubr.f32.mxu0 0.0
    %v8728 = vand.u32 %v7296, 4294901760
    %v8729 = vsub.f32 %v7296, %v8728
    %v8730 = vand.u32 %v8729, 4294901760
    %8731 = vmatmul.mubr.f32.gmra.mrb[0].mxu0 %v8730
    %v8732 = vpop.f32.mrb[0].mxu0
    %v8733 = vadd.f32 %v8610, %v8732
    %v8734 = vpop.f32.mrb[0].mxu0
    %v8735 = vadd.f32 %v8612, %v8734
    %8736 = vmatprep.mubr.f32.mxu0 0.0
    %v8737 = vand.u32 %v7297, 4294901760
    %v8738 = vsub.f32 %v7297, %v8737
    %v8739 = vand.u32 %v8738, 4294901760
    %8740 = vmatmul.mubr.f32.gmra.mrb[0].mxu0 %v8739
    %v8741 = vpop.f32.mrb[0].mxu0
    %v8742 = vadd.f32 %v8618, %v8741
    %v8743 = vpop.f32.mrb[0].mxu0
    %v8744 = vadd.f32 %v8620, %v8743
    %8745 = vdwg.mxu0
    %v8746 = vand.u32 %v8045, 4294901760
    %v8747 = vsub.f32 %v8045, %v8746
    %v8748 = vand.u32 %v8747, 4294901760
    %8749 = vmatprep.subr.mxu0 %v8748
    %v8750 = vand.u32 %v8044, 4294901760
    %v8751 = vsub.f32 %v8044, %v8750
    %v8752 = vand.u32 %v8751, 4294901760
    %8753 = vmatpush1.msra.mxu0 %v8752
    %v8754 = vand.u32 %v8048, 4294901760
    %v8755 = vsub.f32 %v8048, %v8754
    %v8756 = vand.u32 %v8755, 4294901760
    %8757 = vmatprep.subr.mxu0 %v8756
    %v8758 = vand.u32 %v8047, 4294901760
    %v8759 = vsub.f32 %v8047, %v8758
    %v8760 = vand.u32 %v8759, 4294901760
    %8761 = vmatpush1.msra.mxu0 %v8760
    %v8762 = vand.u32 %v8051, 4294901760
    %v8763 = vsub.f32 %v8051, %v8762
    %v8764 = vand.u32 %v8763, 4294901760
    %8765 = vmatprep.subr.mxu0 %v8764
    %v8766 = vand.u32 %v8050, 4294901760
    %v8767 = vsub.f32 %v8050, %v8766
    %v8768 = vand.u32 %v8767, 4294901760
    %8769 = vmatpush1.msra.mxu0 %v8768
    %v8770 = vand.u32 %v8054, 4294901760
    %v8771 = vsub.f32 %v8054, %v8770
    %v8772 = vand.u32 %v8771, 4294901760
    %8773 = vmatprep.subr.mxu0 %v8772
    %v8774 = vand.u32 %v8053, 4294901760
    %v8775 = vsub.f32 %v8053, %v8774
    %v8776 = vand.u32 %v8775, 4294901760
    %8777 = vmatpush1.msra.mxu0 %v8776
    %v8778 = vand.u32 %v8057, 4294901760
    %v8779 = vsub.f32 %v8057, %v8778
    %v8780 = vand.u32 %v8779, 4294901760
    %8781 = vmatprep.subr.mxu0 %v8780
    %v8782 = vand.u32 %v8056, 4294901760
    %v8783 = vsub.f32 %v8056, %v8782
    %v8784 = vand.u32 %v8783, 4294901760
    %8785 = vmatpush1.msra.mxu0 %v8784
    %v8786 = vand.u32 %v8060, 4294901760
    %v8787 = vsub.f32 %v8060, %v8786
    %v8788 = vand.u32 %v8787, 4294901760
    %8789 = vmatprep.subr.mxu0 %v8788
    %v8790 = vand.u32 %v8059, 4294901760
    %v8791 = vsub.f32 %v8059, %v8790
    %v8792 = vand.u32 %v8791, 4294901760
    %8793 = vmatpush1.msra.mxu0 %v8792
    %v8794 = vand.u32 %v8063, 4294901760
    %v8795 = vsub.f32 %v8063, %v8794
    %v8796 = vand.u32 %v8795, 4294901760
    %8797 = vmatprep.subr.mxu0 %v8796
    %v8798 = vand.u32 %v8062, 4294901760
    %v8799 = vsub.f32 %v8062, %v8798
    %v8800 = vand.u32 %v8799, 4294901760
    %8801 = vmatpush1.msra.mxu0 %v8800
    %v8802 = vand.u32 %v8066, 4294901760
    %v8803 = vsub.f32 %v8066, %v8802
    %v8804 = vand.u32 %v8803, 4294901760
    %8805 = vmatprep.subr.mxu0 %v8804
    %v8806 = vand.u32 %v8065, 4294901760
    %v8807 = vsub.f32 %v8065, %v8806
    %v8808 = vand.u32 %v8807, 4294901760
    %8809 = vmatpush1.msra.mxu0 %v8808
    %v8810 = vand.u32 %v8069, 4294901760
    %v8811 = vsub.f32 %v8069, %v8810
    %v8812 = vand.u32 %v8811, 4294901760
    %8813 = vmatprep.subr.mxu0 %v8812
    %v8814 = vand.u32 %v8068, 4294901760
    %v8815 = vsub.f32 %v8068, %v8814
    %v8816 = vand.u32 %v8815, 4294901760
    %8817 = vmatpush1.msra.mxu0 %v8816
    %v8818 = vand.u32 %v8072, 4294901760
    %v8819 = vsub.f32 %v8072, %v8818
    %v8820 = vand.u32 %v8819, 4294901760
    %8821 = vmatprep.subr.mxu0 %v8820
    %v8822 = vand.u32 %v8071, 4294901760
    %v8823 = vsub.f32 %v8071, %v8822
    %v8824 = vand.u32 %v8823, 4294901760
    %8825 = vmatpush1.msra.mxu0 %v8824
    %v8826 = vand.u32 %v8075, 4294901760
    %v8827 = vsub.f32 %v8075, %v8826
    %v8828 = vand.u32 %v8827, 4294901760
    %8829 = vmatprep.subr.mxu0 %v8828
    %v8830 = vand.u32 %v8074, 4294901760
    %v8831 = vsub.f32 %v8074, %v8830
    %v8832 = vand.u32 %v8831, 4294901760
    %8833 = vmatpush1.msra.mxu0 %v8832
    %v8834 = vand.u32 %v8078, 4294901760
    %v8835 = vsub.f32 %v8078, %v8834
    %v8836 = vand.u32 %v8835, 4294901760
    %8837 = vmatprep.subr.mxu0 %v8836
    %v8838 = vand.u32 %v8077, 4294901760
    %v8839 = vsub.f32 %v8077, %v8838
    %v8840 = vand.u32 %v8839, 4294901760
    %8841 = vmatpush1.msra.mxu0 %v8840
    %v8842 = vand.u32 %v8081, 4294901760
    %v8843 = vsub.f32 %v8081, %v8842
    %v8844 = vand.u32 %v8843, 4294901760
    %8845 = vmatprep.subr.mxu0 %v8844
    %v8846 = vand.u32 %v8080, 4294901760
    %v8847 = vsub.f32 %v8080, %v8846
    %v8848 = vand.u32 %v8847, 4294901760
    %8849 = vmatpush1.msra.mxu0 %v8848
    %v8850 = vand.u32 %v8084, 4294901760
    %v8851 = vsub.f32 %v8084, %v8850
    %v8852 = vand.u32 %v8851, 4294901760
    %8853 = vmatprep.subr.mxu0 %v8852
    %v8854 = vand.u32 %v8083, 4294901760
    %v8855 = vsub.f32 %v8083, %v8854
    %v8856 = vand.u32 %v8855, 4294901760
    %8857 = vmatpush1.msra.mxu0 %v8856
    %v8858 = vand.u32 %v8087, 4294901760
    %v8859 = vsub.f32 %v8087, %v8858
    %v8860 = vand.u32 %v8859, 4294901760
    %8861 = vmatprep.subr.mxu0 %v8860
    %v8862 = vand.u32 %v8086, 4294901760
    %v8863 = vsub.f32 %v8086, %v8862
    %v8864 = vand.u32 %v8863, 4294901760
    %8865 = vmatpush1.msra.mxu0 %v8864
    %v8866 = vand.u32 %v8090, 4294901760
    %v8867 = vsub.f32 %v8090, %v8866
    %v8868 = vand.u32 %v8867, 4294901760
    %8869 = vmatprep.subr.mxu0 %v8868
    %v8870 = vand.u32 %v8089, 4294901760
    %v8871 = vsub.f32 %v8089, %v8870
    %v8872 = vand.u32 %v8871, 4294901760
    %8873 = vmatpush1.msra.mxu0 %v8872
    %8874 = vmatprep.subr.mxu0 0.0
    %8875 = vmatpush1.msra.mxu0 0.0
    %8876 = vmatprep.subr.mxu0 0.0
    %8877 = vmatpush1.msra.mxu0 0.0
    %8878 = vmatprep.subr.mxu0 0.0
    %8879 = vmatpush1.msra.mxu0 0.0
    %8880 = vmatprep.subr.mxu0 0.0
    %8881 = vmatpush1.msra.mxu0 0.0
    %8882 = vmatprep.subr.mxu0 0.0
    %8883 = vmatpush1.msra.mxu0 0.0
    %8884 = vmatprep.subr.mxu0 0.0
    %8885 = vmatpush1.msra.mxu0 0.0
    %8886 = vmatprep.subr.mxu0 0.0
    %8887 = vmatpush1.msra.mxu0 0.0
    %8888 = vmatprep.subr.mxu0 0.0
    %8889 = vmatpush1.msra.mxu0 0.0
    %8890 = vmatprep.subr.mxu0 0.0
    %8891 = vmatpush1.msra.mxu0 0.0
    %8892 = vmatprep.subr.mxu0 0.0
    %8893 = vmatpush1.msra.mxu0 0.0
    %8894 = vmatprep.subr.mxu0 0.0
    %8895 = vmatpush1.msra.mxu0 0.0
    %8896 = vmatprep.subr.mxu0 0.0
    %8897 = vmatpush1.msra.mxu0 0.0
    %8898 = vmatprep.subr.mxu0 0.0
    %8899 = vmatpush1.msra.mxu0 0.0
    %8900 = vmatprep.subr.mxu0 0.0
    %8901 = vmatpush1.msra.mxu0 0.0
    %8902 = vmatprep.subr.mxu0 0.0
    %8903 = vmatpush1.msra.mxu0 0.0
    %8904 = vmatprep.subr.mxu0 0.0
    %8905 = vmatpush1.msra.mxu0 0.0
    %8906 = vmatprep.mubr.f32.mxu0 0.0
    %v8907 = vand.u32 %v7295, 4294901760
    %8908 = vmatmul.mubr.f32.gmra.mrb[0].mxu0 %v8907
    %v8909 = vpop.f32.mrb[0].mxu0
    %v8910 = vadd.f32 %v8724, %v8909
    %v8911 = vpop.f32.mrb[0].mxu0
    %v8912 = vadd.f32 %v8726, %v8911
    %8913 = vmatprep.mubr.f32.mxu0 0.0
    %v8914 = vand.u32 %v7296, 4294901760
    %8915 = vmatmul.mubr.f32.gmra.mrb[0].mxu0 %v8914
    %v8916 = vpop.f32.mrb[0].mxu0
    %v8917 = vadd.f32 %v8733, %v8916
    %v8918 = vpop.f32.mrb[0].mxu0
    %v8919 = vadd.f32 %v8735, %v8918
    %8920 = vmatprep.mubr.f32.mxu0 0.0
    %v8921 = vand.u32 %v7297, 4294901760
    %8922 = vmatmul.mubr.f32.gmra.mrb[0].mxu0 %v8921
    %v8923 = vpop.f32.mrb[0].mxu0
    %v8924 = vadd.f32 %v8742, %v8923
    %v8925 = vpop.f32.mrb[0].mxu0
    %v8926 = vadd.f32 %v8744, %v8925
    %8927 = vdwg.mxu0
    %v8928 = vand.u32 %v8045, 4294901760
    %8929 = vmatprep.subr.mxu0 %v8928
    %v8930 = vand.u32 %v8044, 4294901760
    %8931 = vmatpush1.msra.mxu0 %v8930
    %v8932 = vand.u32 %v8048, 4294901760
    %8933 = vmatprep.subr.mxu0 %v8932
    %v8934 = vand.u32 %v8047, 4294901760
    %8935 = vmatpush1.msra.mxu0 %v8934
    %v8936 = vand.u32 %v8051, 4294901760
    %8937 = vmatprep.subr.mxu0 %v8936
    %v8938 = vand.u32 %v8050, 4294901760
    %8939 = vmatpush1.msra.mxu0 %v8938
    %v8940 = vand.u32 %v8054, 4294901760
    %8941 = vmatprep.subr.mxu0 %v8940
    %v8942 = vand.u32 %v8053, 4294901760
    %8943 = vmatpush1.msra.mxu0 %v8942
    %v8944 = vand.u32 %v8057, 4294901760
    %8945 = vmatprep.subr.mxu0 %v8944
    %v8946 = vand.u32 %v8056, 4294901760
    %8947 = vmatpush1.msra.mxu0 %v8946
    %v8948 = vand.u32 %v8060, 4294901760
    %8949 = vmatprep.subr.mxu0 %v8948
    %v8950 = vand.u32 %v8059, 4294901760
    %8951 = vmatpush1.msra.mxu0 %v8950
    %v8952 = vand.u32 %v8063, 4294901760
    %8953 = vmatprep.subr.mxu0 %v8952
    %v8954 = vand.u32 %v8062, 4294901760
    %8955 = vmatpush1.msra.mxu0 %v8954
    %v8956 = vand.u32 %v8066, 4294901760
    %8957 = vmatprep.subr.mxu0 %v8956
    %v8958 = vand.u32 %v8065, 4294901760
    %8959 = vmatpush1.msra.mxu0 %v8958
    %v8960 = vand.u32 %v8069, 4294901760
    %8961 = vmatprep.subr.mxu0 %v8960
    %v8962 = vand.u32 %v8068, 4294901760
    %8963 = vmatpush1.msra.mxu0 %v8962
    %v8964 = vand.u32 %v8072, 4294901760
    %8965 = vmatprep.subr.mxu0 %v8964
    %v8966 = vand.u32 %v8071, 4294901760
    %8967 = vmatpush1.msra.mxu0 %v8966
    %v8968 = vand.u32 %v8075, 4294901760
    %8969 = vmatprep.subr.mxu0 %v8968
    %v8970 = vand.u32 %v8074, 4294901760
    %8971 = vmatpush1.msra.mxu0 %v8970
    %v8972 = vand.u32 %v8078, 4294901760
    %8973 = vmatprep.subr.mxu0 %v8972
    %v8974 = vand.u32 %v8077, 4294901760
    %8975 = vmatpush1.msra.mxu0 %v8974
    %v8976 = vand.u32 %v8081, 4294901760
    %8977 = vmatprep.subr.mxu0 %v8976
    %v8978 = vand.u32 %v8080, 4294901760
    %8979 = vmatpush1.msra.mxu0 %v8978
    %v8980 = vand.u32 %v8084, 4294901760
    %8981 = vmatprep.subr.mxu0 %v8980
    %v8982 = vand.u32 %v8083, 4294901760
    %8983 = vmatpush1.msra.mxu0 %v8982
    %v8984 = vand.u32 %v8087, 4294901760
    %8985 = vmatprep.subr.mxu0 %v8984
    %v8986 = vand.u32 %v8086, 4294901760
    %8987 = vmatpush1.msra.mxu0 %v8986
    %v8988 = vand.u32 %v8090, 4294901760
    %8989 = vmatprep.subr.mxu0 %v8988
    %v8990 = vand.u32 %v8089, 4294901760
    %8991 = vmatpush1.msra.mxu0 %v8990
    %8992 = vmatprep.subr.mxu0 0.0
    %8993 = vmatpush1.msra.mxu0 0.0
    %8994 = vmatprep.subr.mxu0 0.0
    %8995 = vmatpush1.msra.mxu0 0.0
    %8996 = vmatprep.subr.mxu0 0.0
    %8997 = vmatpush1.msra.mxu0 0.0
    %8998 = vmatprep.subr.mxu0 0.0
    %8999 = vmatpush1.msra.mxu0 0.0
    %9000 = vmatprep.subr.mxu0 0.0
    %9001 = vmatpush1.msra.mxu0 0.0
    %9002 = vmatprep.subr.mxu0 0.0
    %9003 = vmatpush1.msra.mxu0 0.0
    %9004 = vmatprep.subr.mxu0 0.0
    %9005 = vmatpush1.msra.mxu0 0.0
    %9006 = vmatprep.subr.mxu0 0.0
    %9007 = vmatpush1.msra.mxu0 0.0
    %9008 = vmatprep.subr.mxu0 0.0
    %9009 = vmatpush1.msra.mxu0 0.0
    %9010 = vmatprep.subr.mxu0 0.0
    %9011 = vmatpush1.msra.mxu0 0.0
    %9012 = vmatprep.subr.mxu0 0.0
    %9013 = vmatpush1.msra.mxu0 0.0
    %9014 = vmatprep.subr.mxu0 0.0
    %9015 = vmatpush1.msra.mxu0 0.0
    %9016 = vmatprep.subr.mxu0 0.0
    %9017 = vmatpush1.msra.mxu0 0.0
    %9018 = vmatprep.subr.mxu0 0.0
    %9019 = vmatpush1.msra.mxu0 0.0
    %9020 = vmatprep.subr.mxu0 0.0
    %9021 = vmatpush1.msra.mxu0 0.0
    %9022 = vmatprep.subr.mxu0 0.0
    %9023 = vmatpush1.msra.mxu0 0.0
    %9024 = vmatprep.mubr.f32.mxu0 0.0
    %v9025 = vand.u32 %v7295, 4294901760
    %9026 = vmatmul.mubr.f32.gmra.mrb[0].mxu0 %v9025
    %v9027 = vpop.f32.mrb[0].mxu0
    %v9028 = vadd.f32 %v8910, %v9027
    %v9029 = vpop.f32.mrb[0].mxu0
    %v9030 = vadd.f32 %v8912, %v9029
    %9031 = vmatprep.mubr.f32.mxu0 0.0
    %v9032 = vand.u32 %v7296, 4294901760
    %9033 = vmatmul.mubr.f32.gmra.mrb[0].mxu0 %v9032
    %v9034 = vpop.f32.mrb[0].mxu0
    %v9035 = vadd.f32 %v8917, %v9034
    %v9036 = vpop.f32.mrb[0].mxu0
    %v9037 = vadd.f32 %v8919, %v9036
    %9038 = vmatprep.mubr.f32.mxu0 0.0
    %v9039 = vand.u32 %v7297, 4294901760
    %9040 = vmatmul.mubr.f32.gmra.mrb[0].mxu0 %v9039
    %v9041 = vpop.f32.mrb[0].mxu0
    %v9042 = vadd.f32 %v8924, %v9041
    %v9043 = vpop.f32.mrb[0].mxu0
    %v9044 = vadd.f32 %v8926, %v9043
    %9045 = vdwg.mxu0
    %9046 = vmatprep.subr.mxu0 0.0
    %v9047 = vand.u32 %v8046, 4294901760
    %9048 = vmatpush1.msra.mxu0 %v9047
    %9049 = vmatprep.subr.mxu0 0.0
    %v9050 = vand.u32 %v8049, 4294901760
    %9051 = vmatpush1.msra.mxu0 %v9050
    %9052 = vmatprep.subr.mxu0 0.0
    %v9053 = vand.u32 %v8052, 4294901760
    %9054 = vmatpush1.msra.mxu0 %v9053
    %9055 = vmatprep.subr.mxu0 0.0
    %v9056 = vand.u32 %v8055, 4294901760
    %9057 = vmatpush1.msra.mxu0 %v9056
    %9058 = vmatprep.subr.mxu0 0.0
    %v9059 = vand.u32 %v8058, 4294901760
    %9060 = vmatpush1.msra.mxu0 %v9059
    %9061 = vmatprep.subr.mxu0 0.0
    %v9062 = vand.u32 %v8061, 4294901760
    %9063 = vmatpush1.msra.mxu0 %v9062
    %9064 = vmatprep.subr.mxu0 0.0
    %v9065 = vand.u32 %v8064, 4294901760
    %9066 = vmatpush1.msra.mxu0 %v9065
    %9067 = vmatprep.subr.mxu0 0.0
    %v9068 = vand.u32 %v8067, 4294901760
    %9069 = vmatpush1.msra.mxu0 %v9068
    %9070 = vmatprep.subr.mxu0 0.0
    %v9071 = vand.u32 %v8070, 4294901760
    %9072 = vmatpush1.msra.mxu0 %v9071
    %9073 = vmatprep.subr.mxu0 0.0
    %v9074 = vand.u32 %v8073, 4294901760
    %9075 = vmatpush1.msra.mxu0 %v9074
    %9076 = vmatprep.subr.mxu0 0.0
    %v9077 = vand.u32 %v8076, 4294901760
    %9078 = vmatpush1.msra.mxu0 %v9077
    %9079 = vmatprep.subr.mxu0 0.0
    %v9080 = vand.u32 %v8079, 4294901760
    %9081 = vmatpush1.msra.mxu0 %v9080
    %9082 = vmatprep.subr.mxu0 0.0
    %v9083 = vand.u32 %v8082, 4294901760
    %9084 = vmatpush1.msra.mxu0 %v9083
    %9085 = vmatprep.subr.mxu0 0.0
    %v9086 = vand.u32 %v8085, 4294901760
    %9087 = vmatpush1.msra.mxu0 %v9086
    %9088 = vmatprep.subr.mxu0 0.0
    %v9089 = vand.u32 %v8088, 4294901760
    %9090 = vmatpush1.msra.mxu0 %v9089
    %9091 = vmatprep.subr.mxu0 0.0
    %v9092 = vand.u32 %v8091, 4294901760
    %9093 = vmatpush1.msra.mxu0 %v9092
    %9094 = vmatprep.subr.mxu0 0.0
    %9095 = vmatpush1.msra.mxu0 0.0
    %9096 = vmatprep.subr.mxu0 0.0
    %9097 = vmatpush1.msra.mxu0 0.0
    %9098 = vmatprep.subr.mxu0 0.0
    %9099 = vmatpush1.msra.mxu0 0.0
    %9100 = vmatprep.subr.mxu0 0.0
    %9101 = vmatpush1.msra.mxu0 0.0
    %9102 = vmatprep.subr.mxu0 0.0
    %9103 = vmatpush1.msra.mxu0 0.0
    %9104 = vmatprep.subr.mxu0 0.0
    %9105 = vmatpush1.msra.mxu0 0.0
    %9106 = vmatprep.subr.mxu0 0.0
    %9107 = vmatpush1.msra.mxu0 0.0
    %9108 = vmatprep.subr.mxu0 0.0
    %9109 = vmatpush1.msra.mxu0 0.0
    %9110 = vmatprep.subr.mxu0 0.0
    %9111 = vmatpush1.msra.mxu0 0.0
    %9112 = vmatprep.subr.mxu0 0.0
    %9113 = vmatpush1.msra.mxu0 0.0
    %9114 = vmatprep.subr.mxu0 0.0
    %9115 = vmatpush1.msra.mxu0 0.0
    %9116 = vmatprep.subr.mxu0 0.0
    %9117 = vmatpush1.msra.mxu0 0.0
    %9118 = vmatprep.subr.mxu0 0.0
    %9119 = vmatpush1.msra.mxu0 0.0
    %9120 = vmatprep.subr.mxu0 0.0
    %9121 = vmatpush1.msra.mxu0 0.0
    %9122 = vmatprep.subr.mxu0 0.0
    %9123 = vmatpush1.msra.mxu0 0.0
    %9124 = vmatprep.subr.mxu0 0.0
    %9125 = vmatpush1.msra.mxu0 0.0
    %9126 = vmatprep.mubr.f32.mxu0 0.0
    %v9127 = vand.u32 %v7295, 4294901760
    %v9128 = vsub.f32 %v7295, %v9127
    %v9129 = vand.u32 %v9128, 4294901760
    %v9130 = vsub.f32 %v9128, %v9129
    %v9131 = vand.u32 %v9130, 4294901760
    %9132 = vmatmul.mubr.f32.gmra.mrb[0].mxu0 %v9131
    %v9133 = vpop.f32.mrb[0].mxu0
    %v9134 = vadd.f32 0.0, %v9133
    %v9135 = vpop.f32.mrb[0].mxu0
    %9136 = vmatprep.mubr.f32.mxu0 0.0
    %v9137 = vand.u32 %v7296, 4294901760
    %v9138 = vsub.f32 %v7296, %v9137
    %v9139 = vand.u32 %v9138, 4294901760
    %v9140 = vsub.f32 %v9138, %v9139
    %v9141 = vand.u32 %v9140, 4294901760
    %9142 = vmatmul.mubr.f32.gmra.mrb[0].mxu0 %v9141
    %v9143 = vpop.f32.mrb[0].mxu0
    %v9144 = vadd.f32 0.0, %v9143
    %v9145 = vpop.f32.mrb[0].mxu0
    %9146 = vmatprep.mubr.f32.mxu0 0.0
    %v9147 = vand.u32 %v7297, 4294901760
    %v9148 = vsub.f32 %v7297, %v9147
    %v9149 = vand.u32 %v9148, 4294901760
    %v9150 = vsub.f32 %v9148, %v9149
    %v9151 = vand.u32 %v9150, 4294901760
    %9152 = vmatmul.mubr.f32.gmra.mrb[0].mxu0 %v9151
    %v9153 = vpop.f32.mrb[0].mxu0
    %v9154 = vadd.f32 0.0, %v9153
    %v9155 = vpop.f32.mrb[0].mxu0
    %9156 = vdwg.mxu0
    %9157 = vmatprep.subr.mxu0 0.0
    %v9158 = vand.u32 %v8046, 4294901760
    %v9159 = vsub.f32 %v8046, %v9158
    %v9160 = vand.u32 %v9159, 4294901760
    %v9161 = vsub.f32 %v9159, %v9160
    %v9162 = vand.u32 %v9161, 4294901760
    %9163 = vmatpush1.msra.mxu0 %v9162
    %9164 = vmatprep.subr.mxu0 0.0
    %v9165 = vand.u32 %v8049, 4294901760
    %v9166 = vsub.f32 %v8049, %v9165
    %v9167 = vand.u32 %v9166, 4294901760
    %v9168 = vsub.f32 %v9166, %v9167
    %v9169 = vand.u32 %v9168, 4294901760
    %9170 = vmatpush1.msra.mxu0 %v9169
    %9171 = vmatprep.subr.mxu0 0.0
    %v9172 = vand.u32 %v8052, 4294901760
    %v9173 = vsub.f32 %v8052, %v9172
    %v9174 = vand.u32 %v9173, 4294901760
    %v9175 = vsub.f32 %v9173, %v9174
    %v9176 = vand.u32 %v9175, 4294901760
    %9177 = vmatpush1.msra.mxu0 %v9176
    %9178 = vmatprep.subr.mxu0 0.0
    %v9179 = vand.u32 %v8055, 4294901760
    %v9180 = vsub.f32 %v8055, %v9179
    %v9181 = vand.u32 %v9180, 4294901760
    %v9182 = vsub.f32 %v9180, %v9181
    %v9183 = vand.u32 %v9182, 4294901760
    %9184 = vmatpush1.msra.mxu0 %v9183
    %9185 = vmatprep.subr.mxu0 0.0
    %v9186 = vand.u32 %v8058, 4294901760
    %v9187 = vsub.f32 %v8058, %v9186
    %v9188 = vand.u32 %v9187, 4294901760
    %v9189 = vsub.f32 %v9187, %v9188
    %v9190 = vand.u32 %v9189, 4294901760
    %9191 = vmatpush1.msra.mxu0 %v9190
    %9192 = vmatprep.subr.mxu0 0.0
    %v9193 = vand.u32 %v8061, 4294901760
    %v9194 = vsub.f32 %v8061, %v9193
    %v9195 = vand.u32 %v9194, 4294901760
    %v9196 = vsub.f32 %v9194, %v9195
    %v9197 = vand.u32 %v9196, 4294901760
    %9198 = vmatpush1.msra.mxu0 %v9197
    %9199 = vmatprep.subr.mxu0 0.0
    %v9200 = vand.u32 %v8064, 4294901760
    %v9201 = vsub.f32 %v8064, %v9200
    %v9202 = vand.u32 %v9201, 4294901760
    %v9203 = vsub.f32 %v9201, %v9202
    %v9204 = vand.u32 %v9203, 4294901760
    %9205 = vmatpush1.msra.mxu0 %v9204
    %9206 = vmatprep.subr.mxu0 0.0
    %v9207 = vand.u32 %v8067, 4294901760
    %v9208 = vsub.f32 %v8067, %v9207
    %v9209 = vand.u32 %v9208, 4294901760
    %v9210 = vsub.f32 %v9208, %v9209
    %v9211 = vand.u32 %v9210, 4294901760
    %9212 = vmatpush1.msra.mxu0 %v9211
    %9213 = vmatprep.subr.mxu0 0.0
    %v9214 = vand.u32 %v8070, 4294901760
    %v9215 = vsub.f32 %v8070, %v9214
    %v9216 = vand.u32 %v9215, 4294901760
    %v9217 = vsub.f32 %v9215, %v9216
    %v9218 = vand.u32 %v9217, 4294901760
    %9219 = vmatpush1.msra.mxu0 %v9218
    %9220 = vmatprep.subr.mxu0 0.0
    %v9221 = vand.u32 %v8073, 4294901760
    %v9222 = vsub.f32 %v8073, %v9221
    %v9223 = vand.u32 %v9222, 4294901760
    %v9224 = vsub.f32 %v9222, %v9223
    %v9225 = vand.u32 %v9224, 4294901760
    %9226 = vmatpush1.msra.mxu0 %v9225
    %9227 = vmatprep.subr.mxu0 0.0
    %v9228 = vand.u32 %v8076, 4294901760
    %v9229 = vsub.f32 %v8076, %v9228
    %v9230 = vand.u32 %v9229, 4294901760
    %v9231 = vsub.f32 %v9229, %v9230
    %v9232 = vand.u32 %v9231, 4294901760
    %9233 = vmatpush1.msra.mxu0 %v9232
    %9234 = vmatprep.subr.mxu0 0.0
    %v9235 = vand.u32 %v8079, 4294901760
    %v9236 = vsub.f32 %v8079, %v9235
    %v9237 = vand.u32 %v9236, 4294901760
    %v9238 = vsub.f32 %v9236, %v9237
    %v9239 = vand.u32 %v9238, 4294901760
    %9240 = vmatpush1.msra.mxu0 %v9239
    %9241 = vmatprep.subr.mxu0 0.0
    %v9242 = vand.u32 %v8082, 4294901760
    %v9243 = vsub.f32 %v8082, %v9242
    %v9244 = vand.u32 %v9243, 4294901760
    %v9245 = vsub.f32 %v9243, %v9244
    %v9246 = vand.u32 %v9245, 4294901760
    %9247 = vmatpush1.msra.mxu0 %v9246
    %9248 = vmatprep.subr.mxu0 0.0
    %v9249 = vand.u32 %v8085, 4294901760
    %v9250 = vsub.f32 %v8085, %v9249
    %v9251 = vand.u32 %v9250, 4294901760
    %v9252 = vsub.f32 %v9250, %v9251
    %v9253 = vand.u32 %v9252, 4294901760
    %9254 = vmatpush1.msra.mxu0 %v9253
    %9255 = vmatprep.subr.mxu0 0.0
    %v9256 = vand.u32 %v8088, 4294901760
    %v9257 = vsub.f32 %v8088, %v9256
    %v9258 = vand.u32 %v9257, 4294901760
    %v9259 = vsub.f32 %v9257, %v9258
    %v9260 = vand.u32 %v9259, 4294901760
    %9261 = vmatpush1.msra.mxu0 %v9260
    %9262 = vmatprep.subr.mxu0 0.0
    %v9263 = vand.u32 %v8091, 4294901760
    %v9264 = vsub.f32 %v8091, %v9263
    %v9265 = vand.u32 %v9264, 4294901760
    %v9266 = vsub.f32 %v9264, %v9265
    %v9267 = vand.u32 %v9266, 4294901760
    %9268 = vmatpush1.msra.mxu0 %v9267
    %9269 = vmatprep.subr.mxu0 0.0
    %9270 = vmatpush1.msra.mxu0 0.0
    %9271 = vmatprep.subr.mxu0 0.0
    %9272 = vmatpush1.msra.mxu0 0.0
    %9273 = vmatprep.subr.mxu0 0.0
    %9274 = vmatpush1.msra.mxu0 0.0
    %9275 = vmatprep.subr.mxu0 0.0
    %9276 = vmatpush1.msra.mxu0 0.0
    %9277 = vmatprep.subr.mxu0 0.0
    %9278 = vmatpush1.msra.mxu0 0.0
    %9279 = vmatprep.subr.mxu0 0.0
    %9280 = vmatpush1.msra.mxu0 0.0
    %9281 = vmatprep.subr.mxu0 0.0
    %9282 = vmatpush1.msra.mxu0 0.0
    %9283 = vmatprep.subr.mxu0 0.0
    %9284 = vmatpush1.msra.mxu0 0.0
    %9285 = vmatprep.subr.mxu0 0.0
    %9286 = vmatpush1.msra.mxu0 0.0
    %9287 = vmatprep.subr.mxu0 0.0
    %9288 = vmatpush1.msra.mxu0 0.0
    %9289 = vmatprep.subr.mxu0 0.0
    %9290 = vmatpush1.msra.mxu0 0.0
    %9291 = vmatprep.subr.mxu0 0.0
    %9292 = vmatpush1.msra.mxu0 0.0
    %9293 = vmatprep.subr.mxu0 0.0
    %9294 = vmatpush1.msra.mxu0 0.0
    %9295 = vmatprep.subr.mxu0 0.0
    %9296 = vmatpush1.msra.mxu0 0.0
    %9297 = vmatprep.subr.mxu0 0.0
    %9298 = vmatpush1.msra.mxu0 0.0
    %9299 = vmatprep.subr.mxu0 0.0
    %9300 = vmatpush1.msra.mxu0 0.0
    %9301 = vmatprep.mubr.f32.mxu0 0.0
    %v9302 = vand.u32 %v7295, 4294901760
    %9303 = vmatmul.mubr.f32.gmra.mrb[0].mxu0 %v9302
    %v9304 = vpop.f32.mrb[0].mxu0
    %v9305 = vadd.f32 %v9134, %v9304
    %v9306 = vpop.f32.mrb[0].mxu0
    %9307 = vmatprep.mubr.f32.mxu0 0.0
    %v9308 = vand.u32 %v7296, 4294901760
    %9309 = vmatmul.mubr.f32.gmra.mrb[0].mxu0 %v9308
    %v9310 = vpop.f32.mrb[0].mxu0
    %v9311 = vadd.f32 %v9144, %v9310
    %v9312 = vpop.f32.mrb[0].mxu0
    %9313 = vmatprep.mubr.f32.mxu0 0.0
    %v9314 = vand.u32 %v7297, 4294901760
    %9315 = vmatmul.mubr.f32.gmra.mrb[0].mxu0 %v9314
    %v9316 = vpop.f32.mrb[0].mxu0
    %v9317 = vadd.f32 %v9154, %v9316
    %v9318 = vpop.f32.mrb[0].mxu0
    %9319 = vdwg.mxu0
    %9320 = vmatprep.subr.mxu0 0.0
    %v9321 = vand.u32 %v8046, 4294901760
    %v9322 = vsub.f32 %v8046, %v9321
    %9323 = vmatpush1.msra.mxu0 %v9322
    %9324 = vmatprep.subr.mxu0 0.0
    %v9325 = vand.u32 %v8049, 4294901760
    %v9326 = vsub.f32 %v8049, %v9325
    %9327 = vmatpush1.msra.mxu0 %v9326
    %9328 = vmatprep.subr.mxu0 0.0
    %v9329 = vand.u32 %v8052, 4294901760
    %v9330 = vsub.f32 %v8052, %v9329
    %9331 = vmatpush1.msra.mxu0 %v9330
    %9332 = vmatprep.subr.mxu0 0.0
    %v9333 = vand.u32 %v8055, 4294901760
    %v9334 = vsub.f32 %v8055, %v9333
    %9335 = vmatpush1.msra.mxu0 %v9334
    %9336 = vmatprep.subr.mxu0 0.0
    %v9337 = vand.u32 %v8058, 4294901760
    %v9338 = vsub.f32 %v8058, %v9337
    %9339 = vmatpush1.msra.mxu0 %v9338
    %9340 = vmatprep.subr.mxu0 0.0
    %v9341 = vand.u32 %v8061, 4294901760
    %v9342 = vsub.f32 %v8061, %v9341
    %9343 = vmatpush1.msra.mxu0 %v9342
    %9344 = vmatprep.subr.mxu0 0.0
    %v9345 = vand.u32 %v8064, 4294901760
    %v9346 = vsub.f32 %v8064, %v9345
    %9347 = vmatpush1.msra.mxu0 %v9346
    %9348 = vmatprep.subr.mxu0 0.0
    %v9349 = vand.u32 %v8067, 4294901760
    %v9350 = vsub.f32 %v8067, %v9349
    %9351 = vmatpush1.msra.mxu0 %v9350
    %9352 = vmatprep.subr.mxu0 0.0
    %v9353 = vand.u32 %v8070, 4294901760
    %v9354 = vsub.f32 %v8070, %v9353
    %9355 = vmatpush1.msra.mxu0 %v9354
    %9356 = vmatprep.subr.mxu0 0.0
    %v9357 = vand.u32 %v8073, 4294901760
    %v9358 = vsub.f32 %v8073, %v9357
    %9359 = vmatpush1.msra.mxu0 %v9358
    %9360 = vmatprep.subr.mxu0 0.0
    %v9361 = vand.u32 %v8076, 4294901760
    %v9362 = vsub.f32 %v8076, %v9361
    %9363 = vmatpush1.msra.mxu0 %v9362
    %9364 = vmatprep.subr.mxu0 0.0
    %v9365 = vand.u32 %v8079, 4294901760
    %v9366 = vsub.f32 %v8079, %v9365
    %9367 = vmatpush1.msra.mxu0 %v9366
    %9368 = vmatprep.subr.mxu0 0.0
    %v9369 = vand.u32 %v8082, 4294901760
    %v9370 = vsub.f32 %v8082, %v9369
    %9371 = vmatpush1.msra.mxu0 %v9370
    %9372 = vmatprep.subr.mxu0 0.0
    %v9373 = vand.u32 %v8085, 4294901760
    %v9374 = vsub.f32 %v8085, %v9373
    %9375 = vmatpush1.msra.mxu0 %v9374
    %9376 = vmatprep.subr.mxu0 0.0
    %v9377 = vand.u32 %v8088, 4294901760
    %v9378 = vsub.f32 %v8088, %v9377
    %9379 = vmatpush1.msra.mxu0 %v9378
    %9380 = vmatprep.subr.mxu0 0.0
    %v9381 = vand.u32 %v8091, 4294901760
    %v9382 = vsub.f32 %v8091, %v9381
    %9383 = vmatpush1.msra.mxu0 %v9382
    %9384 = vmatprep.subr.mxu0 0.0
    %9385 = vmatpush1.msra.mxu0 0.0
    %9386 = vmatprep.subr.mxu0 0.0
    %9387 = vmatpush1.msra.mxu0 0.0
    %9388 = vmatprep.subr.mxu0 0.0
    %9389 = vmatpush1.msra.mxu0 0.0
    %9390 = vmatprep.subr.mxu0 0.0
    %9391 = vmatpush1.msra.mxu0 0.0
    %9392 = vmatprep.subr.mxu0 0.0
    %9393 = vmatpush1.msra.mxu0 0.0
    %9394 = vmatprep.subr.mxu0 0.0
    %9395 = vmatpush1.msra.mxu0 0.0
    %9396 = vmatprep.subr.mxu0 0.0
    %9397 = vmatpush1.msra.mxu0 0.0
    %9398 = vmatprep.subr.mxu0 0.0
    %9399 = vmatpush1.msra.mxu0 0.0
    %9400 = vmatprep.subr.mxu0 0.0
    %9401 = vmatpush1.msra.mxu0 0.0
    %9402 = vmatprep.subr.mxu0 0.0
    %9403 = vmatpush1.msra.mxu0 0.0
    %9404 = vmatprep.subr.mxu0 0.0
    %9405 = vmatpush1.msra.mxu0 0.0
    %9406 = vmatprep.subr.mxu0 0.0
    %9407 = vmatpush1.msra.mxu0 0.0
    %9408 = vmatprep.subr.mxu0 0.0
    %9409 = vmatpush1.msra.mxu0 0.0
    %9410 = vmatprep.subr.mxu0 0.0
    %9411 = vmatpush1.msra.mxu0 0.0
    %9412 = vmatprep.subr.mxu0 0.0
    %9413 = vmatpush1.msra.mxu0 0.0
    %9414 = vmatprep.subr.mxu0 0.0
    %9415 = vmatpush1.msra.mxu0 0.0
    %9416 = vmatprep.mubr.f32.mxu0 0.0
    %v9417 = vand.u32 %v7295, 4294901760
    %v9418 = vsub.f32 %v7295, %v9417
    %9419 = vmatmul.mubr.f32.gmra.mrb[0].mxu0 %v9418
    %v9420 = vpop.f32.mrb[0].mxu0
    %v9421 = vadd.f32 %v9305, %v9420
    %v9422 = vpop.f32.mrb[0].mxu0
    %9423 = vmatprep.mubr.f32.mxu0 0.0
    %v9424 = vand.u32 %v7296, 4294901760
    %v9425 = vsub.f32 %v7296, %v9424
    %9426 = vmatmul.mubr.f32.gmra.mrb[0].mxu0 %v9425
    %v9427 = vpop.f32.mrb[0].mxu0
    %v9428 = vadd.f32 %v9311, %v9427
    %v9429 = vpop.f32.mrb[0].mxu0
    %9430 = vmatprep.mubr.f32.mxu0 0.0
    %v9431 = vand.u32 %v7297, 4294901760
    %v9432 = vsub.f32 %v7297, %v9431
    %9433 = vmatmul.mubr.f32.gmra.mrb[0].mxu0 %v9432
    %v9434 = vpop.f32.mrb[0].mxu0
    %v9435 = vadd.f32 %v9317, %v9434
    %v9436 = vpop.f32.mrb[0].mxu0
    %9437 = vdwg.mxu0
    %9438 = vmatprep.subr.mxu0 0.0
    %v9439 = vand.u32 %v8046, 4294901760
    %9440 = vmatpush1.msra.mxu0 %v9439
    %9441 = vmatprep.subr.mxu0 0.0
    %v9442 = vand.u32 %v8049, 4294901760
    %9443 = vmatpush1.msra.mxu0 %v9442
    %9444 = vmatprep.subr.mxu0 0.0
    %v9445 = vand.u32 %v8052, 4294901760
    %9446 = vmatpush1.msra.mxu0 %v9445
    %9447 = vmatprep.subr.mxu0 0.0
    %v9448 = vand.u32 %v8055, 4294901760
    %9449 = vmatpush1.msra.mxu0 %v9448
    %9450 = vmatprep.subr.mxu0 0.0
    %v9451 = vand.u32 %v8058, 4294901760
    %9452 = vmatpush1.msra.mxu0 %v9451
    %9453 = vmatprep.subr.mxu0 0.0
    %v9454 = vand.u32 %v8061, 4294901760
    %9455 = vmatpush1.msra.mxu0 %v9454
    %9456 = vmatprep.subr.mxu0 0.0
    %v9457 = vand.u32 %v8064, 4294901760
    %9458 = vmatpush1.msra.mxu0 %v9457
    %9459 = vmatprep.subr.mxu0 0.0
    %v9460 = vand.u32 %v8067, 4294901760
    %9461 = vmatpush1.msra.mxu0 %v9460
    %9462 = vmatprep.subr.mxu0 0.0
    %v9463 = vand.u32 %v8070, 4294901760
    %9464 = vmatpush1.msra.mxu0 %v9463
    %9465 = vmatprep.subr.mxu0 0.0
    %v9466 = vand.u32 %v8073, 4294901760
    %9467 = vmatpush1.msra.mxu0 %v9466
    %9468 = vmatprep.subr.mxu0 0.0
    %v9469 = vand.u32 %v8076, 4294901760
    %9470 = vmatpush1.msra.mxu0 %v9469
    %9471 = vmatprep.subr.mxu0 0.0
    %v9472 = vand.u32 %v8079, 4294901760
    %9473 = vmatpush1.msra.mxu0 %v9472
    %9474 = vmatprep.subr.mxu0 0.0
    %v9475 = vand.u32 %v8082, 4294901760
    %9476 = vmatpush1.msra.mxu0 %v9475
    %9477 = vmatprep.subr.mxu0 0.0
    %v9478 = vand.u32 %v8085, 4294901760
    %9479 = vmatpush1.msra.mxu0 %v9478
    %9480 = vmatprep.subr.mxu0 0.0
    %v9481 = vand.u32 %v8088, 4294901760
    %9482 = vmatpush1.msra.mxu0 %v9481
    %9483 = vmatprep.subr.mxu0 0.0
    %v9484 = vand.u32 %v8091, 4294901760
    %9485 = vmatpush1.msra.mxu0 %v9484
    %9486 = vmatprep.subr.mxu0 0.0
    %9487 = vmatpush1.msra.mxu0 0.0
    %9488 = vmatprep.subr.mxu0 0.0
    %9489 = vmatpush1.msra.mxu0 0.0
    %9490 = vmatprep.subr.mxu0 0.0
    %9491 = vmatpush1.msra.mxu0 0.0
    %9492 = vmatprep.subr.mxu0 0.0
    %9493 = vmatpush1.msra.mxu0 0.0
    %9494 = vmatprep.subr.mxu0 0.0
    %9495 = vmatpush1.msra.mxu0 0.0
    %9496 = vmatprep.subr.mxu0 0.0
    %9497 = vmatpush1.msra.mxu0 0.0
    %9498 = vmatprep.subr.mxu0 0.0
    %9499 = vmatpush1.msra.mxu0 0.0
    %9500 = vmatprep.subr.mxu0 0.0
    %9501 = vmatpush1.msra.mxu0 0.0
    %9502 = vmatprep.subr.mxu0 0.0
    %9503 = vmatpush1.msra.mxu0 0.0
    %9504 = vmatprep.subr.mxu0 0.0
    %9505 = vmatpush1.msra.mxu0 0.0
    %9506 = vmatprep.subr.mxu0 0.0
    %9507 = vmatpush1.msra.mxu0 0.0
    %9508 = vmatprep.subr.mxu0 0.0
    %9509 = vmatpush1.msra.mxu0 0.0
    %9510 = vmatprep.subr.mxu0 0.0
    %9511 = vmatpush1.msra.mxu0 0.0
    %9512 = vmatprep.subr.mxu0 0.0
    %9513 = vmatpush1.msra.mxu0 0.0
    %9514 = vmatprep.subr.mxu0 0.0
    %9515 = vmatpush1.msra.mxu0 0.0
    %9516 = vmatprep.subr.mxu0 0.0
    %9517 = vmatpush1.msra.mxu0 0.0
    %9518 = vmatprep.mubr.f32.mxu0 0.0
    %v9519 = vand.u32 %v7295, 4294901760
    %v9520 = vsub.f32 %v7295, %v9519
    %v9521 = vand.u32 %v9520, 4294901760
    %9522 = vmatmul.mubr.f32.gmra.mrb[0].mxu0 %v9521
    %v9523 = vpop.f32.mrb[0].mxu0
    %v9524 = vadd.f32 %v9421, %v9523
    %v9525 = vpop.f32.mrb[0].mxu0
    %9526 = vmatprep.mubr.f32.mxu0 0.0
    %v9527 = vand.u32 %v7296, 4294901760
    %v9528 = vsub.f32 %v7296, %v9527
    %v9529 = vand.u32 %v9528, 4294901760
    %9530 = vmatmul.mubr.f32.gmra.mrb[0].mxu0 %v9529
    %v9531 = vpop.f32.mrb[0].mxu0
    %v9532 = vadd.f32 %v9428, %v9531
    %v9533 = vpop.f32.mrb[0].mxu0
    %9534 = vmatprep.mubr.f32.mxu0 0.0
    %v9535 = vand.u32 %v7297, 4294901760
    %v9536 = vsub.f32 %v7297, %v9535
    %v9537 = vand.u32 %v9536, 4294901760
    %9538 = vmatmul.mubr.f32.gmra.mrb[0].mxu0 %v9537
    %v9539 = vpop.f32.mrb[0].mxu0
    %v9540 = vadd.f32 %v9435, %v9539
    %v9541 = vpop.f32.mrb[0].mxu0
    %9542 = vdwg.mxu0
    %9543 = vmatprep.subr.mxu0 0.0
    %v9544 = vand.u32 %v8046, 4294901760
    %v9545 = vsub.f32 %v8046, %v9544
    %v9546 = vand.u32 %v9545, 4294901760
    %9547 = vmatpush1.msra.mxu0 %v9546
    %9548 = vmatprep.subr.mxu0 0.0
    %v9549 = vand.u32 %v8049, 4294901760
    %v9550 = vsub.f32 %v8049, %v9549
    %v9551 = vand.u32 %v9550, 4294901760
    %9552 = vmatpush1.msra.mxu0 %v9551
    %9553 = vmatprep.subr.mxu0 0.0
    %v9554 = vand.u32 %v8052, 4294901760
    %v9555 = vsub.f32 %v8052, %v9554
    %v9556 = vand.u32 %v9555, 4294901760
    %9557 = vmatpush1.msra.mxu0 %v9556
    %9558 = vmatprep.subr.mxu0 0.0
    %v9559 = vand.u32 %v8055, 4294901760
    %v9560 = vsub.f32 %v8055, %v9559
    %v9561 = vand.u32 %v9560, 4294901760
    %9562 = vmatpush1.msra.mxu0 %v9561
    %9563 = vmatprep.subr.mxu0 0.0
    %v9564 = vand.u32 %v8058, 4294901760
    %v9565 = vsub.f32 %v8058, %v9564
    %v9566 = vand.u32 %v9565, 4294901760
    %9567 = vmatpush1.msra.mxu0 %v9566
    %9568 = vmatprep.subr.mxu0 0.0
    %v9569 = vand.u32 %v8061, 4294901760
    %v9570 = vsub.f32 %v8061, %v9569
    %v9571 = vand.u32 %v9570, 4294901760
    %9572 = vmatpush1.msra.mxu0 %v9571
    %9573 = vmatprep.subr.mxu0 0.0
    %v9574 = vand.u32 %v8064, 4294901760
    %v9575 = vsub.f32 %v8064, %v9574
    %v9576 = vand.u32 %v9575, 4294901760
    %9577 = vmatpush1.msra.mxu0 %v9576
    %9578 = vmatprep.subr.mxu0 0.0
    %v9579 = vand.u32 %v8067, 4294901760
    %v9580 = vsub.f32 %v8067, %v9579
    %v9581 = vand.u32 %v9580, 4294901760
    %9582 = vmatpush1.msra.mxu0 %v9581
    %9583 = vmatprep.subr.mxu0 0.0
    %v9584 = vand.u32 %v8070, 4294901760
    %v9585 = vsub.f32 %v8070, %v9584
    %v9586 = vand.u32 %v9585, 4294901760
    %9587 = vmatpush1.msra.mxu0 %v9586
    %9588 = vmatprep.subr.mxu0 0.0
    %v9589 = vand.u32 %v8073, 4294901760
    %v9590 = vsub.f32 %v8073, %v9589
    %v9591 = vand.u32 %v9590, 4294901760
    %9592 = vmatpush1.msra.mxu0 %v9591
    %9593 = vmatprep.subr.mxu0 0.0
    %v9594 = vand.u32 %v8076, 4294901760
    %v9595 = vsub.f32 %v8076, %v9594
    %v9596 = vand.u32 %v9595, 4294901760
    %9597 = vmatpush1.msra.mxu0 %v9596
    %9598 = vmatprep.subr.mxu0 0.0
    %v9599 = vand.u32 %v8079, 4294901760
    %v9600 = vsub.f32 %v8079, %v9599
    %v9601 = vand.u32 %v9600, 4294901760
    %9602 = vmatpush1.msra.mxu0 %v9601
    %9603 = vmatprep.subr.mxu0 0.0
    %v9604 = vand.u32 %v8082, 4294901760
    %v9605 = vsub.f32 %v8082, %v9604
    %v9606 = vand.u32 %v9605, 4294901760
    %9607 = vmatpush1.msra.mxu0 %v9606
    %9608 = vmatprep.subr.mxu0 0.0
    %v9609 = vand.u32 %v8085, 4294901760
    %v9610 = vsub.f32 %v8085, %v9609
    %v9611 = vand.u32 %v9610, 4294901760
    %9612 = vmatpush1.msra.mxu0 %v9611
    %9613 = vmatprep.subr.mxu0 0.0
    %v9614 = vand.u32 %v8088, 4294901760
    %v9615 = vsub.f32 %v8088, %v9614
    %v9616 = vand.u32 %v9615, 4294901760
    %9617 = vmatpush1.msra.mxu0 %v9616
    %9618 = vmatprep.subr.mxu0 0.0
    %v9619 = vand.u32 %v8091, 4294901760
    %v9620 = vsub.f32 %v8091, %v9619
    %v9621 = vand.u32 %v9620, 4294901760
    %9622 = vmatpush1.msra.mxu0 %v9621
    %9623 = vmatprep.subr.mxu0 0.0
    %9624 = vmatpush1.msra.mxu0 0.0
    %9625 = vmatprep.subr.mxu0 0.0
    %9626 = vmatpush1.msra.mxu0 0.0
    %9627 = vmatprep.subr.mxu0 0.0
    %9628 = vmatpush1.msra.mxu0 0.0
    %9629 = vmatprep.subr.mxu0 0.0
    %9630 = vmatpush1.msra.mxu0 0.0
    %9631 = vmatprep.subr.mxu0 0.0
    %9632 = vmatpush1.msra.mxu0 0.0
    %9633 = vmatprep.subr.mxu0 0.0
    %9634 = vmatpush1.msra.mxu0 0.0
    %9635 = vmatprep.subr.mxu0 0.0
    %9636 = vmatpush1.msra.mxu0 0.0
    %9637 = vmatprep.subr.mxu0 0.0
    %9638 = vmatpush1.msra.mxu0 0.0
    %9639 = vmatprep.subr.mxu0 0.0
    %9640 = vmatpush1.msra.mxu0 0.0
    %9641 = vmatprep.subr.mxu0 0.0
    %9642 = vmatpush1.msra.mxu0 0.0
    %9643 = vmatprep.subr.mxu0 0.0
    %9644 = vmatpush1.msra.mxu0 0.0
    %9645 = vmatprep.subr.mxu0 0.0
    %9646 = vmatpush1.msra.mxu0 0.0
    %9647 = vmatprep.subr.mxu0 0.0
    %9648 = vmatpush1.msra.mxu0 0.0
    %9649 = vmatprep.subr.mxu0 0.0
    %9650 = vmatpush1.msra.mxu0 0.0
    %9651 = vmatprep.subr.mxu0 0.0
    %9652 = vmatpush1.msra.mxu0 0.0
    %9653 = vmatprep.subr.mxu0 0.0
    %9654 = vmatpush1.msra.mxu0 0.0
    %9655 = vmatprep.mubr.f32.mxu0 0.0
    %v9656 = vand.u32 %v7295, 4294901760
    %9657 = vmatmul.mubr.f32.gmra.mrb[0].mxu0 %v9656
    %v9658 = vpop.f32.mrb[0].mxu0
    %v9659 = vadd.f32 %v9524, %v9658
    %v9660 = vpop.f32.mrb[0].mxu0
    %9661 = vmatprep.mubr.f32.mxu0 0.0
    %v9662 = vand.u32 %v7296, 4294901760
    %9663 = vmatmul.mubr.f32.gmra.mrb[0].mxu0 %v9662
    %v9664 = vpop.f32.mrb[0].mxu0
    %v9665 = vadd.f32 %v9532, %v9664
    %v9666 = vpop.f32.mrb[0].mxu0
    %9667 = vmatprep.mubr.f32.mxu0 0.0
    %v9668 = vand.u32 %v7297, 4294901760
    %9669 = vmatmul.mubr.f32.gmra.mrb[0].mxu0 %v9668
    %v9670 = vpop.f32.mrb[0].mxu0
    %v9671 = vadd.f32 %v9540, %v9670
    %v9672 = vpop.f32.mrb[0].mxu0
    %9673 = vdwg.mxu0
    %9674 = vmatprep.subr.mxu0 0.0
    %v9675 = vand.u32 %v8046, 4294901760
    %9676 = vmatpush1.msra.mxu0 %v9675
    %9677 = vmatprep.subr.mxu0 0.0
    %v9678 = vand.u32 %v8049, 4294901760
    %9679 = vmatpush1.msra.mxu0 %v9678
    %9680 = vmatprep.subr.mxu0 0.0
    %v9681 = vand.u32 %v8052, 4294901760
    %9682 = vmatpush1.msra.mxu0 %v9681
    %9683 = vmatprep.subr.mxu0 0.0
    %v9684 = vand.u32 %v8055, 4294901760
    %9685 = vmatpush1.msra.mxu0 %v9684
    %9686 = vmatprep.subr.mxu0 0.0
    %v9687 = vand.u32 %v8058, 4294901760
    %9688 = vmatpush1.msra.mxu0 %v9687
    %9689 = vmatprep.subr.mxu0 0.0
    %v9690 = vand.u32 %v8061, 4294901760
    %9691 = vmatpush1.msra.mxu0 %v9690
    %9692 = vmatprep.subr.mxu0 0.0
    %v9693 = vand.u32 %v8064, 4294901760
    %9694 = vmatpush1.msra.mxu0 %v9693
    %9695 = vmatprep.subr.mxu0 0.0
    %v9696 = vand.u32 %v8067, 4294901760
    %9697 = vmatpush1.msra.mxu0 %v9696
    %9698 = vmatprep.subr.mxu0 0.0
    %v9699 = vand.u32 %v8070, 4294901760
    %9700 = vmatpush1.msra.mxu0 %v9699
    %9701 = vmatprep.subr.mxu0 0.0
    %v9702 = vand.u32 %v8073, 4294901760
    %9703 = vmatpush1.msra.mxu0 %v9702
    %9704 = vmatprep.subr.mxu0 0.0
    %v9705 = vand.u32 %v8076, 4294901760
    %9706 = vmatpush1.msra.mxu0 %v9705
    %9707 = vmatprep.subr.mxu0 0.0
    %v9708 = vand.u32 %v8079, 4294901760
    %9709 = vmatpush1.msra.mxu0 %v9708
    %9710 = vmatprep.subr.mxu0 0.0
    %v9711 = vand.u32 %v8082, 4294901760
    %9712 = vmatpush1.msra.mxu0 %v9711
    %9713 = vmatprep.subr.mxu0 0.0
    %v9714 = vand.u32 %v8085, 4294901760
    %9715 = vmatpush1.msra.mxu0 %v9714
    %9716 = vmatprep.subr.mxu0 0.0
    %v9717 = vand.u32 %v8088, 4294901760
    %9718 = vmatpush1.msra.mxu0 %v9717
    %9719 = vmatprep.subr.mxu0 0.0
    %v9720 = vand.u32 %v8091, 4294901760
    %9721 = vmatpush1.msra.mxu0 %v9720
    %9722 = vmatprep.subr.mxu0 0.0
    %9723 = vmatpush1.msra.mxu0 0.0
    %9724 = vmatprep.subr.mxu0 0.0
    %9725 = vmatpush1.msra.mxu0 0.0
    %9726 = vmatprep.subr.mxu0 0.0
    %9727 = vmatpush1.msra.mxu0 0.0
    %9728 = vmatprep.subr.mxu0 0.0
    %9729 = vmatpush1.msra.mxu0 0.0
    %9730 = vmatprep.subr.mxu0 0.0
    %9731 = vmatpush1.msra.mxu0 0.0
    %9732 = vmatprep.subr.mxu0 0.0
    %9733 = vmatpush1.msra.mxu0 0.0
    %9734 = vmatprep.subr.mxu0 0.0
    %9735 = vmatpush1.msra.mxu0 0.0
    %9736 = vmatprep.subr.mxu0 0.0
    %9737 = vmatpush1.msra.mxu0 0.0
    %9738 = vmatprep.subr.mxu0 0.0
    %9739 = vmatpush1.msra.mxu0 0.0
    %9740 = vmatprep.subr.mxu0 0.0
    %9741 = vmatpush1.msra.mxu0 0.0
    %9742 = vmatprep.subr.mxu0 0.0
    %9743 = vmatpush1.msra.mxu0 0.0
    %9744 = vmatprep.subr.mxu0 0.0
    %9745 = vmatpush1.msra.mxu0 0.0
    %9746 = vmatprep.subr.mxu0 0.0
    %9747 = vmatpush1.msra.mxu0 0.0
    %9748 = vmatprep.subr.mxu0 0.0
    %9749 = vmatpush1.msra.mxu0 0.0
    %9750 = vmatprep.subr.mxu0 0.0
    %9751 = vmatpush1.msra.mxu0 0.0
    %9752 = vmatprep.subr.mxu0 0.0
    %9753 = vmatpush1.msra.mxu0 0.0
    %9754 = vmatprep.mubr.f32.mxu0 0.0
    %v9755 = vand.u32 %v7295, 4294901760
    %9756 = vmatmul.mubr.f32.gmra.mrb[0].mxu0 %v9755
    %v9757 = vpop.f32.mrb[0].mxu0
    %v9758 = vadd.f32 %v9659, %v9757
    %v9759 = vpop.f32.mrb[0].mxu0
    %9760 = vmatprep.mubr.f32.mxu0 0.0
    %v9761 = vand.u32 %v7296, 4294901760
    %9762 = vmatmul.mubr.f32.gmra.mrb[0].mxu0 %v9761
    %v9763 = vpop.f32.mrb[0].mxu0
    %v9764 = vadd.f32 %v9665, %v9763
    %v9765 = vpop.f32.mrb[0].mxu0
    %9766 = vmatprep.mubr.f32.mxu0 0.0
    %v9767 = vand.u32 %v7297, 4294901760
    %9768 = vmatmul.mubr.f32.gmra.mrb[0].mxu0 %v9767
    %v9769 = vpop.f32.mrb[0].mxu0
    %v9770 = vadd.f32 %v9671, %v9769
    %v9771 = vpop.f32.mrb[0].mxu0
    %9772 = vdwg.mxu0
    %v9774 = vlaneseq
    %v9775 = vshrl.u32 %v9774, 7
    %v9776 = vsub.s32 0, %v9775
    %v9777 = vrot.slane %v8092, %v9776
    %v9779 = vadd.f32 %v9758, %v9777
    %v9780 = vadd.f32 %v9764, %v9777
    %v9781 = vadd.f32 %v9770, %v9777
    %9782 = vmatprep.subr.mxu0 0.0
    %v9783 = vand.u32 %v9028, 4294901760
    %9784 = vmatpush1.msra.mxu0 %v9783
    %9785 = vmatprep.subr.mxu0 0.0
    %v9786 = vand.u32 %v9035, 4294901760
    %9787 = vmatpush1.msra.mxu0 %v9786
    %9788 = vmatprep.subr.mxu0 0.0
    %v9789 = vand.u32 %v9042, 4294901760
    %9790 = vmatpush1.msra.mxu0 %v9789
    %9791 = vmatprep.subr.mxu0 0.0
    %9792 = vmatpush1.msra.mxu0 0.0
    %9793 = vmatprep.subr.mxu0 0.0
    %9794 = vmatpush1.msra.mxu0 0.0
    %9795 = vmatprep.subr.mxu0 0.0
    %9796 = vmatpush1.msra.mxu0 0.0
    %9797 = vmatprep.subr.mxu0 0.0
    %9798 = vmatpush1.msra.mxu0 0.0
    %9799 = vmatprep.subr.mxu0 0.0
    %9800 = vmatpush1.msra.mxu0 0.0
    %9801 = vmatprep.subr.mxu0 0.0
    %9802 = vmatpush1.msra.mxu0 0.0
    %9803 = vmatprep.subr.mxu0 0.0
    %9804 = vmatpush1.msra.mxu0 0.0
    %9805 = vmatprep.subr.mxu0 0.0
    %9806 = vmatpush1.msra.mxu0 0.0
    %9807 = vmatprep.subr.mxu0 0.0
    %9808 = vmatpush1.msra.mxu0 0.0
    %9809 = vmatprep.subr.mxu0 0.0
    %9810 = vmatpush1.msra.mxu0 0.0
    %9811 = vmatprep.subr.mxu0 0.0
    %9812 = vmatpush1.msra.mxu0 0.0
    %9813 = vmatprep.subr.mxu0 0.0
    %9814 = vmatpush1.msra.mxu0 0.0
    %9815 = vmatprep.subr.mxu0 0.0
    %9816 = vmatpush1.msra.mxu0 0.0
    %9817 = vmatprep.subr.mxu0 0.0
    %9818 = vmatpush1.msra.mxu0 0.0
    %9819 = vmatprep.subr.mxu0 0.0
    %9820 = vmatpush1.msra.mxu0 0.0
    %9821 = vmatprep.subr.mxu0 0.0
    %9822 = vmatpush1.msra.mxu0 0.0
    %9823 = vmatprep.subr.mxu0 0.0
    %9824 = vmatpush1.msra.mxu0 0.0
    %9825 = vmatprep.subr.mxu0 0.0
    %9826 = vmatpush1.msra.mxu0 0.0
    %9827 = vmatprep.subr.mxu0 0.0
    %9828 = vmatpush1.msra.mxu0 0.0
    %9829 = vmatprep.subr.mxu0 0.0
    %9830 = vmatpush1.msra.mxu0 0.0
    %9831 = vmatprep.subr.mxu0 0.0
    %9832 = vmatpush1.msra.mxu0 0.0
    %9833 = vmatprep.subr.mxu0 0.0
    %9834 = vmatpush1.msra.mxu0 0.0
    %9835 = vmatprep.subr.mxu0 0.0
    %9836 = vmatpush1.msra.mxu0 0.0
    %9837 = vmatprep.subr.mxu0 0.0
    %9838 = vmatpush1.msra.mxu0 0.0
    %9839 = vmatprep.subr.mxu0 0.0
    %9840 = vmatpush1.msra.mxu0 0.0
    %9841 = vmatprep.subr.mxu0 0.0
    %9842 = vmatpush1.msra.mxu0 0.0
    %9843 = vmatprep.subr.mxu0 0.0
    %9844 = vmatpush1.msra.mxu0 0.0
    %9845 = vmatprep.subr.mxu0 0.0
    %9846 = vmatpush1.msra.mxu0 0.0
    %9847 = vmatprep.subr.mxu0 0.0
    %9848 = vmatpush1.msra.mxu0 0.0
    %9849 = vmatprep.mubr.f32.mxu0 0.0
    %v9850 = vand.u32 %v2547, 4294901760
    %v9851 = vsub.f32 %v2547, %v9850
    %v9852 = vand.u32 %v9851, 4294901760
    %v9853 = vsub.f32 %v9851, %v9852
    %v9854 = vand.u32 %v9853, 4294901760
    %9855 = vmatmul.mubr.f32.gmra.mrb[0].mxu0 %v9854
    %v9856 = vpop.f32.mrb[0].mxu0
    %v9857 = vadd.f32 0.0, %v9856
    %v9858 = vpop.f32.mrb[0].mxu0
    %9859 = vmatprep.mubr.f32.mxu0 0.0
    %v9860 = vand.u32 %v2550, 4294901760
    %v9861 = vsub.f32 %v2550, %v9860
    %v9862 = vand.u32 %v9861, 4294901760
    %v9863 = vsub.f32 %v9861, %v9862
    %v9864 = vand.u32 %v9863, 4294901760
    %9865 = vmatmul.mubr.f32.gmra.mrb[0].mxu0 %v9864
    %v9866 = vpop.f32.mrb[0].mxu0
    %v9867 = vadd.f32 0.0, %v9866
    %v9868 = vpop.f32.mrb[0].mxu0
    %9869 = vmatprep.mubr.f32.mxu0 0.0
    %v9870 = vand.u32 %v2553, 4294901760
    %v9871 = vsub.f32 %v2553, %v9870
    %v9872 = vand.u32 %v9871, 4294901760
    %v9873 = vsub.f32 %v9871, %v9872
    %v9874 = vand.u32 %v9873, 4294901760
    %9875 = vmatmul.mubr.f32.gmra.mrb[0].mxu0 %v9874
    %v9876 = vpop.f32.mrb[0].mxu0
    %v9877 = vadd.f32 0.0, %v9876
    %v9878 = vpop.f32.mrb[0].mxu0
    %9879 = vdwg.mxu0
    %9880 = vmatprep.subr.mxu0 0.0
    %v9881 = vand.u32 %v9028, 4294901760
    %v9882 = vsub.f32 %v9028, %v9881
    %v9883 = vand.u32 %v9882, 4294901760
    %v9884 = vsub.f32 %v9882, %v9883
    %v9885 = vand.u32 %v9884, 4294901760
    %9886 = vmatpush1.msra.mxu0 %v9885
    %9887 = vmatprep.subr.mxu0 0.0
    %v9888 = vand.u32 %v9035, 4294901760
    %v9889 = vsub.f32 %v9035, %v9888
    %v9890 = vand.u32 %v9889, 4294901760
    %v9891 = vsub.f32 %v9889, %v9890
    %v9892 = vand.u32 %v9891, 4294901760
    %9893 = vmatpush1.msra.mxu0 %v9892
    %9894 = vmatprep.subr.mxu0 0.0
    %v9895 = vand.u32 %v9042, 4294901760
    %v9896 = vsub.f32 %v9042, %v9895
    %v9897 = vand.u32 %v9896, 4294901760
    %v9898 = vsub.f32 %v9896, %v9897
    %v9899 = vand.u32 %v9898, 4294901760
    %9900 = vmatpush1.msra.mxu0 %v9899
    %9901 = vmatprep.subr.mxu0 0.0
    %9902 = vmatpush1.msra.mxu0 0.0
    %9903 = vmatprep.subr.mxu0 0.0
    %9904 = vmatpush1.msra.mxu0 0.0
    %9905 = vmatprep.subr.mxu0 0.0
    %9906 = vmatpush1.msra.mxu0 0.0
    %9907 = vmatprep.subr.mxu0 0.0
    %9908 = vmatpush1.msra.mxu0 0.0
    %9909 = vmatprep.subr.mxu0 0.0
    %9910 = vmatpush1.msra.mxu0 0.0
    %9911 = vmatprep.subr.mxu0 0.0
    %9912 = vmatpush1.msra.mxu0 0.0
    %9913 = vmatprep.subr.mxu0 0.0
    %9914 = vmatpush1.msra.mxu0 0.0
    %9915 = vmatprep.subr.mxu0 0.0
    %9916 = vmatpush1.msra.mxu0 0.0
    %9917 = vmatprep.subr.mxu0 0.0
    %9918 = vmatpush1.msra.mxu0 0.0
    %9919 = vmatprep.subr.mxu0 0.0
    %9920 = vmatpush1.msra.mxu0 0.0
    %9921 = vmatprep.subr.mxu0 0.0
    %9922 = vmatpush1.msra.mxu0 0.0
    %9923 = vmatprep.subr.mxu0 0.0
    %9924 = vmatpush1.msra.mxu0 0.0
    %9925 = vmatprep.subr.mxu0 0.0
    %9926 = vmatpush1.msra.mxu0 0.0
    %9927 = vmatprep.subr.mxu0 0.0
    %9928 = vmatpush1.msra.mxu0 0.0
    %9929 = vmatprep.subr.mxu0 0.0
    %9930 = vmatpush1.msra.mxu0 0.0
    %9931 = vmatprep.subr.mxu0 0.0
    %9932 = vmatpush1.msra.mxu0 0.0
    %9933 = vmatprep.subr.mxu0 0.0
    %9934 = vmatpush1.msra.mxu0 0.0
    %9935 = vmatprep.subr.mxu0 0.0
    %9936 = vmatpush1.msra.mxu0 0.0
    %9937 = vmatprep.subr.mxu0 0.0
    %9938 = vmatpush1.msra.mxu0 0.0
    %9939 = vmatprep.subr.mxu0 0.0
    %9940 = vmatpush1.msra.mxu0 0.0
    %9941 = vmatprep.subr.mxu0 0.0
    %9942 = vmatpush1.msra.mxu0 0.0
    %9943 = vmatprep.subr.mxu0 0.0
    %9944 = vmatpush1.msra.mxu0 0.0
    %9945 = vmatprep.subr.mxu0 0.0
    %9946 = vmatpush1.msra.mxu0 0.0
    %9947 = vmatprep.subr.mxu0 0.0
    %9948 = vmatpush1.msra.mxu0 0.0
    %9949 = vmatprep.subr.mxu0 0.0
    %9950 = vmatpush1.msra.mxu0 0.0
    %9951 = vmatprep.subr.mxu0 0.0
    %9952 = vmatpush1.msra.mxu0 0.0
    %9953 = vmatprep.subr.mxu0 0.0
    %9954 = vmatpush1.msra.mxu0 0.0
    %9955 = vmatprep.subr.mxu0 0.0
    %9956 = vmatpush1.msra.mxu0 0.0
    %9957 = vmatprep.subr.mxu0 0.0
    %9958 = vmatpush1.msra.mxu0 0.0
    %9959 = vmatprep.mubr.f32.mxu0 0.0
    %v9960 = vand.u32 %v2547, 4294901760
    %9961 = vmatmul.mubr.f32.gmra.mrb[0].mxu0 %v9960
    %v9962 = vpop.f32.mrb[0].mxu0
    %v9963 = vadd.f32 %v9857, %v9962
    %v9964 = vpop.f32.mrb[0].mxu0
    %9965 = vmatprep.mubr.f32.mxu0 0.0
    %v9966 = vand.u32 %v2550, 4294901760
    %9967 = vmatmul.mubr.f32.gmra.mrb[0].mxu0 %v9966
    %v9968 = vpop.f32.mrb[0].mxu0
    %v9969 = vadd.f32 %v9867, %v9968
    %v9970 = vpop.f32.mrb[0].mxu0
    %9971 = vmatprep.mubr.f32.mxu0 0.0
    %v9972 = vand.u32 %v2553, 4294901760
    %9973 = vmatmul.mubr.f32.gmra.mrb[0].mxu0 %v9972
    %v9974 = vpop.f32.mrb[0].mxu0
    %v9975 = vadd.f32 %v9877, %v9974
    %v9976 = vpop.f32.mrb[0].mxu0
    %9977 = vdwg.mxu0
    %9978 = vmatprep.subr.mxu0 0.0
    %v9979 = vand.u32 %v9028, 4294901760
    %v9980 = vsub.f32 %v9028, %v9979
    %9981 = vmatpush1.msra.mxu0 %v9980
    %9982 = vmatprep.subr.mxu0 0.0
    %v9983 = vand.u32 %v9035, 4294901760
    %v9984 = vsub.f32 %v9035, %v9983
    %9985 = vmatpush1.msra.mxu0 %v9984
    %9986 = vmatprep.subr.mxu0 0.0
    %v9987 = vand.u32 %v9042, 4294901760
    %v9988 = vsub.f32 %v9042, %v9987
    %9989 = vmatpush1.msra.mxu0 %v9988
    %9990 = vmatprep.subr.mxu0 0.0
    %9991 = vmatpush1.msra.mxu0 0.0
    %9992 = vmatprep.subr.mxu0 0.0
    %9993 = vmatpush1.msra.mxu0 0.0
    %9994 = vmatprep.subr.mxu0 0.0
    %9995 = vmatpush1.msra.mxu0 0.0
    %9996 = vmatprep.subr.mxu0 0.0
    %9997 = vmatpush1.msra.mxu0 0.0
    %9998 = vmatprep.subr.mxu0 0.0
    %9999 = vmatpush1.msra.mxu0 0.0
    %10000 = vmatprep.subr.mxu0 0.0
    %10001 = vmatpush1.msra.mxu0 0.0
    %10002 = vmatprep.subr.mxu0 0.0
    %10003 = vmatpush1.msra.mxu0 0.0
    %10004 = vmatprep.subr.mxu0 0.0
    %10005 = vmatpush1.msra.mxu0 0.0
    %10006 = vmatprep.subr.mxu0 0.0
    %10007 = vmatpush1.msra.mxu0 0.0
    %10008 = vmatprep.subr.mxu0 0.0
    %10009 = vmatpush1.msra.mxu0 0.0
    %10010 = vmatprep.subr.mxu0 0.0
    %10011 = vmatpush1.msra.mxu0 0.0
    %10012 = vmatprep.subr.mxu0 0.0
    %10013 = vmatpush1.msra.mxu0 0.0
    %10014 = vmatprep.subr.mxu0 0.0
    %10015 = vmatpush1.msra.mxu0 0.0
    %10016 = vmatprep.subr.mxu0 0.0
    %10017 = vmatpush1.msra.mxu0 0.0
    %10018 = vmatprep.subr.mxu0 0.0
    %10019 = vmatpush1.msra.mxu0 0.0
    %10020 = vmatprep.subr.mxu0 0.0
    %10021 = vmatpush1.msra.mxu0 0.0
    %10022 = vmatprep.subr.mxu0 0.0
    %10023 = vmatpush1.msra.mxu0 0.0
    %10024 = vmatprep.subr.mxu0 0.0
    %10025 = vmatpush1.msra.mxu0 0.0
    %10026 = vmatprep.subr.mxu0 0.0
    %10027 = vmatpush1.msra.mxu0 0.0
    %10028 = vmatprep.subr.mxu0 0.0
    %10029 = vmatpush1.msra.mxu0 0.0
    %10030 = vmatprep.subr.mxu0 0.0
    %10031 = vmatpush1.msra.mxu0 0.0
    %10032 = vmatprep.subr.mxu0 0.0
    %10033 = vmatpush1.msra.mxu0 0.0
    %10034 = vmatprep.subr.mxu0 0.0
    %10035 = vmatpush1.msra.mxu0 0.0
    %10036 = vmatprep.subr.mxu0 0.0
    %10037 = vmatpush1.msra.mxu0 0.0
    %10038 = vmatprep.subr.mxu0 0.0
    %10039 = vmatpush1.msra.mxu0 0.0
    %10040 = vmatprep.subr.mxu0 0.0
    %10041 = vmatpush1.msra.mxu0 0.0
    %10042 = vmatprep.subr.mxu0 0.0
    %10043 = vmatpush1.msra.mxu0 0.0
    %10044 = vmatprep.subr.mxu0 0.0
    %10045 = vmatpush1.msra.mxu0 0.0
    %10046 = vmatprep.subr.mxu0 0.0
    %10047 = vmatpush1.msra.mxu0 0.0
    %10048 = vmatprep.mubr.f32.mxu0 0.0
    %v10049 = vand.u32 %v2547, 4294901760
    %v10050 = vsub.f32 %v2547, %v10049
    %10051 = vmatmul.mubr.f32.gmra.mrb[0].mxu0 %v10050
    %v10052 = vpop.f32.mrb[0].mxu0
    %v10053 = vadd.f32 %v9963, %v10052
    %v10054 = vpop.f32.mrb[0].mxu0
    %10055 = vmatprep.mubr.f32.mxu0 0.0
    %v10056 = vand.u32 %v2550, 4294901760
    %v10057 = vsub.f32 %v2550, %v10056
    %10058 = vmatmul.mubr.f32.gmra.mrb[0].mxu0 %v10057
    %v10059 = vpop.f32.mrb[0].mxu0
    %v10060 = vadd.f32 %v9969, %v10059
    %v10061 = vpop.f32.mrb[0].mxu0
    %10062 = vmatprep.mubr.f32.mxu0 0.0
    %v10063 = vand.u32 %v2553, 4294901760
    %v10064 = vsub.f32 %v2553, %v10063
    %10065 = vmatmul.mubr.f32.gmra.mrb[0].mxu0 %v10064
    %v10066 = vpop.f32.mrb[0].mxu0
    %v10067 = vadd.f32 %v9975, %v10066
    %v10068 = vpop.f32.mrb[0].mxu0
    %10069 = vdwg.mxu0
    %10070 = vmatprep.subr.mxu0 0.0
    %v10071 = vand.u32 %v9028, 4294901760
    %10072 = vmatpush1.msra.mxu0 %v10071
    %10073 = vmatprep.subr.mxu0 0.0
    %v10074 = vand.u32 %v9035, 4294901760
    %10075 = vmatpush1.msra.mxu0 %v10074
    %10076 = vmatprep.subr.mxu0 0.0
    %v10077 = vand.u32 %v9042, 4294901760
    %10078 = vmatpush1.msra.mxu0 %v10077
    %10079 = vmatprep.subr.mxu0 0.0
    %10080 = vmatpush1.msra.mxu0 0.0
    %10081 = vmatprep.subr.mxu0 0.0
    %10082 = vmatpush1.msra.mxu0 0.0
    %10083 = vmatprep.subr.mxu0 0.0
    %10084 = vmatpush1.msra.mxu0 0.0
    %10085 = vmatprep.subr.mxu0 0.0
    %10086 = vmatpush1.msra.mxu0 0.0
    %10087 = vmatprep.subr.mxu0 0.0
    %10088 = vmatpush1.msra.mxu0 0.0
    %10089 = vmatprep.subr.mxu0 0.0
    %10090 = vmatpush1.msra.mxu0 0.0
    %10091 = vmatprep.subr.mxu0 0.0
    %10092 = vmatpush1.msra.mxu0 0.0
    %10093 = vmatprep.subr.mxu0 0.0
    %10094 = vmatpush1.msra.mxu0 0.0
    %10095 = vmatprep.subr.mxu0 0.0
    %10096 = vmatpush1.msra.mxu0 0.0
    %10097 = vmatprep.subr.mxu0 0.0
    %10098 = vmatpush1.msra.mxu0 0.0
    %10099 = vmatprep.subr.mxu0 0.0
    %10100 = vmatpush1.msra.mxu0 0.0
    %10101 = vmatprep.subr.mxu0 0.0
    %10102 = vmatpush1.msra.mxu0 0.0
    %10103 = vmatprep.subr.mxu0 0.0
    %10104 = vmatpush1.msra.mxu0 0.0
    %10105 = vmatprep.subr.mxu0 0.0
    %10106 = vmatpush1.msra.mxu0 0.0
    %10107 = vmatprep.subr.mxu0 0.0
    %10108 = vmatpush1.msra.mxu0 0.0
    %10109 = vmatprep.subr.mxu0 0.0
    %10110 = vmatpush1.msra.mxu0 0.0
    %10111 = vmatprep.subr.mxu0 0.0
    %10112 = vmatpush1.msra.mxu0 0.0
    %10113 = vmatprep.subr.mxu0 0.0
    %10114 = vmatpush1.msra.mxu0 0.0
    %10115 = vmatprep.subr.mxu0 0.0
    %10116 = vmatpush1.msra.mxu0 0.0
    %10117 = vmatprep.subr.mxu0 0.0
    %10118 = vmatpush1.msra.mxu0 0.0
    %10119 = vmatprep.subr.mxu0 0.0
    %10120 = vmatpush1.msra.mxu0 0.0
    %10121 = vmatprep.subr.mxu0 0.0
    %10122 = vmatpush1.msra.mxu0 0.0
    %10123 = vmatprep.subr.mxu0 0.0
    %10124 = vmatpush1.msra.mxu0 0.0
    %10125 = vmatprep.subr.mxu0 0.0
    %10126 = vmatpush1.msra.mxu0 0.0
    %10127 = vmatprep.subr.mxu0 0.0
    %10128 = vmatpush1.msra.mxu0 0.0
    %10129 = vmatprep.subr.mxu0 0.0
    %10130 = vmatpush1.msra.mxu0 0.0
    %10131 = vmatprep.subr.mxu0 0.0
    %10132 = vmatpush1.msra.mxu0 0.0
    %10133 = vmatprep.subr.mxu0 0.0
    %10134 = vmatpush1.msra.mxu0 0.0
    %10135 = vmatprep.subr.mxu0 0.0
    %10136 = vmatpush1.msra.mxu0 0.0
    %10137 = vmatprep.mubr.f32.mxu0 0.0
    %v10138 = vand.u32 %v2547, 4294901760
    %v10139 = vsub.f32 %v2547, %v10138
    %v10140 = vand.u32 %v10139, 4294901760
    %10141 = vmatmul.mubr.f32.gmra.mrb[0].mxu0 %v10140
    %v10142 = vpop.f32.mrb[0].mxu0
    %v10143 = vadd.f32 %v10053, %v10142
    %v10144 = vpop.f32.mrb[0].mxu0
    %10145 = vmatprep.mubr.f32.mxu0 0.0
    %v10146 = vand.u32 %v2550, 4294901760
    %v10147 = vsub.f32 %v2550, %v10146
    %v10148 = vand.u32 %v10147, 4294901760
    %10149 = vmatmul.mubr.f32.gmra.mrb[0].mxu0 %v10148
    %v10150 = vpop.f32.mrb[0].mxu0
    %v10151 = vadd.f32 %v10060, %v10150
    %v10152 = vpop.f32.mrb[0].mxu0
    %10153 = vmatprep.mubr.f32.mxu0 0.0
    %v10154 = vand.u32 %v2553, 4294901760
    %v10155 = vsub.f32 %v2553, %v10154
    %v10156 = vand.u32 %v10155, 4294901760
    %10157 = vmatmul.mubr.f32.gmra.mrb[0].mxu0 %v10156
    %v10158 = vpop.f32.mrb[0].mxu0
    %v10159 = vadd.f32 %v10067, %v10158
    %v10160 = vpop.f32.mrb[0].mxu0
    %10161 = vdwg.mxu0
    %10162 = vmatprep.subr.mxu0 0.0
    %v10163 = vand.u32 %v9028, 4294901760
    %v10164 = vsub.f32 %v9028, %v10163
    %v10165 = vand.u32 %v10164, 4294901760
    %10166 = vmatpush1.msra.mxu0 %v10165
    %10167 = vmatprep.subr.mxu0 0.0
    %v10168 = vand.u32 %v9035, 4294901760
    %v10169 = vsub.f32 %v9035, %v10168
    %v10170 = vand.u32 %v10169, 4294901760
    %10171 = vmatpush1.msra.mxu0 %v10170
    %10172 = vmatprep.subr.mxu0 0.0
    %v10173 = vand.u32 %v9042, 4294901760
    %v10174 = vsub.f32 %v9042, %v10173
    %v10175 = vand.u32 %v10174, 4294901760
    %10176 = vmatpush1.msra.mxu0 %v10175
    %10177 = vmatprep.subr.mxu0 0.0
    %10178 = vmatpush1.msra.mxu0 0.0
    %10179 = vmatprep.subr.mxu0 0.0
    %10180 = vmatpush1.msra.mxu0 0.0
    %10181 = vmatprep.subr.mxu0 0.0
    %10182 = vmatpush1.msra.mxu0 0.0
    %10183 = vmatprep.subr.mxu0 0.0
    %10184 = vmatpush1.msra.mxu0 0.0
    %10185 = vmatprep.subr.mxu0 0.0
    %10186 = vmatpush1.msra.mxu0 0.0
    %10187 = vmatprep.subr.mxu0 0.0
    %10188 = vmatpush1.msra.mxu0 0.0
    %10189 = vmatprep.subr.mxu0 0.0
    %10190 = vmatpush1.msra.mxu0 0.0
    %10191 = vmatprep.subr.mxu0 0.0
    %10192 = vmatpush1.msra.mxu0 0.0
    %10193 = vmatprep.subr.mxu0 0.0
    %10194 = vmatpush1.msra.mxu0 0.0
    %10195 = vmatprep.subr.mxu0 0.0
    %10196 = vmatpush1.msra.mxu0 0.0
    %10197 = vmatprep.subr.mxu0 0.0
    %10198 = vmatpush1.msra.mxu0 0.0
    %10199 = vmatprep.subr.mxu0 0.0
    %10200 = vmatpush1.msra.mxu0 0.0
    %10201 = vmatprep.subr.mxu0 0.0
    %10202 = vmatpush1.msra.mxu0 0.0
    %10203 = vmatprep.subr.mxu0 0.0
    %10204 = vmatpush1.msra.mxu0 0.0
    %10205 = vmatprep.subr.mxu0 0.0
    %10206 = vmatpush1.msra.mxu0 0.0
    %10207 = vmatprep.subr.mxu0 0.0
    %10208 = vmatpush1.msra.mxu0 0.0
    %10209 = vmatprep.subr.mxu0 0.0
    %10210 = vmatpush1.msra.mxu0 0.0
    %10211 = vmatprep.subr.mxu0 0.0
    %10212 = vmatpush1.msra.mxu0 0.0
    %10213 = vmatprep.subr.mxu0 0.0
    %10214 = vmatpush1.msra.mxu0 0.0
    %10215 = vmatprep.subr.mxu0 0.0
    %10216 = vmatpush1.msra.mxu0 0.0
    %10217 = vmatprep.subr.mxu0 0.0
    %10218 = vmatpush1.msra.mxu0 0.0
    %10219 = vmatprep.subr.mxu0 0.0
    %10220 = vmatpush1.msra.mxu0 0.0
    %10221 = vmatprep.subr.mxu0 0.0
    %10222 = vmatpush1.msra.mxu0 0.0
    %10223 = vmatprep.subr.mxu0 0.0
    %10224 = vmatpush1.msra.mxu0 0.0
    %10225 = vmatprep.subr.mxu0 0.0
    %10226 = vmatpush1.msra.mxu0 0.0
    %10227 = vmatprep.subr.mxu0 0.0
    %10228 = vmatpush1.msra.mxu0 0.0
    %10229 = vmatprep.subr.mxu0 0.0
    %10230 = vmatpush1.msra.mxu0 0.0
    %10231 = vmatprep.subr.mxu0 0.0
    %10232 = vmatpush1.msra.mxu0 0.0
    %10233 = vmatprep.subr.mxu0 0.0
    %10234 = vmatpush1.msra.mxu0 0.0
    %10235 = vmatprep.mubr.f32.mxu0 0.0
    %v10236 = vand.u32 %v2547, 4294901760
    %10237 = vmatmul.mubr.f32.gmra.mrb[0].mxu0 %v10236
    %v10238 = vpop.f32.mrb[0].mxu0
    %v10239 = vadd.f32 %v10143, %v10238
    %v10240 = vpop.f32.mrb[0].mxu0
    %10241 = vmatprep.mubr.f32.mxu0 0.0
    %v10242 = vand.u32 %v2550, 4294901760
    %10243 = vmatmul.mubr.f32.gmra.mrb[0].mxu0 %v10242
    %v10244 = vpop.f32.mrb[0].mxu0
    %v10245 = vadd.f32 %v10151, %v10244
    %v10246 = vpop.f32.mrb[0].mxu0
    %10247 = vmatprep.mubr.f32.mxu0 0.0
    %v10248 = vand.u32 %v2553, 4294901760
    %10249 = vmatmul.mubr.f32.gmra.mrb[0].mxu0 %v10248
    %v10250 = vpop.f32.mrb[0].mxu0
    %v10251 = vadd.f32 %v10159, %v10250
    %v10252 = vpop.f32.mrb[0].mxu0
    %10253 = vdwg.mxu0
    %10254 = vmatprep.subr.mxu0 0.0
    %v10255 = vand.u32 %v9028, 4294901760
    %10256 = vmatpush1.msra.mxu0 %v10255
    %10257 = vmatprep.subr.mxu0 0.0
    %v10258 = vand.u32 %v9035, 4294901760
    %10259 = vmatpush1.msra.mxu0 %v10258
    %10260 = vmatprep.subr.mxu0 0.0
    %v10261 = vand.u32 %v9042, 4294901760
    %10262 = vmatpush1.msra.mxu0 %v10261
    %10263 = vmatprep.subr.mxu0 0.0
    %10264 = vmatpush1.msra.mxu0 0.0
    %10265 = vmatprep.subr.mxu0 0.0
    %10266 = vmatpush1.msra.mxu0 0.0
    %10267 = vmatprep.subr.mxu0 0.0
    %10268 = vmatpush1.msra.mxu0 0.0
    %10269 = vmatprep.subr.mxu0 0.0
    %10270 = vmatpush1.msra.mxu0 0.0
    %10271 = vmatprep.subr.mxu0 0.0
    %10272 = vmatpush1.msra.mxu0 0.0
    %10273 = vmatprep.subr.mxu0 0.0
    %10274 = vmatpush1.msra.mxu0 0.0
    %10275 = vmatprep.subr.mxu0 0.0
    %10276 = vmatpush1.msra.mxu0 0.0
    %10277 = vmatprep.subr.mxu0 0.0
    %10278 = vmatpush1.msra.mxu0 0.0
    %10279 = vmatprep.subr.mxu0 0.0
    %10280 = vmatpush1.msra.mxu0 0.0
    %10281 = vmatprep.subr.mxu0 0.0
    %10282 = vmatpush1.msra.mxu0 0.0
    %10283 = vmatprep.subr.mxu0 0.0
    %10284 = vmatpush1.msra.mxu0 0.0
    %10285 = vmatprep.subr.mxu0 0.0
    %10286 = vmatpush1.msra.mxu0 0.0
    %10287 = vmatprep.subr.mxu0 0.0
    %10288 = vmatpush1.msra.mxu0 0.0
    %10289 = vmatprep.subr.mxu0 0.0
    %10290 = vmatpush1.msra.mxu0 0.0
    %10291 = vmatprep.subr.mxu0 0.0
    %10292 = vmatpush1.msra.mxu0 0.0
    %10293 = vmatprep.subr.mxu0 0.0
    %10294 = vmatpush1.msra.mxu0 0.0
    %10295 = vmatprep.subr.mxu0 0.0
    %10296 = vmatpush1.msra.mxu0 0.0
    %10297 = vmatprep.subr.mxu0 0.0
    %10298 = vmatpush1.msra.mxu0 0.0
    %10299 = vmatprep.subr.mxu0 0.0
    %10300 = vmatpush1.msra.mxu0 0.0
    %10301 = vmatprep.subr.mxu0 0.0
    %10302 = vmatpush1.msra.mxu0 0.0
    %10303 = vmatprep.subr.mxu0 0.0
    %10304 = vmatpush1.msra.mxu0 0.0
    %10305 = vmatprep.subr.mxu0 0.0
    %10306 = vmatpush1.msra.mxu0 0.0
    %10307 = vmatprep.subr.mxu0 0.0
    %10308 = vmatpush1.msra.mxu0 0.0
    %10309 = vmatprep.subr.mxu0 0.0
    %10310 = vmatpush1.msra.mxu0 0.0
    %10311 = vmatprep.subr.mxu0 0.0
    %10312 = vmatpush1.msra.mxu0 0.0
    %10313 = vmatprep.subr.mxu0 0.0
    %10314 = vmatpush1.msra.mxu0 0.0
    %10315 = vmatprep.subr.mxu0 0.0
    %10316 = vmatpush1.msra.mxu0 0.0
    %10317 = vmatprep.subr.mxu0 0.0
    %10318 = vmatpush1.msra.mxu0 0.0
    %10319 = vmatprep.subr.mxu0 0.0
    %10320 = vmatpush1.msra.mxu0 0.0
    %10321 = vmatprep.mubr.f32.mxu0 0.0
    %v10322 = vand.u32 %v2547, 4294901760
    %10323 = vmatmul.mubr.f32.gmra.mrb[0].mxu0 %v10322
    %v10324 = vpop.f32.mrb[0].mxu0
    %v10325 = vadd.f32 %v10239, %v10324
    %v10326 = vpop.f32.mrb[0].mxu0
    %10327 = vmatprep.mubr.f32.mxu0 0.0
    %v10328 = vand.u32 %v2550, 4294901760
    %10329 = vmatmul.mubr.f32.gmra.mrb[0].mxu0 %v10328
    %v10330 = vpop.f32.mrb[0].mxu0
    %v10331 = vadd.f32 %v10245, %v10330
    %v10332 = vpop.f32.mrb[0].mxu0
    %10333 = vmatprep.mubr.f32.mxu0 0.0
    %v10334 = vand.u32 %v2553, 4294901760
    %10335 = vmatmul.mubr.f32.gmra.mrb[0].mxu0 %v10334
    %v10336 = vpop.f32.mrb[0].mxu0
    %v10337 = vadd.f32 %v10251, %v10336
    %v10338 = vpop.f32.mrb[0].mxu0
    %10339 = vdwg.mxu0
    %v10340 = vadd.f32 %v9779, %v10325
    %v10341 = vadd.f32 %v9780, %v10331
    %v10342 = vadd.f32 %v9781, %v10337
    %10343 = vmatprep.subr.mxu0 0.0
    %v10344 = vand.u32 %v9030, 4294901760
    %10345 = vmatpush1.msra.mxu0 %v10344
    %10346 = vmatprep.subr.mxu0 0.0
    %v10347 = vand.u32 %v9037, 4294901760
    %10348 = vmatpush1.msra.mxu0 %v10347
    %10349 = vmatprep.subr.mxu0 0.0
    %v10350 = vand.u32 %v9044, 4294901760
    %10351 = vmatpush1.msra.mxu0 %v10350
    %10352 = vmatprep.subr.mxu0 0.0
    %10353 = vmatpush1.msra.mxu0 0.0
    %10354 = vmatprep.subr.mxu0 0.0
    %10355 = vmatpush1.msra.mxu0 0.0
    %10356 = vmatprep.subr.mxu0 0.0
    %10357 = vmatpush1.msra.mxu0 0.0
    %10358 = vmatprep.subr.mxu0 0.0
    %10359 = vmatpush1.msra.mxu0 0.0
    %10360 = vmatprep.subr.mxu0 0.0
    %10361 = vmatpush1.msra.mxu0 0.0
    %10362 = vmatprep.subr.mxu0 0.0
    %10363 = vmatpush1.msra.mxu0 0.0
    %10364 = vmatprep.subr.mxu0 0.0
    %10365 = vmatpush1.msra.mxu0 0.0
    %10366 = vmatprep.subr.mxu0 0.0
    %10367 = vmatpush1.msra.mxu0 0.0
    %10368 = vmatprep.subr.mxu0 0.0
    %10369 = vmatpush1.msra.mxu0 0.0
    %10370 = vmatprep.subr.mxu0 0.0
    %10371 = vmatpush1.msra.mxu0 0.0
    %10372 = vmatprep.subr.mxu0 0.0
    %10373 = vmatpush1.msra.mxu0 0.0
    %10374 = vmatprep.subr.mxu0 0.0
    %10375 = vmatpush1.msra.mxu0 0.0
    %10376 = vmatprep.subr.mxu0 0.0
    %10377 = vmatpush1.msra.mxu0 0.0
    %10378 = vmatprep.subr.mxu0 0.0
    %10379 = vmatpush1.msra.mxu0 0.0
    %10380 = vmatprep.subr.mxu0 0.0
    %10381 = vmatpush1.msra.mxu0 0.0
    %10382 = vmatprep.subr.mxu0 0.0
    %10383 = vmatpush1.msra.mxu0 0.0
    %10384 = vmatprep.subr.mxu0 0.0
    %10385 = vmatpush1.msra.mxu0 0.0
    %10386 = vmatprep.subr.mxu0 0.0
    %10387 = vmatpush1.msra.mxu0 0.0
    %10388 = vmatprep.subr.mxu0 0.0
    %10389 = vmatpush1.msra.mxu0 0.0
    %10390 = vmatprep.subr.mxu0 0.0
    %10391 = vmatpush1.msra.mxu0 0.0
    %10392 = vmatprep.subr.mxu0 0.0
    %10393 = vmatpush1.msra.mxu0 0.0
    %10394 = vmatprep.subr.mxu0 0.0
    %10395 = vmatpush1.msra.mxu0 0.0
    %10396 = vmatprep.subr.mxu0 0.0
    %10397 = vmatpush1.msra.mxu0 0.0
    %10398 = vmatprep.subr.mxu0 0.0
    %10399 = vmatpush1.msra.mxu0 0.0
    %10400 = vmatprep.subr.mxu0 0.0
    %10401 = vmatpush1.msra.mxu0 0.0
    %10402 = vmatprep.subr.mxu0 0.0
    %10403 = vmatpush1.msra.mxu0 0.0
    %10404 = vmatprep.subr.mxu0 0.0
    %10405 = vmatpush1.msra.mxu0 0.0
    %10406 = vmatprep.subr.mxu0 0.0
    %10407 = vmatpush1.msra.mxu0 0.0
    %10408 = vmatprep.subr.mxu0 0.0
    %10409 = vmatpush1.msra.mxu0 0.0
    %10410 = vmatprep.mubr.f32.mxu0 0.0
    %v10411 = vand.u32 %v3117, 4294901760
    %v10412 = vsub.f32 %v3117, %v10411
    %v10413 = vand.u32 %v10412, 4294901760
    %v10414 = vsub.f32 %v10412, %v10413
    %v10415 = vand.u32 %v10414, 4294901760
    %10416 = vmatmul.mubr.f32.gmra.mrb[0].mxu0 %v10415
    %v10417 = vpop.f32.mrb[0].mxu0
    %v10418 = vadd.f32 0.0, %v10417
    %v10419 = vpop.f32.mrb[0].mxu0
    %10420 = vmatprep.mubr.f32.mxu0 0.0
    %v10421 = vand.u32 %v3120, 4294901760
    %v10422 = vsub.f32 %v3120, %v10421
    %v10423 = vand.u32 %v10422, 4294901760
    %v10424 = vsub.f32 %v10422, %v10423
    %v10425 = vand.u32 %v10424, 4294901760
    %10426 = vmatmul.mubr.f32.gmra.mrb[0].mxu0 %v10425
    %v10427 = vpop.f32.mrb[0].mxu0
    %v10428 = vadd.f32 0.0, %v10427
    %v10429 = vpop.f32.mrb[0].mxu0
    %10430 = vmatprep.mubr.f32.mxu0 0.0
    %v10431 = vand.u32 %v3123, 4294901760
    %v10432 = vsub.f32 %v3123, %v10431
    %v10433 = vand.u32 %v10432, 4294901760
    %v10434 = vsub.f32 %v10432, %v10433
    %v10435 = vand.u32 %v10434, 4294901760
    %10436 = vmatmul.mubr.f32.gmra.mrb[0].mxu0 %v10435
    %v10437 = vpop.f32.mrb[0].mxu0
    %v10438 = vadd.f32 0.0, %v10437
    %v10439 = vpop.f32.mrb[0].mxu0
    %10440 = vdwg.mxu0
    %10441 = vmatprep.subr.mxu0 0.0
    %v10442 = vand.u32 %v9030, 4294901760
    %v10443 = vsub.f32 %v9030, %v10442
    %v10444 = vand.u32 %v10443, 4294901760
    %v10445 = vsub.f32 %v10443, %v10444
    %v10446 = vand.u32 %v10445, 4294901760
    %10447 = vmatpush1.msra.mxu0 %v10446
    %10448 = vmatprep.subr.mxu0 0.0
    %v10449 = vand.u32 %v9037, 4294901760
    %v10450 = vsub.f32 %v9037, %v10449
    %v10451 = vand.u32 %v10450, 4294901760
    %v10452 = vsub.f32 %v10450, %v10451
    %v10453 = vand.u32 %v10452, 4294901760
    %10454 = vmatpush1.msra.mxu0 %v10453
    %10455 = vmatprep.subr.mxu0 0.0
    %v10456 = vand.u32 %v9044, 4294901760
    %v10457 = vsub.f32 %v9044, %v10456
    %v10458 = vand.u32 %v10457, 4294901760
    %v10459 = vsub.f32 %v10457, %v10458
    %v10460 = vand.u32 %v10459, 4294901760
    %10461 = vmatpush1.msra.mxu0 %v10460
    %10462 = vmatprep.subr.mxu0 0.0
    %10463 = vmatpush1.msra.mxu0 0.0
    %10464 = vmatprep.subr.mxu0 0.0
    %10465 = vmatpush1.msra.mxu0 0.0
    %10466 = vmatprep.subr.mxu0 0.0
    %10467 = vmatpush1.msra.mxu0 0.0
    %10468 = vmatprep.subr.mxu0 0.0
    %10469 = vmatpush1.msra.mxu0 0.0
    %10470 = vmatprep.subr.mxu0 0.0
    %10471 = vmatpush1.msra.mxu0 0.0
    %10472 = vmatprep.subr.mxu0 0.0
    %10473 = vmatpush1.msra.mxu0 0.0
    %10474 = vmatprep.subr.mxu0 0.0
    %10475 = vmatpush1.msra.mxu0 0.0
    %10476 = vmatprep.subr.mxu0 0.0
    %10477 = vmatpush1.msra.mxu0 0.0
    %10478 = vmatprep.subr.mxu0 0.0
    %10479 = vmatpush1.msra.mxu0 0.0
    %10480 = vmatprep.subr.mxu0 0.0
    %10481 = vmatpush1.msra.mxu0 0.0
    %10482 = vmatprep.subr.mxu0 0.0
    %10483 = vmatpush1.msra.mxu0 0.0
    %10484 = vmatprep.subr.mxu0 0.0
    %10485 = vmatpush1.msra.mxu0 0.0
    %10486 = vmatprep.subr.mxu0 0.0
    %10487 = vmatpush1.msra.mxu0 0.0
    %10488 = vmatprep.subr.mxu0 0.0
    %10489 = vmatpush1.msra.mxu0 0.0
    %10490 = vmatprep.subr.mxu0 0.0
    %10491 = vmatpush1.msra.mxu0 0.0
    %10492 = vmatprep.subr.mxu0 0.0
    %10493 = vmatpush1.msra.mxu0 0.0
    %10494 = vmatprep.subr.mxu0 0.0
    %10495 = vmatpush1.msra.mxu0 0.0
    %10496 = vmatprep.subr.mxu0 0.0
    %10497 = vmatpush1.msra.mxu0 0.0
    %10498 = vmatprep.subr.mxu0 0.0
    %10499 = vmatpush1.msra.mxu0 0.0
    %10500 = vmatprep.subr.mxu0 0.0
    %10501 = vmatpush1.msra.mxu0 0.0
    %10502 = vmatprep.subr.mxu0 0.0
    %10503 = vmatpush1.msra.mxu0 0.0
    %10504 = vmatprep.subr.mxu0 0.0
    %10505 = vmatpush1.msra.mxu0 0.0
    %10506 = vmatprep.subr.mxu0 0.0
    %10507 = vmatpush1.msra.mxu0 0.0
    %10508 = vmatprep.subr.mxu0 0.0
    %10509 = vmatpush1.msra.mxu0 0.0
    %10510 = vmatprep.subr.mxu0 0.0
    %10511 = vmatpush1.msra.mxu0 0.0
    %10512 = vmatprep.subr.mxu0 0.0
    %10513 = vmatpush1.msra.mxu0 0.0
    %10514 = vmatprep.subr.mxu0 0.0
    %10515 = vmatpush1.msra.mxu0 0.0
    %10516 = vmatprep.subr.mxu0 0.0
    %10517 = vmatpush1.msra.mxu0 0.0
    %10518 = vmatprep.subr.mxu0 0.0
    %10519 = vmatpush1.msra.mxu0 0.0
    %10520 = vmatprep.mubr.f32.mxu0 0.0
    %v10521 = vand.u32 %v3117, 4294901760
    %10522 = vmatmul.mubr.f32.gmra.mrb[0].mxu0 %v10521
    %v10523 = vpop.f32.mrb[0].mxu0
    %v10524 = vadd.f32 %v10418, %v10523
    %v10525 = vpop.f32.mrb[0].mxu0
    %10526 = vmatprep.mubr.f32.mxu0 0.0
    %v10527 = vand.u32 %v3120, 4294901760
    %10528 = vmatmul.mubr.f32.gmra.mrb[0].mxu0 %v10527
    %v10529 = vpop.f32.mrb[0].mxu0
    %v10530 = vadd.f32 %v10428, %v10529
    %v10531 = vpop.f32.mrb[0].mxu0
    %10532 = vmatprep.mubr.f32.mxu0 0.0
    %v10533 = vand.u32 %v3123, 4294901760
    %10534 = vmatmul.mubr.f32.gmra.mrb[0].mxu0 %v10533
    %v10535 = vpop.f32.mrb[0].mxu0
    %v10536 = vadd.f32 %v10438, %v10535
    %v10537 = vpop.f32.mrb[0].mxu0
    %10538 = vdwg.mxu0
    %10539 = vmatprep.subr.mxu0 0.0
    %v10540 = vand.u32 %v9030, 4294901760
    %v10541 = vsub.f32 %v9030, %v10540
    %10542 = vmatpush1.msra.mxu0 %v10541
    %10543 = vmatprep.subr.mxu0 0.0
    %v10544 = vand.u32 %v9037, 4294901760
    %v10545 = vsub.f32 %v9037, %v10544
    %10546 = vmatpush1.msra.mxu0 %v10545
    %10547 = vmatprep.subr.mxu0 0.0
    %v10548 = vand.u32 %v9044, 4294901760
    %v10549 = vsub.f32 %v9044, %v10548
    %10550 = vmatpush1.msra.mxu0 %v10549
    %10551 = vmatprep.subr.mxu0 0.0
    %10552 = vmatpush1.msra.mxu0 0.0
    %10553 = vmatprep.subr.mxu0 0.0
    %10554 = vmatpush1.msra.mxu0 0.0
    %10555 = vmatprep.subr.mxu0 0.0
    %10556 = vmatpush1.msra.mxu0 0.0
    %10557 = vmatprep.subr.mxu0 0.0
    %10558 = vmatpush1.msra.mxu0 0.0
    %10559 = vmatprep.subr.mxu0 0.0
    %10560 = vmatpush1.msra.mxu0 0.0
    %10561 = vmatprep.subr.mxu0 0.0
    %10562 = vmatpush1.msra.mxu0 0.0
    %10563 = vmatprep.subr.mxu0 0.0
    %10564 = vmatpush1.msra.mxu0 0.0
    %10565 = vmatprep.subr.mxu0 0.0
    %10566 = vmatpush1.msra.mxu0 0.0
    %10567 = vmatprep.subr.mxu0 0.0
    %10568 = vmatpush1.msra.mxu0 0.0
    %10569 = vmatprep.subr.mxu0 0.0
    %10570 = vmatpush1.msra.mxu0 0.0
    %10571 = vmatprep.subr.mxu0 0.0
    %10572 = vmatpush1.msra.mxu0 0.0
    %10573 = vmatprep.subr.mxu0 0.0
    %10574 = vmatpush1.msra.mxu0 0.0
    %10575 = vmatprep.subr.mxu0 0.0
    %10576 = vmatpush1.msra.mxu0 0.0
    %10577 = vmatprep.subr.mxu0 0.0
    %10578 = vmatpush1.msra.mxu0 0.0
    %10579 = vmatprep.subr.mxu0 0.0
    %10580 = vmatpush1.msra.mxu0 0.0
    %10581 = vmatprep.subr.mxu0 0.0
    %10582 = vmatpush1.msra.mxu0 0.0
    %10583 = vmatprep.subr.mxu0 0.0
    %10584 = vmatpush1.msra.mxu0 0.0
    %10585 = vmatprep.subr.mxu0 0.0
    %10586 = vmatpush1.msra.mxu0 0.0
    %10587 = vmatprep.subr.mxu0 0.0
    %10588 = vmatpush1.msra.mxu0 0.0
    %10589 = vmatprep.subr.mxu0 0.0
    %10590 = vmatpush1.msra.mxu0 0.0
    %10591 = vmatprep.subr.mxu0 0.0
    %10592 = vmatpush1.msra.mxu0 0.0
    %10593 = vmatprep.subr.mxu0 0.0
    %10594 = vmatpush1.msra.mxu0 0.0
    %10595 = vmatprep.subr.mxu0 0.0
    %10596 = vmatpush1.msra.mxu0 0.0
    %10597 = vmatprep.subr.mxu0 0.0
    %10598 = vmatpush1.msra.mxu0 0.0
    %10599 = vmatprep.subr.mxu0 0.0
    %10600 = vmatpush1.msra.mxu0 0.0
    %10601 = vmatprep.subr.mxu0 0.0
    %10602 = vmatpush1.msra.mxu0 0.0
    %10603 = vmatprep.subr.mxu0 0.0
    %10604 = vmatpush1.msra.mxu0 0.0
    %10605 = vmatprep.subr.mxu0 0.0
    %10606 = vmatpush1.msra.mxu0 0.0
    %10607 = vmatprep.subr.mxu0 0.0
    %10608 = vmatpush1.msra.mxu0 0.0
    %10609 = vmatprep.mubr.f32.mxu0 0.0
    %v10610 = vand.u32 %v3117, 4294901760
    %v10611 = vsub.f32 %v3117, %v10610
    %10612 = vmatmul.mubr.f32.gmra.mrb[0].mxu0 %v10611
    %v10613 = vpop.f32.mrb[0].mxu0
    %v10614 = vadd.f32 %v10524, %v10613
    %v10615 = vpop.f32.mrb[0].mxu0
    %10616 = vmatprep.mubr.f32.mxu0 0.0
    %v10617 = vand.u32 %v3120, 4294901760
    %v10618 = vsub.f32 %v3120, %v10617
    %10619 = vmatmul.mubr.f32.gmra.mrb[0].mxu0 %v10618
    %v10620 = vpop.f32.mrb[0].mxu0
    %v10621 = vadd.f32 %v10530, %v10620
    %v10622 = vpop.f32.mrb[0].mxu0
    %10623 = vmatprep.mubr.f32.mxu0 0.0
    %v10624 = vand.u32 %v3123, 4294901760
    %v10625 = vsub.f32 %v3123, %v10624
    %10626 = vmatmul.mubr.f32.gmra.mrb[0].mxu0 %v10625
    %v10627 = vpop.f32.mrb[0].mxu0
    %v10628 = vadd.f32 %v10536, %v10627
    %v10629 = vpop.f32.mrb[0].mxu0
    %10630 = vdwg.mxu0
    %10631 = vmatprep.subr.mxu0 0.0
    %v10632 = vand.u32 %v9030, 4294901760
    %10633 = vmatpush1.msra.mxu0 %v10632
    %10634 = vmatprep.subr.mxu0 0.0
    %v10635 = vand.u32 %v9037, 4294901760
    %10636 = vmatpush1.msra.mxu0 %v10635
    %10637 = vmatprep.subr.mxu0 0.0
    %v10638 = vand.u32 %v9044, 4294901760
    %10639 = vmatpush1.msra.mxu0 %v10638
    %10640 = vmatprep.subr.mxu0 0.0
    %10641 = vmatpush1.msra.mxu0 0.0
    %10642 = vmatprep.subr.mxu0 0.0
    %10643 = vmatpush1.msra.mxu0 0.0
    %10644 = vmatprep.subr.mxu0 0.0
    %10645 = vmatpush1.msra.mxu0 0.0
    %10646 = vmatprep.subr.mxu0 0.0
    %10647 = vmatpush1.msra.mxu0 0.0
    %10648 = vmatprep.subr.mxu0 0.0
    %10649 = vmatpush1.msra.mxu0 0.0
    %10650 = vmatprep.subr.mxu0 0.0
    %10651 = vmatpush1.msra.mxu0 0.0
    %10652 = vmatprep.subr.mxu0 0.0
    %10653 = vmatpush1.msra.mxu0 0.0
    %10654 = vmatprep.subr.mxu0 0.0
    %10655 = vmatpush1.msra.mxu0 0.0
    %10656 = vmatprep.subr.mxu0 0.0
    %10657 = vmatpush1.msra.mxu0 0.0
    %10658 = vmatprep.subr.mxu0 0.0
    %10659 = vmatpush1.msra.mxu0 0.0
    %10660 = vmatprep.subr.mxu0 0.0
    %10661 = vmatpush1.msra.mxu0 0.0
    %10662 = vmatprep.subr.mxu0 0.0
    %10663 = vmatpush1.msra.mxu0 0.0
    %10664 = vmatprep.subr.mxu0 0.0
    %10665 = vmatpush1.msra.mxu0 0.0
    %10666 = vmatprep.subr.mxu0 0.0
    %10667 = vmatpush1.msra.mxu0 0.0
    %10668 = vmatprep.subr.mxu0 0.0
    %10669 = vmatpush1.msra.mxu0 0.0
    %10670 = vmatprep.subr.mxu0 0.0
    %10671 = vmatpush1.msra.mxu0 0.0
    %10672 = vmatprep.subr.mxu0 0.0
    %10673 = vmatpush1.msra.mxu0 0.0
    %10674 = vmatprep.subr.mxu0 0.0
    %10675 = vmatpush1.msra.mxu0 0.0
    %10676 = vmatprep.subr.mxu0 0.0
    %10677 = vmatpush1.msra.mxu0 0.0
    %10678 = vmatprep.subr.mxu0 0.0
    %10679 = vmatpush1.msra.mxu0 0.0
    %10680 = vmatprep.subr.mxu0 0.0
    %10681 = vmatpush1.msra.mxu0 0.0
    %10682 = vmatprep.subr.mxu0 0.0
    %10683 = vmatpush1.msra.mxu0 0.0
    %10684 = vmatprep.subr.mxu0 0.0
    %10685 = vmatpush1.msra.mxu0 0.0
    %10686 = vmatprep.subr.mxu0 0.0
    %10687 = vmatpush1.msra.mxu0 0.0
    %10688 = vmatprep.subr.mxu0 0.0
    %10689 = vmatpush1.msra.mxu0 0.0
    %10690 = vmatprep.subr.mxu0 0.0
    %10691 = vmatpush1.msra.mxu0 0.0
    %10692 = vmatprep.subr.mxu0 0.0
    %10693 = vmatpush1.msra.mxu0 0.0
    %10694 = vmatprep.subr.mxu0 0.0
    %10695 = vmatpush1.msra.mxu0 0.0
    %10696 = vmatprep.subr.mxu0 0.0
    %10697 = vmatpush1.msra.mxu0 0.0
    %10698 = vmatprep.mubr.f32.mxu0 0.0
    %v10699 = vand.u32 %v3117, 4294901760
    %v10700 = vsub.f32 %v3117, %v10699
    %v10701 = vand.u32 %v10700, 4294901760
    %10702 = vmatmul.mubr.f32.gmra.mrb[0].mxu0 %v10701
    %v10703 = vpop.f32.mrb[0].mxu0
    %v10704 = vadd.f32 %v10614, %v10703
    %v10705 = vpop.f32.mrb[0].mxu0
    %10706 = vmatprep.mubr.f32.mxu0 0.0
    %v10707 = vand.u32 %v3120, 4294901760
    %v10708 = vsub.f32 %v3120, %v10707
    %v10709 = vand.u32 %v10708, 4294901760
    %10710 = vmatmul.mubr.f32.gmra.mrb[0].mxu0 %v10709
    %v10711 = vpop.f32.mrb[0].mxu0
    %v10712 = vadd.f32 %v10621, %v10711
    %v10713 = vpop.f32.mrb[0].mxu0
    %10714 = vmatprep.mubr.f32.mxu0 0.0
    %v10715 = vand.u32 %v3123, 4294901760
    %v10716 = vsub.f32 %v3123, %v10715
    %v10717 = vand.u32 %v10716, 4294901760
    %10718 = vmatmul.mubr.f32.gmra.mrb[0].mxu0 %v10717
    %v10719 = vpop.f32.mrb[0].mxu0
    %v10720 = vadd.f32 %v10628, %v10719
    %v10721 = vpop.f32.mrb[0].mxu0
    %10722 = vdwg.mxu0
    %10723 = vmatprep.subr.mxu0 0.0
    %v10724 = vand.u32 %v9030, 4294901760
    %v10725 = vsub.f32 %v9030, %v10724
    %v10726 = vand.u32 %v10725, 4294901760
    %10727 = vmatpush1.msra.mxu0 %v10726
    %10728 = vmatprep.subr.mxu0 0.0
    %v10729 = vand.u32 %v9037, 4294901760
    %v10730 = vsub.f32 %v9037, %v10729
    %v10731 = vand.u32 %v10730, 4294901760
    %10732 = vmatpush1.msra.mxu0 %v10731
    %10733 = vmatprep.subr.mxu0 0.0
    %v10734 = vand.u32 %v9044, 4294901760
    %v10735 = vsub.f32 %v9044, %v10734
    %v10736 = vand.u32 %v10735, 4294901760
    %10737 = vmatpush1.msra.mxu0 %v10736
    %10738 = vmatprep.subr.mxu0 0.0
    %10739 = vmatpush1.msra.mxu0 0.0
    %10740 = vmatprep.subr.mxu0 0.0
    %10741 = vmatpush1.msra.mxu0 0.0
    %10742 = vmatprep.subr.mxu0 0.0
    %10743 = vmatpush1.msra.mxu0 0.0
    %10744 = vmatprep.subr.mxu0 0.0
    %10745 = vmatpush1.msra.mxu0 0.0
    %10746 = vmatprep.subr.mxu0 0.0
    %10747 = vmatpush1.msra.mxu0 0.0
    %10748 = vmatprep.subr.mxu0 0.0
    %10749 = vmatpush1.msra.mxu0 0.0
    %10750 = vmatprep.subr.mxu0 0.0
    %10751 = vmatpush1.msra.mxu0 0.0
    %10752 = vmatprep.subr.mxu0 0.0
    %10753 = vmatpush1.msra.mxu0 0.0
    %10754 = vmatprep.subr.mxu0 0.0
    %10755 = vmatpush1.msra.mxu0 0.0
    %10756 = vmatprep.subr.mxu0 0.0
    %10757 = vmatpush1.msra.mxu0 0.0
    %10758 = vmatprep.subr.mxu0 0.0
    %10759 = vmatpush1.msra.mxu0 0.0
    %10760 = vmatprep.subr.mxu0 0.0
    %10761 = vmatpush1.msra.mxu0 0.0
    %10762 = vmatprep.subr.mxu0 0.0
    %10763 = vmatpush1.msra.mxu0 0.0
    %10764 = vmatprep.subr.mxu0 0.0
    %10765 = vmatpush1.msra.mxu0 0.0
    %10766 = vmatprep.subr.mxu0 0.0
    %10767 = vmatpush1.msra.mxu0 0.0
    %10768 = vmatprep.subr.mxu0 0.0
    %10769 = vmatpush1.msra.mxu0 0.0
    %10770 = vmatprep.subr.mxu0 0.0
    %10771 = vmatpush1.msra.mxu0 0.0
    %10772 = vmatprep.subr.mxu0 0.0
    %10773 = vmatpush1.msra.mxu0 0.0
    %10774 = vmatprep.subr.mxu0 0.0
    %10775 = vmatpush1.msra.mxu0 0.0
    %10776 = vmatprep.subr.mxu0 0.0
    %10777 = vmatpush1.msra.mxu0 0.0
    %10778 = vmatprep.subr.mxu0 0.0
    %10779 = vmatpush1.msra.mxu0 0.0
    %10780 = vmatprep.subr.mxu0 0.0
    %10781 = vmatpush1.msra.mxu0 0.0
    %10782 = vmatprep.subr.mxu0 0.0
    %10783 = vmatpush1.msra.mxu0 0.0
    %10784 = vmatprep.subr.mxu0 0.0
    %10785 = vmatpush1.msra.mxu0 0.0
    %10786 = vmatprep.subr.mxu0 0.0
    %10787 = vmatpush1.msra.mxu0 0.0
    %10788 = vmatprep.subr.mxu0 0.0
    %10789 = vmatpush1.msra.mxu0 0.0
    %10790 = vmatprep.subr.mxu0 0.0
    %10791 = vmatpush1.msra.mxu0 0.0
    %10792 = vmatprep.subr.mxu0 0.0
    %10793 = vmatpush1.msra.mxu0 0.0
    %10794 = vmatprep.subr.mxu0 0.0
    %10795 = vmatpush1.msra.mxu0 0.0
    %10796 = vmatprep.mubr.f32.mxu0 0.0
    %v10797 = vand.u32 %v3117, 4294901760
    %10798 = vmatmul.mubr.f32.gmra.mrb[0].mxu0 %v10797
    %v10799 = vpop.f32.mrb[0].mxu0
    %v10800 = vadd.f32 %v10704, %v10799
    %v10801 = vpop.f32.mrb[0].mxu0
    %10802 = vmatprep.mubr.f32.mxu0 0.0
    %v10803 = vand.u32 %v3120, 4294901760
    %10804 = vmatmul.mubr.f32.gmra.mrb[0].mxu0 %v10803
    %v10805 = vpop.f32.mrb[0].mxu0
    %v10806 = vadd.f32 %v10712, %v10805
    %v10807 = vpop.f32.mrb[0].mxu0
    %10808 = vmatprep.mubr.f32.mxu0 0.0
    %v10809 = vand.u32 %v3123, 4294901760
    %10810 = vmatmul.mubr.f32.gmra.mrb[0].mxu0 %v10809
    %v10811 = vpop.f32.mrb[0].mxu0
    %v10812 = vadd.f32 %v10720, %v10811
    %v10813 = vpop.f32.mrb[0].mxu0
    %10814 = vdwg.mxu0
    %10815 = vmatprep.subr.mxu0 0.0
    %v10816 = vand.u32 %v9030, 4294901760
    %10817 = vmatpush1.msra.mxu0 %v10816
    %10818 = vmatprep.subr.mxu0 0.0
    %v10819 = vand.u32 %v9037, 4294901760
    %10820 = vmatpush1.msra.mxu0 %v10819
    %10821 = vmatprep.subr.mxu0 0.0
    %v10822 = vand.u32 %v9044, 4294901760
    %10823 = vmatpush1.msra.mxu0 %v10822
    %10824 = vmatprep.subr.mxu0 0.0
    %10825 = vmatpush1.msra.mxu0 0.0
    %10826 = vmatprep.subr.mxu0 0.0
    %10827 = vmatpush1.msra.mxu0 0.0
    %10828 = vmatprep.subr.mxu0 0.0
    %10829 = vmatpush1.msra.mxu0 0.0
    %10830 = vmatprep.subr.mxu0 0.0
    %10831 = vmatpush1.msra.mxu0 0.0
    %10832 = vmatprep.subr.mxu0 0.0
    %10833 = vmatpush1.msra.mxu0 0.0
    %10834 = vmatprep.subr.mxu0 0.0
    %10835 = vmatpush1.msra.mxu0 0.0
    %10836 = vmatprep.subr.mxu0 0.0
    %10837 = vmatpush1.msra.mxu0 0.0
    %10838 = vmatprep.subr.mxu0 0.0
    %10839 = vmatpush1.msra.mxu0 0.0
    %10840 = vmatprep.subr.mxu0 0.0
    %10841 = vmatpush1.msra.mxu0 0.0
    %10842 = vmatprep.subr.mxu0 0.0
    %10843 = vmatpush1.msra.mxu0 0.0
    %10844 = vmatprep.subr.mxu0 0.0
    %10845 = vmatpush1.msra.mxu0 0.0
    %10846 = vmatprep.subr.mxu0 0.0
    %10847 = vmatpush1.msra.mxu0 0.0
    %10848 = vmatprep.subr.mxu0 0.0
    %10849 = vmatpush1.msra.mxu0 0.0
    %10850 = vmatprep.subr.mxu0 0.0
    %10851 = vmatpush1.msra.mxu0 0.0
    %10852 = vmatprep.subr.mxu0 0.0
    %10853 = vmatpush1.msra.mxu0 0.0
    %10854 = vmatprep.subr.mxu0 0.0
    %10855 = vmatpush1.msra.mxu0 0.0
    %10856 = vmatprep.subr.mxu0 0.0
    %10857 = vmatpush1.msra.mxu0 0.0
    %10858 = vmatprep.subr.mxu0 0.0
    %10859 = vmatpush1.msra.mxu0 0.0
    %10860 = vmatprep.subr.mxu0 0.0
    %10861 = vmatpush1.msra.mxu0 0.0
    %10862 = vmatprep.subr.mxu0 0.0
    %10863 = vmatpush1.msra.mxu0 0.0
    %10864 = vmatprep.subr.mxu0 0.0
    %10865 = vmatpush1.msra.mxu0 0.0
    %10866 = vmatprep.subr.mxu0 0.0
    %10867 = vmatpush1.msra.mxu0 0.0
    %10868 = vmatprep.subr.mxu0 0.0
    %10869 = vmatpush1.msra.mxu0 0.0
    %10870 = vmatprep.subr.mxu0 0.0
    %10871 = vmatpush1.msra.mxu0 0.0
    %10872 = vmatprep.subr.mxu0 0.0
    %10873 = vmatpush1.msra.mxu0 0.0
    %10874 = vmatprep.subr.mxu0 0.0
    %10875 = vmatpush1.msra.mxu0 0.0
    %10876 = vmatprep.subr.mxu0 0.0
    %10877 = vmatpush1.msra.mxu0 0.0
    %10878 = vmatprep.subr.mxu0 0.0
    %10879 = vmatpush1.msra.mxu0 0.0
    %10880 = vmatprep.subr.mxu0 0.0
    %10881 = vmatpush1.msra.mxu0 0.0
    %10882 = vmatprep.mubr.f32.mxu0 0.0
    %v10883 = vand.u32 %v3117, 4294901760
    %10884 = vmatmul.mubr.f32.gmra.mrb[0].mxu0 %v10883
    %v10885 = vpop.f32.mrb[0].mxu0
    %v10886 = vadd.f32 %v10800, %v10885
    %v10887 = vpop.f32.mrb[0].mxu0
    %10888 = vmatprep.mubr.f32.mxu0 0.0
    %v10889 = vand.u32 %v3120, 4294901760
    %10890 = vmatmul.mubr.f32.gmra.mrb[0].mxu0 %v10889
    %v10891 = vpop.f32.mrb[0].mxu0
    %v10892 = vadd.f32 %v10806, %v10891
    %v10893 = vpop.f32.mrb[0].mxu0
    %10894 = vmatprep.mubr.f32.mxu0 0.0
    %v10895 = vand.u32 %v3123, 4294901760
    %10896 = vmatmul.mubr.f32.gmra.mrb[0].mxu0 %v10895
    %v10897 = vpop.f32.mrb[0].mxu0
    %v10898 = vadd.f32 %v10812, %v10897
    %v10899 = vpop.f32.mrb[0].mxu0
    %10900 = vdwg.mxu0
    %v10901 = vadd.f32 %v10340, %v10886
    %v10902 = vadd.f32 %v10341, %v10892
    %v10903 = vadd.f32 %v10342, %v10898
    %v10904 = vmax.f32 %v10901, 0.0
    %v10905 = vmax.f32 %v10902, 0.0
    %v10906 = vmax.f32 %v10903, 0.0
    %v10907 = vld [vmem:[%s12] sm:$0xff]
    %v10908 = vld [vmem:[%s12 + $0x8] sm:$0xff]
    %v10909 = vld [vmem:[%s12 + $0x10] sm:$0xff]
    %v10910 = vld [vmem:[%s12 + $0x18] sm:$0xff]
    %v10911 = vld [vmem:[%s12 + $0x20] sm:$0xff]
    %v10912 = vld [vmem:[%s12 + $0x28] sm:$0xff]
    %v10913 = vld [vmem:[%s12 + $0x30] sm:$0xff]
    %v10914 = vld [vmem:[%s12 + $0x38] sm:$0xff]
    %v10915 = vld [vmem:[%s12 + $0x40] sm:$0xff]
    %v10916 = vld [vmem:[%s12 + $0x48] sm:$0xff]
    %v10917 = vld [vmem:[%s12 + $0x50] sm:$0xff]
    %v10918 = vld [vmem:[%s12 + $0x58] sm:$0xff]
    %v10919 = vld [vmem:[%s12 + $0x60] sm:$0xff]
    %v10920 = vld [vmem:[%s12 + $0x68] sm:$0xff]
    %v10921 = vld [vmem:[%s12 + $0x70] sm:$0xff]
    %v10922 = vld [vmem:[%s12 + $0x78] sm:$0xff]
    %10923 = vmatprep.subr.mxu0 0.0
    %v10924 = vand.u32 %v10907, 4294901760
    %10925 = vmatpush1.msra.mxu0 %v10924
    %10926 = vmatprep.subr.mxu0 0.0
    %v10927 = vand.u32 %v10908, 4294901760
    %10928 = vmatpush1.msra.mxu0 %v10927
    %10929 = vmatprep.subr.mxu0 0.0
    %v10930 = vand.u32 %v10909, 4294901760
    %10931 = vmatpush1.msra.mxu0 %v10930
    %10932 = vmatprep.subr.mxu0 0.0
    %v10933 = vand.u32 %v10910, 4294901760
    %10934 = vmatpush1.msra.mxu0 %v10933
    %10935 = vmatprep.subr.mxu0 0.0
    %v10936 = vand.u32 %v10911, 4294901760
    %10937 = vmatpush1.msra.mxu0 %v10936
    %10938 = vmatprep.subr.mxu0 0.0
    %v10939 = vand.u32 %v10912, 4294901760
    %10940 = vmatpush1.msra.mxu0 %v10939
    %10941 = vmatprep.subr.mxu0 0.0
    %v10942 = vand.u32 %v10913, 4294901760
    %10943 = vmatpush1.msra.mxu0 %v10942
    %10944 = vmatprep.subr.mxu0 0.0
    %v10945 = vand.u32 %v10914, 4294901760
    %10946 = vmatpush1.msra.mxu0 %v10945
    %10947 = vmatprep.subr.mxu0 0.0
    %v10948 = vand.u32 %v10915, 4294901760
    %10949 = vmatpush1.msra.mxu0 %v10948
    %10950 = vmatprep.subr.mxu0 0.0
    %v10951 = vand.u32 %v10916, 4294901760
    %10952 = vmatpush1.msra.mxu0 %v10951
    %10953 = vmatprep.subr.mxu0 0.0
    %v10954 = vand.u32 %v10917, 4294901760
    %10955 = vmatpush1.msra.mxu0 %v10954
    %10956 = vmatprep.subr.mxu0 0.0
    %v10957 = vand.u32 %v10918, 4294901760
    %10958 = vmatpush1.msra.mxu0 %v10957
    %10959 = vmatprep.subr.mxu0 0.0
    %v10960 = vand.u32 %v10919, 4294901760
    %10961 = vmatpush1.msra.mxu0 %v10960
    %10962 = vmatprep.subr.mxu0 0.0
    %v10963 = vand.u32 %v10920, 4294901760
    %10964 = vmatpush1.msra.mxu0 %v10963
    %10965 = vmatprep.subr.mxu0 0.0
    %v10966 = vand.u32 %v10921, 4294901760
    %10967 = vmatpush1.msra.mxu0 %v10966
    %10968 = vmatprep.subr.mxu0 0.0
    %v10969 = vand.u32 %v10922, 4294901760
    %10970 = vmatpush1.msra.mxu0 %v10969
    %10971 = vmatprep.subr.mxu0 0.0
    %10972 = vmatpush1.msra.mxu0 0.0
    %10973 = vmatprep.subr.mxu0 0.0
    %10974 = vmatpush1.msra.mxu0 0.0
    %10975 = vmatprep.subr.mxu0 0.0
    %10976 = vmatpush1.msra.mxu0 0.0
    %10977 = vmatprep.subr.mxu0 0.0
    %10978 = vmatpush1.msra.mxu0 0.0
    %10979 = vmatprep.subr.mxu0 0.0
    %10980 = vmatpush1.msra.mxu0 0.0
    %10981 = vmatprep.subr.mxu0 0.0
    %10982 = vmatpush1.msra.mxu0 0.0
    %10983 = vmatprep.subr.mxu0 0.0
    %10984 = vmatpush1.msra.mxu0 0.0
    %10985 = vmatprep.subr.mxu0 0.0
    %10986 = vmatpush1.msra.mxu0 0.0
    %10987 = vmatprep.subr.mxu0 0.0
    %10988 = vmatpush1.msra.mxu0 0.0
    %10989 = vmatprep.subr.mxu0 0.0
    %10990 = vmatpush1.msra.mxu0 0.0
    %10991 = vmatprep.subr.mxu0 0.0
    %10992 = vmatpush1.msra.mxu0 0.0
    %10993 = vmatprep.subr.mxu0 0.0
    %10994 = vmatpush1.msra.mxu0 0.0
    %10995 = vmatprep.subr.mxu0 0.0
    %10996 = vmatpush1.msra.mxu0 0.0
    %10997 = vmatprep.subr.mxu0 0.0
    %10998 = vmatpush1.msra.mxu0 0.0
    %10999 = vmatprep.subr.mxu0 0.0
    %11000 = vmatpush1.msra.mxu0 0.0
    %11001 = vmatprep.subr.mxu0 0.0
    %11002 = vmatpush1.msra.mxu0 0.0
    %11003 = vmatprep.mubr.f32.mxu0 0.0
    %v11004 = vand.u32 %v10904, 4294901760
    %v11005 = vsub.f32 %v10904, %v11004
    %v11006 = vand.u32 %v11005, 4294901760
    %v11007 = vsub.f32 %v11005, %v11006
    %v11008 = vand.u32 %v11007, 4294901760
    %11009 = vmatmul.mubr.f32.gmra.mrb[0].mxu0 %v11008
    %v11010 = vpop.f32.mrb[0].mxu0
    %v11011 = vadd.f32 0.0, %v11010
    %v11012 = vpop.f32.mrb[0].mxu0
    %11013 = vmatprep.mubr.f32.mxu0 0.0
    %v11014 = vand.u32 %v10905, 4294901760
    %v11015 = vsub.f32 %v10905, %v11014
    %v11016 = vand.u32 %v11015, 4294901760
    %v11017 = vsub.f32 %v11015, %v11016
    %v11018 = vand.u32 %v11017, 4294901760
    %11019 = vmatmul.mubr.f32.gmra.mrb[0].mxu0 %v11018
    %v11020 = vpop.f32.mrb[0].mxu0
    %v11021 = vadd.f32 0.0, %v11020
    %v11022 = vpop.f32.mrb[0].mxu0
    %11023 = vmatprep.mubr.f32.mxu0 0.0
    %v11024 = vand.u32 %v10906, 4294901760
    %v11025 = vsub.f32 %v10906, %v11024
    %v11026 = vand.u32 %v11025, 4294901760
    %v11027 = vsub.f32 %v11025, %v11026
    %v11028 = vand.u32 %v11027, 4294901760
    %11029 = vmatmul.mubr.f32.gmra.mrb[0].mxu0 %v11028
    %v11030 = vpop.f32.mrb[0].mxu0
    %v11031 = vadd.f32 0.0, %v11030
    %v11032 = vpop.f32.mrb[0].mxu0
    %11033 = vdwg.mxu0
    %11034 = vmatprep.subr.mxu0 0.0
    %v11035 = vand.u32 %v10907, 4294901760
    %v11036 = vsub.f32 %v10907, %v11035
    %v11037 = vand.u32 %v11036, 4294901760
    %v11038 = vsub.f32 %v11036, %v11037
    %v11039 = vand.u32 %v11038, 4294901760
    %11040 = vmatpush1.msra.mxu0 %v11039
    %11041 = vmatprep.subr.mxu0 0.0
    %v11042 = vand.u32 %v10908, 4294901760
    %v11043 = vsub.f32 %v10908, %v11042
    %v11044 = vand.u32 %v11043, 4294901760
    %v11045 = vsub.f32 %v11043, %v11044
    %v11046 = vand.u32 %v11045, 4294901760
    %11047 = vmatpush1.msra.mxu0 %v11046
    %11048 = vmatprep.subr.mxu0 0.0
    %v11049 = vand.u32 %v10909, 4294901760
    %v11050 = vsub.f32 %v10909, %v11049
    %v11051 = vand.u32 %v11050, 4294901760
    %v11052 = vsub.f32 %v11050, %v11051
    %v11053 = vand.u32 %v11052, 4294901760
    %11054 = vmatpush1.msra.mxu0 %v11053
    %11055 = vmatprep.subr.mxu0 0.0
    %v11056 = vand.u32 %v10910, 4294901760
    %v11057 = vsub.f32 %v10910, %v11056
    %v11058 = vand.u32 %v11057, 4294901760
    %v11059 = vsub.f32 %v11057, %v11058
    %v11060 = vand.u32 %v11059, 4294901760
    %11061 = vmatpush1.msra.mxu0 %v11060
    %11062 = vmatprep.subr.mxu0 0.0
    %v11063 = vand.u32 %v10911, 4294901760
    %v11064 = vsub.f32 %v10911, %v11063
    %v11065 = vand.u32 %v11064, 4294901760
    %v11066 = vsub.f32 %v11064, %v11065
    %v11067 = vand.u32 %v11066, 4294901760
    %11068 = vmatpush1.msra.mxu0 %v11067
    %11069 = vmatprep.subr.mxu0 0.0
    %v11070 = vand.u32 %v10912, 4294901760
    %v11071 = vsub.f32 %v10912, %v11070
    %v11072 = vand.u32 %v11071, 4294901760
    %v11073 = vsub.f32 %v11071, %v11072
    %v11074 = vand.u32 %v11073, 4294901760
    %11075 = vmatpush1.msra.mxu0 %v11074
    %11076 = vmatprep.subr.mxu0 0.0
    %v11077 = vand.u32 %v10913, 4294901760
    %v11078 = vsub.f32 %v10913, %v11077
    %v11079 = vand.u32 %v11078, 4294901760
    %v11080 = vsub.f32 %v11078, %v11079
    %v11081 = vand.u32 %v11080, 4294901760
    %11082 = vmatpush1.msra.mxu0 %v11081
    %11083 = vmatprep.subr.mxu0 0.0
    %v11084 = vand.u32 %v10914, 4294901760
    %v11085 = vsub.f32 %v10914, %v11084
    %v11086 = vand.u32 %v11085, 4294901760
    %v11087 = vsub.f32 %v11085, %v11086
    %v11088 = vand.u32 %v11087, 4294901760
    %11089 = vmatpush1.msra.mxu0 %v11088
    %11090 = vmatprep.subr.mxu0 0.0
    %v11091 = vand.u32 %v10915, 4294901760
    %v11092 = vsub.f32 %v10915, %v11091
    %v11093 = vand.u32 %v11092, 4294901760
    %v11094 = vsub.f32 %v11092, %v11093
    %v11095 = vand.u32 %v11094, 4294901760
    %11096 = vmatpush1.msra.mxu0 %v11095
    %11097 = vmatprep.subr.mxu0 0.0
    %v11098 = vand.u32 %v10916, 4294901760
    %v11099 = vsub.f32 %v10916, %v11098
    %v11100 = vand.u32 %v11099, 4294901760
    %v11101 = vsub.f32 %v11099, %v11100
    %v11102 = vand.u32 %v11101, 4294901760
    %11103 = vmatpush1.msra.mxu0 %v11102
    %11104 = vmatprep.subr.mxu0 0.0
    %v11105 = vand.u32 %v10917, 4294901760
    %v11106 = vsub.f32 %v10917, %v11105
    %v11107 = vand.u32 %v11106, 4294901760
    %v11108 = vsub.f32 %v11106, %v11107
    %v11109 = vand.u32 %v11108, 4294901760
    %11110 = vmatpush1.msra.mxu0 %v11109
    %11111 = vmatprep.subr.mxu0 0.0
    %v11112 = vand.u32 %v10918, 4294901760
    %v11113 = vsub.f32 %v10918, %v11112
    %v11114 = vand.u32 %v11113, 4294901760
    %v11115 = vsub.f32 %v11113, %v11114
    %v11116 = vand.u32 %v11115, 4294901760
    %11117 = vmatpush1.msra.mxu0 %v11116
    %11118 = vmatprep.subr.mxu0 0.0
    %v11119 = vand.u32 %v10919, 4294901760
    %v11120 = vsub.f32 %v10919, %v11119
    %v11121 = vand.u32 %v11120, 4294901760
    %v11122 = vsub.f32 %v11120, %v11121
    %v11123 = vand.u32 %v11122, 4294901760
    %11124 = vmatpush1.msra.mxu0 %v11123
    %11125 = vmatprep.subr.mxu0 0.0
    %v11126 = vand.u32 %v10920, 4294901760
    %v11127 = vsub.f32 %v10920, %v11126
    %v11128 = vand.u32 %v11127, 4294901760
    %v11129 = vsub.f32 %v11127, %v11128
    %v11130 = vand.u32 %v11129, 4294901760
    %11131 = vmatpush1.msra.mxu0 %v11130
    %11132 = vmatprep.subr.mxu0 0.0
    %v11133 = vand.u32 %v10921, 4294901760
    %v11134 = vsub.f32 %v10921, %v11133
    %v11135 = vand.u32 %v11134, 4294901760
    %v11136 = vsub.f32 %v11134, %v11135
    %v11137 = vand.u32 %v11136, 4294901760
    %11138 = vmatpush1.msra.mxu0 %v11137
    %11139 = vmatprep.subr.mxu0 0.0
    %v11140 = vand.u32 %v10922, 4294901760
    %v11141 = vsub.f32 %v10922, %v11140
    %v11142 = vand.u32 %v11141, 4294901760
    %v11143 = vsub.f32 %v11141, %v11142
    %v11144 = vand.u32 %v11143, 4294901760
    %11145 = vmatpush1.msra.mxu0 %v11144
    %11146 = vmatprep.subr.mxu0 0.0
    %11147 = vmatpush1.msra.mxu0 0.0
    %11148 = vmatprep.subr.mxu0 0.0
    %11149 = vmatpush1.msra.mxu0 0.0
    %11150 = vmatprep.subr.mxu0 0.0
    %11151 = vmatpush1.msra.mxu0 0.0
    %11152 = vmatprep.subr.mxu0 0.0
    %11153 = vmatpush1.msra.mxu0 0.0
    %11154 = vmatprep.subr.mxu0 0.0
    %11155 = vmatpush1.msra.mxu0 0.0
    %11156 = vmatprep.subr.mxu0 0.0
    %11157 = vmatpush1.msra.mxu0 0.0
    %11158 = vmatprep.subr.mxu0 0.0
    %11159 = vmatpush1.msra.mxu0 0.0
    %11160 = vmatprep.subr.mxu0 0.0
    %11161 = vmatpush1.msra.mxu0 0.0
    %11162 = vmatprep.subr.mxu0 0.0
    %11163 = vmatpush1.msra.mxu0 0.0
    %11164 = vmatprep.subr.mxu0 0.0
    %11165 = vmatpush1.msra.mxu0 0.0
    %11166 = vmatprep.subr.mxu0 0.0
    %11167 = vmatpush1.msra.mxu0 0.0
    %11168 = vmatprep.subr.mxu0 0.0
    %11169 = vmatpush1.msra.mxu0 0.0
    %11170 = vmatprep.subr.mxu0 0.0
    %11171 = vmatpush1.msra.mxu0 0.0
    %11172 = vmatprep.subr.mxu0 0.0
    %11173 = vmatpush1.msra.mxu0 0.0
    %11174 = vmatprep.subr.mxu0 0.0
    %11175 = vmatpush1.msra.mxu0 0.0
    %11176 = vmatprep.subr.mxu0 0.0
    %11177 = vmatpush1.msra.mxu0 0.0
    %11178 = vmatprep.mubr.f32.mxu0 0.0
    %v11179 = vand.u32 %v10904, 4294901760
    %11180 = vmatmul.mubr.f32.gmra.mrb[0].mxu0 %v11179
    %v11181 = vpop.f32.mrb[0].mxu0
    %v11182 = vadd.f32 %v11011, %v11181
    %v11183 = vpop.f32.mrb[0].mxu0
    %11184 = vmatprep.mubr.f32.mxu0 0.0
    %v11185 = vand.u32 %v10905, 4294901760
    %11186 = vmatmul.mubr.f32.gmra.mrb[0].mxu0 %v11185
    %v11187 = vpop.f32.mrb[0].mxu0
    %v11188 = vadd.f32 %v11021, %v11187
    %v11189 = vpop.f32.mrb[0].mxu0
    %11190 = vmatprep.mubr.f32.mxu0 0.0
    %v11191 = vand.u32 %v10906, 4294901760
    %11192 = vmatmul.mubr.f32.gmra.mrb[0].mxu0 %v11191
    %v11193 = vpop.f32.mrb[0].mxu0
    %v11194 = vadd.f32 %v11031, %v11193
    %v11195 = vpop.f32.mrb[0].mxu0
    %11196 = vdwg.mxu0
    %11197 = vmatprep.subr.mxu0 0.0
    %v11198 = vand.u32 %v10907, 4294901760
    %v11199 = vsub.f32 %v10907, %v11198
    %11200 = vmatpush1.msra.mxu0 %v11199
    %11201 = vmatprep.subr.mxu0 0.0
    %v11202 = vand.u32 %v10908, 4294901760
    %v11203 = vsub.f32 %v10908, %v11202
    %11204 = vmatpush1.msra.mxu0 %v11203
    %11205 = vmatprep.subr.mxu0 0.0
    %v11206 = vand.u32 %v10909, 4294901760
    %v11207 = vsub.f32 %v10909, %v11206
    %11208 = vmatpush1.msra.mxu0 %v11207
    %11209 = vmatprep.subr.mxu0 0.0
    %v11210 = vand.u32 %v10910, 4294901760
    %v11211 = vsub.f32 %v10910, %v11210
    %11212 = vmatpush1.msra.mxu0 %v11211
    %11213 = vmatprep.subr.mxu0 0.0
    %v11214 = vand.u32 %v10911, 4294901760
    %v11215 = vsub.f32 %v10911, %v11214
    %11216 = vmatpush1.msra.mxu0 %v11215
    %11217 = vmatprep.subr.mxu0 0.0
    %v11218 = vand.u32 %v10912, 4294901760
    %v11219 = vsub.f32 %v10912, %v11218
    %11220 = vmatpush1.msra.mxu0 %v11219
    %11221 = vmatprep.subr.mxu0 0.0
    %v11222 = vand.u32 %v10913, 4294901760
    %v11223 = vsub.f32 %v10913, %v11222
    %11224 = vmatpush1.msra.mxu0 %v11223
    %11225 = vmatprep.subr.mxu0 0.0
    %v11226 = vand.u32 %v10914, 4294901760
    %v11227 = vsub.f32 %v10914, %v11226
    %11228 = vmatpush1.msra.mxu0 %v11227
    %11229 = vmatprep.subr.mxu0 0.0
    %v11230 = vand.u32 %v10915, 4294901760
    %v11231 = vsub.f32 %v10915, %v11230
    %11232 = vmatpush1.msra.mxu0 %v11231
    %11233 = vmatprep.subr.mxu0 0.0
    %v11234 = vand.u32 %v10916, 4294901760
    %v11235 = vsub.f32 %v10916, %v11234
    %11236 = vmatpush1.msra.mxu0 %v11235
    %11237 = vmatprep.subr.mxu0 0.0
    %v11238 = vand.u32 %v10917, 4294901760
    %v11239 = vsub.f32 %v10917, %v11238
    %11240 = vmatpush1.msra.mxu0 %v11239
    %11241 = vmatprep.subr.mxu0 0.0
    %v11242 = vand.u32 %v10918, 4294901760
    %v11243 = vsub.f32 %v10918, %v11242
    %11244 = vmatpush1.msra.mxu0 %v11243
    %11245 = vmatprep.subr.mxu0 0.0
    %v11246 = vand.u32 %v10919, 4294901760
    %v11247 = vsub.f32 %v10919, %v11246
    %11248 = vmatpush1.msra.mxu0 %v11247
    %11249 = vmatprep.subr.mxu0 0.0
    %v11250 = vand.u32 %v10920, 4294901760
    %v11251 = vsub.f32 %v10920, %v11250
    %11252 = vmatpush1.msra.mxu0 %v11251
    %11253 = vmatprep.subr.mxu0 0.0
    %v11254 = vand.u32 %v10921, 4294901760
    %v11255 = vsub.f32 %v10921, %v11254
    %11256 = vmatpush1.msra.mxu0 %v11255
    %11257 = vmatprep.subr.mxu0 0.0
    %v11258 = vand.u32 %v10922, 4294901760
    %v11259 = vsub.f32 %v10922, %v11258
    %11260 = vmatpush1.msra.mxu0 %v11259
    %11261 = vmatprep.subr.mxu0 0.0
    %11262 = vmatpush1.msra.mxu0 0.0
    %11263 = vmatprep.subr.mxu0 0.0
    %11264 = vmatpush1.msra.mxu0 0.0
    %11265 = vmatprep.subr.mxu0 0.0
    %11266 = vmatpush1.msra.mxu0 0.0
    %11267 = vmatprep.subr.mxu0 0.0
    %11268 = vmatpush1.msra.mxu0 0.0
    %11269 = vmatprep.subr.mxu0 0.0
    %11270 = vmatpush1.msra.mxu0 0.0
    %11271 = vmatprep.subr.mxu0 0.0
    %11272 = vmatpush1.msra.mxu0 0.0
    %11273 = vmatprep.subr.mxu0 0.0
    %11274 = vmatpush1.msra.mxu0 0.0
    %11275 = vmatprep.subr.mxu0 0.0
    %11276 = vmatpush1.msra.mxu0 0.0
    %11277 = vmatprep.subr.mxu0 0.0
    %11278 = vmatpush1.msra.mxu0 0.0
    %11279 = vmatprep.subr.mxu0 0.0
    %11280 = vmatpush1.msra.mxu0 0.0
    %11281 = vmatprep.subr.mxu0 0.0
    %11282 = vmatpush1.msra.mxu0 0.0
    %11283 = vmatprep.subr.mxu0 0.0
    %11284 = vmatpush1.msra.mxu0 0.0
    %11285 = vmatprep.subr.mxu0 0.0
    %11286 = vmatpush1.msra.mxu0 0.0
    %11287 = vmatprep.subr.mxu0 0.0
    %11288 = vmatpush1.msra.mxu0 0.0
    %11289 = vmatprep.subr.mxu0 0.0
    %11290 = vmatpush1.msra.mxu0 0.0
    %11291 = vmatprep.subr.mxu0 0.0
    %11292 = vmatpush1.msra.mxu0 0.0
    %11293 = vmatprep.mubr.f32.mxu0 0.0
    %v11294 = vand.u32 %v10904, 4294901760
    %v11295 = vsub.f32 %v10904, %v11294
    %11296 = vmatmul.mubr.f32.gmra.mrb[0].mxu0 %v11295
    %v11297 = vpop.f32.mrb[0].mxu0
    %v11298 = vadd.f32 %v11182, %v11297
    %v11299 = vpop.f32.mrb[0].mxu0
    %11300 = vmatprep.mubr.f32.mxu0 0.0
    %v11301 = vand.u32 %v10905, 4294901760
    %v11302 = vsub.f32 %v10905, %v11301
    %11303 = vmatmul.mubr.f32.gmra.mrb[0].mxu0 %v11302
    %v11304 = vpop.f32.mrb[0].mxu0
    %v11305 = vadd.f32 %v11188, %v11304
    %v11306 = vpop.f32.mrb[0].mxu0
    %11307 = vmatprep.mubr.f32.mxu0 0.0
    %v11308 = vand.u32 %v10906, 4294901760
    %v11309 = vsub.f32 %v10906, %v11308
    %11310 = vmatmul.mubr.f32.gmra.mrb[0].mxu0 %v11309
    %v11311 = vpop.f32.mrb[0].mxu0
    %v11312 = vadd.f32 %v11194, %v11311
    %v11313 = vpop.f32.mrb[0].mxu0
    %11314 = vdwg.mxu0
    %11315 = vmatprep.subr.mxu0 0.0
    %v11316 = vand.u32 %v10907, 4294901760
    %11317 = vmatpush1.msra.mxu0 %v11316
    %11318 = vmatprep.subr.mxu0 0.0
    %v11319 = vand.u32 %v10908, 4294901760
    %11320 = vmatpush1.msra.mxu0 %v11319
    %11321 = vmatprep.subr.mxu0 0.0
    %v11322 = vand.u32 %v10909, 4294901760
    %11323 = vmatpush1.msra.mxu0 %v11322
    %11324 = vmatprep.subr.mxu0 0.0
    %v11325 = vand.u32 %v10910, 4294901760
    %11326 = vmatpush1.msra.mxu0 %v11325
    %11327 = vmatprep.subr.mxu0 0.0
    %v11328 = vand.u32 %v10911, 4294901760
    %11329 = vmatpush1.msra.mxu0 %v11328
    %11330 = vmatprep.subr.mxu0 0.0
    %v11331 = vand.u32 %v10912, 4294901760
    %11332 = vmatpush1.msra.mxu0 %v11331
    %11333 = vmatprep.subr.mxu0 0.0
    %v11334 = vand.u32 %v10913, 4294901760
    %11335 = vmatpush1.msra.mxu0 %v11334
    %11336 = vmatprep.subr.mxu0 0.0
    %v11337 = vand.u32 %v10914, 4294901760
    %11338 = vmatpush1.msra.mxu0 %v11337
    %11339 = vmatprep.subr.mxu0 0.0
    %v11340 = vand.u32 %v10915, 4294901760
    %11341 = vmatpush1.msra.mxu0 %v11340
    %11342 = vmatprep.subr.mxu0 0.0
    %v11343 = vand.u32 %v10916, 4294901760
    %11344 = vmatpush1.msra.mxu0 %v11343
    %11345 = vmatprep.subr.mxu0 0.0
    %v11346 = vand.u32 %v10917, 4294901760
    %11347 = vmatpush1.msra.mxu0 %v11346
    %11348 = vmatprep.subr.mxu0 0.0
    %v11349 = vand.u32 %v10918, 4294901760
    %11350 = vmatpush1.msra.mxu0 %v11349
    %11351 = vmatprep.subr.mxu0 0.0
    %v11352 = vand.u32 %v10919, 4294901760
    %11353 = vmatpush1.msra.mxu0 %v11352
    %11354 = vmatprep.subr.mxu0 0.0
    %v11355 = vand.u32 %v10920, 4294901760
    %11356 = vmatpush1.msra.mxu0 %v11355
    %11357 = vmatprep.subr.mxu0 0.0
    %v11358 = vand.u32 %v10921, 4294901760
    %11359 = vmatpush1.msra.mxu0 %v11358
    %11360 = vmatprep.subr.mxu0 0.0
    %v11361 = vand.u32 %v10922, 4294901760
    %11362 = vmatpush1.msra.mxu0 %v11361
    %11363 = vmatprep.subr.mxu0 0.0
    %11364 = vmatpush1.msra.mxu0 0.0
    %11365 = vmatprep.subr.mxu0 0.0
    %11366 = vmatpush1.msra.mxu0 0.0
    %11367 = vmatprep.subr.mxu0 0.0
    %11368 = vmatpush1.msra.mxu0 0.0
    %11369 = vmatprep.subr.mxu0 0.0
    %11370 = vmatpush1.msra.mxu0 0.0
    %11371 = vmatprep.subr.mxu0 0.0
    %11372 = vmatpush1.msra.mxu0 0.0
    %11373 = vmatprep.subr.mxu0 0.0
    %11374 = vmatpush1.msra.mxu0 0.0
    %11375 = vmatprep.subr.mxu0 0.0
    %11376 = vmatpush1.msra.mxu0 0.0
    %11377 = vmatprep.subr.mxu0 0.0
    %11378 = vmatpush1.msra.mxu0 0.0
    %11379 = vmatprep.subr.mxu0 0.0
    %11380 = vmatpush1.msra.mxu0 0.0
    %11381 = vmatprep.subr.mxu0 0.0
    %11382 = vmatpush1.msra.mxu0 0.0
    %11383 = vmatprep.subr.mxu0 0.0
    %11384 = vmatpush1.msra.mxu0 0.0
    %11385 = vmatprep.subr.mxu0 0.0
    %11386 = vmatpush1.msra.mxu0 0.0
    %11387 = vmatprep.subr.mxu0 0.0
    %11388 = vmatpush1.msra.mxu0 0.0
    %11389 = vmatprep.subr.mxu0 0.0
    %11390 = vmatpush1.msra.mxu0 0.0
    %11391 = vmatprep.subr.mxu0 0.0
    %11392 = vmatpush1.msra.mxu0 0.0
    %11393 = vmatprep.subr.mxu0 0.0
    %11394 = vmatpush1.msra.mxu0 0.0
    %11395 = vmatprep.mubr.f32.mxu0 0.0
    %v11396 = vand.u32 %v10904, 4294901760
    %v11397 = vsub.f32 %v10904, %v11396
    %v11398 = vand.u32 %v11397, 4294901760
    %11399 = vmatmul.mubr.f32.gmra.mrb[0].mxu0 %v11398
    %v11400 = vpop.f32.mrb[0].mxu0
    %v11401 = vadd.f32 %v11298, %v11400
    %v11402 = vpop.f32.mrb[0].mxu0
    %11403 = vmatprep.mubr.f32.mxu0 0.0
    %v11404 = vand.u32 %v10905, 4294901760
    %v11405 = vsub.f32 %v10905, %v11404
    %v11406 = vand.u32 %v11405, 4294901760
    %11407 = vmatmul.mubr.f32.gmra.mrb[0].mxu0 %v11406
    %v11408 = vpop.f32.mrb[0].mxu0
    %v11409 = vadd.f32 %v11305, %v11408
    %v11410 = vpop.f32.mrb[0].mxu0
    %11411 = vmatprep.mubr.f32.mxu0 0.0
    %v11412 = vand.u32 %v10906, 4294901760
    %v11413 = vsub.f32 %v10906, %v11412
    %v11414 = vand.u32 %v11413, 4294901760
    %11415 = vmatmul.mubr.f32.gmra.mrb[0].mxu0 %v11414
    %v11416 = vpop.f32.mrb[0].mxu0
    %v11417 = vadd.f32 %v11312, %v11416
    %v11418 = vpop.f32.mrb[0].mxu0
    %11419 = vdwg.mxu0
    %11420 = vmatprep.subr.mxu0 0.0
    %v11421 = vand.u32 %v10907, 4294901760
    %v11422 = vsub.f32 %v10907, %v11421
    %v11423 = vand.u32 %v11422, 4294901760
    %11424 = vmatpush1.msra.mxu0 %v11423
    %11425 = vmatprep.subr.mxu0 0.0
    %v11426 = vand.u32 %v10908, 4294901760
    %v11427 = vsub.f32 %v10908, %v11426
    %v11428 = vand.u32 %v11427, 4294901760
    %11429 = vmatpush1.msra.mxu0 %v11428
    %11430 = vmatprep.subr.mxu0 0.0
    %v11431 = vand.u32 %v10909, 4294901760
    %v11432 = vsub.f32 %v10909, %v11431
    %v11433 = vand.u32 %v11432, 4294901760
    %11434 = vmatpush1.msra.mxu0 %v11433
    %11435 = vmatprep.subr.mxu0 0.0
    %v11436 = vand.u32 %v10910, 4294901760
    %v11437 = vsub.f32 %v10910, %v11436
    %v11438 = vand.u32 %v11437, 4294901760
    %11439 = vmatpush1.msra.mxu0 %v11438
    %11440 = vmatprep.subr.mxu0 0.0
    %v11441 = vand.u32 %v10911, 4294901760
    %v11442 = vsub.f32 %v10911, %v11441
    %v11443 = vand.u32 %v11442, 4294901760
    %11444 = vmatpush1.msra.mxu0 %v11443
    %11445 = vmatprep.subr.mxu0 0.0
    %v11446 = vand.u32 %v10912, 4294901760
    %v11447 = vsub.f32 %v10912, %v11446
    %v11448 = vand.u32 %v11447, 4294901760
    %11449 = vmatpush1.msra.mxu0 %v11448
    %11450 = vmatprep.subr.mxu0 0.0
    %v11451 = vand.u32 %v10913, 4294901760
    %v11452 = vsub.f32 %v10913, %v11451
    %v11453 = vand.u32 %v11452, 4294901760
    %11454 = vmatpush1.msra.mxu0 %v11453
    %11455 = vmatprep.subr.mxu0 0.0
    %v11456 = vand.u32 %v10914, 4294901760
    %v11457 = vsub.f32 %v10914, %v11456
    %v11458 = vand.u32 %v11457, 4294901760
    %11459 = vmatpush1.msra.mxu0 %v11458
    %11460 = vmatprep.subr.mxu0 0.0
    %v11461 = vand.u32 %v10915, 4294901760
    %v11462 = vsub.f32 %v10915, %v11461
    %v11463 = vand.u32 %v11462, 4294901760
    %11464 = vmatpush1.msra.mxu0 %v11463
    %11465 = vmatprep.subr.mxu0 0.0
    %v11466 = vand.u32 %v10916, 4294901760
    %v11467 = vsub.f32 %v10916, %v11466
    %v11468 = vand.u32 %v11467, 4294901760
    %11469 = vmatpush1.msra.mxu0 %v11468
    %11470 = vmatprep.subr.mxu0 0.0
    %v11471 = vand.u32 %v10917, 4294901760
    %v11472 = vsub.f32 %v10917, %v11471
    %v11473 = vand.u32 %v11472, 4294901760
    %11474 = vmatpush1.msra.mxu0 %v11473
    %11475 = vmatprep.subr.mxu0 0.0
    %v11476 = vand.u32 %v10918, 4294901760
    %v11477 = vsub.f32 %v10918, %v11476
    %v11478 = vand.u32 %v11477, 4294901760
    %11479 = vmatpush1.msra.mxu0 %v11478
    %11480 = vmatprep.subr.mxu0 0.0
    %v11481 = vand.u32 %v10919, 4294901760
    %v11482 = vsub.f32 %v10919, %v11481
    %v11483 = vand.u32 %v11482, 4294901760
    %11484 = vmatpush1.msra.mxu0 %v11483
    %11485 = vmatprep.subr.mxu0 0.0
    %v11486 = vand.u32 %v10920, 4294901760
    %v11487 = vsub.f32 %v10920, %v11486
    %v11488 = vand.u32 %v11487, 4294901760
    %11489 = vmatpush1.msra.mxu0 %v11488
    %11490 = vmatprep.subr.mxu0 0.0
    %v11491 = vand.u32 %v10921, 4294901760
    %v11492 = vsub.f32 %v10921, %v11491
    %v11493 = vand.u32 %v11492, 4294901760
    %11494 = vmatpush1.msra.mxu0 %v11493
    %11495 = vmatprep.subr.mxu0 0.0
    %v11496 = vand.u32 %v10922, 4294901760
    %v11497 = vsub.f32 %v10922, %v11496
    %v11498 = vand.u32 %v11497, 4294901760
    %11499 = vmatpush1.msra.mxu0 %v11498
    %11500 = vmatprep.subr.mxu0 0.0
    %11501 = vmatpush1.msra.mxu0 0.0
    %11502 = vmatprep.subr.mxu0 0.0
    %11503 = vmatpush1.msra.mxu0 0.0
    %11504 = vmatprep.subr.mxu0 0.0
    %11505 = vmatpush1.msra.mxu0 0.0
    %11506 = vmatprep.subr.mxu0 0.0
    %11507 = vmatpush1.msra.mxu0 0.0
    %11508 = vmatprep.subr.mxu0 0.0
    %11509 = vmatpush1.msra.mxu0 0.0
    %11510 = vmatprep.subr.mxu0 0.0
    %11511 = vmatpush1.msra.mxu0 0.0
    %11512 = vmatprep.subr.mxu0 0.0
    %11513 = vmatpush1.msra.mxu0 0.0
    %11514 = vmatprep.subr.mxu0 0.0
    %11515 = vmatpush1.msra.mxu0 0.0
    %11516 = vmatprep.subr.mxu0 0.0
    %11517 = vmatpush1.msra.mxu0 0.0
    %11518 = vmatprep.subr.mxu0 0.0
    %11519 = vmatpush1.msra.mxu0 0.0
    %11520 = vmatprep.subr.mxu0 0.0
    %11521 = vmatpush1.msra.mxu0 0.0
    %11522 = vmatprep.subr.mxu0 0.0
    %11523 = vmatpush1.msra.mxu0 0.0
    %11524 = vmatprep.subr.mxu0 0.0
    %11525 = vmatpush1.msra.mxu0 0.0
    %11526 = vmatprep.subr.mxu0 0.0
    %11527 = vmatpush1.msra.mxu0 0.0
    %11528 = vmatprep.subr.mxu0 0.0
    %11529 = vmatpush1.msra.mxu0 0.0
    %11530 = vmatprep.subr.mxu0 0.0
    %11531 = vmatpush1.msra.mxu0 0.0
    %11532 = vmatprep.mubr.f32.mxu0 0.0
    %v11533 = vand.u32 %v10904, 4294901760
    %11534 = vmatmul.mubr.f32.gmra.mrb[0].mxu0 %v11533
    %v11535 = vpop.f32.mrb[0].mxu0
    %v11536 = vadd.f32 %v11401, %v11535
    %v11537 = vpop.f32.mrb[0].mxu0
    %11538 = vmatprep.mubr.f32.mxu0 0.0
    %v11539 = vand.u32 %v10905, 4294901760
    %11540 = vmatmul.mubr.f32.gmra.mrb[0].mxu0 %v11539
    %v11541 = vpop.f32.mrb[0].mxu0
    %v11542 = vadd.f32 %v11409, %v11541
    %v11543 = vpop.f32.mrb[0].mxu0
    %11544 = vmatprep.mubr.f32.mxu0 0.0
    %v11545 = vand.u32 %v10906, 4294901760
    %11546 = vmatmul.mubr.f32.gmra.mrb[0].mxu0 %v11545
    %v11547 = vpop.f32.mrb[0].mxu0
    %v11548 = vadd.f32 %v11417, %v11547
    %v11549 = vpop.f32.mrb[0].mxu0
    %11550 = vdwg.mxu0
    %11551 = vmatprep.subr.mxu0 0.0
    %v11552 = vand.u32 %v10907, 4294901760
    %11553 = vmatpush1.msra.mxu0 %v11552
    %11554 = vmatprep.subr.mxu0 0.0
    %v11555 = vand.u32 %v10908, 4294901760
    %11556 = vmatpush1.msra.mxu0 %v11555
    %11557 = vmatprep.subr.mxu0 0.0
    %v11558 = vand.u32 %v10909, 4294901760
    %11559 = vmatpush1.msra.mxu0 %v11558
    %11560 = vmatprep.subr.mxu0 0.0
    %v11561 = vand.u32 %v10910, 4294901760
    %11562 = vmatpush1.msra.mxu0 %v11561
    %11563 = vmatprep.subr.mxu0 0.0
    %v11564 = vand.u32 %v10911, 4294901760
    %11565 = vmatpush1.msra.mxu0 %v11564
    %11566 = vmatprep.subr.mxu0 0.0
    %v11567 = vand.u32 %v10912, 4294901760
    %11568 = vmatpush1.msra.mxu0 %v11567
    %11569 = vmatprep.subr.mxu0 0.0
    %v11570 = vand.u32 %v10913, 4294901760
    %11571 = vmatpush1.msra.mxu0 %v11570
    %11572 = vmatprep.subr.mxu0 0.0
    %v11573 = vand.u32 %v10914, 4294901760
    %11574 = vmatpush1.msra.mxu0 %v11573
    %11575 = vmatprep.subr.mxu0 0.0
    %v11576 = vand.u32 %v10915, 4294901760
    %11577 = vmatpush1.msra.mxu0 %v11576
    %11578 = vmatprep.subr.mxu0 0.0
    %v11579 = vand.u32 %v10916, 4294901760
    %11580 = vmatpush1.msra.mxu0 %v11579
    %11581 = vmatprep.subr.mxu0 0.0
    %v11582 = vand.u32 %v10917, 4294901760
    %11583 = vmatpush1.msra.mxu0 %v11582
    %11584 = vmatprep.subr.mxu0 0.0
    %v11585 = vand.u32 %v10918, 4294901760
    %11586 = vmatpush1.msra.mxu0 %v11585
    %11587 = vmatprep.subr.mxu0 0.0
    %v11588 = vand.u32 %v10919, 4294901760
    %11589 = vmatpush1.msra.mxu0 %v11588
    %11590 = vmatprep.subr.mxu0 0.0
    %v11591 = vand.u32 %v10920, 4294901760
    %11592 = vmatpush1.msra.mxu0 %v11591
    %11593 = vmatprep.subr.mxu0 0.0
    %v11594 = vand.u32 %v10921, 4294901760
    %11595 = vmatpush1.msra.mxu0 %v11594
    %11596 = vmatprep.subr.mxu0 0.0
    %v11597 = vand.u32 %v10922, 4294901760
    %11598 = vmatpush1.msra.mxu0 %v11597
    %11599 = vmatprep.subr.mxu0 0.0
    %11600 = vmatpush1.msra.mxu0 0.0
    %11601 = vmatprep.subr.mxu0 0.0
    %11602 = vmatpush1.msra.mxu0 0.0
    %11603 = vmatprep.subr.mxu0 0.0
    %11604 = vmatpush1.msra.mxu0 0.0
    %11605 = vmatprep.subr.mxu0 0.0
    %11606 = vmatpush1.msra.mxu0 0.0
    %11607 = vmatprep.subr.mxu0 0.0
    %11608 = vmatpush1.msra.mxu0 0.0
    %11609 = vmatprep.subr.mxu0 0.0
    %11610 = vmatpush1.msra.mxu0 0.0
    %11611 = vmatprep.subr.mxu0 0.0
    %11612 = vmatpush1.msra.mxu0 0.0
    %11613 = vmatprep.subr.mxu0 0.0
    %11614 = vmatpush1.msra.mxu0 0.0
    %11615 = vmatprep.subr.mxu0 0.0
    %11616 = vmatpush1.msra.mxu0 0.0
    %11617 = vmatprep.subr.mxu0 0.0
    %11618 = vmatpush1.msra.mxu0 0.0
    %11619 = vmatprep.subr.mxu0 0.0
    %11620 = vmatpush1.msra.mxu0 0.0
    %11621 = vmatprep.subr.mxu0 0.0
    %11622 = vmatpush1.msra.mxu0 0.0
    %11623 = vmatprep.subr.mxu0 0.0
    %11624 = vmatpush1.msra.mxu0 0.0
    %11625 = vmatprep.subr.mxu0 0.0
    %11626 = vmatpush1.msra.mxu0 0.0
    %11627 = vmatprep.subr.mxu0 0.0
    %11628 = vmatpush1.msra.mxu0 0.0
    %11629 = vmatprep.subr.mxu0 0.0
    %11630 = vmatpush1.msra.mxu0 0.0
    %11631 = vmatprep.mubr.f32.mxu0 0.0
    %v11632 = vand.u32 %v10904, 4294901760
    %11633 = vmatmul.mubr.f32.gmra.mrb[0].mxu0 %v11632
    %v11634 = vpop.f32.mrb[0].mxu0
    %v11635 = vadd.f32 %v11536, %v11634
    %v11636 = vpop.f32.mrb[0].mxu0
    %11637 = vmatprep.mubr.f32.mxu0 0.0
    %v11638 = vand.u32 %v10905, 4294901760
    %11639 = vmatmul.mubr.f32.gmra.mrb[0].mxu0 %v11638
    %v11640 = vpop.f32.mrb[0].mxu0
    %v11641 = vadd.f32 %v11542, %v11640
    %v11642 = vpop.f32.mrb[0].mxu0
    %11643 = vmatprep.mubr.f32.mxu0 0.0
    %v11644 = vand.u32 %v10906, 4294901760
    %11645 = vmatmul.mubr.f32.gmra.mrb[0].mxu0 %v11644
    %v11646 = vpop.f32.mrb[0].mxu0
    %v11647 = vadd.f32 %v11548, %v11646
    %v11648 = vpop.f32.mrb[0].mxu0
    %11649 = vdwg.mxu0
    %v11650 = vadd.f32 %v8041, %v11635
    %v11651 = vadd.f32 %v8042, %v11641
    %v11652 = vadd.f32 %v8043, %v11647
    %11653 = vst [vmem:[#allocation2] sm:$0xff] %v11650
    %11654 = vst [vmem:[#allocation2 + $0x8] sm:$0xff] %v11651
    %11655 = vst [vmem:[#allocation2 + $0x10] sm:$0xff] %v11652
    // Predicated region
    $region58: #{relcnn_forward.1} parent=1 // pred_check
      _
    $region59: #{relcnn_forward.1} parent=1 // pred_check_branch
      %11657 = sbr.rel (0) target = $region61
    $region60: #{relcnn_forward.1} parent=1 // pred_region
      %s11659 = ssub.s32 384, 384
      %11660 = vsyncadd [#allocation3], %s11659
      %s11661 = sshll.u32 [#allocation2], 4
      %s11662 = int_to_ptr.vmem [resolvable:$true] %s11661
      %11667 = dma.vmem_to_hbm [thread:$0]  %s11662, 384, %s14, [#allocation3], 128, 128, 8
    $region61: #{relcnn_forward.1} parent=1 // pred_fallthru
      _
    // Predicated region
    $region62: #{relcnn_forward.1} parent=1 // pred_check
      _
    $region63: #{relcnn_forward.1} parent=1 // pred_check_branch
      %11669 = sbr.rel (0) target = $region65
    $region64: #{relcnn_forward.1} parent=1 // pred_region
      %11670 = dma.done [#allocation3], 384
    $region65: #{relcnn_forward.1} parent=1 // pred_fallthru
      _
    %11671 = vsyncpa [#allocation3], 1

</llo_original>
